<compile_context>
chip_gen: v6e
topology: v6e:2x2x1
jax: 0.10.0
libtpu: 0.0.40
codegen_flags: <defaults>
</compile_context>

<pallas_src>
import math
import functools

import jax
import jax.numpy as jnp
from jax.experimental import pallas as pl
from jax.experimental.pallas import tpu as pltpu


_VMEM_LIMIT = 32 * 1024 * 1024   # safe on v5e/v6e (128 MiB) and v7x (64 MiB)


# --------------------------------------------------------------------------
# small helpers
# --------------------------------------------------------------------------

def _round_up(x, m):
    return ((x + m - 1) // m) * m


def _tile_and_pad(dim, align, cap):
    """Tile size + padded extent for one GEMM dimension.

    dim <= cap -> single full-extent block (always legal), no padding.
    dim  > cap -> aligned tile, dim padded up to a multiple of the tile.
    """
    if dim <= cap:
        return dim, dim
    nt = -(-dim // cap)
    t = _round_up(-(-dim // nt), align)
    return t, t * nt


def _largest_divisor(n, cap):
    cap = max(1, min(n, cap))
    for d in range(cap, 0, -1):
        if n % d == 0:
            return d
    return 1


def _hw_tile(hw, c, budget):
    """Spatial tile (rows of the (HW, C) view) for the tiled InstanceNorm."""
    cap = max(8, budget // max(1, 2 * c))
    if hw <= cap:
        return hw
    cap8 = (min(cap, hw) // 8) * 8
    for d in range(cap8, 7, -8):
        if hw % d == 0:
            return d
    return max(8, cap8)        # no clean divisor: wrapper pads HW


# --------------------------------------------------------------------------
# Tiled batched GEMM kernel (bias + optional fused residual)
# --------------------------------------------------------------------------

def _gemm_kernel(a_ref, b_ref, bias_ref, o_ref, acc_ref, *, k_steps):
    k = pl.program_id(3)

    @pl.when(k == 0)
    def _():
        acc_ref[...] = jnp.zeros_like(acc_ref)

    acc_ref[...] += jnp.dot(a_ref[0], b_ref[0],
                            preferred_element_type=jnp.float32)

    @pl.when(k == k_steps - 1)
    def _():
        o_ref[0] = (acc_ref[...] + bias_ref[...]).astype(o_ref.dtype)


def _gemm_res_kernel(a_ref, b_ref, bias_ref, r_ref, o_ref, acc_ref, *, k_steps):
    k = pl.program_id(3)

    @pl.when(k == 0)
    def _():
        acc_ref[...] = jnp.zeros_like(acc_ref)

    acc_ref[...] += jnp.dot(a_ref[0], b_ref[0],
                            preferred_element_type=jnp.float32)

    @pl.when(k == k_steps - 1)
    def _():
        o_ref[0] = (acc_ref[...] + bias_ref[...] +
                    r_ref[0].astype(jnp.float32)).astype(o_ref.dtype)


def gemm(a, b, bias=None, residual=None, out_dtype=jnp.bfloat16,
         tm_cap=512, tn_cap=256, tk_cap=1024):
    """Batched (broadcasting) matmul: (BA,M,K) @ (BB,K,N) + bias [+ residual].

    Tiled over (B, M, N, K); bf16 operands, f32 accumulation, fused epilogue.
    Tile caps sized so double-buffered blocks + accumulator stay ~<5 MiB.
    """
    BA, M, K = a.shape
    BB, K2, N = b.shape
    assert K == K2, (a.shape, b.shape)
    assert BA == BB or BA == 1 or BB == 1, (a.shape, b.shape)
    B = max(BA, BB)

    tm, Mp = _tile_and_pad(M, 16, tm_cap)       # 16: bf16 sublane pack
    tk, Kp = _tile_and_pad(K, 128, tk_cap)
    tn, Np = _tile_and_pad(N, 128, tn_cap)

    a = a.astype(jnp.bfloat16)
    b = b.astype(jnp.bfloat16)
    if (Mp, Kp) != (M, K):
        a = jnp.pad(a, ((0, 0), (0, Mp - M), (0, Kp - K)))
    if (Kp, Np) != (K, N):
        b = jnp.pad(b, ((0, 0), (0, Kp - K), (0, Np - N)))

    if bias is None:
        bias_p = jnp.zeros((1, Np), jnp.float32)
    else:
        bias_p = bias.astype(jnp.float32).reshape(1, N)
        if Np != N:
            bias_p = jnp.pad(bias_p, ((0, 0), (0, Np - N)))

    k_steps = Kp // tk

    a_map = (lambda bi, i, j, k: (0, i, k)) if BA == 1 else \
            (lambda bi, i, j, k: (bi, i, k))
    b_map = (lambda bi, i, j, k: (0, k, j)) if BB == 1 else \
            (lambda bi, i, j, k: (bi, k, j))

    in_specs = [
        pl.BlockSpec((1, tm, tk), a_map),
        pl.BlockSpec((1, tk, tn), b_map),
        pl.BlockSpec((1, tn), lambda bi, i, j, k: (0, j)),
    ]
    args = [a, b, bias_p]

    if residual is not None:
        r = residual.astype(jnp.bfloat16)
        if (Mp, Np) != (M, N):
            r = jnp.pad(r, ((0, 0), (0, Mp - M), (0, Np - N)))
        in_specs.append(pl.BlockSpec((1, tm, tn), lambda bi, i, j, k: (bi, i, j)))
        args.append(r)
        kern = functools.partial(_gemm_res_kernel, k_steps=k_steps)
    else:
        kern = functools.partial(_gemm_kernel, k_steps=k_steps)

    out = pl.pallas_call(
        kern,
        out_shape=jax.ShapeDtypeStruct((B, Mp, Np), out_dtype),
        grid=(B, Mp // tm, Np // tn, k_steps),
        in_specs=in_specs,
        out_specs=pl.BlockSpec((1, tm, tn), lambda bi, i, j, k: (bi, i, j)),
        scratch_shapes=[pltpu.VMEM((tm, tn), jnp.float32)],
        compiler_params=pltpu.CompilerParams(
            dimension_semantics=("parallel", "parallel", "parallel", "arbitrary"),
            vmem_limit_bytes=_VMEM_LIMIT),
    )(*args)

    if (Mp, Np) != (M, N):
        out = out[:, :M, :N]
    return out


# --------------------------------------------------------------------------
# Direct (no-im2col) conv for k>1, stride 1: manual double-buffered DMA of
# contiguous row strips from HBM, full-width tap matmuls + f32 sublane rolls.
# --------------------------------------------------------------------------

def _conv_direct_kernel(x_hbm, w_ref, b_ref, o_ref, xbuf, acc_ref, sem,
                        *, kh, kw, th, wpad, wo_p, cin, cout):
    n = pl.program_id(0)
    i = pl.program_id(1)
    n_i = pl.num_programs(1)
    rows = th + kh - 1
    slot = i % 2

    def strip_copy(idx, s):
        return pltpu.make_async_copy(
            x_hbm.at[n, pl.ds(idx * th, rows)], xbuf.at[s], sem.at[s])

    # Prime the pipeline on the first strip of each image.
    @pl.when(i == 0)
    def _():
        strip_copy(0, 0).start()

    # Wait for the strip of this step (started here if i==0, else prefetched).
    strip_copy(i, slot).wait()

    # Prefetch the next strip while the current one is being consumed.
    @pl.when(i + 1 < n_i)
    def _():
        strip_copy(i + 1, 1 - slot).start()

    size0 = th * wpad
    acc_ref[...] = jnp.zeros_like(acc_ref)
    for dy in range(kh):
        # Full-width row slab for this dy: aligned loads only (leading-axis
        # slice, wpad is a multiple of 8 so the reshape is layout-preserving).
        a = xbuf[slot, pl.ds(dy, th)].reshape(size0, cin)          # bf16
        part = None
        for dx in range(kw):
            p = jnp.dot(a, w_ref[dy * kw + dx],
                        preferred_element_type=jnp.float32)
            if dx:
                # out[y, x] needs in[y+dy, x+dx]: shift the tap result left by
                # dx along the flattened row axis.  32-bit sublane roll rides
                # the XLU slot and overlaps the MXU work; the wrapped elements
                # only land in the discarded columns >= wo_p.
                p = pltpu.roll(p, shift=size0 - dx, axis=0)
            part = p if part is None else part + p
        acc_ref[...] += part

    out = acc_ref[...] + b_ref[...]
    o_ref[0] = out.reshape(th, wpad, cout)[:, :wo_p, :].astype(o_ref.dtype)


def _conv_direct(xpad, w, b, kh, kw, out_dtype=jnp.bfloat16):
    """VALID conv, stride 1, on an already (reflection-)padded NHWC input."""
    N, Hp, Wp, Cin = xpad.shape
    Cout = w.shape[0]
    Ho = Hp - kh + 1
    Wo = Wp - kw + 1

    # Output width padded to a multiple of 8; stored input width padded so a
    # whole-width row strip is contiguous in HBM and reshapes stay aligned.
    Wo_p = _round_up(Wo, 8)
    Wpad = _round_up(Wo_p + kw - 1, 8)
    if Wpad != Wp:
        xpad = jnp.pad(xpad, ((0, 0), (0, 0), (0, Wpad - Wp), (0, 0)))

    # Row tile: largest divisor of Ho keeping strip/acc/output buffers within
    # a generous VMEM budget (double buffers included).
    budget = 8 << 20
    per_row = (4 * Wpad * Cin          # 2 bf16 strip slots
               + 4 * Wpad * Cout       # f32 accumulator
               + 4 * Wo_p * Cout)      # double-buffered bf16 output block
    th = _largest_divisor(Ho, max(1, min(256, budget // max(1, per_row))))
    rows = th + kh - 1

    # TODO(synk): fold the kw taps into the contraction (K = kw*Cin) once the
    # lane-concat of sub-128-wide channel slabs is cheap enough.
    wt = jnp.transpose(w, (2, 3, 1, 0)).reshape(kh * kw, Cin, Cout)
    wt = wt.astype(jnp.bfloat16)
    bias2 = b.astype(jnp.float32).reshape(1, Cout)

    out = pl.pallas_call(
        functools.partial(_conv_direct_kernel, kh=kh, kw=kw, th=th,
                          wpad=Wpad, wo_p=Wo_p, cin=Cin, cout=Cout),
        out_shape=jax.ShapeDtypeStruct((N, Ho, Wo_p, Cout), out_dtype),
        grid=(N, Ho // th),
        in_specs=[
            pl.BlockSpec(memory_space=pl.ANY),                 # input stays in HBM
            pl.BlockSpec((kh * kw, Cin, Cout), lambda n, i: (0, 0, 0)),
            pl.BlockSpec((1, Cout), lambda n, i: (0, 0)),
        ],
        out_specs=pl.BlockSpec((1, th, Wo_p, Cout), lambda n, i: (n, i, 0, 0)),
        scratch_shapes=[
            pltpu.VMEM((2, rows, Wpad, Cin), jnp.bfloat16),
            pltpu.VMEM((th * Wpad, Cout), jnp.float32),
            pltpu.SemaphoreType.DMA((2,)),
        ],
        compiler_params=pltpu.CompilerParams(
            dimension_semantics=("parallel", "arbitrary"),
            vmem_limit_bytes=_VMEM_LIMIT),
    )(xpad.astype(jnp.bfloat16), wt, bias2)

    if Wo_p != Wo:
        out = out[:, :, :Wo, :]
    return out


# --------------------------------------------------------------------------
# im2col + GEMM path: thin-channel stem conv and the two stride-2 3x3 convs.
# --------------------------------------------------------------------------

def _conv_im2col(xpad, w, b, kh, kw, stride, out_dtype=jnp.bfloat16):
    # TODO(synk): add a strided variant of the direct-conv kernel so the two
    # stride-2 convs avoid materialising the 9-tap patch tensor in HBM.
    N, Hp, Wp, Cin = xpad.shape
    Cout = w.shape[0]
    Ho = (Hp - kh) // stride + 1
    Wo = (Wp - kw) // stride + 1
    taps = []
    for dy in range(kh):
        for dx in range(kw):
            taps.append(xpad[:, dy:dy + stride * (Ho - 1) + 1:stride,
                               dx:dx + stride * (Wo - 1) + 1:stride, :])
    patches = jnp.stack(taps, axis=3)                       # (N,Ho,Wo,taps,Cin)
    patches = patches.reshape(N, Ho * Wo, kh * kw * Cin)
    wmat = jnp.transpose(w, (2, 3, 1, 0)).reshape(1, kh * kw * Cin, Cout)
    out = gemm(patches, wmat, b, out_dtype=out_dtype)
    return out.reshape(N, Ho, Wo, Cout)


# --------------------------------------------------------------------------
# InstanceNorm(+ReLU): single-pass when the slab fits VMEM, else tiled 2-pass.
# --------------------------------------------------------------------------

def _in_single_kernel(x_ref, o_ref, *, inv_hw, eps, relu):
    x = x_ref[0].astype(jnp.float32)                         # (HW, C)
    s1 = jnp.sum(x, axis=0, keepdims=True)
    s2 = jnp.sum(x * x, axis=0, keepdims=True)
    mean = s1 * inv_hw
    var = s2 * inv_hw - mean * mean
    y = (x - mean) * jax.lax.rsqrt(var + eps)
    if relu:
        y = jnp.maximum(y, 0.0)
    o_ref[0] = y.astype(o_ref.dtype)


def _in_stats_kernel(x_ref, s1_ref, s2_ref):
    j = pl.program_id(1)
    x = x_ref[0].astype(jnp.float32)                         # (thw, C)
    ps1 = jnp.sum(x, axis=0, keepdims=True)
    ps2 = jnp.sum(x * x, axis=0, keepdims=True)

    @pl.when(j == 0)
    def _():
        s1_ref[0] = ps1
        s2_ref[0] = ps2

    @pl.when(j != 0)
    def _():
        s1_ref[0] += ps1
        s2_ref[0] += ps2


def _in_apply_kernel(x_ref, s1_ref, s2_ref, o_ref, *, inv_hw, eps, relu):
    x = x_ref[0].astype(jnp.float32)                         # (thw, C)
    mean = s1_ref[0] * inv_hw
    var = s2_ref[0] * inv_hw - mean * mean
    y = (x - mean) * jax.lax.rsqrt(var + eps)
    if relu:
        y = jnp.maximum(y, 0.0)
    o_ref[0] = y.astype(o_ref.dtype)


def instance_norm(x, relu=False, eps=1e-5):
    """nn.InstanceNorm2d(affine=False) (+ optional fused ReLU), NHWC input."""
    N, H, W, C = x.shape
    HW = H * W
    x2 = x.reshape(N, HW, C)

    # Single-pass fused path: one HBM read + one write per element.
    if HW * C <= 512 * 1024:
        y = pl.pallas_call(
            functools.partial(_in_single_kernel,
                              inv_hw=1.0 / HW, eps=eps, relu=relu),
            out_shape=jax.ShapeDtypeStruct((N, HW, C), x.dtype),
            grid=(N,),
            in_specs=[pl.BlockSpec((1, HW, C), lambda n: (n, 0, 0))],
            out_specs=pl.BlockSpec((1, HW, C), lambda n: (n, 0, 0)),
            compiler_params=pltpu.CompilerParams(
                dimension_semantics=("parallel",),
                vmem_limit_bytes=_VMEM_LIMIT),
        )(x2)
        return y.reshape(N, H, W, C)

    # Tiled two-pass path for large slabs (zero-padding leaves sums intact).
    thw = _hw_tile(HW, C, budget=4 << 20)
    HWp = HW if HW % thw == 0 else _round_up(HW, thw)
    if HWp != HW:
        x2 = jnp.pad(x2, ((0, 0), (0, HWp - HW), (0, 0)))
    nhw = HWp // thw

    s1, s2 = pl.pallas_call(
        _in_stats_kernel,
        out_shape=(jax.ShapeDtypeStruct((N, 1, C), jnp.float32),
                   jax.ShapeDtypeStruct((N, 1, C), jnp.float32)),
        grid=(N, nhw),
        in_specs=[pl.BlockSpec((1, thw, C), lambda n, j: (n, j, 0))],
        out_specs=(pl.BlockSpec((1, 1, C), lambda n, j: (n, 0, 0)),
                   pl.BlockSpec((1, 1, C), lambda n, j: (n, 0, 0))),
        compiler_params=pltpu.CompilerParams(
            dimension_semantics=("parallel", "arbitrary"),
            vmem_limit_bytes=_VMEM_LIMIT),
    )(x2)

    y = pl.pallas_call(
        functools.partial(_in_apply_kernel, inv_hw=1.0 / HW, eps=eps, relu=relu),
        out_shape=jax.ShapeDtypeStruct((N, HWp, C), x.dtype),
        grid=(N, nhw),
        in_specs=[pl.BlockSpec((1, thw, C), lambda n, j: (n, j, 0)),
                  pl.BlockSpec((1, 1, C), lambda n, j: (n, 0, 0)),
                  pl.BlockSpec((1, 1, C), lambda n, j: (n, 0, 0))],
        out_specs=pl.BlockSpec((1, thw, C), lambda n, j: (n, j, 0)),
        compiler_params=pltpu.CompilerParams(
            dimension_semantics=("parallel", "parallel"),
            vmem_limit_bytes=_VMEM_LIMIT),
    )(x2, s1, s2)
    if HWp != HW:
        y = y[:, :HW, :]
    return y.reshape(N, H, W, C)


# --------------------------------------------------------------------------
# Layer wrappers (channels-last / NHWC everywhere)
# --------------------------------------------------------------------------

def _reflect_pad(x, pad):
    return jnp.pad(x, ((0, 0), (pad, pad), (pad, pad), (0, 0)), mode="reflect")


def _upsample_nearest(x, s):
    if not s or s == 1:
        return x
    return jnp.repeat(jnp.repeat(x, s, axis=1), s, axis=2)


def conv1x1(x, p, stride=1, residual=None, out_dtype=jnp.bfloat16):
    """1x1 conv as a pure tiled GEMM, optional fused residual add."""
    if stride > 1:
        x = x[:, ::stride, ::stride, :]
    N, H, W, Cin = x.shape
    w, b = p["w"], p["b"]                                    # (Cout, Cin, 1, 1)
    Cout = w.shape[0]
    wmat = w.reshape(Cout, Cin).T.reshape(1, Cin, Cout)
    a = x.reshape(N, H * W, Cin)
    r = residual.reshape(N, H * W, Cout) if residual is not None else None
    out = gemm(a, wmat, b, residual=r, out_dtype=out_dtype)
    return out.reshape(N, H, W, Cout)


def conv_reflect(x, p, k, stride=1, out_dtype=jnp.bfloat16):
    """ConvLayer: reflection pad floor(k/2) + conv."""
    pad = k // 2
    if pad:
        x = _reflect_pad(x, pad)
    cin = x.shape[-1]
    if stride == 1 and cin > 8:
        return _conv_direct(x, p["w"], p["b"], k, k, out_dtype)
    # Thin-channel stem (Cin=3) and the stride-2 convs: lane-dense im2col GEMM.
    return _conv_im2col(x, p["w"], p["b"], k, k, stride, out_dtype)


# --------------------------------------------------------------------------
# Blocks
# --------------------------------------------------------------------------

def bottleneck_fwd(x, p, stride, downsample):
    if downsample is not None:
        residual = conv1x1(x, p["res"], stride=stride)
    else:
        residual = x
    out = instance_norm(x, relu=True)
    out = conv1x1(out, p["c1"])
    out = instance_norm(out, relu=True)
    out = conv_reflect(out, p["c2"], 3, stride)
    out = instance_norm(out, relu=True)
    out = conv1x1(out, p["c3"], residual=residual)           # fused residual add
    return out


def upbottleneck_fwd(x, p, stride):
    # UpSampleConvLayer(k=1, upsample=s): nearest upsample commutes with a
    # pointwise conv, so run the 1x1 GEMM on the small tensor first.
    residual = _upsample_nearest(conv1x1(x, p["res"]), stride)
    out = instance_norm(x, relu=True)
    out = conv1x1(out, p["c1"])
    out = instance_norm(out, relu=True)
    # TODO(synk): fold the nearest upsample + reflect pad into the direct-conv
    # strip DMA instead of materialising the upsampled tensor in HBM.
    out = _upsample_nearest(out, stride)
    out = conv_reflect(out, p["c2"], 3, 1)
    out = instance_norm(out, relu=True)
    out = conv1x1(out, p["c3"], residual=residual)           # fused residual add
    return out


def comatch_fwd(x, weight, G):
    # torch: P = bmm(weight, G); out = bmm(P^T, X.view(N,C,HW)).view_as(X)
    # channels-last: out_cl = X_cl @ P
    N, H, W, C = x.shape
    P = gemm(weight, G, out_dtype=jnp.float32)               # (1, C, C)
    out = gemm(x.reshape(N, H * W, C), P, out_dtype=jnp.bfloat16)
    return out.reshape(N, H, W, C)


def gram_matrix(y):
    # TODO(synk): transpose-A GEMM variant would avoid this HBM transpose.
    N, H, W, C = y.shape
    f = y.reshape(N, H * W, C)
    ft = jnp.swapaxes(f, 1, 2)                               # (N, C, HW)
    g = gemm(ft, f, out_dtype=jnp.float32)                   # (N, C, C)
    return g / float(C * H * W)


# --------------------------------------------------------------------------
# Parameter init (deterministic, mimics PyTorch Conv2d default init)
# --------------------------------------------------------------------------

def _key_iter(key):
    while True:
        key, sub = jax.random.split(key)
        yield sub


def init_conv(key, cin, cout, k):
    wkey, bkey = jax.random.split(key)
    fan_in = cin * k * k
    bound = 1.0 / math.sqrt(fan_in)
    w = jax.random.uniform(wkey, (cout, cin, k, k), jnp.float32, -bound, bound)
    b = jax.random.uniform(bkey, (cout,), jnp.float32, -bound, bound)
    return {"w": w, "b": b}


def init_bottleneck(keys, inplanes, planes, downsample):
    p = {}
    if downsample is not None:
        p["res"] = init_conv(next(keys), inplanes, planes * 4, 1)
    p["c1"] = init_conv(next(keys), inplanes, planes, 1)
    p["c2"] = init_conv(next(keys), planes, planes, 3)
    p["c3"] = init_conv(next(keys), planes, planes * 4, 1)
    return p


def init_upbottleneck(keys, inplanes, planes):
    return {
        "res": init_conv(next(keys), inplanes, planes * 4, 1),
        "c1": init_conv(next(keys), inplanes, planes, 1),
        "c2": init_conv(next(keys), planes, planes, 3),
        "c3": init_conv(next(keys), planes, planes * 4, 1),
    }


def init_model(key, input_nc=3, output_nc=3, ngf=64, n_blocks=6):
    keys = _key_iter(key)
    exp = 4
    p = {}
    p["m1_conv"] = init_conv(next(keys), input_nc, 64, 7)
    p["m1_b1"] = init_bottleneck(keys, 64, 32, downsample=1)
    p["m1_b2"] = init_bottleneck(keys, 32 * exp, ngf, downsample=1)
    C = ngf * exp
    p["comatch_w"] = jax.random.uniform(next(keys), (1, C, C), jnp.float32, 0.0, 0.02)
    p["blocks"] = [init_bottleneck(keys, ngf * exp, ngf, downsample=None)
                   for _ in range(n_blocks)]
    p["up1"] = init_upbottleneck(keys, ngf * exp, 32)
    p["up2"] = init_upbottleneck(keys, 32 * exp, 16)
    p["final"] = init_conv(next(keys), 16 * exp, output_nc, 7)
    return p


# --------------------------------------------------------------------------
# Model forward (host-facing tensors NCHW f32, internal NHWC bf16)
# --------------------------------------------------------------------------

def model1_fwd(x_cl, params):
    out = conv_reflect(x_cl, params["m1_conv"], 7, 1)
    out = instance_norm(out, relu=True)
    out = bottleneck_fwd(out, params["m1_b1"], stride=2, downsample=1)
    out = bottleneck_fwd(out, params["m1_b2"], stride=2, downsample=1)
    return out


def set_target(style_nchw, params):
    """Model.set_target: G = Gram(model1(style))."""
    s = jnp.transpose(style_nchw, (0, 2, 3, 1)).astype(jnp.bfloat16)
    feats = model1_fwd(s, params)
    return gram_matrix(feats)


def model_forward(x_nchw, params, G):
    x = jnp.transpose(x_nchw, (0, 2, 3, 1)).astype(jnp.bfloat16)
    out = model1_fwd(x, params)
    out = comatch_fwd(out, params["comatch_w"], G)
    for bp in params["blocks"]:
        out = bottleneck_fwd(out, bp, stride=1, downsample=None)
    out = upbottleneck_fwd(out, params["up1"], stride=2)
    out = upbottleneck_fwd(out, params["up2"], stride=2)
    out = instance_norm(out, relu=True)
    out = conv_reflect(out, params["final"], 7, 1, out_dtype=jnp.float32)
    return jnp.transpose(out, (0, 3, 1, 2))                  # back to NCHW f32


# --------------------------------------------------------------------------

if __name__ == "__main__":
    key = jax.random.PRNGKey(0)
    pkey, xkey, skey = jax.random.split(key, 3)

    # Small but structurally faithful configuration.
    input_nc, output_nc, ngf, n_blocks = 3, 3, 16, 2
    params = init_model(pkey, input_nc, output_nc, ngf, n_blocks)

    x = jax.random.normal(xkey, (2, input_nc, 16, 16), jnp.float32)
    style = jax.random.normal(skey, (1, input_nc, 16, 16), jnp.float32)

    # Populate the CoMatch target G exactly as Model.set_target would.
    G = jax.jit(set_target)(style, params)
    G = jax.block_until_ready(G)

    fwd = jax.jit(model_forward)
    out = fwd(x, params, G)
    out = jax.block_until_ready(out)

    assert out.shape == (2, output_nc, 16, 16), out.shape
    assert out.dtype == jnp.float32
    print("KERNEL_OK")
</pallas_src>

<mosaic_0001>
module attributes {stable_mosaic.version = 11 : i64} {
  func.func @_gemm_kernel(%arg0: i32, %arg1: i32, %arg2: i32, %arg3: i32, %arg4: memref<1x256x147xbf16, #tpu.memory_space<vmem>>, %arg5: memref<1x147x64xbf16, #tpu.memory_space<vmem>>, %arg6: memref<1x64xf32, #tpu.memory_space<vmem>>, %arg7: memref<1x256x64xbf16, #tpu.memory_space<vmem>>, %arg8: memref<256x64xf32, #tpu.memory_space<vmem>>) attributes {dimension_semantics = [#tpu.dimension_semantics<parallel>, #tpu.dimension_semantics<parallel>, #tpu.dimension_semantics<parallel>, #tpu.dimension_semantics<arbitrary>], iteration_bounds = array<i64: 1, 1, 1, 1>, scalar_prefetch = 0 : i64, scratch_operands = 1 : i64, tpu.core_type = #tpu.core_type<tc>, window_params = [{transform_indices = @transform_0, window_bounds = array<i64: 1, 256, 147>}, {transform_indices = @transform_1, window_bounds = array<i64: 1, 147, 64>}, {transform_indices = @transform_2, window_bounds = array<i64: 1, 64>}, {transform_indices = @transform_3, window_bounds = array<i64: 1, 256, 64>}]} {
    %c0_i32 = arith.constant 0 : i32
    %0 = arith.cmpi eq, %arg3, %c0_i32 : i32
    %1 = arith.extui %0 : i1 to i32
    %c0_i32_0 = arith.constant 0 : i32
    %2 = arith.cmpi ne, %1, %c0_i32_0 : i32
    scf.if %2 {
      %cst_12 = arith.constant 0.000000e+00 : f32
      %14 = vector.broadcast %cst_12 : f32 to vector<256x64xf32>
      %c0_13 = arith.constant 0 : index
      %c0_14 = arith.constant 0 : index
      %15 = vector.load %arg8[%c0_13, %c0_14] : memref<256x64xf32, #tpu.memory_space<vmem>>, vector<256x64xf32>
      tpu.vector_store %arg8[%c0_13, %c0_14], %14 {strides = array<i32>} : memref<256x64xf32, #tpu.memory_space<vmem>>, vector<256x64xf32>,
    } else {
    }
    %c0 = arith.constant 0 : index
    %c0_1 = arith.constant 0 : index
    %3 = vector.load %arg8[%c0, %c0_1] : memref<256x64xf32, #tpu.memory_space<vmem>>, vector<256x64xf32>
    %c0_2 = arith.constant 0 : index
    %c0_3 = arith.constant 0 : index
    %c0_4 = arith.constant 0 : index
    %4 = vector.load %arg4[%c0_2, %c0_3, %c0_4] : memref<1x256x147xbf16, #tpu.memory_space<vmem>>, vector<1x256x147xbf16>
    %5 = vector.shape_cast %4 : vector<1x256x147xbf16> to vector<256x147xbf16>
    %c0_5 = arith.constant 0 : index
    %c0_6 = arith.constant 0 : index
    %c0_7 = arith.constant 0 : index
    %6 = vector.load %arg5[%c0_5, %c0_6, %c0_7] : memref<1x147x64xbf16, #tpu.memory_space<vmem>>, vector<1x147x64xbf16>
    %7 = vector.shape_cast %6 : vector<1x147x64xbf16> to vector<147x64xbf16>
    %cst = arith.constant dense<0.000000e+00> : vector<256x64xf32>
    %8 = tpu.matmul %5, %7, %cst {dimension_numbers = #tpu.dot_dimension_numbers<[1], [0], [0], [1], [0, 0, 1, 1], [], []>} : vector<256x147xbf16>, vector<147x64xbf16>, vector<256x64xf32> -> vector<256x64xf32>
    %9 = arith.addf %3, %8 : vector<256x64xf32>
    %c0_8 = arith.constant 0 : index
    %c0_9 = arith.constant 0 : index
    %10 = vector.load %arg8[%c0_8, %c0_9] : memref<256x64xf32, #tpu.memory_space<vmem>>, vector<256x64xf32>
    tpu.vector_store %arg8[%c0_8, %c0_9], %9 {strides = array<i32>} : memref<256x64xf32, #tpu.memory_space<vmem>>, vector<256x64xf32>,
    %c0_i32_10 = arith.constant 0 : i32
    %11 = arith.cmpi eq, %arg3, %c0_i32_10 : i32
    %12 = arith.extui %11 : i1 to i32
    %c0_i32_11 = arith.constant 0 : i32
    %13 = arith.cmpi ne, %12, %c0_i32_11 : i32
    scf.if %13 {
      %c0_12 = arith.constant 0 : index
      %c0_13 = arith.constant 0 : index
      %14 = vector.load %arg8[%c0_12, %c0_13] : memref<256x64xf32, #tpu.memory_space<vmem>>, vector<256x64xf32>
      %c0_14 = arith.constant 0 : index
      %c0_15 = arith.constant 0 : index
      %15 = vector.load %arg6[%c0_14, %c0_15] : memref<1x64xf32, #tpu.memory_space<vmem>>, vector<1x64xf32>
      %16 = vector.broadcast %15 : vector<1x64xf32> to vector<256x64xf32>
      %17 = arith.addf %14, %16 : vector<256x64xf32>
      %18 = arith.truncf %17 : vector<256x64xf32> to vector<256x64xbf16>
      %c0_16 = arith.constant 0 : index
      %c0_17 = arith.constant 0 : index
      %c0_18 = arith.constant 0 : index
      %19 = vector.load %arg7[%c0_16, %c0_17, %c0_18] : memref<1x256x64xbf16, #tpu.memory_space<vmem>>, vector<1x256x64xbf16>
      %20 = vector.shape_cast %19 : vector<1x256x64xbf16> to vector<256x64xbf16>
      %21 = vector.shape_cast %18 : vector<256x64xbf16> to vector<1x256x64xbf16>
      tpu.vector_store %arg7[%c0_16, %c0_17, %c0_18], %21 {strides = array<i32>} : memref<1x256x64xbf16, #tpu.memory_space<vmem>>, vector<1x256x64xbf16>,
    } else {
    }
    return
  }
  func.func @transform_0(%arg0: i32, %arg1: i32, %arg2: i32, %arg3: i32) -> (i32, i32, i32) {
    %c0_i32 = arith.constant 0 : i32
    %c0_i32_0 = arith.constant 0 : i32
    return %c0_i32, %arg1, %arg3 : i32, i32, i32
  }
  func.func @transform_1(%arg0: i32, %arg1: i32, %arg2: i32, %arg3: i32) -> (i32, i32, i32) {
    %c0_i32 = arith.constant 0 : i32
    %c0_i32_0 = arith.constant 0 : i32
    return %c0_i32, %arg3, %arg2 : i32, i32, i32
  }
  func.func @transform_2(%arg0: i32, %arg1: i32, %arg2: i32, %arg3: i32) -> (i32, i32) {
    %c0_i32 = arith.constant 0 : i32
    %c0_i32_0 = arith.constant 0 : i32
    return %c0_i32, %arg2 : i32, i32
  }
  func.func @transform_3(%arg0: i32, %arg1: i32, %arg2: i32, %arg3: i32) -> (i32, i32, i32) {
    %c0_i32 = arith.constant 0 : i32
    return %arg0, %arg1, %arg2 : i32, i32, i32
  }
}

module attributes {stable_mosaic.version = 11 : i64} {
  func.func @_in_single_kernel(%arg0: i32, %arg1: memref<1x256x64xbf16, #tpu.memory_space<vmem>>, %arg2: memref<1x256x64xbf16, #tpu.memory_space<vmem>>) attributes {dimension_semantics = [#tpu.dimension_semantics<parallel>], iteration_bounds = array<i64: 1>, scalar_prefetch = 0 : i64, scratch_operands = 0 : i64, tpu.core_type = #tpu.core_type<tc>, window_params = [{transform_indices = @transform_0, window_bounds = array<i64: 1, 256, 64>}, {transform_indices = @transform_1, window_bounds = array<i64: 1, 256, 64>}]} {
    %c0 = arith.constant 0 : index
    %c0_0 = arith.constant 0 : index
    %c0_1 = arith.constant 0 : index
    %0 = vector.load %arg1[%c0, %c0_0, %c0_1] : memref<1x256x64xbf16, #tpu.memory_space<vmem>>, vector<1x256x64xbf16>
    %1 = vector.shape_cast %0 : vector<1x256x64xbf16> to vector<256x64xbf16>
    %2 = arith.extf %1 : vector<256x64xbf16> to vector<256x64xf32>
    %cst = arith.constant dense<0.000000e+00> : vector<64xf32>
    %3 = vector.multi_reduction <add>, %2, %cst [0] : vector<256x64xf32> to vector<64xf32>
    %4 = vector.shape_cast %3 : vector<64xf32> to vector<1x64xf32>
    %5 = arith.mulf %2, %2 : vector<256x64xf32>
    %cst_2 = arith.constant dense<0.000000e+00> : vector<64xf32>
    %6 = vector.multi_reduction <add>, %5, %cst_2 [0] : vector<256x64xf32> to vector<64xf32>
    %7 = vector.shape_cast %6 : vector<64xf32> to vector<1x64xf32>
    %cst_3 = arith.constant 3.906250e-03 : f32
    %8 = vector.broadcast %cst_3 : f32 to vector<1x64xf32>
    %9 = arith.mulf %4, %8 : vector<1x64xf32>
    %cst_4 = arith.constant 3.906250e-03 : f32
    %10 = vector.broadcast %cst_4 : f32 to vector<1x64xf32>
    %11 = arith.mulf %7, %10 : vector<1x64xf32>
    %12 = arith.mulf %9, %9 : vector<1x64xf32>
    %13 = arith.subf %11, %12 : vector<1x64xf32>
    %14 = vector.broadcast %9 : vector<1x64xf32> to vector<256x64xf32>
    %15 = arith.subf %2, %14 : vector<256x64xf32>
    %cst_5 = arith.constant 9.99999974E-6 : f32
    %16 = vector.broadcast %cst_5 : f32 to vector<1x64xf32>
    %17 = arith.addf %13, %16 : vector<1x64xf32>
    %18 = math.rsqrt %17 : vector<1x64xf32>
    %19 = vector.broadcast %18 : vector<1x64xf32> to vector<256x64xf32>
    %20 = arith.mulf %15, %19 : vector<256x64xf32>
    %cst_6 = arith.constant 0.000000e+00 : f32
    %21 = vector.broadcast %cst_6 : f32 to vector<256x64xf32>
    %22 = arith.maximumf %20, %21 : vector<256x64xf32>
    %23 = arith.truncf %22 : vector<256x64xf32> to vector<256x64xbf16>
    %c0_7 = arith.constant 0 : index
    %c0_8 = arith.constant 0 : index
    %c0_9 = arith.constant 0 : index
    %24 = vector.load %arg2[%c0_7, %c0_8, %c0_9] : memref<1x256x64xbf16, #tpu.memory_space<vmem>>, vector<1x256x64xbf16>
    %25 = vector.shape_cast %24 : vector<1x256x64xbf16> to vector<256x64xbf16>
    %26 = vector.shape_cast %23 : vector<256x64xbf16> to vector<1x256x64xbf16>
    tpu.vector_store %arg2[%c0_7, %c0_8, %c0_9], %26 {strides = array<i32>} : memref<1x256x64xbf16, #tpu.memory_space<vmem>>, vector<1x256x64xbf16>,
    return
  }
  func.func @transform_0(%arg0: i32) -> (i32, i32, i32) {
    %c0_i32 = arith.constant 0 : i32
    %c0_i32_0 = arith.constant 0 : i32
    %c0_i32_1 = arith.constant 0 : i32
    return %arg0, %c0_i32, %c0_i32_0 : i32, i32, i32
  }
  func.func @transform_1(%arg0: i32) -> (i32, i32, i32) {
    %c0_i32 = arith.constant 0 : i32
    %c0_i32_0 = arith.constant 0 : i32
    %c0_i32_1 = arith.constant 0 : i32
    return %arg0, %c0_i32, %c0_i32_0 : i32, i32, i32
  }
}

module attributes {stable_mosaic.version = 11 : i64} {
  func.func @_gemm_kernel(%arg0: i32, %arg1: i32, %arg2: i32, %arg3: i32, %arg4: memref<1x256x64xbf16, #tpu.memory_space<vmem>>, %arg5: memref<1x64x32xbf16, #tpu.memory_space<vmem>>, %arg6: memref<1x32xf32, #tpu.memory_space<vmem>>, %arg7: memref<1x256x32xbf16, #tpu.memory_space<vmem>>, %arg8: memref<256x32xf32, #tpu.memory_space<vmem>>) attributes {dimension_semantics = [#tpu.dimension_semantics<parallel>, #tpu.dimension_semantics<parallel>, #tpu.dimension_semantics<parallel>, #tpu.dimension_semantics<arbitrary>], iteration_bounds = array<i64: 1, 1, 1, 1>, scalar_prefetch = 0 : i64, scratch_operands = 1 : i64, tpu.core_type = #tpu.core_type<tc>, window_params = [{transform_indices = @transform_0, window_bounds = array<i64: 1, 256, 64>}, {transform_indices = @transform_1, window_bounds = array<i64: 1, 64, 32>}, {transform_indices = @transform_2, window_bounds = array<i64: 1, 32>}, {transform_indices = @transform_3, window_bounds = array<i64: 1, 256, 32>}]} {
    %c0_i32 = arith.constant 0 : i32
    %0 = arith.cmpi eq, %arg3, %c0_i32 : i32
    %1 = arith.extui %0 : i1 to i32
    %c0_i32_0 = arith.constant 0 : i32
    %2 = arith.cmpi ne, %1, %c0_i32_0 : i32
    scf.if %2 {
      %cst_12 = arith.constant 0.000000e+00 : f32
      %14 = vector.broadcast %cst_12 : f32 to vector<256x32xf32>
      %c0_13 = arith.constant 0 : index
      %c0_14 = arith.constant 0 : index
      %15 = vector.load %arg8[%c0_13, %c0_14] : memref<256x32xf32, #tpu.memory_space<vmem>>, vector<256x32xf32>
      tpu.vector_store %arg8[%c0_13, %c0_14], %14 {strides = array<i32>} : memref<256x32xf32, #tpu.memory_space<vmem>>, vector<256x32xf32>,
    } else {
    }
    %c0 = arith.constant 0 : index
    %c0_1 = arith.constant 0 : index
    %3 = vector.load %arg8[%c0, %c0_1] : memref<256x32xf32, #tpu.memory_space<vmem>>, vector<256x32xf32>
    %c0_2 = arith.constant 0 : index
    %c0_3 = arith.constant 0 : index
    %c0_4 = arith.constant 0 : index
    %4 = vector.load %arg4[%c0_2, %c0_3, %c0_4] : memref<1x256x64xbf16, #tpu.memory_space<vmem>>, vector<1x256x64xbf16>
    %5 = vector.shape_cast %4 : vector<1x256x64xbf16> to vector<256x64xbf16>
    %c0_5 = arith.constant 0 : index
    %c0_6 = arith.constant 0 : index
    %c0_7 = arith.constant 0 : index
    %6 = vector.load %arg5[%c0_5, %c0_6, %c0_7] : memref<1x64x32xbf16, #tpu.memory_space<vmem>>, vector<1x64x32xbf16>
    %7 = vector.shape_cast %6 : vector<1x64x32xbf16> to vector<64x32xbf16>
    %cst = arith.constant dense<0.000000e+00> : vector<256x32xf32>
    %8 = tpu.matmul %5, %7, %cst {dimension_numbers = #tpu.dot_dimension_numbers<[1], [0], [0], [1], [0, 0, 1, 1], [], []>} : vector<256x64xbf16>, vector<64x32xbf16>, vector<256x32xf32> -> vector<256x32xf32>
    %9 = arith.addf %3, %8 : vector<256x32xf32>
    %c0_8 = arith.constant 0 : index
    %c0_9 = arith.constant 0 : index
    %10 = vector.load %arg8[%c0_8, %c0_9] : memref<256x32xf32, #tpu.memory_space<vmem>>, vector<256x32xf32>
    tpu.vector_store %arg8[%c0_8, %c0_9], %9 {strides = array<i32>} : memref<256x32xf32, #tpu.memory_space<vmem>>, vector<256x32xf32>,
    %c0_i32_10 = arith.constant 0 : i32
    %11 = arith.cmpi eq, %arg3, %c0_i32_10 : i32
    %12 = arith.extui %11 : i1 to i32
    %c0_i32_11 = arith.constant 0 : i32
    %13 = arith.cmpi ne, %12, %c0_i32_11 : i32
    scf.if %13 {
      %c0_12 = arith.constant 0 : index
      %c0_13 = arith.constant 0 : index
      %14 = vector.load %arg8[%c0_12, %c0_13] : memref<256x32xf32, #tpu.memory_space<vmem>>, vector<256x32xf32>
      %c0_14 = arith.constant 0 : index
      %c0_15 = arith.constant 0 : index
      %15 = vector.load %arg6[%c0_14, %c0_15] : memref<1x32xf32, #tpu.memory_space<vmem>>, vector<1x32xf32>
      %16 = vector.broadcast %15 : vector<1x32xf32> to vector<256x32xf32>
      %17 = arith.addf %14, %16 : vector<256x32xf32>
      %18 = arith.truncf %17 : vector<256x32xf32> to vector<256x32xbf16>
      %c0_16 = arith.constant 0 : index
      %c0_17 = arith.constant 0 : index
      %c0_18 = arith.constant 0 : index
      %19 = vector.load %arg7[%c0_16, %c0_17, %c0_18] : memref<1x256x32xbf16, #tpu.memory_space<vmem>>, vector<1x256x32xbf16>
      %20 = vector.shape_cast %19 : vector<1x256x32xbf16> to vector<256x32xbf16>
      %21 = vector.shape_cast %18 : vector<256x32xbf16> to vector<1x256x32xbf16>
      tpu.vector_store %arg7[%c0_16, %c0_17, %c0_18], %21 {strides = array<i32>} : memref<1x256x32xbf16, #tpu.memory_space<vmem>>, vector<1x256x32xbf16>,
    } else {
    }
    return
  }
  func.func @transform_0(%arg0: i32, %arg1: i32, %arg2: i32, %arg3: i32) -> (i32, i32, i32) {
    %c0_i32 = arith.constant 0 : i32
    %c0_i32_0 = arith.constant 0 : i32
    return %c0_i32, %arg1, %arg3 : i32, i32, i32
  }
  func.func @transform_1(%arg0: i32, %arg1: i32, %arg2: i32, %arg3: i32) -> (i32, i32, i32) {
    %c0_i32 = arith.constant 0 : i32
    %c0_i32_0 = arith.constant 0 : i32
    return %c0_i32, %arg3, %arg2 : i32, i32, i32
  }
  func.func @transform_2(%arg0: i32, %arg1: i32, %arg2: i32, %arg3: i32) -> (i32, i32) {
    %c0_i32 = arith.constant 0 : i32
    %c0_i32_0 = arith.constant 0 : i32
    return %c0_i32, %arg2 : i32, i32
  }
  func.func @transform_3(%arg0: i32, %arg1: i32, %arg2: i32, %arg3: i32) -> (i32, i32, i32) {
    %c0_i32 = arith.constant 0 : i32
    return %arg0, %arg1, %arg2 : i32, i32, i32
  }
}

module attributes {stable_mosaic.version = 11 : i64} {
  func.func @_in_single_kernel(%arg0: i32, %arg1: memref<1x256x32xbf16, #tpu.memory_space<vmem>>, %arg2: memref<1x256x32xbf16, #tpu.memory_space<vmem>>) attributes {dimension_semantics = [#tpu.dimension_semantics<parallel>], iteration_bounds = array<i64: 1>, scalar_prefetch = 0 : i64, scratch_operands = 0 : i64, tpu.core_type = #tpu.core_type<tc>, window_params = [{transform_indices = @transform_0, window_bounds = array<i64: 1, 256, 32>}, {transform_indices = @transform_1, window_bounds = array<i64: 1, 256, 32>}]} {
    %c0 = arith.constant 0 : index
    %c0_0 = arith.constant 0 : index
    %c0_1 = arith.constant 0 : index
    %0 = vector.load %arg1[%c0, %c0_0, %c0_1] : memref<1x256x32xbf16, #tpu.memory_space<vmem>>, vector<1x256x32xbf16>
    %1 = vector.shape_cast %0 : vector<1x256x32xbf16> to vector<256x32xbf16>
    %2 = arith.extf %1 : vector<256x32xbf16> to vector<256x32xf32>
    %cst = arith.constant dense<0.000000e+00> : vector<32xf32>
    %3 = vector.multi_reduction <add>, %2, %cst [0] : vector<256x32xf32> to vector<32xf32>
    %4 = vector.shape_cast %3 : vector<32xf32> to vector<1x32xf32>
    %5 = arith.mulf %2, %2 : vector<256x32xf32>
    %cst_2 = arith.constant dense<0.000000e+00> : vector<32xf32>
    %6 = vector.multi_reduction <add>, %5, %cst_2 [0] : vector<256x32xf32> to vector<32xf32>
    %7 = vector.shape_cast %6 : vector<32xf32> to vector<1x32xf32>
    %cst_3 = arith.constant 3.906250e-03 : f32
    %8 = vector.broadcast %cst_3 : f32 to vector<1x32xf32>
    %9 = arith.mulf %4, %8 : vector<1x32xf32>
    %cst_4 = arith.constant 3.906250e-03 : f32
    %10 = vector.broadcast %cst_4 : f32 to vector<1x32xf32>
    %11 = arith.mulf %7, %10 : vector<1x32xf32>
    %12 = arith.mulf %9, %9 : vector<1x32xf32>
    %13 = arith.subf %11, %12 : vector<1x32xf32>
    %14 = vector.broadcast %9 : vector<1x32xf32> to vector<256x32xf32>
    %15 = arith.subf %2, %14 : vector<256x32xf32>
    %cst_5 = arith.constant 9.99999974E-6 : f32
    %16 = vector.broadcast %cst_5 : f32 to vector<1x32xf32>
    %17 = arith.addf %13, %16 : vector<1x32xf32>
    %18 = math.rsqrt %17 : vector<1x32xf32>
    %19 = vector.broadcast %18 : vector<1x32xf32> to vector<256x32xf32>
    %20 = arith.mulf %15, %19 : vector<256x32xf32>
    %cst_6 = arith.constant 0.000000e+00 : f32
    %21 = vector.broadcast %cst_6 : f32 to vector<256x32xf32>
    %22 = arith.maximumf %20, %21 : vector<256x32xf32>
    %23 = arith.truncf %22 : vector<256x32xf32> to vector<256x32xbf16>
    %c0_7 = arith.constant 0 : index
    %c0_8 = arith.constant 0 : index
    %c0_9 = arith.constant 0 : index
    %24 = vector.load %arg2[%c0_7, %c0_8, %c0_9] : memref<1x256x32xbf16, #tpu.memory_space<vmem>>, vector<1x256x32xbf16>
    %25 = vector.shape_cast %24 : vector<1x256x32xbf16> to vector<256x32xbf16>
    %26 = vector.shape_cast %23 : vector<256x32xbf16> to vector<1x256x32xbf16>
    tpu.vector_store %arg2[%c0_7, %c0_8, %c0_9], %26 {strides = array<i32>} : memref<1x256x32xbf16, #tpu.memory_space<vmem>>, vector<1x256x32xbf16>,
    return
  }
  func.func @transform_0(%arg0: i32) -> (i32, i32, i32) {
    %c0_i32 = arith.constant 0 : i32
    %c0_i32_0 = arith.constant 0 : i32
    %c0_i32_1 = arith.constant 0 : i32
    return %arg0, %c0_i32, %c0_i32_0 : i32, i32, i32
  }
  func.func @transform_1(%arg0: i32) -> (i32, i32, i32) {
    %c0_i32 = arith.constant 0 : i32
    %c0_i32_0 = arith.constant 0 : i32
    %c0_i32_1 = arith.constant 0 : i32
    return %arg0, %c0_i32, %c0_i32_0 : i32, i32, i32
  }
}

module attributes {stable_mosaic.version = 11 : i64} {
  func.func @_gemm_kernel(%arg0: i32, %arg1: i32, %arg2: i32, %arg3: i32, %arg4: memref<1x64x288xbf16, #tpu.memory_space<vmem>>, %arg5: memref<1x288x32xbf16, #tpu.memory_space<vmem>>, %arg6: memref<1x32xf32, #tpu.memory_space<vmem>>, %arg7: memref<1x64x32xbf16, #tpu.memory_space<vmem>>, %arg8: memref<64x32xf32, #tpu.memory_space<vmem>>) attributes {dimension_semantics = [#tpu.dimension_semantics<parallel>, #tpu.dimension_semantics<parallel>, #tpu.dimension_semantics<parallel>, #tpu.dimension_semantics<arbitrary>], iteration_bounds = array<i64: 1, 1, 1, 1>, scalar_prefetch = 0 : i64, scratch_operands = 1 : i64, tpu.core_type = #tpu.core_type<tc>, window_params = [{transform_indices = @transform_0, window_bounds = array<i64: 1, 64, 288>}, {transform_indices = @transform_1, window_bounds = array<i64: 1, 288, 32>}, {transform_indices = @transform_2, window_bounds = array<i64: 1, 32>}, {transform_indices = @transform_3, window_bounds = array<i64: 1, 64, 32>}]} {
    %c0_i32 = arith.constant 0 : i32
    %0 = arith.cmpi eq, %arg3, %c0_i32 : i32
    %1 = arith.extui %0 : i1 to i32
    %c0_i32_0 = arith.constant 0 : i32
    %2 = arith.cmpi ne, %1, %c0_i32_0 : i32
    scf.if %2 {
      %cst_12 = arith.constant 0.000000e+00 : f32
      %14 = vector.broadcast %cst_12 : f32 to vector<64x32xf32>
      %c0_13 = arith.constant 0 : index
      %c0_14 = arith.constant 0 : index
      %15 = vector.load %arg8[%c0_13, %c0_14] : memref<64x32xf32, #tpu.memory_space<vmem>>, vector<64x32xf32>
      tpu.vector_store %arg8[%c0_13, %c0_14], %14 {strides = array<i32>} : memref<64x32xf32, #tpu.memory_space<vmem>>, vector<64x32xf32>,
    } else {
    }
    %c0 = arith.constant 0 : index
    %c0_1 = arith.constant 0 : index
    %3 = vector.load %arg8[%c0, %c0_1] : memref<64x32xf32, #tpu.memory_space<vmem>>, vector<64x32xf32>
    %c0_2 = arith.constant 0 : index
    %c0_3 = arith.constant 0 : index
    %c0_4 = arith.constant 0 : index
    %4 = vector.load %arg4[%c0_2, %c0_3, %c0_4] : memref<1x64x288xbf16, #tpu.memory_space<vmem>>, vector<1x64x288xbf16>
    %5 = vector.shape_cast %4 : vector<1x64x288xbf16> to vector<64x288xbf16>
    %c0_5 = arith.constant 0 : index
    %c0_6 = arith.constant 0 : index
    %c0_7 = arith.constant 0 : index
    %6 = vector.load %arg5[%c0_5, %c0_6, %c0_7] : memref<1x288x32xbf16, #tpu.memory_space<vmem>>, vector<1x288x32xbf16>
    %7 = vector.shape_cast %6 : vector<1x288x32xbf16> to vector<288x32xbf16>
    %cst = arith.constant dense<0.000000e+00> : vector<64x32xf32>
    %8 = tpu.matmul %5, %7, %cst {dimension_numbers = #tpu.dot_dimension_numbers<[1], [0], [0], [1], [0, 0, 1, 1], [], []>} : vector<64x288xbf16>, vector<288x32xbf16>, vector<64x32xf32> -> vector<64x32xf32>
    %9 = arith.addf %3, %8 : vector<64x32xf32>
    %c0_8 = arith.constant 0 : index
    %c0_9 = arith.constant 0 : index
    %10 = vector.load %arg8[%c0_8, %c0_9] : memref<64x32xf32, #tpu.memory_space<vmem>>, vector<64x32xf32>
    tpu.vector_store %arg8[%c0_8, %c0_9], %9 {strides = array<i32>} : memref<64x32xf32, #tpu.memory_space<vmem>>, vector<64x32xf32>,
    %c0_i32_10 = arith.constant 0 : i32
    %11 = arith.cmpi eq, %arg3, %c0_i32_10 : i32
    %12 = arith.extui %11 : i1 to i32
    %c0_i32_11 = arith.constant 0 : i32
    %13 = arith.cmpi ne, %12, %c0_i32_11 : i32
    scf.if %13 {
      %c0_12 = arith.constant 0 : index
      %c0_13 = arith.constant 0 : index
      %14 = vector.load %arg8[%c0_12, %c0_13] : memref<64x32xf32, #tpu.memory_space<vmem>>, vector<64x32xf32>
      %c0_14 = arith.constant 0 : index
      %c0_15 = arith.constant 0 : index
      %15 = vector.load %arg6[%c0_14, %c0_15] : memref<1x32xf32, #tpu.memory_space<vmem>>, vector<1x32xf32>
      %16 = vector.broadcast %15 : vector<1x32xf32> to vector<64x32xf32>
      %17 = arith.addf %14, %16 : vector<64x32xf32>
      %18 = arith.truncf %17 : vector<64x32xf32> to vector<64x32xbf16>
      %c0_16 = arith.constant 0 : index
      %c0_17 = arith.constant 0 : index
      %c0_18 = arith.constant 0 : index
      %19 = vector.load %arg7[%c0_16, %c0_17, %c0_18] : memref<1x64x32xbf16, #tpu.memory_space<vmem>>, vector<1x64x32xbf16>
      %20 = vector.shape_cast %19 : vector<1x64x32xbf16> to vector<64x32xbf16>
      %21 = vector.shape_cast %18 : vector<64x32xbf16> to vector<1x64x32xbf16>
      tpu.vector_store %arg7[%c0_16, %c0_17, %c0_18], %21 {strides = array<i32>} : memref<1x64x32xbf16, #tpu.memory_space<vmem>>, vector<1x64x32xbf16>,
    } else {
    }
    return
  }
  func.func @transform_0(%arg0: i32, %arg1: i32, %arg2: i32, %arg3: i32) -> (i32, i32, i32) {
    %c0_i32 = arith.constant 0 : i32
    %c0_i32_0 = arith.constant 0 : i32
    return %c0_i32, %arg1, %arg3 : i32, i32, i32
  }
  func.func @transform_1(%arg0: i32, %arg1: i32, %arg2: i32, %arg3: i32) -> (i32, i32, i32) {
    %c0_i32 = arith.constant 0 : i32
    %c0_i32_0 = arith.constant 0 : i32
    return %c0_i32, %arg3, %arg2 : i32, i32, i32
  }
  func.func @transform_2(%arg0: i32, %arg1: i32, %arg2: i32, %arg3: i32) -> (i32, i32) {
    %c0_i32 = arith.constant 0 : i32
    %c0_i32_0 = arith.constant 0 : i32
    return %c0_i32, %arg2 : i32, i32
  }
  func.func @transform_3(%arg0: i32, %arg1: i32, %arg2: i32, %arg3: i32) -> (i32, i32, i32) {
    %c0_i32 = arith.constant 0 : i32
    return %arg0, %arg1, %arg2 : i32, i32, i32
  }
}

module attributes {stable_mosaic.version = 11 : i64} {
  func.func @_in_single_kernel(%arg0: i32, %arg1: memref<1x64x32xbf16, #tpu.memory_space<vmem>>, %arg2: memref<1x64x32xbf16, #tpu.memory_space<vmem>>) attributes {dimension_semantics = [#tpu.dimension_semantics<parallel>], iteration_bounds = array<i64: 1>, scalar_prefetch = 0 : i64, scratch_operands = 0 : i64, tpu.core_type = #tpu.core_type<tc>, window_params = [{transform_indices = @transform_0, window_bounds = array<i64: 1, 64, 32>}, {transform_indices = @transform_1, window_bounds = array<i64: 1, 64, 32>}]} {
    %c0 = arith.constant 0 : index
    %c0_0 = arith.constant 0 : index
    %c0_1 = arith.constant 0 : index
    %0 = vector.load %arg1[%c0, %c0_0, %c0_1] : memref<1x64x32xbf16, #tpu.memory_space<vmem>>, vector<1x64x32xbf16>
    %1 = vector.shape_cast %0 : vector<1x64x32xbf16> to vector<64x32xbf16>
    %2 = arith.extf %1 : vector<64x32xbf16> to vector<64x32xf32>
    %cst = arith.constant dense<0.000000e+00> : vector<32xf32>
    %3 = vector.multi_reduction <add>, %2, %cst [0] : vector<64x32xf32> to vector<32xf32>
    %4 = vector.shape_cast %3 : vector<32xf32> to vector<1x32xf32>
    %5 = arith.mulf %2, %2 : vector<64x32xf32>
    %cst_2 = arith.constant dense<0.000000e+00> : vector<32xf32>
    %6 = vector.multi_reduction <add>, %5, %cst_2 [0] : vector<64x32xf32> to vector<32xf32>
    %7 = vector.shape_cast %6 : vector<32xf32> to vector<1x32xf32>
    %cst_3 = arith.constant 1.562500e-02 : f32
    %8 = vector.broadcast %cst_3 : f32 to vector<1x32xf32>
    %9 = arith.mulf %4, %8 : vector<1x32xf32>
    %cst_4 = arith.constant 1.562500e-02 : f32
    %10 = vector.broadcast %cst_4 : f32 to vector<1x32xf32>
    %11 = arith.mulf %7, %10 : vector<1x32xf32>
    %12 = arith.mulf %9, %9 : vector<1x32xf32>
    %13 = arith.subf %11, %12 : vector<1x32xf32>
    %14 = vector.broadcast %9 : vector<1x32xf32> to vector<64x32xf32>
    %15 = arith.subf %2, %14 : vector<64x32xf32>
    %cst_5 = arith.constant 9.99999974E-6 : f32
    %16 = vector.broadcast %cst_5 : f32 to vector<1x32xf32>
    %17 = arith.addf %13, %16 : vector<1x32xf32>
    %18 = math.rsqrt %17 : vector<1x32xf32>
    %19 = vector.broadcast %18 : vector<1x32xf32> to vector<64x32xf32>
    %20 = arith.mulf %15, %19 : vector<64x32xf32>
    %cst_6 = arith.constant 0.000000e+00 : f32
    %21 = vector.broadcast %cst_6 : f32 to vector<64x32xf32>
    %22 = arith.maximumf %20, %21 : vector<64x32xf32>
    %23 = arith.truncf %22 : vector<64x32xf32> to vector<64x32xbf16>
    %c0_7 = arith.constant 0 : index
    %c0_8 = arith.constant 0 : index
    %c0_9 = arith.constant 0 : index
    %24 = vector.load %arg2[%c0_7, %c0_8, %c0_9] : memref<1x64x32xbf16, #tpu.memory_space<vmem>>, vector<1x64x32xbf16>
    %25 = vector.shape_cast %24 : vector<1x64x32xbf16> to vector<64x32xbf16>
    %26 = vector.shape_cast %23 : vector<64x32xbf16> to vector<1x64x32xbf16>
    tpu.vector_store %arg2[%c0_7, %c0_8, %c0_9], %26 {strides = array<i32>} : memref<1x64x32xbf16, #tpu.memory_space<vmem>>, vector<1x64x32xbf16>,
    return
  }
  func.func @transform_0(%arg0: i32) -> (i32, i32, i32) {
    %c0_i32 = arith.constant 0 : i32
    %c0_i32_0 = arith.constant 0 : i32
    %c0_i32_1 = arith.constant 0 : i32
    return %arg0, %c0_i32, %c0_i32_0 : i32, i32, i32
  }
  func.func @transform_1(%arg0: i32) -> (i32, i32, i32) {
    %c0_i32 = arith.constant 0 : i32
    %c0_i32_0 = arith.constant 0 : i32
    %c0_i32_1 = arith.constant 0 : i32
    return %arg0, %c0_i32, %c0_i32_0 : i32, i32, i32
  }
}

module attributes {stable_mosaic.version = 11 : i64} {
  func.func @_gemm_kernel(%arg0: i32, %arg1: i32, %arg2: i32, %arg3: i32, %arg4: memref<1x64x64xbf16, #tpu.memory_space<vmem>>, %arg5: memref<1x64x128xbf16, #tpu.memory_space<vmem>>, %arg6: memref<1x128xf32, #tpu.memory_space<vmem>>, %arg7: memref<1x64x128xbf16, #tpu.memory_space<vmem>>, %arg8: memref<64x128xf32, #tpu.memory_space<vmem>>) attributes {dimension_semantics = [#tpu.dimension_semantics<parallel>, #tpu.dimension_semantics<parallel>, #tpu.dimension_semantics<parallel>, #tpu.dimension_semantics<arbitrary>], iteration_bounds = array<i64: 1, 1, 1, 1>, scalar_prefetch = 0 : i64, scratch_operands = 1 : i64, tpu.core_type = #tpu.core_type<tc>, window_params = [{transform_indices = @transform_0, window_bounds = array<i64: 1, 64, 64>}, {transform_indices = @transform_1, window_bounds = array<i64: 1, 64, 128>}, {transform_indices = @transform_2, window_bounds = array<i64: 1, 128>}, {transform_indices = @transform_3, window_bounds = array<i64: 1, 64, 128>}]} {
    %c0_i32 = arith.constant 0 : i32
    %0 = arith.cmpi eq, %arg3, %c0_i32 : i32
    %1 = arith.extui %0 : i1 to i32
    %c0_i32_0 = arith.constant 0 : i32
    %2 = arith.cmpi ne, %1, %c0_i32_0 : i32
    scf.if %2 {
      %cst_12 = arith.constant 0.000000e+00 : f32
      %14 = vector.broadcast %cst_12 : f32 to vector<64x128xf32>
      %c0_13 = arith.constant 0 : index
      %c0_14 = arith.constant 0 : index
      %15 = vector.load %arg8[%c0_13, %c0_14] : memref<64x128xf32, #tpu.memory_space<vmem>>, vector<64x128xf32>
      tpu.vector_store %arg8[%c0_13, %c0_14], %14 {strides = array<i32>} : memref<64x128xf32, #tpu.memory_space<vmem>>, vector<64x128xf32>,
    } else {
    }
    %c0 = arith.constant 0 : index
    %c0_1 = arith.constant 0 : index
    %3 = vector.load %arg8[%c0, %c0_1] : memref<64x128xf32, #tpu.memory_space<vmem>>, vector<64x128xf32>
    %c0_2 = arith.constant 0 : index
    %c0_3 = arith.constant 0 : index
    %c0_4 = arith.constant 0 : index
    %4 = vector.load %arg4[%c0_2, %c0_3, %c0_4] : memref<1x64x64xbf16, #tpu.memory_space<vmem>>, vector<1x64x64xbf16>
    %5 = vector.shape_cast %4 : vector<1x64x64xbf16> to vector<64x64xbf16>
    %c0_5 = arith.constant 0 : index
    %c0_6 = arith.constant 0 : index
    %c0_7 = arith.constant 0 : index
    %6 = vector.load %arg5[%c0_5, %c0_6, %c0_7] : memref<1x64x128xbf16, #tpu.memory_space<vmem>>, vector<1x64x128xbf16>
    %7 = vector.shape_cast %6 : vector<1x64x128xbf16> to vector<64x128xbf16>
    %cst = arith.constant dense<0.000000e+00> : vector<64x128xf32>
    %8 = tpu.matmul %5, %7, %cst {dimension_numbers = #tpu.dot_dimension_numbers<[1], [0], [0], [1], [0, 0, 1, 1], [], []>} : vector<64x64xbf16>, vector<64x128xbf16>, vector<64x128xf32> -> vector<64x128xf32>
    %9 = arith.addf %3, %8 : vector<64x128xf32>
    %c0_8 = arith.constant 0 : index
    %c0_9 = arith.constant 0 : index
    %10 = vector.load %arg8[%c0_8, %c0_9] : memref<64x128xf32, #tpu.memory_space<vmem>>, vector<64x128xf32>
    tpu.vector_store %arg8[%c0_8, %c0_9], %9 {strides = array<i32>} : memref<64x128xf32, #tpu.memory_space<vmem>>, vector<64x128xf32>,
    %c0_i32_10 = arith.constant 0 : i32
    %11 = arith.cmpi eq, %arg3, %c0_i32_10 : i32
    %12 = arith.extui %11 : i1 to i32
    %c0_i32_11 = arith.constant 0 : i32
    %13 = arith.cmpi ne, %12, %c0_i32_11 : i32
    scf.if %13 {
      %c0_12 = arith.constant 0 : index
      %c0_13 = arith.constant 0 : index
      %14 = vector.load %arg8[%c0_12, %c0_13] : memref<64x128xf32, #tpu.memory_space<vmem>>, vector<64x128xf32>
      %c0_14 = arith.constant 0 : index
      %c0_15 = arith.constant 0 : index
      %15 = vector.load %arg6[%c0_14, %c0_15] : memref<1x128xf32, #tpu.memory_space<vmem>>, vector<1x128xf32>
      %16 = vector.broadcast %15 : vector<1x128xf32> to vector<64x128xf32>
      %17 = arith.addf %14, %16 : vector<64x128xf32>
      %18 = arith.truncf %17 : vector<64x128xf32> to vector<64x128xbf16>
      %c0_16 = arith.constant 0 : index
      %c0_17 = arith.constant 0 : index
      %c0_18 = arith.constant 0 : index
      %19 = vector.load %arg7[%c0_16, %c0_17, %c0_18] : memref<1x64x128xbf16, #tpu.memory_space<vmem>>, vector<1x64x128xbf16>
      %20 = vector.shape_cast %19 : vector<1x64x128xbf16> to vector<64x128xbf16>
      %21 = vector.shape_cast %18 : vector<64x128xbf16> to vector<1x64x128xbf16>
      tpu.vector_store %arg7[%c0_16, %c0_17, %c0_18], %21 {strides = array<i32>} : memref<1x64x128xbf16, #tpu.memory_space<vmem>>, vector<1x64x128xbf16>,
    } else {
    }
    return
  }
  func.func @transform_0(%arg0: i32, %arg1: i32, %arg2: i32, %arg3: i32) -> (i32, i32, i32) {
    %c0_i32 = arith.constant 0 : i32
    %c0_i32_0 = arith.constant 0 : i32
    return %c0_i32, %arg1, %arg3 : i32, i32, i32
  }
  func.func @transform_1(%arg0: i32, %arg1: i32, %arg2: i32, %arg3: i32) -> (i32, i32, i32) {
    %c0_i32 = arith.constant 0 : i32
    %c0_i32_0 = arith.constant 0 : i32
    return %c0_i32, %arg3, %arg2 : i32, i32, i32
  }
  func.func @transform_2(%arg0: i32, %arg1: i32, %arg2: i32, %arg3: i32) -> (i32, i32) {
    %c0_i32 = arith.constant 0 : i32
    %c0_i32_0 = arith.constant 0 : i32
    return %c0_i32, %arg2 : i32, i32
  }
  func.func @transform_3(%arg0: i32, %arg1: i32, %arg2: i32, %arg3: i32) -> (i32, i32, i32) {
    %c0_i32 = arith.constant 0 : i32
    return %arg0, %arg1, %arg2 : i32, i32, i32
  }
}

module attributes {stable_mosaic.version = 11 : i64} {
  func.func @_gemm_res_kernel(%arg0: i32, %arg1: i32, %arg2: i32, %arg3: i32, %arg4: memref<1x64x32xbf16, #tpu.memory_space<vmem>>, %arg5: memref<1x32x128xbf16, #tpu.memory_space<vmem>>, %arg6: memref<1x128xf32, #tpu.memory_space<vmem>>, %arg7: memref<1x64x128xbf16, #tpu.memory_space<vmem>>, %arg8: memref<1x64x128xbf16, #tpu.memory_space<vmem>>, %arg9: memref<64x128xf32, #tpu.memory_space<vmem>>) attributes {dimension_semantics = [#tpu.dimension_semantics<parallel>, #tpu.dimension_semantics<parallel>, #tpu.dimension_semantics<parallel>, #tpu.dimension_semantics<arbitrary>], iteration_bounds = array<i64: 1, 1, 1, 1>, scalar_prefetch = 0 : i64, scratch_operands = 1 : i64, tpu.core_type = #tpu.core_type<tc>, window_params = [{transform_indices = @transform_0, window_bounds = array<i64: 1, 64, 32>}, {transform_indices = @transform_1, window_bounds = array<i64: 1, 32, 128>}, {transform_indices = @transform_2, window_bounds = array<i64: 1, 128>}, {transform_indices = @transform_3, window_bounds = array<i64: 1, 64, 128>}, {transform_indices = @transform_4, window_bounds = array<i64: 1, 64, 128>}]} {
    %c0_i32 = arith.constant 0 : i32
    %0 = arith.cmpi eq, %arg3, %c0_i32 : i32
    %1 = arith.extui %0 : i1 to i32
    %c0_i32_0 = arith.constant 0 : i32
    %2 = arith.cmpi ne, %1, %c0_i32_0 : i32
    scf.if %2 {
      %cst_12 = arith.constant 0.000000e+00 : f32
      %14 = vector.broadcast %cst_12 : f32 to vector<64x128xf32>
      %c0_13 = arith.constant 0 : index
      %c0_14 = arith.constant 0 : index
      %15 = vector.load %arg9[%c0_13, %c0_14] : memref<64x128xf32, #tpu.memory_space<vmem>>, vector<64x128xf32>
      tpu.vector_store %arg9[%c0_13, %c0_14], %14 {strides = array<i32>} : memref<64x128xf32, #tpu.memory_space<vmem>>, vector<64x128xf32>,
    } else {
    }
    %c0 = arith.constant 0 : index
    %c0_1 = arith.constant 0 : index
    %3 = vector.load %arg9[%c0, %c0_1] : memref<64x128xf32, #tpu.memory_space<vmem>>, vector<64x128xf32>
    %c0_2 = arith.constant 0 : index
    %c0_3 = arith.constant 0 : index
    %c0_4 = arith.constant 0 : index
    %4 = vector.load %arg4[%c0_2, %c0_3, %c0_4] : memref<1x64x32xbf16, #tpu.memory_space<vmem>>, vector<1x64x32xbf16>
    %5 = vector.shape_cast %4 : vector<1x64x32xbf16> to vector<64x32xbf16>
    %c0_5 = arith.constant 0 : index
    %c0_6 = arith.constant 0 : index
    %c0_7 = arith.constant 0 : index
    %6 = vector.load %arg5[%c0_5, %c0_6, %c0_7] : memref<1x32x128xbf16, #tpu.memory_space<vmem>>, vector<1x32x128xbf16>
    %7 = vector.shape_cast %6 : vector<1x32x128xbf16> to vector<32x128xbf16>
    %cst = arith.constant dense<0.000000e+00> : vector<64x128xf32>
    %8 = tpu.matmul %5, %7, %cst {dimension_numbers = #tpu.dot_dimension_numbers<[1], [0], [0], [1], [0, 0, 1, 1], [], []>} : vector<64x32xbf16>, vector<32x128xbf16>, vector<64x128xf32> -> vector<64x128xf32>
    %9 = arith.addf %3, %8 : vector<64x128xf32>
    %c0_8 = arith.constant 0 : index
    %c0_9 = arith.constant 0 : index
    %10 = vector.load %arg9[%c0_8, %c0_9] : memref<64x128xf32, #tpu.memory_space<vmem>>, vector<64x128xf32>
    tpu.vector_store %arg9[%c0_8, %c0_9], %9 {strides = array<i32>} : memref<64x128xf32, #tpu.memory_space<vmem>>, vector<64x128xf32>,
    %c0_i32_10 = arith.constant 0 : i32
    %11 = arith.cmpi eq, %arg3, %c0_i32_10 : i32
    %12 = arith.extui %11 : i1 to i32
    %c0_i32_11 = arith.constant 0 : i32
    %13 = arith.cmpi ne, %12, %c0_i32_11 : i32
    scf.if %13 {
      %c0_12 = arith.constant 0 : index
      %c0_13 = arith.constant 0 : index
      %14 = vector.load %arg9[%c0_12, %c0_13] : memref<64x128xf32, #tpu.memory_space<vmem>>, vector<64x128xf32>
      %c0_14 = arith.constant 0 : index
      %c0_15 = arith.constant 0 : index
      %15 = vector.load %arg6[%c0_14, %c0_15] : memref<1x128xf32, #tpu.memory_space<vmem>>, vector<1x128xf32>
      %16 = vector.broadcast %15 : vector<1x128xf32> to vector<64x128xf32>
      %17 = arith.addf %14, %16 : vector<64x128xf32>
      %c0_16 = arith.constant 0 : index
      %c0_17 = arith.constant 0 : index
      %c0_18 = arith.constant 0 : index
      %18 = vector.load %arg7[%c0_16, %c0_17, %c0_18] : memref<1x64x128xbf16, #tpu.memory_space<vmem>>, vector<1x64x128xbf16>
      %19 = vector.shape_cast %18 : vector<1x64x128xbf16> to vector<64x128xbf16>
      %20 = arith.extf %19 : vector<64x128xbf16> to vector<64x128xf32>
      %21 = arith.addf %17, %20 : vector<64x128xf32>
      %22 = arith.truncf %21 : vector<64x128xf32> to vector<64x128xbf16>
      %c0_19 = arith.constant 0 : index
      %c0_20 = arith.constant 0 : index
      %c0_21 = arith.constant 0 : index
      %23 = vector.load %arg8[%c0_19, %c0_20, %c0_21] : memref<1x64x128xbf16, #tpu.memory_space<vmem>>, vector<1x64x128xbf16>
      %24 = vector.shape_cast %23 : vector<1x64x128xbf16> to vector<64x128xbf16>
      %25 = vector.shape_cast %22 : vector<64x128xbf16> to vector<1x64x128xbf16>
      tpu.vector_store %arg8[%c0_19, %c0_20, %c0_21], %25 {strides = array<i32>} : memref<1x64x128xbf16, #tpu.memory_space<vmem>>, vector<1x64x128xbf16>,
    } else {
    }
    return
  }
  func.func @transform_0(%arg0: i32, %arg1: i32, %arg2: i32, %arg3: i32) -> (i32, i32, i32) {
    %c0_i32 = arith.constant 0 : i32
    %c0_i32_0 = arith.constant 0 : i32
    return %c0_i32, %arg1, %arg3 : i32, i32, i32
  }
  func.func @transform_1(%arg0: i32, %arg1: i32, %arg2: i32, %arg3: i32) -> (i32, i32, i32) {
    %c0_i32 = arith.constant 0 : i32
    %c0_i32_0 = arith.constant 0 : i32
    return %c0_i32, %arg3, %arg2 : i32, i32, i32
  }
  func.func @transform_2(%arg0: i32, %arg1: i32, %arg2: i32, %arg3: i32) -> (i32, i32) {
    %c0_i32 = arith.constant 0 : i32
    %c0_i32_0 = arith.constant 0 : i32
    return %c0_i32, %arg2 : i32, i32
  }
  func.func @transform_3(%arg0: i32, %arg1: i32, %arg2: i32, %arg3: i32) -> (i32, i32, i32) {
    %c0_i32 = arith.constant 0 : i32
    return %arg0, %arg1, %arg2 : i32, i32, i32
  }
  func.func @transform_4(%arg0: i32, %arg1: i32, %arg2: i32, %arg3: i32) -> (i32, i32, i32) {
    %c0_i32 = arith.constant 0 : i32
    return %arg0, %arg1, %arg2 : i32, i32, i32
  }
}

module attributes {stable_mosaic.version = 11 : i64} {
  func.func @_in_single_kernel(%arg0: i32, %arg1: memref<1x64x128xbf16, #tpu.memory_space<vmem>>, %arg2: memref<1x64x128xbf16, #tpu.memory_space<vmem>>) attributes {dimension_semantics = [#tpu.dimension_semantics<parallel>], iteration_bounds = array<i64: 1>, scalar_prefetch = 0 : i64, scratch_operands = 0 : i64, tpu.core_type = #tpu.core_type<tc>, window_params = [{transform_indices = @transform_0, window_bounds = array<i64: 1, 64, 128>}, {transform_indices = @transform_1, window_bounds = array<i64: 1, 64, 128>}]} {
    %c0 = arith.constant 0 : index
    %c0_0 = arith.constant 0 : index
    %c0_1 = arith.constant 0 : index
    %0 = vector.load %arg1[%c0, %c0_0, %c0_1] : memref<1x64x128xbf16, #tpu.memory_space<vmem>>, vector<1x64x128xbf16>
    %1 = vector.shape_cast %0 : vector<1x64x128xbf16> to vector<64x128xbf16>
    %2 = arith.extf %1 : vector<64x128xbf16> to vector<64x128xf32>
    %cst = arith.constant dense<0.000000e+00> : vector<128xf32>
    %3 = vector.multi_reduction <add>, %2, %cst [0] : vector<64x128xf32> to vector<128xf32>
    %4 = vector.shape_cast %3 : vector<128xf32> to vector<1x128xf32>
    %5 = arith.mulf %2, %2 : vector<64x128xf32>
    %cst_2 = arith.constant dense<0.000000e+00> : vector<128xf32>
    %6 = vector.multi_reduction <add>, %5, %cst_2 [0] : vector<64x128xf32> to vector<128xf32>
    %7 = vector.shape_cast %6 : vector<128xf32> to vector<1x128xf32>
    %cst_3 = arith.constant 1.562500e-02 : f32
    %8 = vector.broadcast %cst_3 : f32 to vector<1x128xf32>
    %9 = arith.mulf %4, %8 : vector<1x128xf32>
    %cst_4 = arith.constant 1.562500e-02 : f32
    %10 = vector.broadcast %cst_4 : f32 to vector<1x128xf32>
    %11 = arith.mulf %7, %10 : vector<1x128xf32>
    %12 = arith.mulf %9, %9 : vector<1x128xf32>
    %13 = arith.subf %11, %12 : vector<1x128xf32>
    %14 = vector.broadcast %9 : vector<1x128xf32> to vector<64x128xf32>
    %15 = arith.subf %2, %14 : vector<64x128xf32>
    %cst_5 = arith.constant 9.99999974E-6 : f32
    %16 = vector.broadcast %cst_5 : f32 to vector<1x128xf32>
    %17 = arith.addf %13, %16 : vector<1x128xf32>
    %18 = math.rsqrt %17 : vector<1x128xf32>
    %19 = vector.broadcast %18 : vector<1x128xf32> to vector<64x128xf32>
    %20 = arith.mulf %15, %19 : vector<64x128xf32>
    %cst_6 = arith.constant 0.000000e+00 : f32
    %21 = vector.broadcast %cst_6 : f32 to vector<64x128xf32>
    %22 = arith.maximumf %20, %21 : vector<64x128xf32>
    %23 = arith.truncf %22 : vector<64x128xf32> to vector<64x128xbf16>
    %c0_7 = arith.constant 0 : index
    %c0_8 = arith.constant 0 : index
    %c0_9 = arith.constant 0 : index
    %24 = vector.load %arg2[%c0_7, %c0_8, %c0_9] : memref<1x64x128xbf16, #tpu.memory_space<vmem>>, vector<1x64x128xbf16>
    %25 = vector.shape_cast %24 : vector<1x64x128xbf16> to vector<64x128xbf16>
    %26 = vector.shape_cast %23 : vector<64x128xbf16> to vector<1x64x128xbf16>
    tpu.vector_store %arg2[%c0_7, %c0_8, %c0_9], %26 {strides = array<i32>} : memref<1x64x128xbf16, #tpu.memory_space<vmem>>, vector<1x64x128xbf16>,
    return
  }
  func.func @transform_0(%arg0: i32) -> (i32, i32, i32) {
    %c0_i32 = arith.constant 0 : i32
    %c0_i32_0 = arith.constant 0 : i32
    %c0_i32_1 = arith.constant 0 : i32
    return %arg0, %c0_i32, %c0_i32_0 : i32, i32, i32
  }
  func.func @transform_1(%arg0: i32) -> (i32, i32, i32) {
    %c0_i32 = arith.constant 0 : i32
    %c0_i32_0 = arith.constant 0 : i32
    %c0_i32_1 = arith.constant 0 : i32
    return %arg0, %c0_i32, %c0_i32_0 : i32, i32, i32
  }
}

module attributes {stable_mosaic.version = 11 : i64} {
  func.func @_gemm_kernel(%arg0: i32, %arg1: i32, %arg2: i32, %arg3: i32, %arg4: memref<1x64x128xbf16, #tpu.memory_space<vmem>>, %arg5: memref<1x128x16xbf16, #tpu.memory_space<vmem>>, %arg6: memref<1x16xf32, #tpu.memory_space<vmem>>, %arg7: memref<1x64x16xbf16, #tpu.memory_space<vmem>>, %arg8: memref<64x16xf32, #tpu.memory_space<vmem>>) attributes {dimension_semantics = [#tpu.dimension_semantics<parallel>, #tpu.dimension_semantics<parallel>, #tpu.dimension_semantics<parallel>, #tpu.dimension_semantics<arbitrary>], iteration_bounds = array<i64: 1, 1, 1, 1>, scalar_prefetch = 0 : i64, scratch_operands = 1 : i64, tpu.core_type = #tpu.core_type<tc>, window_params = [{transform_indices = @transform_0, window_bounds = array<i64: 1, 64, 128>}, {transform_indices = @transform_1, window_bounds = array<i64: 1, 128, 16>}, {transform_indices = @transform_2, window_bounds = array<i64: 1, 16>}, {transform_indices = @transform_3, window_bounds = array<i64: 1, 64, 16>}]} {
    %c0_i32 = arith.constant 0 : i32
    %0 = arith.cmpi eq, %arg3, %c0_i32 : i32
    %1 = arith.extui %0 : i1 to i32
    %c0_i32_0 = arith.constant 0 : i32
    %2 = arith.cmpi ne, %1, %c0_i32_0 : i32
    scf.if %2 {
      %cst_12 = arith.constant 0.000000e+00 : f32
      %14 = vector.broadcast %cst_12 : f32 to vector<64x16xf32>
      %c0_13 = arith.constant 0 : index
      %c0_14 = arith.constant 0 : index
      %15 = vector.load %arg8[%c0_13, %c0_14] : memref<64x16xf32, #tpu.memory_space<vmem>>, vector<64x16xf32>
      tpu.vector_store %arg8[%c0_13, %c0_14], %14 {strides = array<i32>} : memref<64x16xf32, #tpu.memory_space<vmem>>, vector<64x16xf32>,
    } else {
    }
    %c0 = arith.constant 0 : index
    %c0_1 = arith.constant 0 : index
    %3 = vector.load %arg8[%c0, %c0_1] : memref<64x16xf32, #tpu.memory_space<vmem>>, vector<64x16xf32>
    %c0_2 = arith.constant 0 : index
    %c0_3 = arith.constant 0 : index
    %c0_4 = arith.constant 0 : index
    %4 = vector.load %arg4[%c0_2, %c0_3, %c0_4] : memref<1x64x128xbf16, #tpu.memory_space<vmem>>, vector<1x64x128xbf16>
    %5 = vector.shape_cast %4 : vector<1x64x128xbf16> to vector<64x128xbf16>
    %c0_5 = arith.constant 0 : index
    %c0_6 = arith.constant 0 : index
    %c0_7 = arith.constant 0 : index
    %6 = vector.load %arg5[%c0_5, %c0_6, %c0_7] : memref<1x128x16xbf16, #tpu.memory_space<vmem>>, vector<1x128x16xbf16>
    %7 = vector.shape_cast %6 : vector<1x128x16xbf16> to vector<128x16xbf16>
    %cst = arith.constant dense<0.000000e+00> : vector<64x16xf32>
    %8 = tpu.matmul %5, %7, %cst {dimension_numbers = #tpu.dot_dimension_numbers<[1], [0], [0], [1], [0, 0, 1, 1], [], []>} : vector<64x128xbf16>, vector<128x16xbf16>, vector<64x16xf32> -> vector<64x16xf32>
    %9 = arith.addf %3, %8 : vector<64x16xf32>
    %c0_8 = arith.constant 0 : index
    %c0_9 = arith.constant 0 : index
    %10 = vector.load %arg8[%c0_8, %c0_9] : memref<64x16xf32, #tpu.memory_space<vmem>>, vector<64x16xf32>
    tpu.vector_store %arg8[%c0_8, %c0_9], %9 {strides = array<i32>} : memref<64x16xf32, #tpu.memory_space<vmem>>, vector<64x16xf32>,
    %c0_i32_10 = arith.constant 0 : i32
    %11 = arith.cmpi eq, %arg3, %c0_i32_10 : i32
    %12 = arith.extui %11 : i1 to i32
    %c0_i32_11 = arith.constant 0 : i32
    %13 = arith.cmpi ne, %12, %c0_i32_11 : i32
    scf.if %13 {
      %c0_12 = arith.constant 0 : index
      %c0_13 = arith.constant 0 : index
      %14 = vector.load %arg8[%c0_12, %c0_13] : memref<64x16xf32, #tpu.memory_space<vmem>>, vector<64x16xf32>
      %c0_14 = arith.constant 0 : index
      %c0_15 = arith.constant 0 : index
      %15 = vector.load %arg6[%c0_14, %c0_15] : memref<1x16xf32, #tpu.memory_space<vmem>>, vector<1x16xf32>
      %16 = vector.broadcast %15 : vector<1x16xf32> to vector<64x16xf32>
      %17 = arith.addf %14, %16 : vector<64x16xf32>
      %18 = arith.truncf %17 : vector<64x16xf32> to vector<64x16xbf16>
      %c0_16 = arith.constant 0 : index
      %c0_17 = arith.constant 0 : index
      %c0_18 = arith.constant 0 : index
      %19 = vector.load %arg7[%c0_16, %c0_17, %c0_18] : memref<1x64x16xbf16, #tpu.memory_space<vmem>>, vector<1x64x16xbf16>
      %20 = vector.shape_cast %19 : vector<1x64x16xbf16> to vector<64x16xbf16>
      %21 = vector.shape_cast %18 : vector<64x16xbf16> to vector<1x64x16xbf16>
      tpu.vector_store %arg7[%c0_16, %c0_17, %c0_18], %21 {strides = array<i32>} : memref<1x64x16xbf16, #tpu.memory_space<vmem>>, vector<1x64x16xbf16>,
    } else {
    }
    return
  }
  func.func @transform_0(%arg0: i32, %arg1: i32, %arg2: i32, %arg3: i32) -> (i32, i32, i32) {
    %c0_i32 = arith.constant 0 : i32
    %c0_i32_0 = arith.constant 0 : i32
    return %c0_i32, %arg1, %arg3 : i32, i32, i32
  }
  func.func @transform_1(%arg0: i32, %arg1: i32, %arg2: i32, %arg3: i32) -> (i32, i32, i32) {
    %c0_i32 = arith.constant 0 : i32
    %c0_i32_0 = arith.constant 0 : i32
    return %c0_i32, %arg3, %arg2 : i32, i32, i32
  }
  func.func @transform_2(%arg0: i32, %arg1: i32, %arg2: i32, %arg3: i32) -> (i32, i32) {
    %c0_i32 = arith.constant 0 : i32
    %c0_i32_0 = arith.constant 0 : i32
    return %c0_i32, %arg2 : i32, i32
  }
  func.func @transform_3(%arg0: i32, %arg1: i32, %arg2: i32, %arg3: i32) -> (i32, i32, i32) {
    %c0_i32 = arith.constant 0 : i32
    return %arg0, %arg1, %arg2 : i32, i32, i32
  }
}

module attributes {stable_mosaic.version = 11 : i64} {
  func.func @_in_single_kernel(%arg0: i32, %arg1: memref<1x64x16xbf16, #tpu.memory_space<vmem>>, %arg2: memref<1x64x16xbf16, #tpu.memory_space<vmem>>) attributes {dimension_semantics = [#tpu.dimension_semantics<parallel>], iteration_bounds = array<i64: 1>, scalar_prefetch = 0 : i64, scratch_operands = 0 : i64, tpu.core_type = #tpu.core_type<tc>, window_params = [{transform_indices = @transform_0, window_bounds = array<i64: 1, 64, 16>}, {transform_indices = @transform_1, window_bounds = array<i64: 1, 64, 16>}]} {
    %c0 = arith.constant 0 : index
    %c0_0 = arith.constant 0 : index
    %c0_1 = arith.constant 0 : index
    %0 = vector.load %arg1[%c0, %c0_0, %c0_1] : memref<1x64x16xbf16, #tpu.memory_space<vmem>>, vector<1x64x16xbf16>
    %1 = vector.shape_cast %0 : vector<1x64x16xbf16> to vector<64x16xbf16>
    %2 = arith.extf %1 : vector<64x16xbf16> to vector<64x16xf32>
    %cst = arith.constant dense<0.000000e+00> : vector<16xf32>
    %3 = vector.multi_reduction <add>, %2, %cst [0] : vector<64x16xf32> to vector<16xf32>
    %4 = vector.shape_cast %3 : vector<16xf32> to vector<1x16xf32>
    %5 = arith.mulf %2, %2 : vector<64x16xf32>
    %cst_2 = arith.constant dense<0.000000e+00> : vector<16xf32>
    %6 = vector.multi_reduction <add>, %5, %cst_2 [0] : vector<64x16xf32> to vector<16xf32>
    %7 = vector.shape_cast %6 : vector<16xf32> to vector<1x16xf32>
    %cst_3 = arith.constant 1.562500e-02 : f32
    %8 = vector.broadcast %cst_3 : f32 to vector<1x16xf32>
    %9 = arith.mulf %4, %8 : vector<1x16xf32>
    %cst_4 = arith.constant 1.562500e-02 : f32
    %10 = vector.broadcast %cst_4 : f32 to vector<1x16xf32>
    %11 = arith.mulf %7, %10 : vector<1x16xf32>
    %12 = arith.mulf %9, %9 : vector<1x16xf32>
    %13 = arith.subf %11, %12 : vector<1x16xf32>
    %14 = vector.broadcast %9 : vector<1x16xf32> to vector<64x16xf32>
    %15 = arith.subf %2, %14 : vector<64x16xf32>
    %cst_5 = arith.constant 9.99999974E-6 : f32
    %16 = vector.broadcast %cst_5 : f32 to vector<1x16xf32>
    %17 = arith.addf %13, %16 : vector<1x16xf32>
    %18 = math.rsqrt %17 : vector<1x16xf32>
    %19 = vector.broadcast %18 : vector<1x16xf32> to vector<64x16xf32>
    %20 = arith.mulf %15, %19 : vector<64x16xf32>
    %cst_6 = arith.constant 0.000000e+00 : f32
    %21 = vector.broadcast %cst_6 : f32 to vector<64x16xf32>
    %22 = arith.maximumf %20, %21 : vector<64x16xf32>
    %23 = arith.truncf %22 : vector<64x16xf32> to vector<64x16xbf16>
    %c0_7 = arith.constant 0 : index
    %c0_8 = arith.constant 0 : index
    %c0_9 = arith.constant 0 : index
    %24 = vector.load %arg2[%c0_7, %c0_8, %c0_9] : memref<1x64x16xbf16, #tpu.memory_space<vmem>>, vector<1x64x16xbf16>
    %25 = vector.shape_cast %24 : vector<1x64x16xbf16> to vector<64x16xbf16>
    %26 = vector.shape_cast %23 : vector<64x16xbf16> to vector<1x64x16xbf16>
    tpu.vector_store %arg2[%c0_7, %c0_8, %c0_9], %26 {strides = array<i32>} : memref<1x64x16xbf16, #tpu.memory_space<vmem>>, vector<1x64x16xbf16>,
    return
  }
  func.func @transform_0(%arg0: i32) -> (i32, i32, i32) {
    %c0_i32 = arith.constant 0 : i32
    %c0_i32_0 = arith.constant 0 : i32
    %c0_i32_1 = arith.constant 0 : i32
    return %arg0, %c0_i32, %c0_i32_0 : i32, i32, i32
  }
  func.func @transform_1(%arg0: i32) -> (i32, i32, i32) {
    %c0_i32 = arith.constant 0 : i32
    %c0_i32_0 = arith.constant 0 : i32
    %c0_i32_1 = arith.constant 0 : i32
    return %arg0, %c0_i32, %c0_i32_0 : i32, i32, i32
  }
}

module attributes {stable_mosaic.version = 11 : i64} {
  func.func @_in_single_kernel(%arg0: i32, %arg1: memref<1x16x16xbf16, #tpu.memory_space<vmem>>, %arg2: memref<1x16x16xbf16, #tpu.memory_space<vmem>>) attributes {dimension_semantics = [#tpu.dimension_semantics<parallel>], iteration_bounds = array<i64: 1>, scalar_prefetch = 0 : i64, scratch_operands = 0 : i64, tpu.core_type = #tpu.core_type<tc>, window_params = [{transform_indices = @transform_0, window_bounds = array<i64: 1, 16, 16>}, {transform_indices = @transform_1, window_bounds = array<i64: 1, 16, 16>}]} {
    %c0 = arith.constant 0 : index
    %c0_0 = arith.constant 0 : index
    %c0_1 = arith.constant 0 : index
    %0 = vector.load %arg1[%c0, %c0_0, %c0_1] : memref<1x16x16xbf16, #tpu.memory_space<vmem>>, vector<1x16x16xbf16>
    %1 = vector.shape_cast %0 : vector<1x16x16xbf16> to vector<16x16xbf16>
    %2 = arith.extf %1 : vector<16x16xbf16> to vector<16x16xf32>
    %cst = arith.constant dense<0.000000e+00> : vector<16xf32>
    %3 = vector.multi_reduction <add>, %2, %cst [0] : vector<16x16xf32> to vector<16xf32>
    %4 = vector.shape_cast %3 : vector<16xf32> to vector<1x16xf32>
    %5 = arith.mulf %2, %2 : vector<16x16xf32>
    %cst_2 = arith.constant dense<0.000000e+00> : vector<16xf32>
    %6 = vector.multi_reduction <add>, %5, %cst_2 [0] : vector<16x16xf32> to vector<16xf32>
    %7 = vector.shape_cast %6 : vector<16xf32> to vector<1x16xf32>
    %cst_3 = arith.constant 6.250000e-02 : f32
    %8 = vector.broadcast %cst_3 : f32 to vector<1x16xf32>
    %9 = arith.mulf %4, %8 : vector<1x16xf32>
    %cst_4 = arith.constant 6.250000e-02 : f32
    %10 = vector.broadcast %cst_4 : f32 to vector<1x16xf32>
    %11 = arith.mulf %7, %10 : vector<1x16xf32>
    %12 = arith.mulf %9, %9 : vector<1x16xf32>
    %13 = arith.subf %11, %12 : vector<1x16xf32>
    %14 = vector.broadcast %9 : vector<1x16xf32> to vector<16x16xf32>
    %15 = arith.subf %2, %14 : vector<16x16xf32>
    %cst_5 = arith.constant 9.99999974E-6 : f32
    %16 = vector.broadcast %cst_5 : f32 to vector<1x16xf32>
    %17 = arith.addf %13, %16 : vector<1x16xf32>
    %18 = math.rsqrt %17 : vector<1x16xf32>
    %19 = vector.broadcast %18 : vector<1x16xf32> to vector<16x16xf32>
    %20 = arith.mulf %15, %19 : vector<16x16xf32>
    %cst_6 = arith.constant 0.000000e+00 : f32
    %21 = vector.broadcast %cst_6 : f32 to vector<16x16xf32>
    %22 = arith.maximumf %20, %21 : vector<16x16xf32>
    %23 = arith.truncf %22 : vector<16x16xf32> to vector<16x16xbf16>
    %c0_7 = arith.constant 0 : index
    %c0_8 = arith.constant 0 : index
    %c0_9 = arith.constant 0 : index
    %24 = vector.load %arg2[%c0_7, %c0_8, %c0_9] : memref<1x16x16xbf16, #tpu.memory_space<vmem>>, vector<1x16x16xbf16>
    %25 = vector.shape_cast %24 : vector<1x16x16xbf16> to vector<16x16xbf16>
    %26 = vector.shape_cast %23 : vector<16x16xbf16> to vector<1x16x16xbf16>
    tpu.vector_store %arg2[%c0_7, %c0_8, %c0_9], %26 {strides = array<i32>} : memref<1x16x16xbf16, #tpu.memory_space<vmem>>, vector<1x16x16xbf16>,
    return
  }
  func.func @transform_0(%arg0: i32) -> (i32, i32, i32) {
    %c0_i32 = arith.constant 0 : i32
    %c0_i32_0 = arith.constant 0 : i32
    %c0_i32_1 = arith.constant 0 : i32
    return %arg0, %c0_i32, %c0_i32_0 : i32, i32, i32
  }
  func.func @transform_1(%arg0: i32) -> (i32, i32, i32) {
    %c0_i32 = arith.constant 0 : i32
    %c0_i32_0 = arith.constant 0 : i32
    %c0_i32_1 = arith.constant 0 : i32
    return %arg0, %c0_i32, %c0_i32_0 : i32, i32, i32
  }
}

module attributes {stable_mosaic.version = 11 : i64} {
  func.func @_gemm_kernel(%arg0: i32, %arg1: i32, %arg2: i32, %arg3: i32, %arg4: memref<1x16x144xbf16, #tpu.memory_space<vmem>>, %arg5: memref<1x144x16xbf16, #tpu.memory_space<vmem>>, %arg6: memref<1x16xf32, #tpu.memory_space<vmem>>, %arg7: memref<1x16x16xbf16, #tpu.memory_space<vmem>>, %arg8: memref<16x16xf32, #tpu.memory_space<vmem>>) attributes {dimension_semantics = [#tpu.dimension_semantics<parallel>, #tpu.dimension_semantics<parallel>, #tpu.dimension_semantics<parallel>, #tpu.dimension_semantics<arbitrary>], iteration_bounds = array<i64: 1, 1, 1, 1>, scalar_prefetch = 0 : i64, scratch_operands = 1 : i64, tpu.core_type = #tpu.core_type<tc>, window_params = [{transform_indices = @transform_0, window_bounds = array<i64: 1, 16, 144>}, {transform_indices = @transform_1, window_bounds = array<i64: 1, 144, 16>}, {transform_indices = @transform_2, window_bounds = array<i64: 1, 16>}, {transform_indices = @transform_3, window_bounds = array<i64: 1, 16, 16>}]} {
    %c0_i32 = arith.constant 0 : i32
    %0 = arith.cmpi eq, %arg3, %c0_i32 : i32
    %1 = arith.extui %0 : i1 to i32
    %c0_i32_0 = arith.constant 0 : i32
    %2 = arith.cmpi ne, %1, %c0_i32_0 : i32
    scf.if %2 {
      %cst_12 = arith.constant 0.000000e+00 : f32
      %14 = vector.broadcast %cst_12 : f32 to vector<16x16xf32>
      %c0_13 = arith.constant 0 : index
      %c0_14 = arith.constant 0 : index
      %15 = vector.load %arg8[%c0_13, %c0_14] : memref<16x16xf32, #tpu.memory_space<vmem>>, vector<16x16xf32>
      tpu.vector_store %arg8[%c0_13, %c0_14], %14 {strides = array<i32>} : memref<16x16xf32, #tpu.memory_space<vmem>>, vector<16x16xf32>,
    } else {
    }
    %c0 = arith.constant 0 : index
    %c0_1 = arith.constant 0 : index
    %3 = vector.load %arg8[%c0, %c0_1] : memref<16x16xf32, #tpu.memory_space<vmem>>, vector<16x16xf32>
    %c0_2 = arith.constant 0 : index
    %c0_3 = arith.constant 0 : index
    %c0_4 = arith.constant 0 : index
    %4 = vector.load %arg4[%c0_2, %c0_3, %c0_4] : memref<1x16x144xbf16, #tpu.memory_space<vmem>>, vector<1x16x144xbf16>
    %5 = vector.shape_cast %4 : vector<1x16x144xbf16> to vector<16x144xbf16>
    %c0_5 = arith.constant 0 : index
    %c0_6 = arith.constant 0 : index
    %c0_7 = arith.constant 0 : index
    %6 = vector.load %arg5[%c0_5, %c0_6, %c0_7] : memref<1x144x16xbf16, #tpu.memory_space<vmem>>, vector<1x144x16xbf16>
    %7 = vector.shape_cast %6 : vector<1x144x16xbf16> to vector<144x16xbf16>
    %cst = arith.constant dense<0.000000e+00> : vector<16x16xf32>
    %8 = tpu.matmul %5, %7, %cst {dimension_numbers = #tpu.dot_dimension_numbers<[1], [0], [0], [1], [0, 0, 1, 1], [], []>} : vector<16x144xbf16>, vector<144x16xbf16>, vector<16x16xf32> -> vector<16x16xf32>
    %9 = arith.addf %3, %8 : vector<16x16xf32>
    %c0_8 = arith.constant 0 : index
    %c0_9 = arith.constant 0 : index
    %10 = vector.load %arg8[%c0_8, %c0_9] : memref<16x16xf32, #tpu.memory_space<vmem>>, vector<16x16xf32>
    tpu.vector_store %arg8[%c0_8, %c0_9], %9 {strides = array<i32>} : memref<16x16xf32, #tpu.memory_space<vmem>>, vector<16x16xf32>,
    %c0_i32_10 = arith.constant 0 : i32
    %11 = arith.cmpi eq, %arg3, %c0_i32_10 : i32
    %12 = arith.extui %11 : i1 to i32
    %c0_i32_11 = arith.constant 0 : i32
    %13 = arith.cmpi ne, %12, %c0_i32_11 : i32
    scf.if %13 {
      %c0_12 = arith.constant 0 : index
      %c0_13 = arith.constant 0 : index
      %14 = vector.load %arg8[%c0_12, %c0_13] : memref<16x16xf32, #tpu.memory_space<vmem>>, vector<16x16xf32>
      %c0_14 = arith.constant 0 : index
      %c0_15 = arith.constant 0 : index
      %15 = vector.load %arg6[%c0_14, %c0_15] : memref<1x16xf32, #tpu.memory_space<vmem>>, vector<1x16xf32>
      %16 = vector.broadcast %15 : vector<1x16xf32> to vector<16x16xf32>
      %17 = arith.addf %14, %16 : vector<16x16xf32>
      %18 = arith.truncf %17 : vector<16x16xf32> to vector<16x16xbf16>
      %c0_16 = arith.constant 0 : index
      %c0_17 = arith.constant 0 : index
      %c0_18 = arith.constant 0 : index
      %19 = vector.load %arg7[%c0_16, %c0_17, %c0_18] : memref<1x16x16xbf16, #tpu.memory_space<vmem>>, vector<1x16x16xbf16>
      %20 = vector.shape_cast %19 : vector<1x16x16xbf16> to vector<16x16xbf16>
      %21 = vector.shape_cast %18 : vector<16x16xbf16> to vector<1x16x16xbf16>
      tpu.vector_store %arg7[%c0_16, %c0_17, %c0_18], %21 {strides = array<i32>} : memref<1x16x16xbf16, #tpu.memory_space<vmem>>, vector<1x16x16xbf16>,
    } else {
    }
    return
  }
  func.func @transform_0(%arg0: i32, %arg1: i32, %arg2: i32, %arg3: i32) -> (i32, i32, i32) {
    %c0_i32 = arith.constant 0 : i32
    %c0_i32_0 = arith.constant 0 : i32
    return %c0_i32, %arg1, %arg3 : i32, i32, i32
  }
  func.func @transform_1(%arg0: i32, %arg1: i32, %arg2: i32, %arg3: i32) -> (i32, i32, i32) {
    %c0_i32 = arith.constant 0 : i32
    %c0_i32_0 = arith.constant 0 : i32
    return %c0_i32, %arg3, %arg2 : i32, i32, i32
  }
  func.func @transform_2(%arg0: i32, %arg1: i32, %arg2: i32, %arg3: i32) -> (i32, i32) {
    %c0_i32 = arith.constant 0 : i32
    %c0_i32_0 = arith.constant 0 : i32
    return %c0_i32, %arg2 : i32, i32
  }
  func.func @transform_3(%arg0: i32, %arg1: i32, %arg2: i32, %arg3: i32) -> (i32, i32, i32) {
    %c0_i32 = arith.constant 0 : i32
    return %arg0, %arg1, %arg2 : i32, i32, i32
  }
}

module attributes {stable_mosaic.version = 11 : i64} {
  func.func @_gemm_kernel(%arg0: i32, %arg1: i32, %arg2: i32, %arg3: i32, %arg4: memref<1x16x128xbf16, #tpu.memory_space<vmem>>, %arg5: memref<1x128x64xbf16, #tpu.memory_space<vmem>>, %arg6: memref<1x64xf32, #tpu.memory_space<vmem>>, %arg7: memref<1x16x64xbf16, #tpu.memory_space<vmem>>, %arg8: memref<16x64xf32, #tpu.memory_space<vmem>>) attributes {dimension_semantics = [#tpu.dimension_semantics<parallel>, #tpu.dimension_semantics<parallel>, #tpu.dimension_semantics<parallel>, #tpu.dimension_semantics<arbitrary>], iteration_bounds = array<i64: 1, 1, 1, 1>, scalar_prefetch = 0 : i64, scratch_operands = 1 : i64, tpu.core_type = #tpu.core_type<tc>, window_params = [{transform_indices = @transform_0, window_bounds = array<i64: 1, 16, 128>}, {transform_indices = @transform_1, window_bounds = array<i64: 1, 128, 64>}, {transform_indices = @transform_2, window_bounds = array<i64: 1, 64>}, {transform_indices = @transform_3, window_bounds = array<i64: 1, 16, 64>}]} {
    %c0_i32 = arith.constant 0 : i32
    %0 = arith.cmpi eq, %arg3, %c0_i32 : i32
    %1 = arith.extui %0 : i1 to i32
    %c0_i32_0 = arith.constant 0 : i32
    %2 = arith.cmpi ne, %1, %c0_i32_0 : i32
    scf.if %2 {
      %cst_12 = arith.constant 0.000000e+00 : f32
      %14 = vector.broadcast %cst_12 : f32 to vector<16x64xf32>
      %c0_13 = arith.constant 0 : index
      %c0_14 = arith.constant 0 : index
      %15 = vector.load %arg8[%c0_13, %c0_14] : memref<16x64xf32, #tpu.memory_space<vmem>>, vector<16x64xf32>
      tpu.vector_store %arg8[%c0_13, %c0_14], %14 {strides = array<i32>} : memref<16x64xf32, #tpu.memory_space<vmem>>, vector<16x64xf32>,
    } else {
    }
    %c0 = arith.constant 0 : index
    %c0_1 = arith.constant 0 : index
    %3 = vector.load %arg8[%c0, %c0_1] : memref<16x64xf32, #tpu.memory_space<vmem>>, vector<16x64xf32>
    %c0_2 = arith.constant 0 : index
    %c0_3 = arith.constant 0 : index
    %c0_4 = arith.constant 0 : index
    %4 = vector.load %arg4[%c0_2, %c0_3, %c0_4] : memref<1x16x128xbf16, #tpu.memory_space<vmem>>, vector<1x16x128xbf16>
    %5 = vector.shape_cast %4 : vector<1x16x128xbf16> to vector<16x128xbf16>
    %c0_5 = arith.constant 0 : index
    %c0_6 = arith.constant 0 : index
    %c0_7 = arith.constant 0 : index
    %6 = vector.load %arg5[%c0_5, %c0_6, %c0_7] : memref<1x128x64xbf16, #tpu.memory_space<vmem>>, vector<1x128x64xbf16>
    %7 = vector.shape_cast %6 : vector<1x128x64xbf16> to vector<128x64xbf16>
    %cst = arith.constant dense<0.000000e+00> : vector<16x64xf32>
    %8 = tpu.matmul %5, %7, %cst {dimension_numbers = #tpu.dot_dimension_numbers<[1], [0], [0], [1], [0, 0, 1, 1], [], []>} : vector<16x128xbf16>, vector<128x64xbf16>, vector<16x64xf32> -> vector<16x64xf32>
    %9 = arith.addf %3, %8 : vector<16x64xf32>
    %c0_8 = arith.constant 0 : index
    %c0_9 = arith.constant 0 : index
    %10 = vector.load %arg8[%c0_8, %c0_9] : memref<16x64xf32, #tpu.memory_space<vmem>>, vector<16x64xf32>
    tpu.vector_store %arg8[%c0_8, %c0_9], %9 {strides = array<i32>} : memref<16x64xf32, #tpu.memory_space<vmem>>, vector<16x64xf32>,
    %c0_i32_10 = arith.constant 0 : i32
    %11 = arith.cmpi eq, %arg3, %c0_i32_10 : i32
    %12 = arith.extui %11 : i1 to i32
    %c0_i32_11 = arith.constant 0 : i32
    %13 = arith.cmpi ne, %12, %c0_i32_11 : i32
    scf.if %13 {
      %c0_12 = arith.constant 0 : index
      %c0_13 = arith.constant 0 : index
      %14 = vector.load %arg8[%c0_12, %c0_13] : memref<16x64xf32, #tpu.memory_space<vmem>>, vector<16x64xf32>
      %c0_14 = arith.constant 0 : index
      %c0_15 = arith.constant 0 : index
      %15 = vector.load %arg6[%c0_14, %c0_15] : memref<1x64xf32, #tpu.memory_space<vmem>>, vector<1x64xf32>
      %16 = vector.broadcast %15 : vector<1x64xf32> to vector<16x64xf32>
      %17 = arith.addf %14, %16 : vector<16x64xf32>
      %18 = arith.truncf %17 : vector<16x64xf32> to vector<16x64xbf16>
      %c0_16 = arith.constant 0 : index
      %c0_17 = arith.constant 0 : index
      %c0_18 = arith.constant 0 : index
      %19 = vector.load %arg7[%c0_16, %c0_17, %c0_18] : memref<1x16x64xbf16, #tpu.memory_space<vmem>>, vector<1x16x64xbf16>
      %20 = vector.shape_cast %19 : vector<1x16x64xbf16> to vector<16x64xbf16>
      %21 = vector.shape_cast %18 : vector<16x64xbf16> to vector<1x16x64xbf16>
      tpu.vector_store %arg7[%c0_16, %c0_17, %c0_18], %21 {strides = array<i32>} : memref<1x16x64xbf16, #tpu.memory_space<vmem>>, vector<1x16x64xbf16>,
    } else {
    }
    return
  }
  func.func @transform_0(%arg0: i32, %arg1: i32, %arg2: i32, %arg3: i32) -> (i32, i32, i32) {
    %c0_i32 = arith.constant 0 : i32
    %c0_i32_0 = arith.constant 0 : i32
    return %c0_i32, %arg1, %arg3 : i32, i32, i32
  }
  func.func @transform_1(%arg0: i32, %arg1: i32, %arg2: i32, %arg3: i32) -> (i32, i32, i32) {
    %c0_i32 = arith.constant 0 : i32
    %c0_i32_0 = arith.constant 0 : i32
    return %c0_i32, %arg3, %arg2 : i32, i32, i32
  }
  func.func @transform_2(%arg0: i32, %arg1: i32, %arg2: i32, %arg3: i32) -> (i32, i32) {
    %c0_i32 = arith.constant 0 : i32
    %c0_i32_0 = arith.constant 0 : i32
    return %c0_i32, %arg2 : i32, i32
  }
  func.func @transform_3(%arg0: i32, %arg1: i32, %arg2: i32, %arg3: i32) -> (i32, i32, i32) {
    %c0_i32 = arith.constant 0 : i32
    return %arg0, %arg1, %arg2 : i32, i32, i32
  }
}

module attributes {stable_mosaic.version = 11 : i64} {
  func.func @_gemm_res_kernel(%arg0: i32, %arg1: i32, %arg2: i32, %arg3: i32, %arg4: memref<1x16x16xbf16, #tpu.memory_space<vmem>>, %arg5: memref<1x16x64xbf16, #tpu.memory_space<vmem>>, %arg6: memref<1x64xf32, #tpu.memory_space<vmem>>, %arg7: memref<1x16x64xbf16, #tpu.memory_space<vmem>>, %arg8: memref<1x16x64xbf16, #tpu.memory_space<vmem>>, %arg9: memref<16x64xf32, #tpu.memory_space<vmem>>) attributes {dimension_semantics = [#tpu.dimension_semantics<parallel>, #tpu.dimension_semantics<parallel>, #tpu.dimension_semantics<parallel>, #tpu.dimension_semantics<arbitrary>], iteration_bounds = array<i64: 1, 1, 1, 1>, scalar_prefetch = 0 : i64, scratch_operands = 1 : i64, tpu.core_type = #tpu.core_type<tc>, window_params = [{transform_indices = @transform_0, window_bounds = array<i64: 1, 16, 16>}, {transform_indices = @transform_1, window_bounds = array<i64: 1, 16, 64>}, {transform_indices = @transform_2, window_bounds = array<i64: 1, 64>}, {transform_indices = @transform_3, window_bounds = array<i64: 1, 16, 64>}, {transform_indices = @transform_4, window_bounds = array<i64: 1, 16, 64>}]} {
    %c0_i32 = arith.constant 0 : i32
    %0 = arith.cmpi eq, %arg3, %c0_i32 : i32
    %1 = arith.extui %0 : i1 to i32
    %c0_i32_0 = arith.constant 0 : i32
    %2 = arith.cmpi ne, %1, %c0_i32_0 : i32
    scf.if %2 {
      %cst_12 = arith.constant 0.000000e+00 : f32
      %14 = vector.broadcast %cst_12 : f32 to vector<16x64xf32>
      %c0_13 = arith.constant 0 : index
      %c0_14 = arith.constant 0 : index
      %15 = vector.load %arg9[%c0_13, %c0_14] : memref<16x64xf32, #tpu.memory_space<vmem>>, vector<16x64xf32>
      tpu.vector_store %arg9[%c0_13, %c0_14], %14 {strides = array<i32>} : memref<16x64xf32, #tpu.memory_space<vmem>>, vector<16x64xf32>,
    } else {
    }
    %c0 = arith.constant 0 : index
    %c0_1 = arith.constant 0 : index
    %3 = vector.load %arg9[%c0, %c0_1] : memref<16x64xf32, #tpu.memory_space<vmem>>, vector<16x64xf32>
    %c0_2 = arith.constant 0 : index
    %c0_3 = arith.constant 0 : index
    %c0_4 = arith.constant 0 : index
    %4 = vector.load %arg4[%c0_2, %c0_3, %c0_4] : memref<1x16x16xbf16, #tpu.memory_space<vmem>>, vector<1x16x16xbf16>
    %5 = vector.shape_cast %4 : vector<1x16x16xbf16> to vector<16x16xbf16>
    %c0_5 = arith.constant 0 : index
    %c0_6 = arith.constant 0 : index
    %c0_7 = arith.constant 0 : index
    %6 = vector.load %arg5[%c0_5, %c0_6, %c0_7] : memref<1x16x64xbf16, #tpu.memory_space<vmem>>, vector<1x16x64xbf16>
    %7 = vector.shape_cast %6 : vector<1x16x64xbf16> to vector<16x64xbf16>
    %cst = arith.constant dense<0.000000e+00> : vector<16x64xf32>
    %8 = tpu.matmul %5, %7, %cst {dimension_numbers = #tpu.dot_dimension_numbers<[1], [0], [0], [1], [0, 0, 1, 1], [], []>} : vector<16x16xbf16>, vector<16x64xbf16>, vector<16x64xf32> -> vector<16x64xf32>
    %9 = arith.addf %3, %8 : vector<16x64xf32>
    %c0_8 = arith.constant 0 : index
    %c0_9 = arith.constant 0 : index
    %10 = vector.load %arg9[%c0_8, %c0_9] : memref<16x64xf32, #tpu.memory_space<vmem>>, vector<16x64xf32>
    tpu.vector_store %arg9[%c0_8, %c0_9], %9 {strides = array<i32>} : memref<16x64xf32, #tpu.memory_space<vmem>>, vector<16x64xf32>,
    %c0_i32_10 = arith.constant 0 : i32
    %11 = arith.cmpi eq, %arg3, %c0_i32_10 : i32
    %12 = arith.extui %11 : i1 to i32
    %c0_i32_11 = arith.constant 0 : i32
    %13 = arith.cmpi ne, %12, %c0_i32_11 : i32
    scf.if %13 {
      %c0_12 = arith.constant 0 : index
      %c0_13 = arith.constant 0 : index
      %14 = vector.load %arg9[%c0_12, %c0_13] : memref<16x64xf32, #tpu.memory_space<vmem>>, vector<16x64xf32>
      %c0_14 = arith.constant 0 : index
      %c0_15 = arith.constant 0 : index
      %15 = vector.load %arg6[%c0_14, %c0_15] : memref<1x64xf32, #tpu.memory_space<vmem>>, vector<1x64xf32>
      %16 = vector.broadcast %15 : vector<1x64xf32> to vector<16x64xf32>
      %17 = arith.addf %14, %16 : vector<16x64xf32>
      %c0_16 = arith.constant 0 : index
      %c0_17 = arith.constant 0 : index
      %c0_18 = arith.constant 0 : index
      %18 = vector.load %arg7[%c0_16, %c0_17, %c0_18] : memref<1x16x64xbf16, #tpu.memory_space<vmem>>, vector<1x16x64xbf16>
      %19 = vector.shape_cast %18 : vector<1x16x64xbf16> to vector<16x64xbf16>
      %20 = arith.extf %19 : vector<16x64xbf16> to vector<16x64xf32>
      %21 = arith.addf %17, %20 : vector<16x64xf32>
      %22 = arith.truncf %21 : vector<16x64xf32> to vector<16x64xbf16>
      %c0_19 = arith.constant 0 : index
      %c0_20 = arith.constant 0 : index
      %c0_21 = arith.constant 0 : index
      %23 = vector.load %arg8[%c0_19, %c0_20, %c0_21] : memref<1x16x64xbf16, #tpu.memory_space<vmem>>, vector<1x16x64xbf16>
      %24 = vector.shape_cast %23 : vector<1x16x64xbf16> to vector<16x64xbf16>
      %25 = vector.shape_cast %22 : vector<16x64xbf16> to vector<1x16x64xbf16>
      tpu.vector_store %arg8[%c0_19, %c0_20, %c0_21], %25 {strides = array<i32>} : memref<1x16x64xbf16, #tpu.memory_space<vmem>>, vector<1x16x64xbf16>,
    } else {
    }
    return
  }
  func.func @transform_0(%arg0: i32, %arg1: i32, %arg2: i32, %arg3: i32) -> (i32, i32, i32) {
    %c0_i32 = arith.constant 0 : i32
    %c0_i32_0 = arith.constant 0 : i32
    return %c0_i32, %arg1, %arg3 : i32, i32, i32
  }
  func.func @transform_1(%arg0: i32, %arg1: i32, %arg2: i32, %arg3: i32) -> (i32, i32, i32) {
    %c0_i32 = arith.constant 0 : i32
    %c0_i32_0 = arith.constant 0 : i32
    return %c0_i32, %arg3, %arg2 : i32, i32, i32
  }
  func.func @transform_2(%arg0: i32, %arg1: i32, %arg2: i32, %arg3: i32) -> (i32, i32) {
    %c0_i32 = arith.constant 0 : i32
    %c0_i32_0 = arith.constant 0 : i32
    return %c0_i32, %arg2 : i32, i32
  }
  func.func @transform_3(%arg0: i32, %arg1: i32, %arg2: i32, %arg3: i32) -> (i32, i32, i32) {
    %c0_i32 = arith.constant 0 : i32
    return %arg0, %arg1, %arg2 : i32, i32, i32
  }
  func.func @transform_4(%arg0: i32, %arg1: i32, %arg2: i32, %arg3: i32) -> (i32, i32, i32) {
    %c0_i32 = arith.constant 0 : i32
    return %arg0, %arg1, %arg2 : i32, i32, i32
  }
}

module attributes {stable_mosaic.version = 11 : i64} {
  func.func @_gemm_kernel(%arg0: i32, %arg1: i32, %arg2: i32, %arg3: i32, %arg4: memref<1x64x16xbf16, #tpu.memory_space<vmem>>, %arg5: memref<1x16x64xbf16, #tpu.memory_space<vmem>>, %arg6: memref<1x64xf32, #tpu.memory_space<vmem>>, %arg7: memref<1x64x64xf32, #tpu.memory_space<vmem>>, %arg8: memref<64x64xf32, #tpu.memory_space<vmem>>) attributes {dimension_semantics = [#tpu.dimension_semantics<parallel>, #tpu.dimension_semantics<parallel>, #tpu.dimension_semantics<parallel>, #tpu.dimension_semantics<arbitrary>], iteration_bounds = array<i64: 1, 1, 1, 1>, scalar_prefetch = 0 : i64, scratch_operands = 1 : i64, tpu.core_type = #tpu.core_type<tc>, window_params = [{transform_indices = @transform_0, window_bounds = array<i64: 1, 64, 16>}, {transform_indices = @transform_1, window_bounds = array<i64: 1, 16, 64>}, {transform_indices = @transform_2, window_bounds = array<i64: 1, 64>}, {transform_indices = @transform_3, window_bounds = array<i64: 1, 64, 64>}]} {
    %c0_i32 = arith.constant 0 : i32
    %0 = arith.cmpi eq, %arg3, %c0_i32 : i32
    %1 = arith.extui %0 : i1 to i32
    %c0_i32_0 = arith.constant 0 : i32
    %2 = arith.cmpi ne, %1, %c0_i32_0 : i32
    scf.if %2 {
      %cst_12 = arith.constant 0.000000e+00 : f32
      %14 = vector.broadcast %cst_12 : f32 to vector<64x64xf32>
      %c0_13 = arith.constant 0 : index
      %c0_14 = arith.constant 0 : index
      %15 = vector.load %arg8[%c0_13, %c0_14] : memref<64x64xf32, #tpu.memory_space<vmem>>, vector<64x64xf32>
      tpu.vector_store %arg8[%c0_13, %c0_14], %14 {strides = array<i32>} : memref<64x64xf32, #tpu.memory_space<vmem>>, vector<64x64xf32>,
    } else {
    }
    %c0 = arith.constant 0 : index
    %c0_1 = arith.constant 0 : index
    %3 = vector.load %arg8[%c0, %c0_1] : memref<64x64xf32, #tpu.memory_space<vmem>>, vector<64x64xf32>
    %c0_2 = arith.constant 0 : index
    %c0_3 = arith.constant 0 : index
    %c0_4 = arith.constant 0 : index
    %4 = vector.load %arg4[%c0_2, %c0_3, %c0_4] : memref<1x64x16xbf16, #tpu.memory_space<vmem>>, vector<1x64x16xbf16>
    %5 = vector.shape_cast %4 : vector<1x64x16xbf16> to vector<64x16xbf16>
    %c0_5 = arith.constant 0 : index
    %c0_6 = arith.constant 0 : index
    %c0_7 = arith.constant 0 : index
    %6 = vector.load %arg5[%c0_5, %c0_6, %c0_7] : memref<1x16x64xbf16, #tpu.memory_space<vmem>>, vector<1x16x64xbf16>
    %7 = vector.shape_cast %6 : vector<1x16x64xbf16> to vector<16x64xbf16>
    %cst = arith.constant dense<0.000000e+00> : vector<64x64xf32>
    %8 = tpu.matmul %5, %7, %cst {dimension_numbers = #tpu.dot_dimension_numbers<[1], [0], [0], [1], [0, 0, 1, 1], [], []>} : vector<64x16xbf16>, vector<16x64xbf16>, vector<64x64xf32> -> vector<64x64xf32>
    %9 = arith.addf %3, %8 : vector<64x64xf32>
    %c0_8 = arith.constant 0 : index
    %c0_9 = arith.constant 0 : index
    %10 = vector.load %arg8[%c0_8, %c0_9] : memref<64x64xf32, #tpu.memory_space<vmem>>, vector<64x64xf32>
    tpu.vector_store %arg8[%c0_8, %c0_9], %9 {strides = array<i32>} : memref<64x64xf32, #tpu.memory_space<vmem>>, vector<64x64xf32>,
    %c0_i32_10 = arith.constant 0 : i32
    %11 = arith.cmpi eq, %arg3, %c0_i32_10 : i32
    %12 = arith.extui %11 : i1 to i32
    %c0_i32_11 = arith.constant 0 : i32
    %13 = arith.cmpi ne, %12, %c0_i32_11 : i32
    scf.if %13 {
      %c0_12 = arith.constant 0 : index
      %c0_13 = arith.constant 0 : index
      %14 = vector.load %arg8[%c0_12, %c0_13] : memref<64x64xf32, #tpu.memory_space<vmem>>, vector<64x64xf32>
      %c0_14 = arith.constant 0 : index
      %c0_15 = arith.constant 0 : index
      %15 = vector.load %arg6[%c0_14, %c0_15] : memref<1x64xf32, #tpu.memory_space<vmem>>, vector<1x64xf32>
      %16 = vector.broadcast %15 : vector<1x64xf32> to vector<64x64xf32>
      %17 = arith.addf %14, %16 : vector<64x64xf32>
      %c0_16 = arith.constant 0 : index
      %c0_17 = arith.constant 0 : index
      %c0_18 = arith.constant 0 : index
      %18 = vector.load %arg7[%c0_16, %c0_17, %c0_18] : memref<1x64x64xf32, #tpu.memory_space<vmem>>, vector<1x64x64xf32>
      %19 = vector.shape_cast %18 : vector<1x64x64xf32> to vector<64x64xf32>
      %20 = vector.shape_cast %17 : vector<64x64xf32> to vector<1x64x64xf32>
      tpu.vector_store %arg7[%c0_16, %c0_17, %c0_18], %20 {strides = array<i32>} : memref<1x64x64xf32, #tpu.memory_space<vmem>>, vector<1x64x64xf32>,
    } else {
    }
    return
  }
  func.func @transform_0(%arg0: i32, %arg1: i32, %arg2: i32, %arg3: i32) -> (i32, i32, i32) {
    %c0_i32 = arith.constant 0 : i32
    %c0_i32_0 = arith.constant 0 : i32
    return %c0_i32, %arg1, %arg3 : i32, i32, i32
  }
  func.func @transform_1(%arg0: i32, %arg1: i32, %arg2: i32, %arg3: i32) -> (i32, i32, i32) {
    %c0_i32 = arith.constant 0 : i32
    %c0_i32_0 = arith.constant 0 : i32
    return %c0_i32, %arg3, %arg2 : i32, i32, i32
  }
  func.func @transform_2(%arg0: i32, %arg1: i32, %arg2: i32, %arg3: i32) -> (i32, i32) {
    %c0_i32 = arith.constant 0 : i32
    %c0_i32_0 = arith.constant 0 : i32
    return %c0_i32, %arg2 : i32, i32
  }
  func.func @transform_3(%arg0: i32, %arg1: i32, %arg2: i32, %arg3: i32) -> (i32, i32, i32) {
    %c0_i32 = arith.constant 0 : i32
    return %arg0, %arg1, %arg2 : i32, i32, i32
  }
}

</mosaic_0001>

<llo_original>
// kernel: set_target.18
$region0: #{set_target.18}
  #allocation0 [shape = 'u32[]', space=smem, size = 0x4, offset = 0x4, fixed_abs, tag = 'smem constant byte address 0x4 - core index']
  #allocation1 [shape = 'u32[144,128]{1,0:T(1,128)}', space=vmem, size = 0x12000, scoped, tag = 'internal scratch']
  %s0 = inlined_call_operand.vmem [shape: bf16[1,256,64], index: 0, kind: input, shape index: {}]
  %s1 = inlined_call_operand.vmem [shape: bf16[1,256,64], index: 1, kind: output, shape index: {}]
  %s2 = sld [smem:[#allocation0]]
  $region14: #{set_target.18} parent=0
    _
  %s4 = ssub.s32 1, %s2
  %s5 = scalar_select 0, %s4, %s2
  // Predicated region
  $region2: #{set_target.18} parent=0 // pred_check
    _
  $region3: #{set_target.18} parent=0 // pred_check_branch
    %7 = sbr.rel (0) target = $region5
  $region4: #{set_target.18} parent=0 // pred_region
    _
  $region5: #{set_target.18} parent=0 // pred_fallthru
    _
  %v8 = vld [vmem:[%s0] sm:$0xf]
  %v9 = vld [vmem:[%s0 + $0x4] sm:$0xf]
  %v10 = vld [vmem:[%s0 + $0x8] sm:$0xf]
  %v11 = vld [vmem:[%s0 + $0xc] sm:$0xf]
  %v12 = vld [vmem:[%s0 + $0x10] sm:$0xf]
  %v13 = vld [vmem:[%s0 + $0x14] sm:$0xf]
  %v14 = vld [vmem:[%s0 + $0x18] sm:$0xf]
  %v15 = vld [vmem:[%s0 + $0x1c] sm:$0xf]
  %v16 = vld [vmem:[%s0 + $0x20] sm:$0xf]
  %v17 = vld [vmem:[%s0 + $0x24] sm:$0xf]
  %v18 = vld [vmem:[%s0 + $0x28] sm:$0xf]
  %v19 = vld [vmem:[%s0 + $0x2c] sm:$0xf]
  %v20 = vld [vmem:[%s0 + $0x30] sm:$0xf]
  %v21 = vld [vmem:[%s0 + $0x34] sm:$0xf]
  %v22 = vld [vmem:[%s0 + $0x38] sm:$0xf]
  %v23 = vld [vmem:[%s0 + $0x3c] sm:$0xf]
  %v24 = vld [vmem:[%s0 + $0x40] sm:$0xf]
  %v25 = vld [vmem:[%s0 + $0x44] sm:$0xf]
  %v26 = vld [vmem:[%s0 + $0x48] sm:$0xf]
  %v27 = vld [vmem:[%s0 + $0x4c] sm:$0xf]
  %v28 = vld [vmem:[%s0 + $0x50] sm:$0xf]
  %v29 = vld [vmem:[%s0 + $0x54] sm:$0xf]
  %v30 = vld [vmem:[%s0 + $0x58] sm:$0xf]
  %v31 = vld [vmem:[%s0 + $0x5c] sm:$0xf]
  %v32 = vld [vmem:[%s0 + $0x60] sm:$0xf]
  %v33 = vld [vmem:[%s0 + $0x64] sm:$0xf]
  %v34 = vld [vmem:[%s0 + $0x68] sm:$0xf]
  %v35 = vld [vmem:[%s0 + $0x6c] sm:$0xf]
  %v36 = vld [vmem:[%s0 + $0x70] sm:$0xf]
  %v37 = vld [vmem:[%s0 + $0x74] sm:$0xf]
  %v38 = vld [vmem:[%s0 + $0x78] sm:$0xf]
  %v39 = vld [vmem:[%s0 + $0x7c] sm:$0xf]
  %v40 = vunpack.c.l.bf16 %v8
  %v41 = vunpack.c.l.bf16 %v9
  %v42 = vunpack.c.l.bf16 %v10
  %v43 = vunpack.c.l.bf16 %v11
  %v44 = vunpack.c.l.bf16 %v12
  %v45 = vunpack.c.l.bf16 %v13
  %v46 = vunpack.c.l.bf16 %v14
  %v47 = vunpack.c.l.bf16 %v15
  %v48 = vunpack.c.l.bf16 %v16
  %v49 = vunpack.c.l.bf16 %v17
  %v50 = vunpack.c.l.bf16 %v18
  %v51 = vunpack.c.l.bf16 %v19
  %v52 = vunpack.c.l.bf16 %v20
  %v53 = vunpack.c.l.bf16 %v21
  %v54 = vunpack.c.l.bf16 %v22
  %v55 = vunpack.c.l.bf16 %v23
  %v56 = vunpack.c.l.bf16 %v24
  %v57 = vunpack.c.l.bf16 %v25
  %v58 = vunpack.c.l.bf16 %v26
  %v59 = vunpack.c.l.bf16 %v27
  %v60 = vunpack.c.l.bf16 %v28
  %v61 = vunpack.c.l.bf16 %v29
  %v62 = vunpack.c.l.bf16 %v30
  %v63 = vunpack.c.l.bf16 %v31
  %v64 = vunpack.c.l.bf16 %v32
  %v65 = vunpack.c.l.bf16 %v33
  %v66 = vunpack.c.l.bf16 %v34
  %v67 = vunpack.c.l.bf16 %v35
  %v68 = vunpack.c.l.bf16 %v36
  %v69 = vunpack.c.l.bf16 %v37
  %v70 = vunpack.c.l.bf16 %v38
  %v71 = vunpack.c.l.bf16 %v39
  %vm72 = vcmask 523264
  %v73 = vsel %vm72, %v40, 0.0
  %v74 = vsel %vm72, %v41, 0.0
  %v75 = vadd.f32 %v73, %v74
  %v76 = vsel %vm72, %v42, 0.0
  %v77 = vadd.f32 %v75, %v76
  %v78 = vsel %vm72, %v43, 0.0
  %v79 = vadd.f32 %v77, %v78
  %v80 = vsel %vm72, %v44, 0.0
  %v81 = vadd.f32 %v79, %v80
  %v82 = vsel %vm72, %v45, 0.0
  %v83 = vadd.f32 %v81, %v82
  %v84 = vsel %vm72, %v46, 0.0
  %v85 = vadd.f32 %v83, %v84
  %v86 = vsel %vm72, %v47, 0.0
  %v87 = vadd.f32 %v85, %v86
  %v88 = vsel %vm72, %v48, 0.0
  %v89 = vadd.f32 %v87, %v88
  %v90 = vsel %vm72, %v49, 0.0
  %v91 = vadd.f32 %v89, %v90
  %v92 = vsel %vm72, %v50, 0.0
  %v93 = vadd.f32 %v91, %v92
  %v94 = vsel %vm72, %v51, 0.0
  %v95 = vadd.f32 %v93, %v94
  %v96 = vsel %vm72, %v52, 0.0
  %v97 = vadd.f32 %v95, %v96
  %v98 = vsel %vm72, %v53, 0.0
  %v99 = vadd.f32 %v97, %v98
  %v100 = vsel %vm72, %v54, 0.0
  %v101 = vadd.f32 %v99, %v100
  %v102 = vsel %vm72, %v55, 0.0
  %v103 = vadd.f32 %v101, %v102
  %v104 = vsel %vm72, %v56, 0.0
  %v105 = vadd.f32 %v103, %v104
  %v106 = vsel %vm72, %v57, 0.0
  %v107 = vadd.f32 %v105, %v106
  %v108 = vsel %vm72, %v58, 0.0
  %v109 = vadd.f32 %v107, %v108
  %v110 = vsel %vm72, %v59, 0.0
  %v111 = vadd.f32 %v109, %v110
  %v112 = vsel %vm72, %v60, 0.0
  %v113 = vadd.f32 %v111, %v112
  %v114 = vsel %vm72, %v61, 0.0
  %v115 = vadd.f32 %v113, %v114
  %v116 = vsel %vm72, %v62, 0.0
  %v117 = vadd.f32 %v115, %v116
  %v118 = vsel %vm72, %v63, 0.0
  %v119 = vadd.f32 %v117, %v118
  %v120 = vsel %vm72, %v64, 0.0
  %v121 = vadd.f32 %v119, %v120
  %v122 = vsel %vm72, %v65, 0.0
  %v123 = vadd.f32 %v121, %v122
  %v124 = vsel %vm72, %v66, 0.0
  %v125 = vadd.f32 %v123, %v124
  %v126 = vsel %vm72, %v67, 0.0
  %v127 = vadd.f32 %v125, %v126
  %v128 = vsel %vm72, %v68, 0.0
  %v129 = vadd.f32 %v127, %v128
  %v130 = vsel %vm72, %v69, 0.0
  %v131 = vadd.f32 %v129, %v130
  %v132 = vsel %vm72, %v70, 0.0
  %v133 = vadd.f32 %v131, %v132
  %v134 = vsel %vm72, %v71, 0.0
  %v135 = vadd.f32 %v133, %v134
  %v136 = vrot.slane %v135, 4
  %v137 = vadd.f32 %v135, %v136
  %v138 = vrot.slane %v137, 2
  %v139 = vadd.f32 %v137, %v138
  %v140 = vrot.slane %v139, 1
  %v141 = vadd.f32 %v139, %v140
  %v142 = vmul.f32 %v40, %v40
  %v143 = vmul.f32 %v41, %v41
  %v144 = vmul.f32 %v42, %v42
  %v145 = vmul.f32 %v43, %v43
  %v146 = vmul.f32 %v44, %v44
  %v147 = vmul.f32 %v45, %v45
  %v148 = vmul.f32 %v46, %v46
  %v149 = vmul.f32 %v47, %v47
  %v150 = vmul.f32 %v48, %v48
  %v151 = vmul.f32 %v49, %v49
  %v152 = vmul.f32 %v50, %v50
  %v153 = vmul.f32 %v51, %v51
  %v154 = vmul.f32 %v52, %v52
  %v155 = vmul.f32 %v53, %v53
  %v156 = vmul.f32 %v54, %v54
  %v157 = vmul.f32 %v55, %v55
  %v158 = vmul.f32 %v56, %v56
  %v159 = vmul.f32 %v57, %v57
  %v160 = vmul.f32 %v58, %v58
  %v161 = vmul.f32 %v59, %v59
  %v162 = vmul.f32 %v60, %v60
  %v163 = vmul.f32 %v61, %v61
  %v164 = vmul.f32 %v62, %v62
  %v165 = vmul.f32 %v63, %v63
  %v166 = vmul.f32 %v64, %v64
  %v167 = vmul.f32 %v65, %v65
  %v168 = vmul.f32 %v66, %v66
  %v169 = vmul.f32 %v67, %v67
  %v170 = vmul.f32 %v68, %v68
  %v171 = vmul.f32 %v69, %v69
  %v172 = vmul.f32 %v70, %v70
  %v173 = vmul.f32 %v71, %v71
  %v174 = vsel %vm72, %v142, 0.0
  %v175 = vsel %vm72, %v143, 0.0
  %v176 = vadd.f32 %v174, %v175
  %v177 = vsel %vm72, %v144, 0.0
  %v178 = vadd.f32 %v176, %v177
  %v179 = vsel %vm72, %v145, 0.0
  %v180 = vadd.f32 %v178, %v179
  %v181 = vsel %vm72, %v146, 0.0
  %v182 = vadd.f32 %v180, %v181
  %v183 = vsel %vm72, %v147, 0.0
  %v184 = vadd.f32 %v182, %v183
  %v185 = vsel %vm72, %v148, 0.0
  %v186 = vadd.f32 %v184, %v185
  %v187 = vsel %vm72, %v149, 0.0
  %v188 = vadd.f32 %v186, %v187
  %v189 = vsel %vm72, %v150, 0.0
  %v190 = vadd.f32 %v188, %v189
  %v191 = vsel %vm72, %v151, 0.0
  %v192 = vadd.f32 %v190, %v191
  %v193 = vsel %vm72, %v152, 0.0
  %v194 = vadd.f32 %v192, %v193
  %v195 = vsel %vm72, %v153, 0.0
  %v196 = vadd.f32 %v194, %v195
  %v197 = vsel %vm72, %v154, 0.0
  %v198 = vadd.f32 %v196, %v197
  %v199 = vsel %vm72, %v155, 0.0
  %v200 = vadd.f32 %v198, %v199
  %v201 = vsel %vm72, %v156, 0.0
  %v202 = vadd.f32 %v200, %v201
  %v203 = vsel %vm72, %v157, 0.0
  %v204 = vadd.f32 %v202, %v203
  %v205 = vsel %vm72, %v158, 0.0
  %v206 = vadd.f32 %v204, %v205
  %v207 = vsel %vm72, %v159, 0.0
  %v208 = vadd.f32 %v206, %v207
  %v209 = vsel %vm72, %v160, 0.0
  %v210 = vadd.f32 %v208, %v209
  %v211 = vsel %vm72, %v161, 0.0
  %v212 = vadd.f32 %v210, %v211
  %v213 = vsel %vm72, %v162, 0.0
  %v214 = vadd.f32 %v212, %v213
  %v215 = vsel %vm72, %v163, 0.0
  %v216 = vadd.f32 %v214, %v215
  %v217 = vsel %vm72, %v164, 0.0
  %v218 = vadd.f32 %v216, %v217
  %v219 = vsel %vm72, %v165, 0.0
  %v220 = vadd.f32 %v218, %v219
  %v221 = vsel %vm72, %v166, 0.0
  %v222 = vadd.f32 %v220, %v221
  %v223 = vsel %vm72, %v167, 0.0
  %v224 = vadd.f32 %v222, %v223
  %v225 = vsel %vm72, %v168, 0.0
  %v226 = vadd.f32 %v224, %v225
  %v227 = vsel %vm72, %v169, 0.0
  %v228 = vadd.f32 %v226, %v227
  %v229 = vsel %vm72, %v170, 0.0
  %v230 = vadd.f32 %v228, %v229
  %v231 = vsel %vm72, %v171, 0.0
  %v232 = vadd.f32 %v230, %v231
  %v233 = vsel %vm72, %v172, 0.0
  %v234 = vadd.f32 %v232, %v233
  %v235 = vsel %vm72, %v173, 0.0
  %v236 = vadd.f32 %v234, %v235
  %v237 = vrot.slane %v236, 4
  %v238 = vadd.f32 %v236, %v237
  %v239 = vrot.slane %v238, 2
  %v240 = vadd.f32 %v238, %v239
  %v241 = vrot.slane %v240, 1
  %v242 = vadd.f32 %v240, %v241
  %v243 = vmul.f32 %v141, 0.00390625
  %v244 = vmul.f32 %v242, 0.00390625
  %v245 = vmul.f32 %v243, %v243
  %v246 = vsub.f32 %v244, %v245
  %v247 = vsub.f32 %v40, %v243
  %v248 = vsub.f32 %v41, %v243
  %v249 = vsub.f32 %v42, %v243
  %v250 = vsub.f32 %v43, %v243
  %v251 = vsub.f32 %v44, %v243
  %v252 = vsub.f32 %v45, %v243
  %v253 = vsub.f32 %v46, %v243
  %v254 = vsub.f32 %v47, %v243
  %v255 = vsub.f32 %v48, %v243
  %v256 = vsub.f32 %v49, %v243
  %v257 = vsub.f32 %v50, %v243
  %v258 = vsub.f32 %v51, %v243
  %v259 = vsub.f32 %v52, %v243
  %v260 = vsub.f32 %v53, %v243
  %v261 = vsub.f32 %v54, %v243
  %v262 = vsub.f32 %v55, %v243
  %v263 = vsub.f32 %v56, %v243
  %v264 = vsub.f32 %v57, %v243
  %v265 = vsub.f32 %v58, %v243
  %v266 = vsub.f32 %v59, %v243
  %v267 = vsub.f32 %v60, %v243
  %v268 = vsub.f32 %v61, %v243
  %v269 = vsub.f32 %v62, %v243
  %v270 = vsub.f32 %v63, %v243
  %v271 = vsub.f32 %v64, %v243
  %v272 = vsub.f32 %v65, %v243
  %v273 = vsub.f32 %v66, %v243
  %v274 = vsub.f32 %v67, %v243
  %v275 = vsub.f32 %v68, %v243
  %v276 = vsub.f32 %v69, %v243
  %v277 = vsub.f32 %v70, %v243
  %v278 = vsub.f32 %v71, %v243
  %v279 = vadd.f32 %v246, 1e-05
  %v280 = vrsqrt.pop %v279
  %v281 = vmul.f32 %v247, %v280
  %v282 = vmul.f32 %v248, %v280
  %v283 = vmul.f32 %v249, %v280
  %v284 = vmul.f32 %v250, %v280
  %v285 = vmul.f32 %v251, %v280
  %v286 = vmul.f32 %v252, %v280
  %v287 = vmul.f32 %v253, %v280
  %v288 = vmul.f32 %v254, %v280
  %v289 = vmul.f32 %v255, %v280
  %v290 = vmul.f32 %v256, %v280
  %v291 = vmul.f32 %v257, %v280
  %v292 = vmul.f32 %v258, %v280
  %v293 = vmul.f32 %v259, %v280
  %v294 = vmul.f32 %v260, %v280
  %v295 = vmul.f32 %v261, %v280
  %v296 = vmul.f32 %v262, %v280
  %v297 = vmul.f32 %v263, %v280
  %v298 = vmul.f32 %v264, %v280
  %v299 = vmul.f32 %v265, %v280
  %v300 = vmul.f32 %v266, %v280
  %v301 = vmul.f32 %v267, %v280
  %v302 = vmul.f32 %v268, %v280
  %v303 = vmul.f32 %v269, %v280
  %v304 = vmul.f32 %v270, %v280
  %v305 = vmul.f32 %v271, %v280
  %v306 = vmul.f32 %v272, %v280
  %v307 = vmul.f32 %v273, %v280
  %v308 = vmul.f32 %v274, %v280
  %v309 = vmul.f32 %v275, %v280
  %v310 = vmul.f32 %v276, %v280
  %v311 = vmul.f32 %v277, %v280
  %v312 = vmul.f32 %v278, %v280
  %v313 = vmax.f32 %v281, 0.0
  %v314 = vmax.f32 %v282, 0.0
  %v315 = vmax.f32 %v283, 0.0
  %v316 = vmax.f32 %v284, 0.0
  %v317 = vmax.f32 %v285, 0.0
  %v318 = vmax.f32 %v286, 0.0
  %v319 = vmax.f32 %v287, 0.0
  %v320 = vmax.f32 %v288, 0.0
  %v321 = vmax.f32 %v289, 0.0
  %v322 = vmax.f32 %v290, 0.0
  %v323 = vmax.f32 %v291, 0.0
  %v324 = vmax.f32 %v292, 0.0
  %v325 = vmax.f32 %v293, 0.0
  %v326 = vmax.f32 %v294, 0.0
  %v327 = vmax.f32 %v295, 0.0
  %v328 = vmax.f32 %v296, 0.0
  %v329 = vmax.f32 %v297, 0.0
  %v330 = vmax.f32 %v298, 0.0
  %v331 = vmax.f32 %v299, 0.0
  %v332 = vmax.f32 %v300, 0.0
  %v333 = vmax.f32 %v301, 0.0
  %v334 = vmax.f32 %v302, 0.0
  %v335 = vmax.f32 %v303, 0.0
  %v336 = vmax.f32 %v304, 0.0
  %v337 = vmax.f32 %v305, 0.0
  %v338 = vmax.f32 %v306, 0.0
  %v339 = vmax.f32 %v307, 0.0
  %v340 = vmax.f32 %v308, 0.0
  %v341 = vmax.f32 %v309, 0.0
  %v342 = vmax.f32 %v310, 0.0
  %v343 = vmax.f32 %v311, 0.0
  %v344 = vmax.f32 %v312, 0.0
  %v345 = vpack.c.bf16 %v314, %v313
  %v346 = vpack.c.bf16 %v316, %v315
  %v347 = vpack.c.bf16 %v318, %v317
  %v348 = vpack.c.bf16 %v320, %v319
  %v349 = vpack.c.bf16 %v322, %v321
  %v350 = vpack.c.bf16 %v324, %v323
  %v351 = vpack.c.bf16 %v326, %v325
  %v352 = vpack.c.bf16 %v328, %v327
  %v353 = vpack.c.bf16 %v330, %v329
  %v354 = vpack.c.bf16 %v332, %v331
  %v355 = vpack.c.bf16 %v334, %v333
  %v356 = vpack.c.bf16 %v336, %v335
  %v357 = vpack.c.bf16 %v338, %v337
  %v358 = vpack.c.bf16 %v340, %v339
  %v359 = vpack.c.bf16 %v342, %v341
  %v360 = vpack.c.bf16 %v344, %v343
  %v377 = vunpack.c.l.b16 %v345
  %v378 = vunpack.c.h.b16 %v345
  %v379 = vunpack.c.l.b16 %v346
  %v380 = vunpack.c.h.b16 %v346
  %v381 = vunpack.c.l.b16 %v347
  %v382 = vunpack.c.h.b16 %v347
  %v383 = vunpack.c.l.b16 %v348
  %v384 = vunpack.c.h.b16 %v348
  %v385 = vunpack.c.l.b16 %v349
  %v386 = vunpack.c.h.b16 %v349
  %v387 = vunpack.c.l.b16 %v350
  %v388 = vunpack.c.h.b16 %v350
  %v389 = vunpack.c.l.b16 %v351
  %v390 = vunpack.c.h.b16 %v351
  %v391 = vunpack.c.l.b16 %v352
  %v392 = vunpack.c.h.b16 %v352
  %v393 = vunpack.c.l.b16 %v353
  %v394 = vunpack.c.h.b16 %v353
  %v395 = vunpack.c.l.b16 %v354
  %v396 = vunpack.c.h.b16 %v354
  %v397 = vunpack.c.l.b16 %v355
  %v398 = vunpack.c.h.b16 %v355
  %v399 = vunpack.c.l.b16 %v356
  %v400 = vunpack.c.h.b16 %v356
  %v401 = vunpack.c.l.b16 %v357
  %v402 = vunpack.c.h.b16 %v357
  %v403 = vunpack.c.l.b16 %v358
  %v404 = vunpack.c.h.b16 %v358
  %v405 = vunpack.c.l.b16 %v359
  %v406 = vunpack.c.h.b16 %v359
  %v407 = vunpack.c.l.b16 %v360
  %v408 = vunpack.c.h.b16 %v360
  %v409 = vpack.c.b16 %v377, %v377
  %v410 = vpack.c.b16 %v378, %v378
  %v411 = vpack.c.b16 %v379, %v379
  %v412 = vpack.c.b16 %v380, %v380
  %v413 = vpack.c.b16 %v381, %v381
  %v414 = vpack.c.b16 %v382, %v382
  %v415 = vpack.c.b16 %v383, %v383
  %v416 = vpack.c.b16 %v384, %v384
  %v417 = vpack.c.b16 %v385, %v385
  %v418 = vpack.c.b16 %v386, %v386
  %v419 = vpack.c.b16 %v387, %v387
  %v420 = vpack.c.b16 %v388, %v388
  %v421 = vpack.c.b16 %v389, %v389
  %v422 = vpack.c.b16 %v390, %v390
  %v423 = vpack.c.b16 %v391, %v391
  %v424 = vpack.c.b16 %v392, %v392
  %v425 = vpack.c.b16 %v393, %v393
  %v426 = vpack.c.b16 %v394, %v394
  %v427 = vpack.c.b16 %v395, %v395
  %v428 = vpack.c.b16 %v396, %v396
  %v429 = vpack.c.b16 %v397, %v397
  %v430 = vpack.c.b16 %v398, %v398
  %v431 = vpack.c.b16 %v399, %v399
  %v432 = vpack.c.b16 %v400, %v400
  %v433 = vpack.c.b16 %v401, %v401
  %v434 = vpack.c.b16 %v402, %v402
  %v435 = vpack.c.b16 %v403, %v403
  %v436 = vpack.c.b16 %v404, %v404
  %v437 = vpack.c.b16 %v405, %v405
  %v438 = vpack.c.b16 %v406, %v406
  %v439 = vpack.c.b16 %v407, %v407
  %v440 = vpack.c.b16 %v408, %v408
  %vm473 = vcmask 519168
  %474 = vst.msk [vmem:[%s1] sm:$0xf] %vm473, %v409
  %475 = vst.msk [vmem:[%s1 + $0x4] sm:$0xf] %vm473, %v410
  %476 = vst.msk [vmem:[%s1 + $0x8] sm:$0xf] %vm473, %v411
  %477 = vst.msk [vmem:[%s1 + $0xc] sm:$0xf] %vm473, %v412
  %478 = vst.msk [vmem:[%s1 + $0x10] sm:$0xf] %vm473, %v413
  %479 = vst.msk [vmem:[%s1 + $0x14] sm:$0xf] %vm473, %v414
  %480 = vst.msk [vmem:[%s1 + $0x18] sm:$0xf] %vm473, %v415
  %481 = vst.msk [vmem:[%s1 + $0x1c] sm:$0xf] %vm473, %v416
  %482 = vst.msk [vmem:[%s1 + $0x20] sm:$0xf] %vm473, %v417
  %483 = vst.msk [vmem:[%s1 + $0x24] sm:$0xf] %vm473, %v418
  %484 = vst.msk [vmem:[%s1 + $0x28] sm:$0xf] %vm473, %v419
  %485 = vst.msk [vmem:[%s1 + $0x2c] sm:$0xf] %vm473, %v420
  %486 = vst.msk [vmem:[%s1 + $0x30] sm:$0xf] %vm473, %v421
  %487 = vst.msk [vmem:[%s1 + $0x34] sm:$0xf] %vm473, %v422
  %488 = vst.msk [vmem:[%s1 + $0x38] sm:$0xf] %vm473, %v423
  %489 = vst.msk [vmem:[%s1 + $0x3c] sm:$0xf] %vm473, %v424
  %490 = vst.msk [vmem:[%s1 + $0x40] sm:$0xf] %vm473, %v425
  %491 = vst.msk [vmem:[%s1 + $0x44] sm:$0xf] %vm473, %v426
  %492 = vst.msk [vmem:[%s1 + $0x48] sm:$0xf] %vm473, %v427
  %493 = vst.msk [vmem:[%s1 + $0x4c] sm:$0xf] %vm473, %v428
  %494 = vst.msk [vmem:[%s1 + $0x50] sm:$0xf] %vm473, %v429
  %495 = vst.msk [vmem:[%s1 + $0x54] sm:$0xf] %vm473, %v430
  %496 = vst.msk [vmem:[%s1 + $0x58] sm:$0xf] %vm473, %v431
  %497 = vst.msk [vmem:[%s1 + $0x5c] sm:$0xf] %vm473, %v432
  %498 = vst.msk [vmem:[%s1 + $0x60] sm:$0xf] %vm473, %v433
  %499 = vst.msk [vmem:[%s1 + $0x64] sm:$0xf] %vm473, %v434
  %500 = vst.msk [vmem:[%s1 + $0x68] sm:$0xf] %vm473, %v435
  %501 = vst.msk [vmem:[%s1 + $0x6c] sm:$0xf] %vm473, %v436
  %502 = vst.msk [vmem:[%s1 + $0x70] sm:$0xf] %vm473, %v437
  %503 = vst.msk [vmem:[%s1 + $0x74] sm:$0xf] %vm473, %v438
  %504 = vst.msk [vmem:[%s1 + $0x78] sm:$0xf] %vm473, %v439
  %505 = vst.msk [vmem:[%s1 + $0x7c] sm:$0xf] %vm473, %v440
  // Predicated region
  $region6: #{set_target.18} parent=0 // pred_check
    _
  $region7: #{set_target.18} parent=0 // pred_check_branch
    %507 = sbr.rel (0) target = $region9
  $region8: #{set_target.18} parent=0 // pred_region
    _
  $region9: #{set_target.18} parent=0 // pred_fallthru
    _
  // Predicated region
  $region10: #{set_target.18} parent=0 // pred_check
    _
  $region11: #{set_target.18} parent=0 // pred_check_branch
    %509 = sbr.rel (0) target = $region13
  $region12: #{set_target.18} parent=0 // pred_region
    _
  $region13: #{set_target.18} parent=0 // pred_fallthru
    _

// kernel: set_target.17
$region0: #{set_target.17}
  #allocation0 [shape = 'u32[]', space=smem, size = 0x4, offset = 0x4, fixed_abs, tag = 'smem constant byte address 0x4 - core index']
  #allocation1 [shape = 'u32[144,128]{1,0:T(1,128)}', space=vmem, size = 0x12000, scoped, tag = 'internal scratch']
  #allocation2 [shape = 'f32[256,64]{1,0:T(8,128)}', space=vmem, size = 0x20000, scoped, tag = 'scratch operand']
  %s0 = inlined_call_operand.vmem [shape: bf16[1,256,147], index: 0, kind: input, shape index: {}]
  %s1 = inlined_call_operand.vmem [shape: bf16[1,147,64], index: 1, kind: input, shape index: {}]
  %s2 = inlined_call_operand.vmem [shape: f32[1,64], index: 2, kind: input, shape index: {}]
  %s3 = inlined_call_operand.vmem [shape: bf16[1,256,64], index: 3, kind: output, shape index: {}]
  %s4 = sld [smem:[#allocation0]]
  $region30: #{set_target.17} parent=0
    _
  %s6 = ssub.s32 1, %s4
  %s7 = scalar_select 0, %s6, %s4
  // Predicated region
  $region2: #{set_target.17} parent=0 // pred_check
    _
  $region3: #{set_target.17} parent=0 // pred_check_branch
    %9 = sbr.rel (0) target = $region5
  $region4: #{set_target.17} parent=0 // pred_region
    _
  $region5: #{set_target.17} parent=0 // pred_fallthru
    _
  // Predicated region
  $region6: #{set_target.17} parent=0 // pred_check
    _
  $region7: #{set_target.17} parent=0 // pred_check_branch
    %11 = sbr.rel (0) target = $region9
  $region8: #{set_target.17} parent=0 // pred_region
    _
  $region9: #{set_target.17} parent=0 // pred_fallthru
    _
  // Predicated region
  $region10: #{set_target.17} parent=0 // pred_check
    _
  $region11: #{set_target.17} parent=0 // pred_check_branch
    %13 = sbr.rel (0) target = $region13
  $region12: #{set_target.17} parent=0 // pred_region
    _
  $region13: #{set_target.17} parent=0 // pred_fallthru
    _
  %p15 = scmp.eq.s32.totalorder 0, 0
  // Predicated region
  $region14: #{set_target.17} parent=0 // pred_check
    %p16 = pneg %p15
  $region15: #{set_target.17} parent=0 // pred_check_branch
    %18 = sbr.rel (%p16) target = $region17
  $region16: #{set_target.17} parent=0 // pred_region
    %vm19 = vcmask 523264
    %20 = vst.msk [vmem:[#allocation2] sm:$0xff] %vm19, 0.0
    %21 = vst.msk [vmem:[#allocation2 + $0x8] sm:$0xff] %vm19, 0.0
    %22 = vst.msk [vmem:[#allocation2 + $0x10] sm:$0xff] %vm19, 0.0
    %23 = vst.msk [vmem:[#allocation2 + $0x18] sm:$0xff] %vm19, 0.0
    %24 = vst.msk [vmem:[#allocation2 + $0x20] sm:$0xff] %vm19, 0.0
    %25 = vst.msk [vmem:[#allocation2 + $0x28] sm:$0xff] %vm19, 0.0
    %26 = vst.msk [vmem:[#allocation2 + $0x30] sm:$0xff] %vm19, 0.0
    %27 = vst.msk [vmem:[#allocation2 + $0x38] sm:$0xff] %vm19, 0.0
    %28 = vst.msk [vmem:[#allocation2 + $0x40] sm:$0xff] %vm19, 0.0
    %29 = vst.msk [vmem:[#allocation2 + $0x48] sm:$0xff] %vm19, 0.0
    %30 = vst.msk [vmem:[#allocation2 + $0x50] sm:$0xff] %vm19, 0.0
    %31 = vst.msk [vmem:[#allocation2 + $0x58] sm:$0xff] %vm19, 0.0
    %32 = vst.msk [vmem:[#allocation2 + $0x60] sm:$0xff] %vm19, 0.0
    %33 = vst.msk [vmem:[#allocation2 + $0x68] sm:$0xff] %vm19, 0.0
    %34 = vst.msk [vmem:[#allocation2 + $0x70] sm:$0xff] %vm19, 0.0
    %35 = vst.msk [vmem:[#allocation2 + $0x78] sm:$0xff] %vm19, 0.0
    %36 = vst.msk [vmem:[#allocation2 + $0x80] sm:$0xff] %vm19, 0.0
    %37 = vst.msk [vmem:[#allocation2 + $0x88] sm:$0xff] %vm19, 0.0
    %38 = vst.msk [vmem:[#allocation2 + $0x90] sm:$0xff] %vm19, 0.0
    %39 = vst.msk [vmem:[#allocation2 + $0x98] sm:$0xff] %vm19, 0.0
    %40 = vst.msk [vmem:[#allocation2 + $0xa0] sm:$0xff] %vm19, 0.0
    %41 = vst.msk [vmem:[#allocation2 + $0xa8] sm:$0xff] %vm19, 0.0
    %42 = vst.msk [vmem:[#allocation2 + $0xb0] sm:$0xff] %vm19, 0.0
    %43 = vst.msk [vmem:[#allocation2 + $0xb8] sm:$0xff] %vm19, 0.0
    %44 = vst.msk [vmem:[#allocation2 + $0xc0] sm:$0xff] %vm19, 0.0
    %45 = vst.msk [vmem:[#allocation2 + $0xc8] sm:$0xff] %vm19, 0.0
    %46 = vst.msk [vmem:[#allocation2 + $0xd0] sm:$0xff] %vm19, 0.0
    %47 = vst.msk [vmem:[#allocation2 + $0xd8] sm:$0xff] %vm19, 0.0
    %48 = vst.msk [vmem:[#allocation2 + $0xe0] sm:$0xff] %vm19, 0.0
    %49 = vst.msk [vmem:[#allocation2 + $0xe8] sm:$0xff] %vm19, 0.0
    %50 = vst.msk [vmem:[#allocation2 + $0xf0] sm:$0xff] %vm19, 0.0
    %51 = vst.msk [vmem:[#allocation2 + $0xf8] sm:$0xff] %vm19, 0.0
  $region17: #{set_target.17} parent=0 // pred_fallthru
    _
  %v52 = vld [vmem:[#allocation2] sm:$0xff]
  %v53 = vld [vmem:[#allocation2 + $0x8] sm:$0xff]
  %v54 = vld [vmem:[#allocation2 + $0x10] sm:$0xff]
  %v55 = vld [vmem:[#allocation2 + $0x18] sm:$0xff]
  %v56 = vld [vmem:[#allocation2 + $0x20] sm:$0xff]
  %v57 = vld [vmem:[#allocation2 + $0x28] sm:$0xff]
  %v58 = vld [vmem:[#allocation2 + $0x30] sm:$0xff]
  %v59 = vld [vmem:[#allocation2 + $0x38] sm:$0xff]
  %v60 = vld [vmem:[#allocation2 + $0x40] sm:$0xff]
  %v61 = vld [vmem:[#allocation2 + $0x48] sm:$0xff]
  %v62 = vld [vmem:[#allocation2 + $0x50] sm:$0xff]
  %v63 = vld [vmem:[#allocation2 + $0x58] sm:$0xff]
  %v64 = vld [vmem:[#allocation2 + $0x60] sm:$0xff]
  %v65 = vld [vmem:[#allocation2 + $0x68] sm:$0xff]
  %v66 = vld [vmem:[#allocation2 + $0x70] sm:$0xff]
  %v67 = vld [vmem:[#allocation2 + $0x78] sm:$0xff]
  %v68 = vld [vmem:[#allocation2 + $0x80] sm:$0xff]
  %v69 = vld [vmem:[#allocation2 + $0x88] sm:$0xff]
  %v70 = vld [vmem:[#allocation2 + $0x90] sm:$0xff]
  %v71 = vld [vmem:[#allocation2 + $0x98] sm:$0xff]
  %v72 = vld [vmem:[#allocation2 + $0xa0] sm:$0xff]
  %v73 = vld [vmem:[#allocation2 + $0xa8] sm:$0xff]
  %v74 = vld [vmem:[#allocation2 + $0xb0] sm:$0xff]
  %v75 = vld [vmem:[#allocation2 + $0xb8] sm:$0xff]
  %v76 = vld [vmem:[#allocation2 + $0xc0] sm:$0xff]
  %v77 = vld [vmem:[#allocation2 + $0xc8] sm:$0xff]
  %v78 = vld [vmem:[#allocation2 + $0xd0] sm:$0xff]
  %v79 = vld [vmem:[#allocation2 + $0xd8] sm:$0xff]
  %v80 = vld [vmem:[#allocation2 + $0xe0] sm:$0xff]
  %v81 = vld [vmem:[#allocation2 + $0xe8] sm:$0xff]
  %v82 = vld [vmem:[#allocation2 + $0xf0] sm:$0xff]
  %v83 = vld [vmem:[#allocation2 + $0xf8] sm:$0xff]
  %v84 = vld [vmem:[%s0] sm:$0xff]
  %v85 = vld [vmem:[%s0 + $0x8] sm:$0xff]
  %v86 = vld [vmem:[%s0 + $0x10] sm:$0xff]
  %v87 = vld [vmem:[%s0 + $0x18] sm:$0xff]
  %v88 = vld [vmem:[%s0 + $0x20] sm:$0xff]
  %v89 = vld [vmem:[%s0 + $0x28] sm:$0xff]
  %v90 = vld [vmem:[%s0 + $0x30] sm:$0xff]
  %v91 = vld [vmem:[%s0 + $0x38] sm:$0xff]
  %v92 = vld [vmem:[%s0 + $0x40] sm:$0xff]
  %v93 = vld [vmem:[%s0 + $0x48] sm:$0xff]
  %v94 = vld [vmem:[%s0 + $0x50] sm:$0xff]
  %v95 = vld [vmem:[%s0 + $0x58] sm:$0xff]
  %v96 = vld [vmem:[%s0 + $0x60] sm:$0xff]
  %v97 = vld [vmem:[%s0 + $0x68] sm:$0xff]
  %v98 = vld [vmem:[%s0 + $0x70] sm:$0xff]
  %v99 = vld [vmem:[%s0 + $0x78] sm:$0xff]
  %v100 = vld [vmem:[%s0 + $0x80] sm:$0xff]
  %v101 = vld [vmem:[%s0 + $0x88] sm:$0xff]
  %v102 = vld [vmem:[%s0 + $0x90] sm:$0xff]
  %v103 = vld [vmem:[%s0 + $0x98] sm:$0xff]
  %v104 = vld [vmem:[%s0 + $0xa0] sm:$0xff]
  %v105 = vld [vmem:[%s0 + $0xa8] sm:$0xff]
  %v106 = vld [vmem:[%s0 + $0xb0] sm:$0xff]
  %v107 = vld [vmem:[%s0 + $0xb8] sm:$0xff]
  %v108 = vld [vmem:[%s0 + $0xc0] sm:$0xff]
  %v109 = vld [vmem:[%s0 + $0xc8] sm:$0xff]
  %v110 = vld [vmem:[%s0 + $0xd0] sm:$0xff]
  %v111 = vld [vmem:[%s0 + $0xd8] sm:$0xff]
  %v112 = vld [vmem:[%s0 + $0xe0] sm:$0xff]
  %v113 = vld [vmem:[%s0 + $0xe8] sm:$0xff]
  %v114 = vld [vmem:[%s0 + $0xf0] sm:$0xff]
  %v115 = vld [vmem:[%s0 + $0xf8] sm:$0xff]
  %v116 = vld [vmem:[%s1] sm:$0xf]
  %v117 = vld [vmem:[%s1 + $0x4] sm:$0xf]
  %v118 = vld [vmem:[%s1 + $0x8] sm:$0xf]
  %v119 = vld [vmem:[%s1 + $0xc] sm:$0xf]
  %v120 = vld [vmem:[%s1 + $0x10] sm:$0xf]
  %v121 = vld [vmem:[%s1 + $0x14] sm:$0xf]
  %v122 = vld [vmem:[%s1 + $0x18] sm:$0xf]
  %v123 = vld [vmem:[%s1 + $0x1c] sm:$0xf]
  %v124 = vld [vmem:[%s1 + $0x20] sm:$0xf]
  %v125 = vld [vmem:[%s1 + $0x24] sm:$0xf]
  %v126 = vld [vmem:[%s1 + $0x28] sm:$0xf]
  %v127 = vld [vmem:[%s1 + $0x2c] sm:$0xf]
  %v128 = vld [vmem:[%s1 + $0x30] sm:$0xf]
  %v129 = vld [vmem:[%s1 + $0x34] sm:$0xf]
  %v130 = vld [vmem:[%s1 + $0x38] sm:$0xf]
  %v131 = vld [vmem:[%s1 + $0x3c] sm:$0xf]
  %v132 = vld [vmem:[%s1 + $0x40] sm:$0xf]
  %v133 = vld [vmem:[%s1 + $0x44] sm:$0xf]
  %v134 = vld [vmem:[%s1 + $0x48] sm:$0x3]
  %v167 = vunpack.c.l.b16 %v84
  %v168 = vunpack.c.h.b16 %v84
  %v169 = vunpack.c.l.b16 %v85
  %v170 = vunpack.c.h.b16 %v85
  %v171 = vunpack.c.l.b16 %v86
  %v172 = vunpack.c.h.b16 %v86
  %v173 = vunpack.c.l.b16 %v87
  %v174 = vunpack.c.h.b16 %v87
  %v175 = vunpack.c.l.b16 %v88
  %v176 = vunpack.c.h.b16 %v88
  %v177 = vunpack.c.l.b16 %v89
  %v178 = vunpack.c.h.b16 %v89
  %v179 = vunpack.c.l.b16 %v90
  %v180 = vunpack.c.h.b16 %v90
  %v181 = vunpack.c.l.b16 %v91
  %v182 = vunpack.c.h.b16 %v91
  %v183 = vunpack.c.l.b16 %v92
  %v184 = vunpack.c.h.b16 %v92
  %v185 = vunpack.c.l.b16 %v93
  %v186 = vunpack.c.h.b16 %v93
  %v187 = vunpack.c.l.b16 %v94
  %v188 = vunpack.c.h.b16 %v94
  %v189 = vunpack.c.l.b16 %v95
  %v190 = vunpack.c.h.b16 %v95
  %v191 = vunpack.c.l.b16 %v96
  %v192 = vunpack.c.h.b16 %v96
  %v193 = vunpack.c.l.b16 %v97
  %v194 = vunpack.c.h.b16 %v97
  %v195 = vunpack.c.l.b16 %v98
  %v196 = vunpack.c.h.b16 %v98
  %v197 = vunpack.c.l.b16 %v99
  %v198 = vunpack.c.h.b16 %v99
  %v199 = vunpack.c.l.b16 %v100
  %v200 = vunpack.c.h.b16 %v100
  %v201 = vunpack.c.l.b16 %v101
  %v202 = vunpack.c.h.b16 %v101
  %v203 = vunpack.c.l.b16 %v102
  %v204 = vunpack.c.h.b16 %v102
  %v205 = vunpack.c.l.b16 %v103
  %v206 = vunpack.c.h.b16 %v103
  %v207 = vunpack.c.l.b16 %v104
  %v208 = vunpack.c.h.b16 %v104
  %v209 = vunpack.c.l.b16 %v105
  %v210 = vunpack.c.h.b16 %v105
  %v211 = vunpack.c.l.b16 %v106
  %v212 = vunpack.c.h.b16 %v106
  %v213 = vunpack.c.l.b16 %v107
  %v214 = vunpack.c.h.b16 %v107
  %v215 = vunpack.c.l.b16 %v108
  %v216 = vunpack.c.h.b16 %v108
  %v217 = vunpack.c.l.b16 %v109
  %v218 = vunpack.c.h.b16 %v109
  %v219 = vunpack.c.l.b16 %v110
  %v220 = vunpack.c.h.b16 %v110
  %v221 = vunpack.c.l.b16 %v111
  %v222 = vunpack.c.h.b16 %v111
  %v223 = vunpack.c.l.b16 %v112
  %v224 = vunpack.c.h.b16 %v112
  %v225 = vunpack.c.l.b16 %v113
  %v226 = vunpack.c.h.b16 %v113
  %v227 = vunpack.c.l.b16 %v114
  %v228 = vunpack.c.h.b16 %v114
  %v229 = vunpack.c.l.b16 %v115
  %v230 = vunpack.c.h.b16 %v115
  %v231 = vpack.c.b16 %v169, %v167
  %v232 = vpack.c.b16 %v170, %v168
  %v233 = vpack.c.b16 %v173, %v171
  %v234 = vpack.c.b16 %v174, %v172
  %v235 = vpack.c.b16 %v177, %v175
  %v236 = vpack.c.b16 %v178, %v176
  %v237 = vpack.c.b16 %v181, %v179
  %v238 = vpack.c.b16 %v182, %v180
  %v239 = vpack.c.b16 %v185, %v183
  %v240 = vpack.c.b16 %v186, %v184
  %v241 = vpack.c.b16 %v189, %v187
  %v242 = vpack.c.b16 %v190, %v188
  %v243 = vpack.c.b16 %v193, %v191
  %v244 = vpack.c.b16 %v194, %v192
  %v245 = vpack.c.b16 %v197, %v195
  %v246 = vpack.c.b16 %v198, %v196
  %v247 = vpack.c.b16 %v201, %v199
  %v248 = vpack.c.b16 %v202, %v200
  %v249 = vpack.c.b16 %v205, %v203
  %v250 = vpack.c.b16 %v206, %v204
  %v251 = vpack.c.b16 %v209, %v207
  %v252 = vpack.c.b16 %v210, %v208
  %v253 = vpack.c.b16 %v213, %v211
  %v254 = vpack.c.b16 %v214, %v212
  %v255 = vpack.c.b16 %v217, %v215
  %v256 = vpack.c.b16 %v218, %v216
  %v257 = vpack.c.b16 %v221, %v219
  %v258 = vpack.c.b16 %v222, %v220
  %v259 = vpack.c.b16 %v225, %v223
  %v260 = vpack.c.b16 %v226, %v224
  %v261 = vpack.c.b16 %v229, %v227
  %v262 = vpack.c.b16 %v230, %v228
  %v298 = vunpack.c.l.b16 %v116
  %v299 = vunpack.c.l.b16 %v117
  %v300 = vunpack.c.l.b16 %v118
  %v301 = vunpack.c.l.b16 %v119
  %v302 = vunpack.c.l.b16 %v120
  %v303 = vunpack.c.l.b16 %v121
  %v304 = vunpack.c.l.b16 %v122
  %v305 = vunpack.c.l.b16 %v123
  %v306 = vunpack.c.l.b16 %v124
  %v307 = vunpack.c.l.b16 %v125
  %v308 = vunpack.c.l.b16 %v126
  %v309 = vunpack.c.l.b16 %v127
  %v310 = vunpack.c.l.b16 %v128
  %v311 = vunpack.c.l.b16 %v129
  %v312 = vunpack.c.l.b16 %v130
  %v313 = vunpack.c.l.b16 %v131
  %v314 = vunpack.c.l.b16 %v132
  %v315 = vunpack.c.l.b16 %v133
  %v316 = vunpack.c.l.b16 %v134
  %v317 = vpack.c.b16 %v299, %v298
  %v318 = vpack.c.b16 %v301, %v300
  %v319 = vpack.c.b16 %v303, %v302
  %v320 = vpack.c.b16 %v305, %v304
  %v321 = vpack.c.b16 %v307, %v306
  %v322 = vpack.c.b16 %v309, %v308
  %v323 = vpack.c.b16 %v311, %v310
  %v324 = vpack.c.b16 %v313, %v312
  %v325 = vpack.c.b16 %v315, %v314
  %v326 = vpack.c.b16 %v316, %v316
  %vm336 = vcmask 154624
  %v338 = vsel %vm336, %v232, 0
  %v341 = vsel %vm336, %v234, 0
  %v344 = vsel %vm336, %v236, 0
  %v347 = vsel %vm336, %v238, 0
  %v350 = vsel %vm336, %v240, 0
  %v353 = vsel %vm336, %v242, 0
  %v356 = vsel %vm336, %v244, 0
  %v359 = vsel %vm336, %v246, 0
  %v362 = vsel %vm336, %v248, 0
  %v365 = vsel %vm336, %v250, 0
  %v368 = vsel %vm336, %v252, 0
  %v371 = vsel %vm336, %v254, 0
  %v374 = vsel %vm336, %v256, 0
  %v377 = vsel %vm336, %v258, 0
  %v380 = vsel %vm336, %v260, 0
  %v383 = vsel %vm336, %v262, 0
  %vm385 = vcmask 1040384
  %vm386 = vcmask 1041408
  %v387 = vsel %vm385, 4294967295, 65535
  %v388 = vsel %vm386, %v387, 0
  %v390 = vand.u32 %v326, %v388
  %392 = vmatprep.subr.bf16.mxu0 0
  %393 = vmatpush1.bf16.msra.mxu0 %v324
  %394 = vmatprep.subr.bf16.mxu0 0
  %395 = vmatpush1.bf16.msra.mxu0 %v323
  %396 = vmatprep.subr.bf16.mxu0 0
  %397 = vmatpush1.bf16.msra.mxu0 %v322
  %398 = vmatprep.subr.bf16.mxu0 0
  %399 = vmatpush1.bf16.msra.mxu0 %v321
  %400 = vmatprep.subr.bf16.mxu0 0
  %401 = vmatpush1.bf16.msra.mxu0 %v320
  %402 = vmatprep.subr.bf16.mxu0 0
  %403 = vmatpush1.bf16.msra.mxu0 %v319
  %404 = vmatprep.subr.bf16.mxu0 0
  %405 = vmatpush1.bf16.msra.mxu0 %v318
  %406 = vmatprep.subr.bf16.mxu0 0
  %407 = vmatpush1.bf16.msra.mxu0 %v317
  %408 = vmatprep.subr.bf16.mxu0 0
  %409 = vmatpush2.bf16.msra.mxu0 0
  %410 = vmatprep.subr.bf16.mxu0 0
  %411 = vmatpush2.bf16.msra.mxu0 0
  %412 = vmatprep.subr.bf16.mxu0 0
  %413 = vmatpush2.bf16.msra.mxu0 0
  %414 = vmatprep.subr.bf16.mxu0 0
  %415 = vmatpush2.bf16.msra.mxu0 0
  %416 = vmatprep.subr.bf16.mxu0 0
  %417 = vmatpush2.bf16.msra.mxu0 0
  %418 = vmatprep.subr.bf16.mxu0 0
  %419 = vmatpush2.bf16.msra.mxu0 0
  %420 = vmatprep.subr.bf16.mxu0 0
  %421 = vmatpush2.bf16.msra.mxu0 %v390
  %422 = vmatprep.subr.bf16.mxu0 0
  %423 = vmatpush2.bf16.msra.mxu0 %v325
  %424 = vmatprep.mubr.bf16.mxu0 %v338
  %425 = vmatmul.mubr.bf16.gmra.mxu0 %v231
  %v426 = vpop.f32.mrf.mxu0
  %v427 = vadd.f32 0.0, %v426
  %v428 = vpop.f32.mrf.mxu0
  %v429 = vpop.f32.mrf.mxu0
  %v430 = vadd.f32 0.0, %v429
  %v431 = vpop.f32.mrf.mxu0
  %432 = vmatprep.mubr.bf16.mxu0 %v341
  %433 = vmatmul.mubr.bf16.gmra.mxu0 %v233
  %v434 = vpop.f32.mrf.mxu0
  %v435 = vadd.f32 0.0, %v434
  %v436 = vpop.f32.mrf.mxu0
  %v437 = vpop.f32.mrf.mxu0
  %v438 = vadd.f32 0.0, %v437
  %v439 = vpop.f32.mrf.mxu0
  %440 = vmatprep.mubr.bf16.mxu0 %v344
  %441 = vmatmul.mubr.bf16.gmra.mxu0 %v235
  %v442 = vpop.f32.mrf.mxu0
  %v443 = vadd.f32 0.0, %v442
  %v444 = vpop.f32.mrf.mxu0
  %v445 = vpop.f32.mrf.mxu0
  %v446 = vadd.f32 0.0, %v445
  %v447 = vpop.f32.mrf.mxu0
  %448 = vmatprep.mubr.bf16.mxu0 %v347
  %449 = vmatmul.mubr.bf16.gmra.mxu0 %v237
  %v450 = vpop.f32.mrf.mxu0
  %v451 = vadd.f32 0.0, %v450
  %v452 = vpop.f32.mrf.mxu0
  %v453 = vpop.f32.mrf.mxu0
  %v454 = vadd.f32 0.0, %v453
  %v455 = vpop.f32.mrf.mxu0
  %456 = vmatprep.mubr.bf16.mxu0 %v350
  %457 = vmatmul.mubr.bf16.gmra.mxu0 %v239
  %v458 = vpop.f32.mrf.mxu0
  %v459 = vadd.f32 0.0, %v458
  %v460 = vpop.f32.mrf.mxu0
  %v461 = vpop.f32.mrf.mxu0
  %v462 = vadd.f32 0.0, %v461
  %v463 = vpop.f32.mrf.mxu0
  %464 = vmatprep.mubr.bf16.mxu0 %v353
  %465 = vmatmul.mubr.bf16.gmra.mxu0 %v241
  %v466 = vpop.f32.mrf.mxu0
  %v467 = vadd.f32 0.0, %v466
  %v468 = vpop.f32.mrf.mxu0
  %v469 = vpop.f32.mrf.mxu0
  %v470 = vadd.f32 0.0, %v469
  %v471 = vpop.f32.mrf.mxu0
  %472 = vmatprep.mubr.bf16.mxu0 %v356
  %473 = vmatmul.mubr.bf16.gmra.mxu0 %v243
  %v474 = vpop.f32.mrf.mxu0
  %v475 = vadd.f32 0.0, %v474
  %v476 = vpop.f32.mrf.mxu0
  %v477 = vpop.f32.mrf.mxu0
  %v478 = vadd.f32 0.0, %v477
  %v479 = vpop.f32.mrf.mxu0
  %480 = vmatprep.mubr.bf16.mxu0 %v359
  %481 = vmatmul.mubr.bf16.gmra.mxu0 %v245
  %v482 = vpop.f32.mrf.mxu0
  %v483 = vadd.f32 0.0, %v482
  %v484 = vpop.f32.mrf.mxu0
  %v485 = vpop.f32.mrf.mxu0
  %v486 = vadd.f32 0.0, %v485
  %v487 = vpop.f32.mrf.mxu0
  %488 = vmatprep.mubr.bf16.mxu0 %v362
  %489 = vmatmul.mubr.bf16.gmra.mxu0 %v247
  %v490 = vpop.f32.mrf.mxu0
  %v491 = vadd.f32 0.0, %v490
  %v492 = vpop.f32.mrf.mxu0
  %v493 = vpop.f32.mrf.mxu0
  %v494 = vadd.f32 0.0, %v493
  %v495 = vpop.f32.mrf.mxu0
  %496 = vmatprep.mubr.bf16.mxu0 %v365
  %497 = vmatmul.mubr.bf16.gmra.mxu0 %v249
  %v498 = vpop.f32.mrf.mxu0
  %v499 = vadd.f32 0.0, %v498
  %v500 = vpop.f32.mrf.mxu0
  %v501 = vpop.f32.mrf.mxu0
  %v502 = vadd.f32 0.0, %v501
  %v503 = vpop.f32.mrf.mxu0
  %504 = vmatprep.mubr.bf16.mxu0 %v368
  %505 = vmatmul.mubr.bf16.gmra.mxu0 %v251
  %v506 = vpop.f32.mrf.mxu0
  %v507 = vadd.f32 0.0, %v506
  %v508 = vpop.f32.mrf.mxu0
  %v509 = vpop.f32.mrf.mxu0
  %v510 = vadd.f32 0.0, %v509
  %v511 = vpop.f32.mrf.mxu0
  %512 = vmatprep.mubr.bf16.mxu0 %v371
  %513 = vmatmul.mubr.bf16.gmra.mxu0 %v253
  %v514 = vpop.f32.mrf.mxu0
  %v515 = vadd.f32 0.0, %v514
  %v516 = vpop.f32.mrf.mxu0
  %v517 = vpop.f32.mrf.mxu0
  %v518 = vadd.f32 0.0, %v517
  %v519 = vpop.f32.mrf.mxu0
  %520 = vmatprep.mubr.bf16.mxu0 %v374
  %521 = vmatmul.mubr.bf16.gmra.mxu0 %v255
  %v522 = vpop.f32.mrf.mxu0
  %v523 = vadd.f32 0.0, %v522
  %v524 = vpop.f32.mrf.mxu0
  %v525 = vpop.f32.mrf.mxu0
  %v526 = vadd.f32 0.0, %v525
  %v527 = vpop.f32.mrf.mxu0
  %528 = vmatprep.mubr.bf16.mxu0 %v377
  %529 = vmatmul.mubr.bf16.gmra.mxu0 %v257
  %v530 = vpop.f32.mrf.mxu0
  %v531 = vadd.f32 0.0, %v530
  %v532 = vpop.f32.mrf.mxu0
  %v533 = vpop.f32.mrf.mxu0
  %v534 = vadd.f32 0.0, %v533
  %v535 = vpop.f32.mrf.mxu0
  %536 = vmatprep.mubr.bf16.mxu0 %v380
  %537 = vmatmul.mubr.bf16.gmra.mxu0 %v259
  %v538 = vpop.f32.mrf.mxu0
  %v539 = vadd.f32 0.0, %v538
  %v540 = vpop.f32.mrf.mxu0
  %v541 = vpop.f32.mrf.mxu0
  %v542 = vadd.f32 0.0, %v541
  %v543 = vpop.f32.mrf.mxu0
  %544 = vmatprep.mubr.bf16.mxu0 %v383
  %545 = vmatmul.mubr.bf16.gmra.mxu0 %v261
  %v546 = vpop.f32.mrf.mxu0
  %v547 = vadd.f32 0.0, %v546
  %v548 = vpop.f32.mrf.mxu0
  %v549 = vpop.f32.mrf.mxu0
  %v550 = vadd.f32 0.0, %v549
  %v551 = vpop.f32.mrf.mxu0
  %552 = vdwg.mxu0
  %v553 = vadd.f32 %v52, %v427
  %v554 = vadd.f32 %v53, %v430
  %v555 = vadd.f32 %v54, %v435
  %v556 = vadd.f32 %v55, %v438
  %v557 = vadd.f32 %v56, %v443
  %v558 = vadd.f32 %v57, %v446
  %v559 = vadd.f32 %v58, %v451
  %v560 = vadd.f32 %v59, %v454
  %v561 = vadd.f32 %v60, %v459
  %v562 = vadd.f32 %v61, %v462
  %v563 = vadd.f32 %v62, %v467
  %v564 = vadd.f32 %v63, %v470
  %v565 = vadd.f32 %v64, %v475
  %v566 = vadd.f32 %v65, %v478
  %v567 = vadd.f32 %v66, %v483
  %v568 = vadd.f32 %v67, %v486
  %v569 = vadd.f32 %v68, %v491
  %v570 = vadd.f32 %v69, %v494
  %v571 = vadd.f32 %v70, %v499
  %v572 = vadd.f32 %v71, %v502
  %v573 = vadd.f32 %v72, %v507
  %v574 = vadd.f32 %v73, %v510
  %v575 = vadd.f32 %v74, %v515
  %v576 = vadd.f32 %v75, %v518
  %v577 = vadd.f32 %v76, %v523
  %v578 = vadd.f32 %v77, %v526
  %v579 = vadd.f32 %v78, %v531
  %v580 = vadd.f32 %v79, %v534
  %v581 = vadd.f32 %v80, %v539
  %v582 = vadd.f32 %v81, %v542
  %v583 = vadd.f32 %v82, %v547
  %v584 = vadd.f32 %v83, %v550
  %vm585 = vcmask 523264
  %586 = vst.msk [vmem:[#allocation2] sm:$0xff] %vm585, %v553
  %587 = vst.msk [vmem:[#allocation2 + $0x8] sm:$0xff] %vm585, %v554
  %588 = vst.msk [vmem:[#allocation2 + $0x10] sm:$0xff] %vm585, %v555
  %589 = vst.msk [vmem:[#allocation2 + $0x18] sm:$0xff] %vm585, %v556
  %590 = vst.msk [vmem:[#allocation2 + $0x20] sm:$0xff] %vm585, %v557
  %591 = vst.msk [vmem:[#allocation2 + $0x28] sm:$0xff] %vm585, %v558
  %592 = vst.msk [vmem:[#allocation2 + $0x30] sm:$0xff] %vm585, %v559
  %593 = vst.msk [vmem:[#allocation2 + $0x38] sm:$0xff] %vm585, %v560
  %594 = vst.msk [vmem:[#allocation2 + $0x40] sm:$0xff] %vm585, %v561
  %595 = vst.msk [vmem:[#allocation2 + $0x48] sm:$0xff] %vm585, %v562
  %596 = vst.msk [vmem:[#allocation2 + $0x50] sm:$0xff] %vm585, %v563
  %597 = vst.msk [vmem:[#allocation2 + $0x58] sm:$0xff] %vm585, %v564
  %598 = vst.msk [vmem:[#allocation2 + $0x60] sm:$0xff] %vm585, %v565
  %599 = vst.msk [vmem:[#allocation2 + $0x68] sm:$0xff] %vm585, %v566
  %600 = vst.msk [vmem:[#allocation2 + $0x70] sm:$0xff] %vm585, %v567
  %601 = vst.msk [vmem:[#allocation2 + $0x78] sm:$0xff] %vm585, %v568
  %602 = vst.msk [vmem:[#allocation2 + $0x80] sm:$0xff] %vm585, %v569
  %603 = vst.msk [vmem:[#allocation2 + $0x88] sm:$0xff] %vm585, %v570
  %604 = vst.msk [vmem:[#allocation2 + $0x90] sm:$0xff] %vm585, %v571
  %605 = vst.msk [vmem:[#allocation2 + $0x98] sm:$0xff] %vm585, %v572
  %606 = vst.msk [vmem:[#allocation2 + $0xa0] sm:$0xff] %vm585, %v573
  %607 = vst.msk [vmem:[#allocation2 + $0xa8] sm:$0xff] %vm585, %v574
  %608 = vst.msk [vmem:[#allocation2 + $0xb0] sm:$0xff] %vm585, %v575
  %609 = vst.msk [vmem:[#allocation2 + $0xb8] sm:$0xff] %vm585, %v576
  %610 = vst.msk [vmem:[#allocation2 + $0xc0] sm:$0xff] %vm585, %v577
  %611 = vst.msk [vmem:[#allocation2 + $0xc8] sm:$0xff] %vm585, %v578
  %612 = vst.msk [vmem:[#allocation2 + $0xd0] sm:$0xff] %vm585, %v579
  %613 = vst.msk [vmem:[#allocation2 + $0xd8] sm:$0xff] %vm585, %v580
  %614 = vst.msk [vmem:[#allocation2 + $0xe0] sm:$0xff] %vm585, %v581
  %615 = vst.msk [vmem:[#allocation2 + $0xe8] sm:$0xff] %vm585, %v582
  %616 = vst.msk [vmem:[#allocation2 + $0xf0] sm:$0xff] %vm585, %v583
  %617 = vst.msk [vmem:[#allocation2 + $0xf8] sm:$0xff] %vm585, %v584
  // Predicated region
  $region18: #{set_target.17} parent=0 // pred_check
    %p618 = pneg %p15
  $region19: #{set_target.17} parent=0 // pred_check_branch
    %620 = sbr.rel (%p618) target = $region21
  $region20: #{set_target.17} parent=0 // pred_region
    %v621 = vld [vmem:[#allocation2] sm:$0xff]
    %v622 = vld [vmem:[#allocation2 + $0x8] sm:$0xff]
    %v623 = vld [vmem:[#allocation2 + $0x10] sm:$0xff]
    %v624 = vld [vmem:[#allocation2 + $0x18] sm:$0xff]
    %v625 = vld [vmem:[#allocation2 + $0x20] sm:$0xff]
    %v626 = vld [vmem:[#allocation2 + $0x28] sm:$0xff]
    %v627 = vld [vmem:[#allocation2 + $0x30] sm:$0xff]
    %v628 = vld [vmem:[#allocation2 + $0x38] sm:$0xff]
    %v629 = vld [vmem:[#allocation2 + $0x40] sm:$0xff]
    %v630 = vld [vmem:[#allocation2 + $0x48] sm:$0xff]
    %v631 = vld [vmem:[#allocation2 + $0x50] sm:$0xff]
    %v632 = vld [vmem:[#allocation2 + $0x58] sm:$0xff]
    %v633 = vld [vmem:[#allocation2 + $0x60] sm:$0xff]
    %v634 = vld [vmem:[#allocation2 + $0x68] sm:$0xff]
    %v635 = vld [vmem:[#allocation2 + $0x70] sm:$0xff]
    %v636 = vld [vmem:[#allocation2 + $0x78] sm:$0xff]
    %v637 = vld [vmem:[#allocation2 + $0x80] sm:$0xff]
    %v638 = vld [vmem:[#allocation2 + $0x88] sm:$0xff]
    %v639 = vld [vmem:[#allocation2 + $0x90] sm:$0xff]
    %v640 = vld [vmem:[#allocation2 + $0x98] sm:$0xff]
    %v641 = vld [vmem:[#allocation2 + $0xa0] sm:$0xff]
    %v642 = vld [vmem:[#allocation2 + $0xa8] sm:$0xff]
    %v643 = vld [vmem:[#allocation2 + $0xb0] sm:$0xff]
    %v644 = vld [vmem:[#allocation2 + $0xb8] sm:$0xff]
    %v645 = vld [vmem:[#allocation2 + $0xc0] sm:$0xff]
    %v646 = vld [vmem:[#allocation2 + $0xc8] sm:$0xff]
    %v647 = vld [vmem:[#allocation2 + $0xd0] sm:$0xff]
    %v648 = vld [vmem:[#allocation2 + $0xd8] sm:$0xff]
    %v649 = vld [vmem:[#allocation2 + $0xe0] sm:$0xff]
    %v650 = vld [vmem:[#allocation2 + $0xe8] sm:$0xff]
    %v651 = vld [vmem:[#allocation2 + $0xf0] sm:$0xff]
    %v652 = vld [vmem:[#allocation2 + $0xf8] sm:$0xff]
    %v653 = vld [vmem:[%s2] sm:$0x1]
    %v655 = vlaneseq
    %v656 = vshrl.u32 %v655, 7
    %v657 = vsub.s32 0, %v656
    %v658 = vrot.slane %v653, %v657
    %v660 = vadd.f32 %v621, %v658
    %v661 = vadd.f32 %v622, %v658
    %v662 = vadd.f32 %v623, %v658
    %v663 = vadd.f32 %v624, %v658
    %v664 = vadd.f32 %v625, %v658
    %v665 = vadd.f32 %v626, %v658
    %v666 = vadd.f32 %v627, %v658
    %v667 = vadd.f32 %v628, %v658
    %v668 = vadd.f32 %v629, %v658
    %v669 = vadd.f32 %v630, %v658
    %v670 = vadd.f32 %v631, %v658
    %v671 = vadd.f32 %v632, %v658
    %v672 = vadd.f32 %v633, %v658
    %v673 = vadd.f32 %v634, %v658
    %v674 = vadd.f32 %v635, %v658
    %v675 = vadd.f32 %v636, %v658
    %v676 = vadd.f32 %v637, %v658
    %v677 = vadd.f32 %v638, %v658
    %v678 = vadd.f32 %v639, %v658
    %v679 = vadd.f32 %v640, %v658
    %v680 = vadd.f32 %v641, %v658
    %v681 = vadd.f32 %v642, %v658
    %v682 = vadd.f32 %v643, %v658
    %v683 = vadd.f32 %v644, %v658
    %v684 = vadd.f32 %v645, %v658
    %v685 = vadd.f32 %v646, %v658
    %v686 = vadd.f32 %v647, %v658
    %v687 = vadd.f32 %v648, %v658
    %v688 = vadd.f32 %v649, %v658
    %v689 = vadd.f32 %v650, %v658
    %v690 = vadd.f32 %v651, %v658
    %v691 = vadd.f32 %v652, %v658
    %v692 = vpack.c.bf16 %v661, %v660
    %v693 = vpack.c.bf16 %v663, %v662
    %v694 = vpack.c.bf16 %v665, %v664
    %v695 = vpack.c.bf16 %v667, %v666
    %v696 = vpack.c.bf16 %v669, %v668
    %v697 = vpack.c.bf16 %v671, %v670
    %v698 = vpack.c.bf16 %v673, %v672
    %v699 = vpack.c.bf16 %v675, %v674
    %v700 = vpack.c.bf16 %v677, %v676
    %v701 = vpack.c.bf16 %v679, %v678
    %v702 = vpack.c.bf16 %v681, %v680
    %v703 = vpack.c.bf16 %v683, %v682
    %v704 = vpack.c.bf16 %v685, %v684
    %v705 = vpack.c.bf16 %v687, %v686
    %v706 = vpack.c.bf16 %v689, %v688
    %v707 = vpack.c.bf16 %v691, %v690
    %v724 = vunpack.c.l.b16 %v692
    %v725 = vunpack.c.h.b16 %v692
    %v726 = vunpack.c.l.b16 %v693
    %v727 = vunpack.c.h.b16 %v693
    %v728 = vunpack.c.l.b16 %v694
    %v729 = vunpack.c.h.b16 %v694
    %v730 = vunpack.c.l.b16 %v695
    %v731 = vunpack.c.h.b16 %v695
    %v732 = vunpack.c.l.b16 %v696
    %v733 = vunpack.c.h.b16 %v696
    %v734 = vunpack.c.l.b16 %v697
    %v735 = vunpack.c.h.b16 %v697
    %v736 = vunpack.c.l.b16 %v698
    %v737 = vunpack.c.h.b16 %v698
    %v738 = vunpack.c.l.b16 %v699
    %v739 = vunpack.c.h.b16 %v699
    %v740 = vunpack.c.l.b16 %v700
    %v741 = vunpack.c.h.b16 %v700
    %v742 = vunpack.c.l.b16 %v701
    %v743 = vunpack.c.h.b16 %v701
    %v744 = vunpack.c.l.b16 %v702
    %v745 = vunpack.c.h.b16 %v702
    %v746 = vunpack.c.l.b16 %v703
    %v747 = vunpack.c.h.b16 %v703
    %v748 = vunpack.c.l.b16 %v704
    %v749 = vunpack.c.h.b16 %v704
    %v750 = vunpack.c.l.b16 %v705
    %v751 = vunpack.c.h.b16 %v705
    %v752 = vunpack.c.l.b16 %v706
    %v753 = vunpack.c.h.b16 %v706
    %v754 = vunpack.c.l.b16 %v707
    %v755 = vunpack.c.h.b16 %v707
    %v756 = vpack.c.b16 %v724, %v724
    %v757 = vpack.c.b16 %v725, %v725
    %v758 = vpack.c.b16 %v726, %v726
    %v759 = vpack.c.b16 %v727, %v727
    %v760 = vpack.c.b16 %v728, %v728
    %v761 = vpack.c.b16 %v729, %v729
    %v762 = vpack.c.b16 %v730, %v730
    %v763 = vpack.c.b16 %v731, %v731
    %v764 = vpack.c.b16 %v732, %v732
    %v765 = vpack.c.b16 %v733, %v733
    %v766 = vpack.c.b16 %v734, %v734
    %v767 = vpack.c.b16 %v735, %v735
    %v768 = vpack.c.b16 %v736, %v736
    %v769 = vpack.c.b16 %v737, %v737
    %v770 = vpack.c.b16 %v738, %v738
    %v771 = vpack.c.b16 %v739, %v739
    %v772 = vpack.c.b16 %v740, %v740
    %v773 = vpack.c.b16 %v741, %v741
    %v774 = vpack.c.b16 %v742, %v742
    %v775 = vpack.c.b16 %v743, %v743
    %v776 = vpack.c.b16 %v744, %v744
    %v777 = vpack.c.b16 %v745, %v745
    %v778 = vpack.c.b16 %v746, %v746
    %v779 = vpack.c.b16 %v747, %v747
    %v780 = vpack.c.b16 %v748, %v748
    %v781 = vpack.c.b16 %v749, %v749
    %v782 = vpack.c.b16 %v750, %v750
    %v783 = vpack.c.b16 %v751, %v751
    %v784 = vpack.c.b16 %v752, %v752
    %v785 = vpack.c.b16 %v753, %v753
    %v786 = vpack.c.b16 %v754, %v754
    %v787 = vpack.c.b16 %v755, %v755
    %vm820 = vcmask 519168
    %821 = vst.msk [vmem:[%s3] sm:$0xf] %vm820, %v756
    %822 = vst.msk [vmem:[%s3 + $0x4] sm:$0xf] %vm820, %v757
    %823 = vst.msk [vmem:[%s3 + $0x8] sm:$0xf] %vm820, %v758
    %824 = vst.msk [vmem:[%s3 + $0xc] sm:$0xf] %vm820, %v759
    %825 = vst.msk [vmem:[%s3 + $0x10] sm:$0xf] %vm820, %v760
    %826 = vst.msk [vmem:[%s3 + $0x14] sm:$0xf] %vm820, %v761
    %827 = vst.msk [vmem:[%s3 + $0x18] sm:$0xf] %vm820, %v762
    %828 = vst.msk [vmem:[%s3 + $0x1c] sm:$0xf] %vm820, %v763
    %829 = vst.msk [vmem:[%s3 + $0x20] sm:$0xf] %vm820, %v764
    %830 = vst.msk [vmem:[%s3 + $0x24] sm:$0xf] %vm820, %v765
    %831 = vst.msk [vmem:[%s3 + $0x28] sm:$0xf] %vm820, %v766
    %832 = vst.msk [vmem:[%s3 + $0x2c] sm:$0xf] %vm820, %v767
    %833 = vst.msk [vmem:[%s3 + $0x30] sm:$0xf] %vm820, %v768
    %834 = vst.msk [vmem:[%s3 + $0x34] sm:$0xf] %vm820, %v769
    %835 = vst.msk [vmem:[%s3 + $0x38] sm:$0xf] %vm820, %v770
    %836 = vst.msk [vmem:[%s3 + $0x3c] sm:$0xf] %vm820, %v771
    %837 = vst.msk [vmem:[%s3 + $0x40] sm:$0xf] %vm820, %v772
    %838 = vst.msk [vmem:[%s3 + $0x44] sm:$0xf] %vm820, %v773
    %839 = vst.msk [vmem:[%s3 + $0x48] sm:$0xf] %vm820, %v774
    %840 = vst.msk [vmem:[%s3 + $0x4c] sm:$0xf] %vm820, %v775
    %841 = vst.msk [vmem:[%s3 + $0x50] sm:$0xf] %vm820, %v776
    %842 = vst.msk [vmem:[%s3 + $0x54] sm:$0xf] %vm820, %v777
    %843 = vst.msk [vmem:[%s3 + $0x58] sm:$0xf] %vm820, %v778
    %844 = vst.msk [vmem:[%s3 + $0x5c] sm:$0xf] %vm820, %v779
    %845 = vst.msk [vmem:[%s3 + $0x60] sm:$0xf] %vm820, %v780
    %846 = vst.msk [vmem:[%s3 + $0x64] sm:$0xf] %vm820, %v781
    %847 = vst.msk [vmem:[%s3 + $0x68] sm:$0xf] %vm820, %v782
    %848 = vst.msk [vmem:[%s3 + $0x6c] sm:$0xf] %vm820, %v783
    %849 = vst.msk [vmem:[%s3 + $0x70] sm:$0xf] %vm820, %v784
    %850 = vst.msk [vmem:[%s3 + $0x74] sm:$0xf] %vm820, %v785
    %851 = vst.msk [vmem:[%s3 + $0x78] sm:$0xf] %vm820, %v786
    %852 = vst.msk [vmem:[%s3 + $0x7c] sm:$0xf] %vm820, %v787
  $region21: #{set_target.17} parent=0 // pred_fallthru
    _
  // Predicated region
  $region22: #{set_target.17} parent=0 // pred_check
    _
  $region23: #{set_target.17} parent=0 // pred_check_branch
    %854 = sbr.rel (0) target = $region25
  $region24: #{set_target.17} parent=0 // pred_region
    _
  $region25: #{set_target.17} parent=0 // pred_fallthru
    _
  // Predicated region
  $region26: #{set_target.17} parent=0 // pred_check
    _
  $region27: #{set_target.17} parent=0 // pred_check_branch
    %856 = sbr.rel (0) target = $region29
  $region28: #{set_target.17} parent=0 // pred_region
    _
  $region29: #{set_target.17} parent=0 // pred_fallthru
    _

// kernel: set_target.21
$region0: #{set_target.21}
  #allocation0 [shape = 'u32[]', space=smem, size = 0x4, offset = 0x4, fixed_abs, tag = 'smem constant byte address 0x4 - core index']
  #allocation1 [shape = 'u32[144,128]{1,0:T(1,128)}', space=vmem, size = 0x12000, scoped, tag = 'internal scratch']
  #allocation2 [shape = 'f32[256,32]{1,0:T(8,128)}', space=vmem, size = 0x20000, scoped, tag = 'scratch operand']
  %s0 = inlined_call_operand.vmem [shape: bf16[1,256,64], index: 0, kind: input, shape index: {}]
  %s1 = inlined_call_operand.vmem [shape: bf16[1,64,32], index: 1, kind: input, shape index: {}]
  %s2 = inlined_call_operand.vmem [shape: f32[1,32], index: 2, kind: input, shape index: {}]
  %s3 = inlined_call_operand.vmem [shape: bf16[1,256,32], index: 3, kind: output, shape index: {}]
  %s4 = sld [smem:[#allocation0]]
  $region30: #{set_target.21} parent=0
    _
  %s6 = ssub.s32 1, %s4
  %s7 = scalar_select 0, %s6, %s4
  // Predicated region
  $region2: #{set_target.21} parent=0 // pred_check
    _
  $region3: #{set_target.21} parent=0 // pred_check_branch
    %9 = sbr.rel (0) target = $region5
  $region4: #{set_target.21} parent=0 // pred_region
    _
  $region5: #{set_target.21} parent=0 // pred_fallthru
    _
  // Predicated region
  $region6: #{set_target.21} parent=0 // pred_check
    _
  $region7: #{set_target.21} parent=0 // pred_check_branch
    %11 = sbr.rel (0) target = $region9
  $region8: #{set_target.21} parent=0 // pred_region
    _
  $region9: #{set_target.21} parent=0 // pred_fallthru
    _
  // Predicated region
  $region10: #{set_target.21} parent=0 // pred_check
    _
  $region11: #{set_target.21} parent=0 // pred_check_branch
    %13 = sbr.rel (0) target = $region13
  $region12: #{set_target.21} parent=0 // pred_region
    _
  $region13: #{set_target.21} parent=0 // pred_fallthru
    _
  %p15 = scmp.eq.s32.totalorder 0, 0
  // Predicated region
  $region14: #{set_target.21} parent=0 // pred_check
    %p16 = pneg %p15
  $region15: #{set_target.21} parent=0 // pred_check_branch
    %18 = sbr.rel (%p16) target = $region17
  $region16: #{set_target.21} parent=0 // pred_region
    %vm19 = vcmask 261120
    %20 = vst.msk [vmem:[#allocation2] sm:$0xff] %vm19, 0.0
    %21 = vst.msk [vmem:[#allocation2 + $0x8] sm:$0xff] %vm19, 0.0
    %22 = vst.msk [vmem:[#allocation2 + $0x10] sm:$0xff] %vm19, 0.0
    %23 = vst.msk [vmem:[#allocation2 + $0x18] sm:$0xff] %vm19, 0.0
    %24 = vst.msk [vmem:[#allocation2 + $0x20] sm:$0xff] %vm19, 0.0
    %25 = vst.msk [vmem:[#allocation2 + $0x28] sm:$0xff] %vm19, 0.0
    %26 = vst.msk [vmem:[#allocation2 + $0x30] sm:$0xff] %vm19, 0.0
    %27 = vst.msk [vmem:[#allocation2 + $0x38] sm:$0xff] %vm19, 0.0
    %28 = vst.msk [vmem:[#allocation2 + $0x40] sm:$0xff] %vm19, 0.0
    %29 = vst.msk [vmem:[#allocation2 + $0x48] sm:$0xff] %vm19, 0.0
    %30 = vst.msk [vmem:[#allocation2 + $0x50] sm:$0xff] %vm19, 0.0
    %31 = vst.msk [vmem:[#allocation2 + $0x58] sm:$0xff] %vm19, 0.0
    %32 = vst.msk [vmem:[#allocation2 + $0x60] sm:$0xff] %vm19, 0.0
    %33 = vst.msk [vmem:[#allocation2 + $0x68] sm:$0xff] %vm19, 0.0
    %34 = vst.msk [vmem:[#allocation2 + $0x70] sm:$0xff] %vm19, 0.0
    %35 = vst.msk [vmem:[#allocation2 + $0x78] sm:$0xff] %vm19, 0.0
    %36 = vst.msk [vmem:[#allocation2 + $0x80] sm:$0xff] %vm19, 0.0
    %37 = vst.msk [vmem:[#allocation2 + $0x88] sm:$0xff] %vm19, 0.0
    %38 = vst.msk [vmem:[#allocation2 + $0x90] sm:$0xff] %vm19, 0.0
    %39 = vst.msk [vmem:[#allocation2 + $0x98] sm:$0xff] %vm19, 0.0
    %40 = vst.msk [vmem:[#allocation2 + $0xa0] sm:$0xff] %vm19, 0.0
    %41 = vst.msk [vmem:[#allocation2 + $0xa8] sm:$0xff] %vm19, 0.0
    %42 = vst.msk [vmem:[#allocation2 + $0xb0] sm:$0xff] %vm19, 0.0
    %43 = vst.msk [vmem:[#allocation2 + $0xb8] sm:$0xff] %vm19, 0.0
    %44 = vst.msk [vmem:[#allocation2 + $0xc0] sm:$0xff] %vm19, 0.0
    %45 = vst.msk [vmem:[#allocation2 + $0xc8] sm:$0xff] %vm19, 0.0
    %46 = vst.msk [vmem:[#allocation2 + $0xd0] sm:$0xff] %vm19, 0.0
    %47 = vst.msk [vmem:[#allocation2 + $0xd8] sm:$0xff] %vm19, 0.0
    %48 = vst.msk [vmem:[#allocation2 + $0xe0] sm:$0xff] %vm19, 0.0
    %49 = vst.msk [vmem:[#allocation2 + $0xe8] sm:$0xff] %vm19, 0.0
    %50 = vst.msk [vmem:[#allocation2 + $0xf0] sm:$0xff] %vm19, 0.0
    %51 = vst.msk [vmem:[#allocation2 + $0xf8] sm:$0xff] %vm19, 0.0
  $region17: #{set_target.21} parent=0 // pred_fallthru
    _
  %v52 = vld [vmem:[#allocation2] sm:$0xff]
  %v53 = vld [vmem:[#allocation2 + $0x8] sm:$0xff]
  %v54 = vld [vmem:[#allocation2 + $0x10] sm:$0xff]
  %v55 = vld [vmem:[#allocation2 + $0x18] sm:$0xff]
  %v56 = vld [vmem:[#allocation2 + $0x20] sm:$0xff]
  %v57 = vld [vmem:[#allocation2 + $0x28] sm:$0xff]
  %v58 = vld [vmem:[#allocation2 + $0x30] sm:$0xff]
  %v59 = vld [vmem:[#allocation2 + $0x38] sm:$0xff]
  %v60 = vld [vmem:[#allocation2 + $0x40] sm:$0xff]
  %v61 = vld [vmem:[#allocation2 + $0x48] sm:$0xff]
  %v62 = vld [vmem:[#allocation2 + $0x50] sm:$0xff]
  %v63 = vld [vmem:[#allocation2 + $0x58] sm:$0xff]
  %v64 = vld [vmem:[#allocation2 + $0x60] sm:$0xff]
  %v65 = vld [vmem:[#allocation2 + $0x68] sm:$0xff]
  %v66 = vld [vmem:[#allocation2 + $0x70] sm:$0xff]
  %v67 = vld [vmem:[#allocation2 + $0x78] sm:$0xff]
  %v68 = vld [vmem:[#allocation2 + $0x80] sm:$0xff]
  %v69 = vld [vmem:[#allocation2 + $0x88] sm:$0xff]
  %v70 = vld [vmem:[#allocation2 + $0x90] sm:$0xff]
  %v71 = vld [vmem:[#allocation2 + $0x98] sm:$0xff]
  %v72 = vld [vmem:[#allocation2 + $0xa0] sm:$0xff]
  %v73 = vld [vmem:[#allocation2 + $0xa8] sm:$0xff]
  %v74 = vld [vmem:[#allocation2 + $0xb0] sm:$0xff]
  %v75 = vld [vmem:[#allocation2 + $0xb8] sm:$0xff]
  %v76 = vld [vmem:[#allocation2 + $0xc0] sm:$0xff]
  %v77 = vld [vmem:[#allocation2 + $0xc8] sm:$0xff]
  %v78 = vld [vmem:[#allocation2 + $0xd0] sm:$0xff]
  %v79 = vld [vmem:[#allocation2 + $0xd8] sm:$0xff]
  %v80 = vld [vmem:[#allocation2 + $0xe0] sm:$0xff]
  %v81 = vld [vmem:[#allocation2 + $0xe8] sm:$0xff]
  %v82 = vld [vmem:[#allocation2 + $0xf0] sm:$0xff]
  %v83 = vld [vmem:[#allocation2 + $0xf8] sm:$0xff]
  %v84 = vld [vmem:[%s0] sm:$0xf]
  %v85 = vld [vmem:[%s0 + $0x4] sm:$0xf]
  %v86 = vld [vmem:[%s0 + $0x8] sm:$0xf]
  %v87 = vld [vmem:[%s0 + $0xc] sm:$0xf]
  %v88 = vld [vmem:[%s0 + $0x10] sm:$0xf]
  %v89 = vld [vmem:[%s0 + $0x14] sm:$0xf]
  %v90 = vld [vmem:[%s0 + $0x18] sm:$0xf]
  %v91 = vld [vmem:[%s0 + $0x1c] sm:$0xf]
  %v92 = vld [vmem:[%s0 + $0x20] sm:$0xf]
  %v93 = vld [vmem:[%s0 + $0x24] sm:$0xf]
  %v94 = vld [vmem:[%s0 + $0x28] sm:$0xf]
  %v95 = vld [vmem:[%s0 + $0x2c] sm:$0xf]
  %v96 = vld [vmem:[%s0 + $0x30] sm:$0xf]
  %v97 = vld [vmem:[%s0 + $0x34] sm:$0xf]
  %v98 = vld [vmem:[%s0 + $0x38] sm:$0xf]
  %v99 = vld [vmem:[%s0 + $0x3c] sm:$0xf]
  %v100 = vld [vmem:[%s0 + $0x40] sm:$0xf]
  %v101 = vld [vmem:[%s0 + $0x44] sm:$0xf]
  %v102 = vld [vmem:[%s0 + $0x48] sm:$0xf]
  %v103 = vld [vmem:[%s0 + $0x4c] sm:$0xf]
  %v104 = vld [vmem:[%s0 + $0x50] sm:$0xf]
  %v105 = vld [vmem:[%s0 + $0x54] sm:$0xf]
  %v106 = vld [vmem:[%s0 + $0x58] sm:$0xf]
  %v107 = vld [vmem:[%s0 + $0x5c] sm:$0xf]
  %v108 = vld [vmem:[%s0 + $0x60] sm:$0xf]
  %v109 = vld [vmem:[%s0 + $0x64] sm:$0xf]
  %v110 = vld [vmem:[%s0 + $0x68] sm:$0xf]
  %v111 = vld [vmem:[%s0 + $0x6c] sm:$0xf]
  %v112 = vld [vmem:[%s0 + $0x70] sm:$0xf]
  %v113 = vld [vmem:[%s0 + $0x74] sm:$0xf]
  %v114 = vld [vmem:[%s0 + $0x78] sm:$0xf]
  %v115 = vld [vmem:[%s0 + $0x7c] sm:$0xf]
  %v116 = vld [vmem:[%s1] sm:$0xf]
  %v117 = vld [vmem:[%s1 + $0x4] sm:$0xf]
  %v118 = vld [vmem:[%s1 + $0x8] sm:$0xf]
  %v119 = vld [vmem:[%s1 + $0xc] sm:$0xf]
  %v120 = vld [vmem:[%s1 + $0x10] sm:$0xf]
  %v121 = vld [vmem:[%s1 + $0x14] sm:$0xf]
  %v122 = vld [vmem:[%s1 + $0x18] sm:$0xf]
  %v123 = vld [vmem:[%s1 + $0x1c] sm:$0xf]
  %v156 = vunpack.c.l.b16 %v84
  %v157 = vunpack.c.l.b16 %v85
  %v158 = vunpack.c.l.b16 %v86
  %v159 = vunpack.c.l.b16 %v87
  %v160 = vunpack.c.l.b16 %v88
  %v161 = vunpack.c.l.b16 %v89
  %v162 = vunpack.c.l.b16 %v90
  %v163 = vunpack.c.l.b16 %v91
  %v164 = vunpack.c.l.b16 %v92
  %v165 = vunpack.c.l.b16 %v93
  %v166 = vunpack.c.l.b16 %v94
  %v167 = vunpack.c.l.b16 %v95
  %v168 = vunpack.c.l.b16 %v96
  %v169 = vunpack.c.l.b16 %v97
  %v170 = vunpack.c.l.b16 %v98
  %v171 = vunpack.c.l.b16 %v99
  %v172 = vunpack.c.l.b16 %v100
  %v173 = vunpack.c.l.b16 %v101
  %v174 = vunpack.c.l.b16 %v102
  %v175 = vunpack.c.l.b16 %v103
  %v176 = vunpack.c.l.b16 %v104
  %v177 = vunpack.c.l.b16 %v105
  %v178 = vunpack.c.l.b16 %v106
  %v179 = vunpack.c.l.b16 %v107
  %v180 = vunpack.c.l.b16 %v108
  %v181 = vunpack.c.l.b16 %v109
  %v182 = vunpack.c.l.b16 %v110
  %v183 = vunpack.c.l.b16 %v111
  %v184 = vunpack.c.l.b16 %v112
  %v185 = vunpack.c.l.b16 %v113
  %v186 = vunpack.c.l.b16 %v114
  %v187 = vunpack.c.l.b16 %v115
  %v188 = vpack.c.b16 %v157, %v156
  %v189 = vpack.c.b16 %v159, %v158
  %v190 = vpack.c.b16 %v161, %v160
  %v191 = vpack.c.b16 %v163, %v162
  %v192 = vpack.c.b16 %v165, %v164
  %v193 = vpack.c.b16 %v167, %v166
  %v194 = vpack.c.b16 %v169, %v168
  %v195 = vpack.c.b16 %v171, %v170
  %v196 = vpack.c.b16 %v173, %v172
  %v197 = vpack.c.b16 %v175, %v174
  %v198 = vpack.c.b16 %v177, %v176
  %v199 = vpack.c.b16 %v179, %v178
  %v200 = vpack.c.b16 %v181, %v180
  %v201 = vpack.c.b16 %v183, %v182
  %v202 = vpack.c.b16 %v185, %v184
  %v203 = vpack.c.b16 %v187, %v186
  %v212 = vunpack.c.l.b16 %v116
  %v213 = vunpack.c.l.b16 %v117
  %v214 = vunpack.c.l.b16 %v118
  %v215 = vunpack.c.l.b16 %v119
  %v216 = vunpack.c.l.b16 %v120
  %v217 = vunpack.c.l.b16 %v121
  %v218 = vunpack.c.l.b16 %v122
  %v219 = vunpack.c.l.b16 %v123
  %v220 = vpack.c.b16 %v213, %v212
  %v221 = vpack.c.b16 %v215, %v214
  %v222 = vpack.c.b16 %v217, %v216
  %v223 = vpack.c.b16 %v219, %v218
  %vm228 = vcmask 523264
  %v230 = vsel %vm228, %v188, 0
  %v233 = vsel %vm228, %v189, 0
  %v236 = vsel %vm228, %v190, 0
  %v239 = vsel %vm228, %v191, 0
  %v242 = vsel %vm228, %v192, 0
  %v245 = vsel %vm228, %v193, 0
  %v248 = vsel %vm228, %v194, 0
  %v251 = vsel %vm228, %v195, 0
  %v254 = vsel %vm228, %v196, 0
  %v257 = vsel %vm228, %v197, 0
  %v260 = vsel %vm228, %v198, 0
  %v263 = vsel %vm228, %v199, 0
  %v266 = vsel %vm228, %v200, 0
  %v269 = vsel %vm228, %v201, 0
  %v272 = vsel %vm228, %v202, 0
  %v275 = vsel %vm228, %v203, 0
  %277 = vmatprep.subr.bf16.mxu0 0
  %278 = vmatpush1.bf16.msra.mxu0 0
  %279 = vmatprep.subr.bf16.mxu0 0
  %280 = vmatpush1.bf16.msra.mxu0 0
  %281 = vmatprep.subr.bf16.mxu0 0
  %282 = vmatpush1.bf16.msra.mxu0 0
  %283 = vmatprep.subr.bf16.mxu0 0
  %284 = vmatpush1.bf16.msra.mxu0 0
  %285 = vmatprep.subr.bf16.mxu0 0
  %286 = vmatpush1.bf16.msra.mxu0 %v223
  %287 = vmatprep.subr.bf16.mxu0 0
  %288 = vmatpush1.bf16.msra.mxu0 %v222
  %289 = vmatprep.subr.bf16.mxu0 0
  %290 = vmatpush1.bf16.msra.mxu0 %v221
  %291 = vmatprep.subr.bf16.mxu0 0
  %292 = vmatpush1.bf16.msra.mxu0 %v220
  %293 = vmatprep.subr.bf16.mxu0 0
  %294 = vmatpush2.bf16.msra.mxu0 0
  %295 = vmatprep.subr.bf16.mxu0 0
  %296 = vmatpush2.bf16.msra.mxu0 0
  %297 = vmatprep.subr.bf16.mxu0 0
  %298 = vmatpush2.bf16.msra.mxu0 0
  %299 = vmatprep.subr.bf16.mxu0 0
  %300 = vmatpush2.bf16.msra.mxu0 0
  %301 = vmatprep.subr.bf16.mxu0 0
  %302 = vmatpush2.bf16.msra.mxu0 0
  %303 = vmatprep.subr.bf16.mxu0 0
  %304 = vmatpush2.bf16.msra.mxu0 0
  %305 = vmatprep.subr.bf16.mxu0 0
  %306 = vmatpush2.bf16.msra.mxu0 0
  %307 = vmatprep.subr.bf16.mxu0 0
  %308 = vmatpush2.bf16.msra.mxu0 0
  %309 = vmatprep.mubr.bf16.mxu0 0
  %310 = vmatmul.mubr.bf16.gmra.mxu0 %v230
  %v311 = vpop.f32.mrf.mxu0
  %v312 = vadd.f32 0.0, %v311
  %v313 = vpop.f32.mrf.mxu0
  %v314 = vpop.f32.mrf.mxu0
  %v315 = vadd.f32 0.0, %v314
  %v316 = vpop.f32.mrf.mxu0
  %317 = vmatprep.mubr.bf16.mxu0 0
  %318 = vmatmul.mubr.bf16.gmra.mxu0 %v233
  %v319 = vpop.f32.mrf.mxu0
  %v320 = vadd.f32 0.0, %v319
  %v321 = vpop.f32.mrf.mxu0
  %v322 = vpop.f32.mrf.mxu0
  %v323 = vadd.f32 0.0, %v322
  %v324 = vpop.f32.mrf.mxu0
  %325 = vmatprep.mubr.bf16.mxu0 0
  %326 = vmatmul.mubr.bf16.gmra.mxu0 %v236
  %v327 = vpop.f32.mrf.mxu0
  %v328 = vadd.f32 0.0, %v327
  %v329 = vpop.f32.mrf.mxu0
  %v330 = vpop.f32.mrf.mxu0
  %v331 = vadd.f32 0.0, %v330
  %v332 = vpop.f32.mrf.mxu0
  %333 = vmatprep.mubr.bf16.mxu0 0
  %334 = vmatmul.mubr.bf16.gmra.mxu0 %v239
  %v335 = vpop.f32.mrf.mxu0
  %v336 = vadd.f32 0.0, %v335
  %v337 = vpop.f32.mrf.mxu0
  %v338 = vpop.f32.mrf.mxu0
  %v339 = vadd.f32 0.0, %v338
  %v340 = vpop.f32.mrf.mxu0
  %341 = vmatprep.mubr.bf16.mxu0 0
  %342 = vmatmul.mubr.bf16.gmra.mxu0 %v242
  %v343 = vpop.f32.mrf.mxu0
  %v344 = vadd.f32 0.0, %v343
  %v345 = vpop.f32.mrf.mxu0
  %v346 = vpop.f32.mrf.mxu0
  %v347 = vadd.f32 0.0, %v346
  %v348 = vpop.f32.mrf.mxu0
  %349 = vmatprep.mubr.bf16.mxu0 0
  %350 = vmatmul.mubr.bf16.gmra.mxu0 %v245
  %v351 = vpop.f32.mrf.mxu0
  %v352 = vadd.f32 0.0, %v351
  %v353 = vpop.f32.mrf.mxu0
  %v354 = vpop.f32.mrf.mxu0
  %v355 = vadd.f32 0.0, %v354
  %v356 = vpop.f32.mrf.mxu0
  %357 = vmatprep.mubr.bf16.mxu0 0
  %358 = vmatmul.mubr.bf16.gmra.mxu0 %v248
  %v359 = vpop.f32.mrf.mxu0
  %v360 = vadd.f32 0.0, %v359
  %v361 = vpop.f32.mrf.mxu0
  %v362 = vpop.f32.mrf.mxu0
  %v363 = vadd.f32 0.0, %v362
  %v364 = vpop.f32.mrf.mxu0
  %365 = vmatprep.mubr.bf16.mxu0 0
  %366 = vmatmul.mubr.bf16.gmra.mxu0 %v251
  %v367 = vpop.f32.mrf.mxu0
  %v368 = vadd.f32 0.0, %v367
  %v369 = vpop.f32.mrf.mxu0
  %v370 = vpop.f32.mrf.mxu0
  %v371 = vadd.f32 0.0, %v370
  %v372 = vpop.f32.mrf.mxu0
  %373 = vmatprep.mubr.bf16.mxu0 0
  %374 = vmatmul.mubr.bf16.gmra.mxu0 %v254
  %v375 = vpop.f32.mrf.mxu0
  %v376 = vadd.f32 0.0, %v375
  %v377 = vpop.f32.mrf.mxu0
  %v378 = vpop.f32.mrf.mxu0
  %v379 = vadd.f32 0.0, %v378
  %v380 = vpop.f32.mrf.mxu0
  %381 = vmatprep.mubr.bf16.mxu0 0
  %382 = vmatmul.mubr.bf16.gmra.mxu0 %v257
  %v383 = vpop.f32.mrf.mxu0
  %v384 = vadd.f32 0.0, %v383
  %v385 = vpop.f32.mrf.mxu0
  %v386 = vpop.f32.mrf.mxu0
  %v387 = vadd.f32 0.0, %v386
  %v388 = vpop.f32.mrf.mxu0
  %389 = vmatprep.mubr.bf16.mxu0 0
  %390 = vmatmul.mubr.bf16.gmra.mxu0 %v260
  %v391 = vpop.f32.mrf.mxu0
  %v392 = vadd.f32 0.0, %v391
  %v393 = vpop.f32.mrf.mxu0
  %v394 = vpop.f32.mrf.mxu0
  %v395 = vadd.f32 0.0, %v394
  %v396 = vpop.f32.mrf.mxu0
  %397 = vmatprep.mubr.bf16.mxu0 0
  %398 = vmatmul.mubr.bf16.gmra.mxu0 %v263
  %v399 = vpop.f32.mrf.mxu0
  %v400 = vadd.f32 0.0, %v399
  %v401 = vpop.f32.mrf.mxu0
  %v402 = vpop.f32.mrf.mxu0
  %v403 = vadd.f32 0.0, %v402
  %v404 = vpop.f32.mrf.mxu0
  %405 = vmatprep.mubr.bf16.mxu0 0
  %406 = vmatmul.mubr.bf16.gmra.mxu0 %v266
  %v407 = vpop.f32.mrf.mxu0
  %v408 = vadd.f32 0.0, %v407
  %v409 = vpop.f32.mrf.mxu0
  %v410 = vpop.f32.mrf.mxu0
  %v411 = vadd.f32 0.0, %v410
  %v412 = vpop.f32.mrf.mxu0
  %413 = vmatprep.mubr.bf16.mxu0 0
  %414 = vmatmul.mubr.bf16.gmra.mxu0 %v269
  %v415 = vpop.f32.mrf.mxu0
  %v416 = vadd.f32 0.0, %v415
  %v417 = vpop.f32.mrf.mxu0
  %v418 = vpop.f32.mrf.mxu0
  %v419 = vadd.f32 0.0, %v418
  %v420 = vpop.f32.mrf.mxu0
  %421 = vmatprep.mubr.bf16.mxu0 0
  %422 = vmatmul.mubr.bf16.gmra.mxu0 %v272
  %v423 = vpop.f32.mrf.mxu0
  %v424 = vadd.f32 0.0, %v423
  %v425 = vpop.f32.mrf.mxu0
  %v426 = vpop.f32.mrf.mxu0
  %v427 = vadd.f32 0.0, %v426
  %v428 = vpop.f32.mrf.mxu0
  %429 = vmatprep.mubr.bf16.mxu0 0
  %430 = vmatmul.mubr.bf16.gmra.mxu0 %v275
  %v431 = vpop.f32.mrf.mxu0
  %v432 = vadd.f32 0.0, %v431
  %v433 = vpop.f32.mrf.mxu0
  %v434 = vpop.f32.mrf.mxu0
  %v435 = vadd.f32 0.0, %v434
  %v436 = vpop.f32.mrf.mxu0
  %437 = vdwg.mxu0
  %v438 = vadd.f32 %v52, %v312
  %v439 = vadd.f32 %v53, %v315
  %v440 = vadd.f32 %v54, %v320
  %v441 = vadd.f32 %v55, %v323
  %v442 = vadd.f32 %v56, %v328
  %v443 = vadd.f32 %v57, %v331
  %v444 = vadd.f32 %v58, %v336
  %v445 = vadd.f32 %v59, %v339
  %v446 = vadd.f32 %v60, %v344
  %v447 = vadd.f32 %v61, %v347
  %v448 = vadd.f32 %v62, %v352
  %v449 = vadd.f32 %v63, %v355
  %v450 = vadd.f32 %v64, %v360
  %v451 = vadd.f32 %v65, %v363
  %v452 = vadd.f32 %v66, %v368
  %v453 = vadd.f32 %v67, %v371
  %v454 = vadd.f32 %v68, %v376
  %v455 = vadd.f32 %v69, %v379
  %v456 = vadd.f32 %v70, %v384
  %v457 = vadd.f32 %v71, %v387
  %v458 = vadd.f32 %v72, %v392
  %v459 = vadd.f32 %v73, %v395
  %v460 = vadd.f32 %v74, %v400
  %v461 = vadd.f32 %v75, %v403
  %v462 = vadd.f32 %v76, %v408
  %v463 = vadd.f32 %v77, %v411
  %v464 = vadd.f32 %v78, %v416
  %v465 = vadd.f32 %v79, %v419
  %v466 = vadd.f32 %v80, %v424
  %v467 = vadd.f32 %v81, %v427
  %v468 = vadd.f32 %v82, %v432
  %v469 = vadd.f32 %v83, %v435
  %vm470 = vcmask 261120
  %471 = vst.msk [vmem:[#allocation2] sm:$0xff] %vm470, %v438
  %472 = vst.msk [vmem:[#allocation2 + $0x8] sm:$0xff] %vm470, %v439
  %473 = vst.msk [vmem:[#allocation2 + $0x10] sm:$0xff] %vm470, %v440
  %474 = vst.msk [vmem:[#allocation2 + $0x18] sm:$0xff] %vm470, %v441
  %475 = vst.msk [vmem:[#allocation2 + $0x20] sm:$0xff] %vm470, %v442
  %476 = vst.msk [vmem:[#allocation2 + $0x28] sm:$0xff] %vm470, %v443
  %477 = vst.msk [vmem:[#allocation2 + $0x30] sm:$0xff] %vm470, %v444
  %478 = vst.msk [vmem:[#allocation2 + $0x38] sm:$0xff] %vm470, %v445
  %479 = vst.msk [vmem:[#allocation2 + $0x40] sm:$0xff] %vm470, %v446
  %480 = vst.msk [vmem:[#allocation2 + $0x48] sm:$0xff] %vm470, %v447
  %481 = vst.msk [vmem:[#allocation2 + $0x50] sm:$0xff] %vm470, %v448
  %482 = vst.msk [vmem:[#allocation2 + $0x58] sm:$0xff] %vm470, %v449
  %483 = vst.msk [vmem:[#allocation2 + $0x60] sm:$0xff] %vm470, %v450
  %484 = vst.msk [vmem:[#allocation2 + $0x68] sm:$0xff] %vm470, %v451
  %485 = vst.msk [vmem:[#allocation2 + $0x70] sm:$0xff] %vm470, %v452
  %486 = vst.msk [vmem:[#allocation2 + $0x78] sm:$0xff] %vm470, %v453
  %487 = vst.msk [vmem:[#allocation2 + $0x80] sm:$0xff] %vm470, %v454
  %488 = vst.msk [vmem:[#allocation2 + $0x88] sm:$0xff] %vm470, %v455
  %489 = vst.msk [vmem:[#allocation2 + $0x90] sm:$0xff] %vm470, %v456
  %490 = vst.msk [vmem:[#allocation2 + $0x98] sm:$0xff] %vm470, %v457
  %491 = vst.msk [vmem:[#allocation2 + $0xa0] sm:$0xff] %vm470, %v458
  %492 = vst.msk [vmem:[#allocation2 + $0xa8] sm:$0xff] %vm470, %v459
  %493 = vst.msk [vmem:[#allocation2 + $0xb0] sm:$0xff] %vm470, %v460
  %494 = vst.msk [vmem:[#allocation2 + $0xb8] sm:$0xff] %vm470, %v461
  %495 = vst.msk [vmem:[#allocation2 + $0xc0] sm:$0xff] %vm470, %v462
  %496 = vst.msk [vmem:[#allocation2 + $0xc8] sm:$0xff] %vm470, %v463
  %497 = vst.msk [vmem:[#allocation2 + $0xd0] sm:$0xff] %vm470, %v464
  %498 = vst.msk [vmem:[#allocation2 + $0xd8] sm:$0xff] %vm470, %v465
  %499 = vst.msk [vmem:[#allocation2 + $0xe0] sm:$0xff] %vm470, %v466
  %500 = vst.msk [vmem:[#allocation2 + $0xe8] sm:$0xff] %vm470, %v467
  %501 = vst.msk [vmem:[#allocation2 + $0xf0] sm:$0xff] %vm470, %v468
  %502 = vst.msk [vmem:[#allocation2 + $0xf8] sm:$0xff] %vm470, %v469
  // Predicated region
  $region18: #{set_target.21} parent=0 // pred_check
    %p503 = pneg %p15
  $region19: #{set_target.21} parent=0 // pred_check_branch
    %505 = sbr.rel (%p503) target = $region21
  $region20: #{set_target.21} parent=0 // pred_region
    %v506 = vld [vmem:[#allocation2] sm:$0xff]
    %v507 = vld [vmem:[#allocation2 + $0x8] sm:$0xff]
    %v508 = vld [vmem:[#allocation2 + $0x10] sm:$0xff]
    %v509 = vld [vmem:[#allocation2 + $0x18] sm:$0xff]
    %v510 = vld [vmem:[#allocation2 + $0x20] sm:$0xff]
    %v511 = vld [vmem:[#allocation2 + $0x28] sm:$0xff]
    %v512 = vld [vmem:[#allocation2 + $0x30] sm:$0xff]
    %v513 = vld [vmem:[#allocation2 + $0x38] sm:$0xff]
    %v514 = vld [vmem:[#allocation2 + $0x40] sm:$0xff]
    %v515 = vld [vmem:[#allocation2 + $0x48] sm:$0xff]
    %v516 = vld [vmem:[#allocation2 + $0x50] sm:$0xff]
    %v517 = vld [vmem:[#allocation2 + $0x58] sm:$0xff]
    %v518 = vld [vmem:[#allocation2 + $0x60] sm:$0xff]
    %v519 = vld [vmem:[#allocation2 + $0x68] sm:$0xff]
    %v520 = vld [vmem:[#allocation2 + $0x70] sm:$0xff]
    %v521 = vld [vmem:[#allocation2 + $0x78] sm:$0xff]
    %v522 = vld [vmem:[#allocation2 + $0x80] sm:$0xff]
    %v523 = vld [vmem:[#allocation2 + $0x88] sm:$0xff]
    %v524 = vld [vmem:[#allocation2 + $0x90] sm:$0xff]
    %v525 = vld [vmem:[#allocation2 + $0x98] sm:$0xff]
    %v526 = vld [vmem:[#allocation2 + $0xa0] sm:$0xff]
    %v527 = vld [vmem:[#allocation2 + $0xa8] sm:$0xff]
    %v528 = vld [vmem:[#allocation2 + $0xb0] sm:$0xff]
    %v529 = vld [vmem:[#allocation2 + $0xb8] sm:$0xff]
    %v530 = vld [vmem:[#allocation2 + $0xc0] sm:$0xff]
    %v531 = vld [vmem:[#allocation2 + $0xc8] sm:$0xff]
    %v532 = vld [vmem:[#allocation2 + $0xd0] sm:$0xff]
    %v533 = vld [vmem:[#allocation2 + $0xd8] sm:$0xff]
    %v534 = vld [vmem:[#allocation2 + $0xe0] sm:$0xff]
    %v535 = vld [vmem:[#allocation2 + $0xe8] sm:$0xff]
    %v536 = vld [vmem:[#allocation2 + $0xf0] sm:$0xff]
    %v537 = vld [vmem:[#allocation2 + $0xf8] sm:$0xff]
    %v538 = vld [vmem:[%s2] sm:$0x1]
    %v540 = vlaneseq
    %v541 = vshrl.u32 %v540, 7
    %v542 = vsub.s32 0, %v541
    %v543 = vrot.slane %v538, %v542
    %v545 = vadd.f32 %v506, %v543
    %v546 = vadd.f32 %v507, %v543
    %v547 = vadd.f32 %v508, %v543
    %v548 = vadd.f32 %v509, %v543
    %v549 = vadd.f32 %v510, %v543
    %v550 = vadd.f32 %v511, %v543
    %v551 = vadd.f32 %v512, %v543
    %v552 = vadd.f32 %v513, %v543
    %v553 = vadd.f32 %v514, %v543
    %v554 = vadd.f32 %v515, %v543
    %v555 = vadd.f32 %v516, %v543
    %v556 = vadd.f32 %v517, %v543
    %v557 = vadd.f32 %v518, %v543
    %v558 = vadd.f32 %v519, %v543
    %v559 = vadd.f32 %v520, %v543
    %v560 = vadd.f32 %v521, %v543
    %v561 = vadd.f32 %v522, %v543
    %v562 = vadd.f32 %v523, %v543
    %v563 = vadd.f32 %v524, %v543
    %v564 = vadd.f32 %v525, %v543
    %v565 = vadd.f32 %v526, %v543
    %v566 = vadd.f32 %v527, %v543
    %v567 = vadd.f32 %v528, %v543
    %v568 = vadd.f32 %v529, %v543
    %v569 = vadd.f32 %v530, %v543
    %v570 = vadd.f32 %v531, %v543
    %v571 = vadd.f32 %v532, %v543
    %v572 = vadd.f32 %v533, %v543
    %v573 = vadd.f32 %v534, %v543
    %v574 = vadd.f32 %v535, %v543
    %v575 = vadd.f32 %v536, %v543
    %v576 = vadd.f32 %v537, %v543
    %v577 = vpack.c.bf16 %v546, %v545
    %v578 = vpack.c.bf16 %v548, %v547
    %v579 = vpack.c.bf16 %v550, %v549
    %v580 = vpack.c.bf16 %v552, %v551
    %v581 = vpack.c.bf16 %v554, %v553
    %v582 = vpack.c.bf16 %v556, %v555
    %v583 = vpack.c.bf16 %v558, %v557
    %v584 = vpack.c.bf16 %v560, %v559
    %v585 = vpack.c.bf16 %v562, %v561
    %v586 = vpack.c.bf16 %v564, %v563
    %v587 = vpack.c.bf16 %v566, %v565
    %v588 = vpack.c.bf16 %v568, %v567
    %v589 = vpack.c.bf16 %v570, %v569
    %v590 = vpack.c.bf16 %v572, %v571
    %v591 = vpack.c.bf16 %v574, %v573
    %v592 = vpack.c.bf16 %v576, %v575
    %v609 = vunpack.c.l.b16 %v577
    %v610 = vunpack.c.h.b16 %v577
    %v611 = vunpack.c.l.b16 %v578
    %v612 = vunpack.c.h.b16 %v578
    %v613 = vunpack.c.l.b16 %v579
    %v614 = vunpack.c.h.b16 %v579
    %v615 = vunpack.c.l.b16 %v580
    %v616 = vunpack.c.h.b16 %v580
    %v617 = vunpack.c.l.b16 %v581
    %v618 = vunpack.c.h.b16 %v581
    %v619 = vunpack.c.l.b16 %v582
    %v620 = vunpack.c.h.b16 %v582
    %v621 = vunpack.c.l.b16 %v583
    %v622 = vunpack.c.h.b16 %v583
    %v623 = vunpack.c.l.b16 %v584
    %v624 = vunpack.c.h.b16 %v584
    %v625 = vunpack.c.l.b16 %v585
    %v626 = vunpack.c.h.b16 %v585
    %v627 = vunpack.c.l.b16 %v586
    %v628 = vunpack.c.h.b16 %v586
    %v629 = vunpack.c.l.b16 %v587
    %v630 = vunpack.c.h.b16 %v587
    %v631 = vunpack.c.l.b16 %v588
    %v632 = vunpack.c.h.b16 %v588
    %v633 = vunpack.c.l.b16 %v589
    %v634 = vunpack.c.h.b16 %v589
    %v635 = vunpack.c.l.b16 %v590
    %v636 = vunpack.c.h.b16 %v590
    %v637 = vunpack.c.l.b16 %v591
    %v638 = vunpack.c.h.b16 %v591
    %v639 = vunpack.c.l.b16 %v592
    %v640 = vunpack.c.h.b16 %v592
    %v641 = vpack.c.b16 %v609, %v609
    %v642 = vpack.c.b16 %v610, %v610
    %v643 = vpack.c.b16 %v611, %v611
    %v644 = vpack.c.b16 %v612, %v612
    %v645 = vpack.c.b16 %v613, %v613
    %v646 = vpack.c.b16 %v614, %v614
    %v647 = vpack.c.b16 %v615, %v615
    %v648 = vpack.c.b16 %v616, %v616
    %v649 = vpack.c.b16 %v617, %v617
    %v650 = vpack.c.b16 %v618, %v618
    %v651 = vpack.c.b16 %v619, %v619
    %v652 = vpack.c.b16 %v620, %v620
    %v653 = vpack.c.b16 %v621, %v621
    %v654 = vpack.c.b16 %v622, %v622
    %v655 = vpack.c.b16 %v623, %v623
    %v656 = vpack.c.b16 %v624, %v624
    %v657 = vpack.c.b16 %v625, %v625
    %v658 = vpack.c.b16 %v626, %v626
    %v659 = vpack.c.b16 %v627, %v627
    %v660 = vpack.c.b16 %v628, %v628
    %v661 = vpack.c.b16 %v629, %v629
    %v662 = vpack.c.b16 %v630, %v630
    %v663 = vpack.c.b16 %v631, %v631
    %v664 = vpack.c.b16 %v632, %v632
    %v665 = vpack.c.b16 %v633, %v633
    %v666 = vpack.c.b16 %v634, %v634
    %v667 = vpack.c.b16 %v635, %v635
    %v668 = vpack.c.b16 %v636, %v636
    %v669 = vpack.c.b16 %v637, %v637
    %v670 = vpack.c.b16 %v638, %v638
    %v671 = vpack.c.b16 %v639, %v639
    %v672 = vpack.c.b16 %v640, %v640
    %vm705 = vcmask 257024
    %706 = vst.msk [vmem:[%s3] sm:$0xf] %vm705, %v641
    %707 = vst.msk [vmem:[%s3 + $0x4] sm:$0xf] %vm705, %v642
    %708 = vst.msk [vmem:[%s3 + $0x8] sm:$0xf] %vm705, %v643
    %709 = vst.msk [vmem:[%s3 + $0xc] sm:$0xf] %vm705, %v644
    %710 = vst.msk [vmem:[%s3 + $0x10] sm:$0xf] %vm705, %v645
    %711 = vst.msk [vmem:[%s3 + $0x14] sm:$0xf] %vm705, %v646
    %712 = vst.msk [vmem:[%s3 + $0x18] sm:$0xf] %vm705, %v647
    %713 = vst.msk [vmem:[%s3 + $0x1c] sm:$0xf] %vm705, %v648
    %714 = vst.msk [vmem:[%s3 + $0x20] sm:$0xf] %vm705, %v649
    %715 = vst.msk [vmem:[%s3 + $0x24] sm:$0xf] %vm705, %v650
    %716 = vst.msk [vmem:[%s3 + $0x28] sm:$0xf] %vm705, %v651
    %717 = vst.msk [vmem:[%s3 + $0x2c] sm:$0xf] %vm705, %v652
    %718 = vst.msk [vmem:[%s3 + $0x30] sm:$0xf] %vm705, %v653
    %719 = vst.msk [vmem:[%s3 + $0x34] sm:$0xf] %vm705, %v654
    %720 = vst.msk [vmem:[%s3 + $0x38] sm:$0xf] %vm705, %v655
    %721 = vst.msk [vmem:[%s3 + $0x3c] sm:$0xf] %vm705, %v656
    %722 = vst.msk [vmem:[%s3 + $0x40] sm:$0xf] %vm705, %v657
    %723 = vst.msk [vmem:[%s3 + $0x44] sm:$0xf] %vm705, %v658
    %724 = vst.msk [vmem:[%s3 + $0x48] sm:$0xf] %vm705, %v659
    %725 = vst.msk [vmem:[%s3 + $0x4c] sm:$0xf] %vm705, %v660
    %726 = vst.msk [vmem:[%s3 + $0x50] sm:$0xf] %vm705, %v661
    %727 = vst.msk [vmem:[%s3 + $0x54] sm:$0xf] %vm705, %v662
    %728 = vst.msk [vmem:[%s3 + $0x58] sm:$0xf] %vm705, %v663
    %729 = vst.msk [vmem:[%s3 + $0x5c] sm:$0xf] %vm705, %v664
    %730 = vst.msk [vmem:[%s3 + $0x60] sm:$0xf] %vm705, %v665
    %731 = vst.msk [vmem:[%s3 + $0x64] sm:$0xf] %vm705, %v666
    %732 = vst.msk [vmem:[%s3 + $0x68] sm:$0xf] %vm705, %v667
    %733 = vst.msk [vmem:[%s3 + $0x6c] sm:$0xf] %vm705, %v668
    %734 = vst.msk [vmem:[%s3 + $0x70] sm:$0xf] %vm705, %v669
    %735 = vst.msk [vmem:[%s3 + $0x74] sm:$0xf] %vm705, %v670
    %736 = vst.msk [vmem:[%s3 + $0x78] sm:$0xf] %vm705, %v671
    %737 = vst.msk [vmem:[%s3 + $0x7c] sm:$0xf] %vm705, %v672
  $region21: #{set_target.21} parent=0 // pred_fallthru
    _
  // Predicated region
  $region22: #{set_target.21} parent=0 // pred_check
    _
  $region23: #{set_target.21} parent=0 // pred_check_branch
    %739 = sbr.rel (0) target = $region25
  $region24: #{set_target.21} parent=0 // pred_region
    _
  $region25: #{set_target.21} parent=0 // pred_fallthru
    _
  // Predicated region
  $region26: #{set_target.21} parent=0 // pred_check
    _
  $region27: #{set_target.21} parent=0 // pred_check_branch
    %741 = sbr.rel (0) target = $region29
  $region28: #{set_target.21} parent=0 // pred_region
    _
  $region29: #{set_target.21} parent=0 // pred_fallthru
    _

// kernel: set_target.22
$region0: #{set_target.22}
  #allocation0 [shape = 'u32[]', space=smem, size = 0x4, offset = 0x4, fixed_abs, tag = 'smem constant byte address 0x4 - core index']
  #allocation1 [shape = 'u32[144,128]{1,0:T(1,128)}', space=vmem, size = 0x12000, scoped, tag = 'internal scratch']
  %s0 = inlined_call_operand.vmem [shape: bf16[1,256,32], index: 0, kind: input, shape index: {}]
  %s1 = inlined_call_operand.vmem [shape: bf16[1,256,32], index: 1, kind: output, shape index: {}]
  %s2 = sld [smem:[#allocation0]]
  $region14: #{set_target.22} parent=0
    _
  %s4 = ssub.s32 1, %s2
  %s5 = scalar_select 0, %s4, %s2
  // Predicated region
  $region2: #{set_target.22} parent=0 // pred_check
    _
  $region3: #{set_target.22} parent=0 // pred_check_branch
    %7 = sbr.rel (0) target = $region5
  $region4: #{set_target.22} parent=0 // pred_region
    _
  $region5: #{set_target.22} parent=0 // pred_fallthru
    _
  %v8 = vld [vmem:[%s0] sm:$0xf]
  %v9 = vld [vmem:[%s0 + $0x4] sm:$0xf]
  %v10 = vld [vmem:[%s0 + $0x8] sm:$0xf]
  %v11 = vld [vmem:[%s0 + $0xc] sm:$0xf]
  %v12 = vld [vmem:[%s0 + $0x10] sm:$0xf]
  %v13 = vld [vmem:[%s0 + $0x14] sm:$0xf]
  %v14 = vld [vmem:[%s0 + $0x18] sm:$0xf]
  %v15 = vld [vmem:[%s0 + $0x1c] sm:$0xf]
  %v16 = vld [vmem:[%s0 + $0x20] sm:$0xf]
  %v17 = vld [vmem:[%s0 + $0x24] sm:$0xf]
  %v18 = vld [vmem:[%s0 + $0x28] sm:$0xf]
  %v19 = vld [vmem:[%s0 + $0x2c] sm:$0xf]
  %v20 = vld [vmem:[%s0 + $0x30] sm:$0xf]
  %v21 = vld [vmem:[%s0 + $0x34] sm:$0xf]
  %v22 = vld [vmem:[%s0 + $0x38] sm:$0xf]
  %v23 = vld [vmem:[%s0 + $0x3c] sm:$0xf]
  %v24 = vld [vmem:[%s0 + $0x40] sm:$0xf]
  %v25 = vld [vmem:[%s0 + $0x44] sm:$0xf]
  %v26 = vld [vmem:[%s0 + $0x48] sm:$0xf]
  %v27 = vld [vmem:[%s0 + $0x4c] sm:$0xf]
  %v28 = vld [vmem:[%s0 + $0x50] sm:$0xf]
  %v29 = vld [vmem:[%s0 + $0x54] sm:$0xf]
  %v30 = vld [vmem:[%s0 + $0x58] sm:$0xf]
  %v31 = vld [vmem:[%s0 + $0x5c] sm:$0xf]
  %v32 = vld [vmem:[%s0 + $0x60] sm:$0xf]
  %v33 = vld [vmem:[%s0 + $0x64] sm:$0xf]
  %v34 = vld [vmem:[%s0 + $0x68] sm:$0xf]
  %v35 = vld [vmem:[%s0 + $0x6c] sm:$0xf]
  %v36 = vld [vmem:[%s0 + $0x70] sm:$0xf]
  %v37 = vld [vmem:[%s0 + $0x74] sm:$0xf]
  %v38 = vld [vmem:[%s0 + $0x78] sm:$0xf]
  %v39 = vld [vmem:[%s0 + $0x7c] sm:$0xf]
  %v40 = vunpack.c.l.bf16 %v8
  %v41 = vunpack.c.l.bf16 %v9
  %v42 = vunpack.c.l.bf16 %v10
  %v43 = vunpack.c.l.bf16 %v11
  %v44 = vunpack.c.l.bf16 %v12
  %v45 = vunpack.c.l.bf16 %v13
  %v46 = vunpack.c.l.bf16 %v14
  %v47 = vunpack.c.l.bf16 %v15
  %v48 = vunpack.c.l.bf16 %v16
  %v49 = vunpack.c.l.bf16 %v17
  %v50 = vunpack.c.l.bf16 %v18
  %v51 = vunpack.c.l.bf16 %v19
  %v52 = vunpack.c.l.bf16 %v20
  %v53 = vunpack.c.l.bf16 %v21
  %v54 = vunpack.c.l.bf16 %v22
  %v55 = vunpack.c.l.bf16 %v23
  %v56 = vunpack.c.l.bf16 %v24
  %v57 = vunpack.c.l.bf16 %v25
  %v58 = vunpack.c.l.bf16 %v26
  %v59 = vunpack.c.l.bf16 %v27
  %v60 = vunpack.c.l.bf16 %v28
  %v61 = vunpack.c.l.bf16 %v29
  %v62 = vunpack.c.l.bf16 %v30
  %v63 = vunpack.c.l.bf16 %v31
  %v64 = vunpack.c.l.bf16 %v32
  %v65 = vunpack.c.l.bf16 %v33
  %v66 = vunpack.c.l.bf16 %v34
  %v67 = vunpack.c.l.bf16 %v35
  %v68 = vunpack.c.l.bf16 %v36
  %v69 = vunpack.c.l.bf16 %v37
  %v70 = vunpack.c.l.bf16 %v38
  %v71 = vunpack.c.l.bf16 %v39
  %vm72 = vcmask 261120
  %v73 = vsel %vm72, %v40, 0.0
  %v74 = vsel %vm72, %v41, 0.0
  %v75 = vadd.f32 %v73, %v74
  %v76 = vsel %vm72, %v42, 0.0
  %v77 = vadd.f32 %v75, %v76
  %v78 = vsel %vm72, %v43, 0.0
  %v79 = vadd.f32 %v77, %v78
  %v80 = vsel %vm72, %v44, 0.0
  %v81 = vadd.f32 %v79, %v80
  %v82 = vsel %vm72, %v45, 0.0
  %v83 = vadd.f32 %v81, %v82
  %v84 = vsel %vm72, %v46, 0.0
  %v85 = vadd.f32 %v83, %v84
  %v86 = vsel %vm72, %v47, 0.0
  %v87 = vadd.f32 %v85, %v86
  %v88 = vsel %vm72, %v48, 0.0
  %v89 = vadd.f32 %v87, %v88
  %v90 = vsel %vm72, %v49, 0.0
  %v91 = vadd.f32 %v89, %v90
  %v92 = vsel %vm72, %v50, 0.0
  %v93 = vadd.f32 %v91, %v92
  %v94 = vsel %vm72, %v51, 0.0
  %v95 = vadd.f32 %v93, %v94
  %v96 = vsel %vm72, %v52, 0.0
  %v97 = vadd.f32 %v95, %v96
  %v98 = vsel %vm72, %v53, 0.0
  %v99 = vadd.f32 %v97, %v98
  %v100 = vsel %vm72, %v54, 0.0
  %v101 = vadd.f32 %v99, %v100
  %v102 = vsel %vm72, %v55, 0.0
  %v103 = vadd.f32 %v101, %v102
  %v104 = vsel %vm72, %v56, 0.0
  %v105 = vadd.f32 %v103, %v104
  %v106 = vsel %vm72, %v57, 0.0
  %v107 = vadd.f32 %v105, %v106
  %v108 = vsel %vm72, %v58, 0.0
  %v109 = vadd.f32 %v107, %v108
  %v110 = vsel %vm72, %v59, 0.0
  %v111 = vadd.f32 %v109, %v110
  %v112 = vsel %vm72, %v60, 0.0
  %v113 = vadd.f32 %v111, %v112
  %v114 = vsel %vm72, %v61, 0.0
  %v115 = vadd.f32 %v113, %v114
  %v116 = vsel %vm72, %v62, 0.0
  %v117 = vadd.f32 %v115, %v116
  %v118 = vsel %vm72, %v63, 0.0
  %v119 = vadd.f32 %v117, %v118
  %v120 = vsel %vm72, %v64, 0.0
  %v121 = vadd.f32 %v119, %v120
  %v122 = vsel %vm72, %v65, 0.0
  %v123 = vadd.f32 %v121, %v122
  %v124 = vsel %vm72, %v66, 0.0
  %v125 = vadd.f32 %v123, %v124
  %v126 = vsel %vm72, %v67, 0.0
  %v127 = vadd.f32 %v125, %v126
  %v128 = vsel %vm72, %v68, 0.0
  %v129 = vadd.f32 %v127, %v128
  %v130 = vsel %vm72, %v69, 0.0
  %v131 = vadd.f32 %v129, %v130
  %v132 = vsel %vm72, %v70, 0.0
  %v133 = vadd.f32 %v131, %v132
  %v134 = vsel %vm72, %v71, 0.0
  %v135 = vadd.f32 %v133, %v134
  %v136 = vrot.slane %v135, 4
  %v137 = vadd.f32 %v135, %v136
  %v138 = vrot.slane %v137, 2
  %v139 = vadd.f32 %v137, %v138
  %v140 = vrot.slane %v139, 1
  %v141 = vadd.f32 %v139, %v140
  %v142 = vmul.f32 %v40, %v40
  %v143 = vmul.f32 %v41, %v41
  %v144 = vmul.f32 %v42, %v42
  %v145 = vmul.f32 %v43, %v43
  %v146 = vmul.f32 %v44, %v44
  %v147 = vmul.f32 %v45, %v45
  %v148 = vmul.f32 %v46, %v46
  %v149 = vmul.f32 %v47, %v47
  %v150 = vmul.f32 %v48, %v48
  %v151 = vmul.f32 %v49, %v49
  %v152 = vmul.f32 %v50, %v50
  %v153 = vmul.f32 %v51, %v51
  %v154 = vmul.f32 %v52, %v52
  %v155 = vmul.f32 %v53, %v53
  %v156 = vmul.f32 %v54, %v54
  %v157 = vmul.f32 %v55, %v55
  %v158 = vmul.f32 %v56, %v56
  %v159 = vmul.f32 %v57, %v57
  %v160 = vmul.f32 %v58, %v58
  %v161 = vmul.f32 %v59, %v59
  %v162 = vmul.f32 %v60, %v60
  %v163 = vmul.f32 %v61, %v61
  %v164 = vmul.f32 %v62, %v62
  %v165 = vmul.f32 %v63, %v63
  %v166 = vmul.f32 %v64, %v64
  %v167 = vmul.f32 %v65, %v65
  %v168 = vmul.f32 %v66, %v66
  %v169 = vmul.f32 %v67, %v67
  %v170 = vmul.f32 %v68, %v68
  %v171 = vmul.f32 %v69, %v69
  %v172 = vmul.f32 %v70, %v70
  %v173 = vmul.f32 %v71, %v71
  %v174 = vsel %vm72, %v142, 0.0
  %v175 = vsel %vm72, %v143, 0.0
  %v176 = vadd.f32 %v174, %v175
  %v177 = vsel %vm72, %v144, 0.0
  %v178 = vadd.f32 %v176, %v177
  %v179 = vsel %vm72, %v145, 0.0
  %v180 = vadd.f32 %v178, %v179
  %v181 = vsel %vm72, %v146, 0.0
  %v182 = vadd.f32 %v180, %v181
  %v183 = vsel %vm72, %v147, 0.0
  %v184 = vadd.f32 %v182, %v183
  %v185 = vsel %vm72, %v148, 0.0
  %v186 = vadd.f32 %v184, %v185
  %v187 = vsel %vm72, %v149, 0.0
  %v188 = vadd.f32 %v186, %v187
  %v189 = vsel %vm72, %v150, 0.0
  %v190 = vadd.f32 %v188, %v189
  %v191 = vsel %vm72, %v151, 0.0
  %v192 = vadd.f32 %v190, %v191
  %v193 = vsel %vm72, %v152, 0.0
  %v194 = vadd.f32 %v192, %v193
  %v195 = vsel %vm72, %v153, 0.0
  %v196 = vadd.f32 %v194, %v195
  %v197 = vsel %vm72, %v154, 0.0
  %v198 = vadd.f32 %v196, %v197
  %v199 = vsel %vm72, %v155, 0.0
  %v200 = vadd.f32 %v198, %v199
  %v201 = vsel %vm72, %v156, 0.0
  %v202 = vadd.f32 %v200, %v201
  %v203 = vsel %vm72, %v157, 0.0
  %v204 = vadd.f32 %v202, %v203
  %v205 = vsel %vm72, %v158, 0.0
  %v206 = vadd.f32 %v204, %v205
  %v207 = vsel %vm72, %v159, 0.0
  %v208 = vadd.f32 %v206, %v207
  %v209 = vsel %vm72, %v160, 0.0
  %v210 = vadd.f32 %v208, %v209
  %v211 = vsel %vm72, %v161, 0.0
  %v212 = vadd.f32 %v210, %v211
  %v213 = vsel %vm72, %v162, 0.0
  %v214 = vadd.f32 %v212, %v213
  %v215 = vsel %vm72, %v163, 0.0
  %v216 = vadd.f32 %v214, %v215
  %v217 = vsel %vm72, %v164, 0.0
  %v218 = vadd.f32 %v216, %v217
  %v219 = vsel %vm72, %v165, 0.0
  %v220 = vadd.f32 %v218, %v219
  %v221 = vsel %vm72, %v166, 0.0
  %v222 = vadd.f32 %v220, %v221
  %v223 = vsel %vm72, %v167, 0.0
  %v224 = vadd.f32 %v222, %v223
  %v225 = vsel %vm72, %v168, 0.0
  %v226 = vadd.f32 %v224, %v225
  %v227 = vsel %vm72, %v169, 0.0
  %v228 = vadd.f32 %v226, %v227
  %v229 = vsel %vm72, %v170, 0.0
  %v230 = vadd.f32 %v228, %v229
  %v231 = vsel %vm72, %v171, 0.0
  %v232 = vadd.f32 %v230, %v231
  %v233 = vsel %vm72, %v172, 0.0
  %v234 = vadd.f32 %v232, %v233
  %v235 = vsel %vm72, %v173, 0.0
  %v236 = vadd.f32 %v234, %v235
  %v237 = vrot.slane %v236, 4
  %v238 = vadd.f32 %v236, %v237
  %v239 = vrot.slane %v238, 2
  %v240 = vadd.f32 %v238, %v239
  %v241 = vrot.slane %v240, 1
  %v242 = vadd.f32 %v240, %v241
  %v243 = vmul.f32 %v141, 0.00390625
  %v244 = vmul.f32 %v242, 0.00390625
  %v245 = vmul.f32 %v243, %v243
  %v246 = vsub.f32 %v244, %v245
  %v247 = vsub.f32 %v40, %v243
  %v248 = vsub.f32 %v41, %v243
  %v249 = vsub.f32 %v42, %v243
  %v250 = vsub.f32 %v43, %v243
  %v251 = vsub.f32 %v44, %v243
  %v252 = vsub.f32 %v45, %v243
  %v253 = vsub.f32 %v46, %v243
  %v254 = vsub.f32 %v47, %v243
  %v255 = vsub.f32 %v48, %v243
  %v256 = vsub.f32 %v49, %v243
  %v257 = vsub.f32 %v50, %v243
  %v258 = vsub.f32 %v51, %v243
  %v259 = vsub.f32 %v52, %v243
  %v260 = vsub.f32 %v53, %v243
  %v261 = vsub.f32 %v54, %v243
  %v262 = vsub.f32 %v55, %v243
  %v263 = vsub.f32 %v56, %v243
  %v264 = vsub.f32 %v57, %v243
  %v265 = vsub.f32 %v58, %v243
  %v266 = vsub.f32 %v59, %v243
  %v267 = vsub.f32 %v60, %v243
  %v268 = vsub.f32 %v61, %v243
  %v269 = vsub.f32 %v62, %v243
  %v270 = vsub.f32 %v63, %v243
  %v271 = vsub.f32 %v64, %v243
  %v272 = vsub.f32 %v65, %v243
  %v273 = vsub.f32 %v66, %v243
  %v274 = vsub.f32 %v67, %v243
  %v275 = vsub.f32 %v68, %v243
  %v276 = vsub.f32 %v69, %v243
  %v277 = vsub.f32 %v70, %v243
  %v278 = vsub.f32 %v71, %v243
  %v279 = vadd.f32 %v246, 1e-05
  %v280 = vrsqrt.pop %v279
  %v281 = vmul.f32 %v247, %v280
  %v282 = vmul.f32 %v248, %v280
  %v283 = vmul.f32 %v249, %v280
  %v284 = vmul.f32 %v250, %v280
  %v285 = vmul.f32 %v251, %v280
  %v286 = vmul.f32 %v252, %v280
  %v287 = vmul.f32 %v253, %v280
  %v288 = vmul.f32 %v254, %v280
  %v289 = vmul.f32 %v255, %v280
  %v290 = vmul.f32 %v256, %v280
  %v291 = vmul.f32 %v257, %v280
  %v292 = vmul.f32 %v258, %v280
  %v293 = vmul.f32 %v259, %v280
  %v294 = vmul.f32 %v260, %v280
  %v295 = vmul.f32 %v261, %v280
  %v296 = vmul.f32 %v262, %v280
  %v297 = vmul.f32 %v263, %v280
  %v298 = vmul.f32 %v264, %v280
  %v299 = vmul.f32 %v265, %v280
  %v300 = vmul.f32 %v266, %v280
  %v301 = vmul.f32 %v267, %v280
  %v302 = vmul.f32 %v268, %v280
  %v303 = vmul.f32 %v269, %v280
  %v304 = vmul.f32 %v270, %v280
  %v305 = vmul.f32 %v271, %v280
  %v306 = vmul.f32 %v272, %v280
  %v307 = vmul.f32 %v273, %v280
  %v308 = vmul.f32 %v274, %v280
  %v309 = vmul.f32 %v275, %v280
  %v310 = vmul.f32 %v276, %v280
  %v311 = vmul.f32 %v277, %v280
  %v312 = vmul.f32 %v278, %v280
  %v313 = vmax.f32 %v281, 0.0
  %v314 = vmax.f32 %v282, 0.0
  %v315 = vmax.f32 %v283, 0.0
  %v316 = vmax.f32 %v284, 0.0
  %v317 = vmax.f32 %v285, 0.0
  %v318 = vmax.f32 %v286, 0.0
  %v319 = vmax.f32 %v287, 0.0
  %v320 = vmax.f32 %v288, 0.0
  %v321 = vmax.f32 %v289, 0.0
  %v322 = vmax.f32 %v290, 0.0
  %v323 = vmax.f32 %v291, 0.0
  %v324 = vmax.f32 %v292, 0.0
  %v325 = vmax.f32 %v293, 0.0
  %v326 = vmax.f32 %v294, 0.0
  %v327 = vmax.f32 %v295, 0.0
  %v328 = vmax.f32 %v296, 0.0
  %v329 = vmax.f32 %v297, 0.0
  %v330 = vmax.f32 %v298, 0.0
  %v331 = vmax.f32 %v299, 0.0
  %v332 = vmax.f32 %v300, 0.0
  %v333 = vmax.f32 %v301, 0.0
  %v334 = vmax.f32 %v302, 0.0
  %v335 = vmax.f32 %v303, 0.0
  %v336 = vmax.f32 %v304, 0.0
  %v337 = vmax.f32 %v305, 0.0
  %v338 = vmax.f32 %v306, 0.0
  %v339 = vmax.f32 %v307, 0.0
  %v340 = vmax.f32 %v308, 0.0
  %v341 = vmax.f32 %v309, 0.0
  %v342 = vmax.f32 %v310, 0.0
  %v343 = vmax.f32 %v311, 0.0
  %v344 = vmax.f32 %v312, 0.0
  %v345 = vpack.c.bf16 %v314, %v313
  %v346 = vpack.c.bf16 %v316, %v315
  %v347 = vpack.c.bf16 %v318, %v317
  %v348 = vpack.c.bf16 %v320, %v319
  %v349 = vpack.c.bf16 %v322, %v321
  %v350 = vpack.c.bf16 %v324, %v323
  %v351 = vpack.c.bf16 %v326, %v325
  %v352 = vpack.c.bf16 %v328, %v327
  %v353 = vpack.c.bf16 %v330, %v329
  %v354 = vpack.c.bf16 %v332, %v331
  %v355 = vpack.c.bf16 %v334, %v333
  %v356 = vpack.c.bf16 %v336, %v335
  %v357 = vpack.c.bf16 %v338, %v337
  %v358 = vpack.c.bf16 %v340, %v339
  %v359 = vpack.c.bf16 %v342, %v341
  %v360 = vpack.c.bf16 %v344, %v343
  %v377 = vunpack.c.l.b16 %v345
  %v378 = vunpack.c.h.b16 %v345
  %v379 = vunpack.c.l.b16 %v346
  %v380 = vunpack.c.h.b16 %v346
  %v381 = vunpack.c.l.b16 %v347
  %v382 = vunpack.c.h.b16 %v347
  %v383 = vunpack.c.l.b16 %v348
  %v384 = vunpack.c.h.b16 %v348
  %v385 = vunpack.c.l.b16 %v349
  %v386 = vunpack.c.h.b16 %v349
  %v387 = vunpack.c.l.b16 %v350
  %v388 = vunpack.c.h.b16 %v350
  %v389 = vunpack.c.l.b16 %v351
  %v390 = vunpack.c.h.b16 %v351
  %v391 = vunpack.c.l.b16 %v352
  %v392 = vunpack.c.h.b16 %v352
  %v393 = vunpack.c.l.b16 %v353
  %v394 = vunpack.c.h.b16 %v353
  %v395 = vunpack.c.l.b16 %v354
  %v396 = vunpack.c.h.b16 %v354
  %v397 = vunpack.c.l.b16 %v355
  %v398 = vunpack.c.h.b16 %v355
  %v399 = vunpack.c.l.b16 %v356
  %v400 = vunpack.c.h.b16 %v356
  %v401 = vunpack.c.l.b16 %v357
  %v402 = vunpack.c.h.b16 %v357
  %v403 = vunpack.c.l.b16 %v358
  %v404 = vunpack.c.h.b16 %v358
  %v405 = vunpack.c.l.b16 %v359
  %v406 = vunpack.c.h.b16 %v359
  %v407 = vunpack.c.l.b16 %v360
  %v408 = vunpack.c.h.b16 %v360
  %v409 = vpack.c.b16 %v377, %v377
  %v410 = vpack.c.b16 %v378, %v378
  %v411 = vpack.c.b16 %v379, %v379
  %v412 = vpack.c.b16 %v380, %v380
  %v413 = vpack.c.b16 %v381, %v381
  %v414 = vpack.c.b16 %v382, %v382
  %v415 = vpack.c.b16 %v383, %v383
  %v416 = vpack.c.b16 %v384, %v384
  %v417 = vpack.c.b16 %v385, %v385
  %v418 = vpack.c.b16 %v386, %v386
  %v419 = vpack.c.b16 %v387, %v387
  %v420 = vpack.c.b16 %v388, %v388
  %v421 = vpack.c.b16 %v389, %v389
  %v422 = vpack.c.b16 %v390, %v390
  %v423 = vpack.c.b16 %v391, %v391
  %v424 = vpack.c.b16 %v392, %v392
  %v425 = vpack.c.b16 %v393, %v393
  %v426 = vpack.c.b16 %v394, %v394
  %v427 = vpack.c.b16 %v395, %v395
  %v428 = vpack.c.b16 %v396, %v396
  %v429 = vpack.c.b16 %v397, %v397
  %v430 = vpack.c.b16 %v398, %v398
  %v431 = vpack.c.b16 %v399, %v399
  %v432 = vpack.c.b16 %v400, %v400
  %v433 = vpack.c.b16 %v401, %v401
  %v434 = vpack.c.b16 %v402, %v402
  %v435 = vpack.c.b16 %v403, %v403
  %v436 = vpack.c.b16 %v404, %v404
  %v437 = vpack.c.b16 %v405, %v405
  %v438 = vpack.c.b16 %v406, %v406
  %v439 = vpack.c.b16 %v407, %v407
  %v440 = vpack.c.b16 %v408, %v408
  %vm473 = vcmask 257024
  %474 = vst.msk [vmem:[%s1] sm:$0xf] %vm473, %v409
  %475 = vst.msk [vmem:[%s1 + $0x4] sm:$0xf] %vm473, %v410
  %476 = vst.msk [vmem:[%s1 + $0x8] sm:$0xf] %vm473, %v411
  %477 = vst.msk [vmem:[%s1 + $0xc] sm:$0xf] %vm473, %v412
  %478 = vst.msk [vmem:[%s1 + $0x10] sm:$0xf] %vm473, %v413
  %479 = vst.msk [vmem:[%s1 + $0x14] sm:$0xf] %vm473, %v414
  %480 = vst.msk [vmem:[%s1 + $0x18] sm:$0xf] %vm473, %v415
  %481 = vst.msk [vmem:[%s1 + $0x1c] sm:$0xf] %vm473, %v416
  %482 = vst.msk [vmem:[%s1 + $0x20] sm:$0xf] %vm473, %v417
  %483 = vst.msk [vmem:[%s1 + $0x24] sm:$0xf] %vm473, %v418
  %484 = vst.msk [vmem:[%s1 + $0x28] sm:$0xf] %vm473, %v419
  %485 = vst.msk [vmem:[%s1 + $0x2c] sm:$0xf] %vm473, %v420
  %486 = vst.msk [vmem:[%s1 + $0x30] sm:$0xf] %vm473, %v421
  %487 = vst.msk [vmem:[%s1 + $0x34] sm:$0xf] %vm473, %v422
  %488 = vst.msk [vmem:[%s1 + $0x38] sm:$0xf] %vm473, %v423
  %489 = vst.msk [vmem:[%s1 + $0x3c] sm:$0xf] %vm473, %v424
  %490 = vst.msk [vmem:[%s1 + $0x40] sm:$0xf] %vm473, %v425
  %491 = vst.msk [vmem:[%s1 + $0x44] sm:$0xf] %vm473, %v426
  %492 = vst.msk [vmem:[%s1 + $0x48] sm:$0xf] %vm473, %v427
  %493 = vst.msk [vmem:[%s1 + $0x4c] sm:$0xf] %vm473, %v428
  %494 = vst.msk [vmem:[%s1 + $0x50] sm:$0xf] %vm473, %v429
  %495 = vst.msk [vmem:[%s1 + $0x54] sm:$0xf] %vm473, %v430
  %496 = vst.msk [vmem:[%s1 + $0x58] sm:$0xf] %vm473, %v431
  %497 = vst.msk [vmem:[%s1 + $0x5c] sm:$0xf] %vm473, %v432
  %498 = vst.msk [vmem:[%s1 + $0x60] sm:$0xf] %vm473, %v433
  %499 = vst.msk [vmem:[%s1 + $0x64] sm:$0xf] %vm473, %v434
  %500 = vst.msk [vmem:[%s1 + $0x68] sm:$0xf] %vm473, %v435
  %501 = vst.msk [vmem:[%s1 + $0x6c] sm:$0xf] %vm473, %v436
  %502 = vst.msk [vmem:[%s1 + $0x70] sm:$0xf] %vm473, %v437
  %503 = vst.msk [vmem:[%s1 + $0x74] sm:$0xf] %vm473, %v438
  %504 = vst.msk [vmem:[%s1 + $0x78] sm:$0xf] %vm473, %v439
  %505 = vst.msk [vmem:[%s1 + $0x7c] sm:$0xf] %vm473, %v440
  // Predicated region
  $region6: #{set_target.22} parent=0 // pred_check
    _
  $region7: #{set_target.22} parent=0 // pred_check_branch
    %507 = sbr.rel (0) target = $region9
  $region8: #{set_target.22} parent=0 // pred_region
    _
  $region9: #{set_target.22} parent=0 // pred_fallthru
    _
  // Predicated region
  $region10: #{set_target.22} parent=0 // pred_check
    _
  $region11: #{set_target.22} parent=0 // pred_check_branch
    %509 = sbr.rel (0) target = $region13
  $region12: #{set_target.22} parent=0 // pred_region
    _
  $region13: #{set_target.22} parent=0 // pred_fallthru
    _

// kernel: set_target.23
$region0: #{set_target.23}
  #allocation0 [shape = 'u32[]', space=smem, size = 0x4, offset = 0x4, fixed_abs, tag = 'smem constant byte address 0x4 - core index']
  #allocation1 [shape = 'u32[144,128]{1,0:T(1,128)}', space=vmem, size = 0x12000, scoped, tag = 'internal scratch']
  #allocation2 [shape = 'f32[64,32]{1,0:T(8,128)}', space=vmem, size = 0x8000, scoped, tag = 'scratch operand']
  %s0 = inlined_call_operand.vmem [shape: bf16[1,64,288], index: 0, kind: input, shape index: {}]
  %s1 = inlined_call_operand.vmem [shape: bf16[1,288,32], index: 1, kind: input, shape index: {}]
  %s2 = inlined_call_operand.vmem [shape: f32[1,32], index: 2, kind: input, shape index: {}]
  %s3 = inlined_call_operand.vmem [shape: bf16[1,64,32], index: 3, kind: output, shape index: {}]
  %s4 = sld [smem:[#allocation0]]
  $region30: #{set_target.23} parent=0
    _
  %s6 = ssub.s32 1, %s4
  %s7 = scalar_select 0, %s6, %s4
  // Predicated region
  $region2: #{set_target.23} parent=0 // pred_check
    _
  $region3: #{set_target.23} parent=0 // pred_check_branch
    %9 = sbr.rel (0) target = $region5
  $region4: #{set_target.23} parent=0 // pred_region
    _
  $region5: #{set_target.23} parent=0 // pred_fallthru
    _
  // Predicated region
  $region6: #{set_target.23} parent=0 // pred_check
    _
  $region7: #{set_target.23} parent=0 // pred_check_branch
    %11 = sbr.rel (0) target = $region9
  $region8: #{set_target.23} parent=0 // pred_region
    _
  $region9: #{set_target.23} parent=0 // pred_fallthru
    _
  // Predicated region
  $region10: #{set_target.23} parent=0 // pred_check
    _
  $region11: #{set_target.23} parent=0 // pred_check_branch
    %13 = sbr.rel (0) target = $region13
  $region12: #{set_target.23} parent=0 // pred_region
    _
  $region13: #{set_target.23} parent=0 // pred_fallthru
    _
  %p15 = scmp.eq.s32.totalorder 0, 0
  // Predicated region
  $region14: #{set_target.23} parent=0 // pred_check
    %p16 = pneg %p15
  $region15: #{set_target.23} parent=0 // pred_check_branch
    %18 = sbr.rel (%p16) target = $region17
  $region16: #{set_target.23} parent=0 // pred_region
    %vm19 = vcmask 261120
    %20 = vst.msk [vmem:[#allocation2] sm:$0xff] %vm19, 0.0
    %21 = vst.msk [vmem:[#allocation2 + $0x8] sm:$0xff] %vm19, 0.0
    %22 = vst.msk [vmem:[#allocation2 + $0x10] sm:$0xff] %vm19, 0.0
    %23 = vst.msk [vmem:[#allocation2 + $0x18] sm:$0xff] %vm19, 0.0
    %24 = vst.msk [vmem:[#allocation2 + $0x20] sm:$0xff] %vm19, 0.0
    %25 = vst.msk [vmem:[#allocation2 + $0x28] sm:$0xff] %vm19, 0.0
    %26 = vst.msk [vmem:[#allocation2 + $0x30] sm:$0xff] %vm19, 0.0
    %27 = vst.msk [vmem:[#allocation2 + $0x38] sm:$0xff] %vm19, 0.0
  $region17: #{set_target.23} parent=0 // pred_fallthru
    _
  %v28 = vld [vmem:[#allocation2] sm:$0xff]
  %v29 = vld [vmem:[#allocation2 + $0x8] sm:$0xff]
  %v30 = vld [vmem:[#allocation2 + $0x10] sm:$0xff]
  %v31 = vld [vmem:[#allocation2 + $0x18] sm:$0xff]
  %v32 = vld [vmem:[#allocation2 + $0x20] sm:$0xff]
  %v33 = vld [vmem:[#allocation2 + $0x28] sm:$0xff]
  %v34 = vld [vmem:[#allocation2 + $0x30] sm:$0xff]
  %v35 = vld [vmem:[#allocation2 + $0x38] sm:$0xff]
  %v36 = vld [vmem:[%s0] sm:$0xff]
  %v37 = vld [vmem:[%s0 + $0x8] sm:$0xf]
  %v38 = vld [vmem:[%s0 + $0xc] sm:$0xff]
  %v39 = vld [vmem:[%s0 + $0x14] sm:$0xf]
  %v40 = vld [vmem:[%s0 + $0x18] sm:$0xff]
  %v41 = vld [vmem:[%s0 + $0x20] sm:$0xf]
  %v42 = vld [vmem:[%s0 + $0x24] sm:$0xff]
  %v43 = vld [vmem:[%s0 + $0x2c] sm:$0xf]
  %v44 = vld [vmem:[%s0 + $0x30] sm:$0xff]
  %v45 = vld [vmem:[%s0 + $0x38] sm:$0xf]
  %v46 = vld [vmem:[%s0 + $0x3c] sm:$0xff]
  %v47 = vld [vmem:[%s0 + $0x44] sm:$0xf]
  %v48 = vld [vmem:[%s0 + $0x48] sm:$0xff]
  %v49 = vld [vmem:[%s0 + $0x50] sm:$0xf]
  %v50 = vld [vmem:[%s0 + $0x54] sm:$0xff]
  %v51 = vld [vmem:[%s0 + $0x5c] sm:$0xf]
  %v52 = vld [vmem:[%s1] sm:$0xf]
  %v53 = vld [vmem:[%s1 + $0x4] sm:$0xf]
  %v54 = vld [vmem:[%s1 + $0x8] sm:$0xf]
  %v55 = vld [vmem:[%s1 + $0xc] sm:$0xf]
  %v56 = vld [vmem:[%s1 + $0x10] sm:$0xf]
  %v57 = vld [vmem:[%s1 + $0x14] sm:$0xf]
  %v58 = vld [vmem:[%s1 + $0x18] sm:$0xf]
  %v59 = vld [vmem:[%s1 + $0x1c] sm:$0xf]
  %v60 = vld [vmem:[%s1 + $0x20] sm:$0xf]
  %v61 = vld [vmem:[%s1 + $0x24] sm:$0xf]
  %v62 = vld [vmem:[%s1 + $0x28] sm:$0xf]
  %v63 = vld [vmem:[%s1 + $0x2c] sm:$0xf]
  %v64 = vld [vmem:[%s1 + $0x30] sm:$0xf]
  %v65 = vld [vmem:[%s1 + $0x34] sm:$0xf]
  %v66 = vld [vmem:[%s1 + $0x38] sm:$0xf]
  %v67 = vld [vmem:[%s1 + $0x3c] sm:$0xf]
  %v68 = vld [vmem:[%s1 + $0x40] sm:$0xf]
  %v69 = vld [vmem:[%s1 + $0x44] sm:$0xf]
  %v70 = vld [vmem:[%s1 + $0x48] sm:$0xf]
  %v71 = vld [vmem:[%s1 + $0x4c] sm:$0xf]
  %v72 = vld [vmem:[%s1 + $0x50] sm:$0xf]
  %v73 = vld [vmem:[%s1 + $0x54] sm:$0xf]
  %v74 = vld [vmem:[%s1 + $0x58] sm:$0xf]
  %v75 = vld [vmem:[%s1 + $0x5c] sm:$0xf]
  %v76 = vld [vmem:[%s1 + $0x60] sm:$0xf]
  %v77 = vld [vmem:[%s1 + $0x64] sm:$0xf]
  %v78 = vld [vmem:[%s1 + $0x68] sm:$0xf]
  %v79 = vld [vmem:[%s1 + $0x6c] sm:$0xf]
  %v80 = vld [vmem:[%s1 + $0x70] sm:$0xf]
  %v81 = vld [vmem:[%s1 + $0x74] sm:$0xf]
  %v82 = vld [vmem:[%s1 + $0x78] sm:$0xf]
  %v83 = vld [vmem:[%s1 + $0x7c] sm:$0xf]
  %v84 = vld [vmem:[%s1 + $0x80] sm:$0xf]
  %v85 = vld [vmem:[%s1 + $0x84] sm:$0xf]
  %v86 = vld [vmem:[%s1 + $0x88] sm:$0xf]
  %v87 = vld [vmem:[%s1 + $0x8c] sm:$0xf]
  %v104 = vunpack.c.l.b16 %v36
  %v105 = vunpack.c.h.b16 %v36
  %v106 = vunpack.c.l.b16 %v37
  %v107 = vunpack.c.l.b16 %v38
  %v108 = vunpack.c.h.b16 %v38
  %v109 = vunpack.c.l.b16 %v39
  %v110 = vunpack.c.l.b16 %v40
  %v111 = vunpack.c.h.b16 %v40
  %v112 = vunpack.c.l.b16 %v41
  %v113 = vunpack.c.l.b16 %v42
  %v114 = vunpack.c.h.b16 %v42
  %v115 = vunpack.c.l.b16 %v43
  %v116 = vunpack.c.l.b16 %v44
  %v117 = vunpack.c.h.b16 %v44
  %v118 = vunpack.c.l.b16 %v45
  %v119 = vunpack.c.l.b16 %v46
  %v120 = vunpack.c.h.b16 %v46
  %v121 = vunpack.c.l.b16 %v47
  %v122 = vunpack.c.l.b16 %v48
  %v123 = vunpack.c.h.b16 %v48
  %v124 = vunpack.c.l.b16 %v49
  %v125 = vunpack.c.l.b16 %v50
  %v126 = vunpack.c.h.b16 %v50
  %v127 = vunpack.c.l.b16 %v51
  %v128 = vpack.c.b16 %v107, %v104
  %v129 = vpack.c.b16 %v108, %v105
  %v130 = vpack.c.b16 %v109, %v106
  %v131 = vpack.c.b16 %v113, %v110
  %v132 = vpack.c.b16 %v114, %v111
  %v133 = vpack.c.b16 %v115, %v112
  %v134 = vpack.c.b16 %v119, %v116
  %v135 = vpack.c.b16 %v120, %v117
  %v136 = vpack.c.b16 %v121, %v118
  %v137 = vpack.c.b16 %v125, %v122
  %v138 = vpack.c.b16 %v126, %v123
  %v139 = vpack.c.b16 %v127, %v124
  %v184 = vunpack.c.l.b16 %v52
  %v185 = vunpack.c.l.b16 %v53
  %v186 = vunpack.c.l.b16 %v54
  %v187 = vunpack.c.l.b16 %v55
  %v188 = vunpack.c.l.b16 %v56
  %v189 = vunpack.c.l.b16 %v57
  %v190 = vunpack.c.l.b16 %v58
  %v191 = vunpack.c.l.b16 %v59
  %v192 = vunpack.c.l.b16 %v60
  %v193 = vunpack.c.l.b16 %v61
  %v194 = vunpack.c.l.b16 %v62
  %v195 = vunpack.c.l.b16 %v63
  %v196 = vunpack.c.l.b16 %v64
  %v197 = vunpack.c.l.b16 %v65
  %v198 = vunpack.c.l.b16 %v66
  %v199 = vunpack.c.l.b16 %v67
  %v200 = vunpack.c.l.b16 %v68
  %v201 = vunpack.c.l.b16 %v69
  %v202 = vunpack.c.l.b16 %v70
  %v203 = vunpack.c.l.b16 %v71
  %v204 = vunpack.c.l.b16 %v72
  %v205 = vunpack.c.l.b16 %v73
  %v206 = vunpack.c.l.b16 %v74
  %v207 = vunpack.c.l.b16 %v75
  %v208 = vunpack.c.l.b16 %v76
  %v209 = vunpack.c.l.b16 %v77
  %v210 = vunpack.c.l.b16 %v78
  %v211 = vunpack.c.l.b16 %v79
  %v212 = vunpack.c.l.b16 %v80
  %v213 = vunpack.c.l.b16 %v81
  %v214 = vunpack.c.l.b16 %v82
  %v215 = vunpack.c.l.b16 %v83
  %v216 = vunpack.c.l.b16 %v84
  %v217 = vunpack.c.l.b16 %v85
  %v218 = vunpack.c.l.b16 %v86
  %v219 = vunpack.c.l.b16 %v87
  %v220 = vpack.c.b16 %v185, %v184
  %v221 = vpack.c.b16 %v187, %v186
  %v222 = vpack.c.b16 %v189, %v188
  %v223 = vpack.c.b16 %v191, %v190
  %v224 = vpack.c.b16 %v193, %v192
  %v225 = vpack.c.b16 %v195, %v194
  %v226 = vpack.c.b16 %v197, %v196
  %v227 = vpack.c.b16 %v199, %v198
  %v228 = vpack.c.b16 %v201, %v200
  %v229 = vpack.c.b16 %v203, %v202
  %v230 = vpack.c.b16 %v205, %v204
  %v231 = vpack.c.b16 %v207, %v206
  %v232 = vpack.c.b16 %v209, %v208
  %v233 = vpack.c.b16 %v211, %v210
  %v234 = vpack.c.b16 %v213, %v212
  %v235 = vpack.c.b16 %v215, %v214
  %v236 = vpack.c.b16 %v217, %v216
  %v237 = vpack.c.b16 %v219, %v218
  %vm256 = vcmask 261120
  %v258 = vsel %vm256, %v130, 0
  %v261 = vsel %vm256, %v133, 0
  %v264 = vsel %vm256, %v136, 0
  %v267 = vsel %vm256, %v139, 0
  %269 = vmatprep.subr.bf16.mxu0 0
  %270 = vmatpush1.bf16.msra.mxu0 %v227
  %271 = vmatprep.subr.bf16.mxu0 0
  %272 = vmatpush1.bf16.msra.mxu0 %v226
  %273 = vmatprep.subr.bf16.mxu0 0
  %274 = vmatpush1.bf16.msra.mxu0 %v225
  %275 = vmatprep.subr.bf16.mxu0 0
  %276 = vmatpush1.bf16.msra.mxu0 %v224
  %277 = vmatprep.subr.bf16.mxu0 0
  %278 = vmatpush1.bf16.msra.mxu0 %v223
  %279 = vmatprep.subr.bf16.mxu0 0
  %280 = vmatpush1.bf16.msra.mxu0 %v222
  %281 = vmatprep.subr.bf16.mxu0 0
  %282 = vmatpush1.bf16.msra.mxu0 %v221
  %283 = vmatprep.subr.bf16.mxu0 0
  %284 = vmatpush1.bf16.msra.mxu0 %v220
  %285 = vmatprep.subr.bf16.mxu0 0
  %286 = vmatpush2.bf16.msra.mxu0 %v235
  %287 = vmatprep.subr.bf16.mxu0 0
  %288 = vmatpush2.bf16.msra.mxu0 %v234
  %289 = vmatprep.subr.bf16.mxu0 0
  %290 = vmatpush2.bf16.msra.mxu0 %v233
  %291 = vmatprep.subr.bf16.mxu0 0
  %292 = vmatpush2.bf16.msra.mxu0 %v232
  %293 = vmatprep.subr.bf16.mxu0 0
  %294 = vmatpush2.bf16.msra.mxu0 %v231
  %295 = vmatprep.subr.bf16.mxu0 0
  %296 = vmatpush2.bf16.msra.mxu0 %v230
  %297 = vmatprep.subr.bf16.mxu0 0
  %298 = vmatpush2.bf16.msra.mxu0 %v229
  %299 = vmatprep.subr.bf16.mxu0 0
  %300 = vmatpush2.bf16.msra.mxu0 %v228
  %301 = vmatprep.mubr.bf16.mxu0 %v129
  %302 = vmatmul.mubr.bf16.gmra.mxu0 %v128
  %v303 = vpop.f32.mrf.mxu0
  %v304 = vadd.f32 0.0, %v303
  %v305 = vpop.f32.mrf.mxu0
  %v306 = vpop.f32.mrf.mxu0
  %v307 = vadd.f32 0.0, %v306
  %v308 = vpop.f32.mrf.mxu0
  %309 = vmatprep.mubr.bf16.mxu0 %v132
  %310 = vmatmul.mubr.bf16.gmra.mxu0 %v131
  %v311 = vpop.f32.mrf.mxu0
  %v312 = vadd.f32 0.0, %v311
  %v313 = vpop.f32.mrf.mxu0
  %v314 = vpop.f32.mrf.mxu0
  %v315 = vadd.f32 0.0, %v314
  %v316 = vpop.f32.mrf.mxu0
  %317 = vmatprep.mubr.bf16.mxu0 %v135
  %318 = vmatmul.mubr.bf16.gmra.mxu0 %v134
  %v319 = vpop.f32.mrf.mxu0
  %v320 = vadd.f32 0.0, %v319
  %v321 = vpop.f32.mrf.mxu0
  %v322 = vpop.f32.mrf.mxu0
  %v323 = vadd.f32 0.0, %v322
  %v324 = vpop.f32.mrf.mxu0
  %325 = vmatprep.mubr.bf16.mxu0 %v138
  %326 = vmatmul.mubr.bf16.gmra.mxu0 %v137
  %v327 = vpop.f32.mrf.mxu0
  %v328 = vadd.f32 0.0, %v327
  %v329 = vpop.f32.mrf.mxu0
  %v330 = vpop.f32.mrf.mxu0
  %v331 = vadd.f32 0.0, %v330
  %v332 = vpop.f32.mrf.mxu0
  %333 = vdwg.mxu0
  %334 = vmatprep.subr.bf16.mxu0 0
  %335 = vmatpush1.bf16.msra.mxu0 0
  %336 = vmatprep.subr.bf16.mxu0 0
  %337 = vmatpush1.bf16.msra.mxu0 0
  %338 = vmatprep.subr.bf16.mxu0 0
  %339 = vmatpush1.bf16.msra.mxu0 0
  %340 = vmatprep.subr.bf16.mxu0 0
  %341 = vmatpush1.bf16.msra.mxu0 0
  %342 = vmatprep.subr.bf16.mxu0 0
  %343 = vmatpush1.bf16.msra.mxu0 0
  %344 = vmatprep.subr.bf16.mxu0 0
  %345 = vmatpush1.bf16.msra.mxu0 0
  %346 = vmatprep.subr.bf16.mxu0 0
  %347 = vmatpush1.bf16.msra.mxu0 %v237
  %348 = vmatprep.subr.bf16.mxu0 0
  %349 = vmatpush1.bf16.msra.mxu0 %v236
  %350 = vmatprep.subr.bf16.mxu0 0
  %351 = vmatpush2.bf16.msra.mxu0 0
  %352 = vmatprep.subr.bf16.mxu0 0
  %353 = vmatpush2.bf16.msra.mxu0 0
  %354 = vmatprep.subr.bf16.mxu0 0
  %355 = vmatpush2.bf16.msra.mxu0 0
  %356 = vmatprep.subr.bf16.mxu0 0
  %357 = vmatpush2.bf16.msra.mxu0 0
  %358 = vmatprep.subr.bf16.mxu0 0
  %359 = vmatpush2.bf16.msra.mxu0 0
  %360 = vmatprep.subr.bf16.mxu0 0
  %361 = vmatpush2.bf16.msra.mxu0 0
  %362 = vmatprep.subr.bf16.mxu0 0
  %363 = vmatpush2.bf16.msra.mxu0 0
  %364 = vmatprep.subr.bf16.mxu0 0
  %365 = vmatpush2.bf16.msra.mxu0 0
  %366 = vmatprep.mubr.bf16.mxu0 0
  %367 = vmatmul.mubr.bf16.gmra.mxu0 %v258
  %v368 = vpop.f32.mrf.mxu0
  %v369 = vadd.f32 %v304, %v368
  %v370 = vpop.f32.mrf.mxu0
  %v371 = vpop.f32.mrf.mxu0
  %v372 = vadd.f32 %v307, %v371
  %v373 = vpop.f32.mrf.mxu0
  %374 = vmatprep.mubr.bf16.mxu0 0
  %375 = vmatmul.mubr.bf16.gmra.mxu0 %v261
  %v376 = vpop.f32.mrf.mxu0
  %v377 = vadd.f32 %v312, %v376
  %v378 = vpop.f32.mrf.mxu0
  %v379 = vpop.f32.mrf.mxu0
  %v380 = vadd.f32 %v315, %v379
  %v381 = vpop.f32.mrf.mxu0
  %382 = vmatprep.mubr.bf16.mxu0 0
  %383 = vmatmul.mubr.bf16.gmra.mxu0 %v264
  %v384 = vpop.f32.mrf.mxu0
  %v385 = vadd.f32 %v320, %v384
  %v386 = vpop.f32.mrf.mxu0
  %v387 = vpop.f32.mrf.mxu0
  %v388 = vadd.f32 %v323, %v387
  %v389 = vpop.f32.mrf.mxu0
  %390 = vmatprep.mubr.bf16.mxu0 0
  %391 = vmatmul.mubr.bf16.gmra.mxu0 %v267
  %v392 = vpop.f32.mrf.mxu0
  %v393 = vadd.f32 %v328, %v392
  %v394 = vpop.f32.mrf.mxu0
  %v395 = vpop.f32.mrf.mxu0
  %v396 = vadd.f32 %v331, %v395
  %v397 = vpop.f32.mrf.mxu0
  %398 = vdwg.mxu0
  %v399 = vadd.f32 %v28, %v369
  %v400 = vadd.f32 %v29, %v372
  %v401 = vadd.f32 %v30, %v377
  %v402 = vadd.f32 %v31, %v380
  %v403 = vadd.f32 %v32, %v385
  %v404 = vadd.f32 %v33, %v388
  %v405 = vadd.f32 %v34, %v393
  %v406 = vadd.f32 %v35, %v396
  %407 = vst.msk [vmem:[#allocation2] sm:$0xff] %vm256, %v399
  %408 = vst.msk [vmem:[#allocation2 + $0x8] sm:$0xff] %vm256, %v400
  %409 = vst.msk [vmem:[#allocation2 + $0x10] sm:$0xff] %vm256, %v401
  %410 = vst.msk [vmem:[#allocation2 + $0x18] sm:$0xff] %vm256, %v402
  %411 = vst.msk [vmem:[#allocation2 + $0x20] sm:$0xff] %vm256, %v403
  %412 = vst.msk [vmem:[#allocation2 + $0x28] sm:$0xff] %vm256, %v404
  %413 = vst.msk [vmem:[#allocation2 + $0x30] sm:$0xff] %vm256, %v405
  %414 = vst.msk [vmem:[#allocation2 + $0x38] sm:$0xff] %vm256, %v406
  // Predicated region
  $region18: #{set_target.23} parent=0 // pred_check
    %p415 = pneg %p15
  $region19: #{set_target.23} parent=0 // pred_check_branch
    %417 = sbr.rel (%p415) target = $region21
  $region20: #{set_target.23} parent=0 // pred_region
    %v418 = vld [vmem:[#allocation2] sm:$0xff]
    %v419 = vld [vmem:[#allocation2 + $0x8] sm:$0xff]
    %v420 = vld [vmem:[#allocation2 + $0x10] sm:$0xff]
    %v421 = vld [vmem:[#allocation2 + $0x18] sm:$0xff]
    %v422 = vld [vmem:[#allocation2 + $0x20] sm:$0xff]
    %v423 = vld [vmem:[#allocation2 + $0x28] sm:$0xff]
    %v424 = vld [vmem:[#allocation2 + $0x30] sm:$0xff]
    %v425 = vld [vmem:[#allocation2 + $0x38] sm:$0xff]
    %v426 = vld [vmem:[%s2] sm:$0x1]
    %v428 = vlaneseq
    %v429 = vshrl.u32 %v428, 7
    %v430 = vsub.s32 0, %v429
    %v431 = vrot.slane %v426, %v430
    %v433 = vadd.f32 %v418, %v431
    %v434 = vadd.f32 %v419, %v431
    %v435 = vadd.f32 %v420, %v431
    %v436 = vadd.f32 %v421, %v431
    %v437 = vadd.f32 %v422, %v431
    %v438 = vadd.f32 %v423, %v431
    %v439 = vadd.f32 %v424, %v431
    %v440 = vadd.f32 %v425, %v431
    %v441 = vpack.c.bf16 %v434, %v433
    %v442 = vpack.c.bf16 %v436, %v435
    %v443 = vpack.c.bf16 %v438, %v437
    %v444 = vpack.c.bf16 %v440, %v439
    %v449 = vunpack.c.l.b16 %v441
    %v450 = vunpack.c.h.b16 %v441
    %v451 = vunpack.c.l.b16 %v442
    %v452 = vunpack.c.h.b16 %v442
    %v453 = vunpack.c.l.b16 %v443
    %v454 = vunpack.c.h.b16 %v443
    %v455 = vunpack.c.l.b16 %v444
    %v456 = vunpack.c.h.b16 %v444
    %v457 = vpack.c.b16 %v449, %v449
    %v458 = vpack.c.b16 %v450, %v450
    %v459 = vpack.c.b16 %v451, %v451
    %v460 = vpack.c.b16 %v452, %v452
    %v461 = vpack.c.b16 %v453, %v453
    %v462 = vpack.c.b16 %v454, %v454
    %v463 = vpack.c.b16 %v455, %v455
    %v464 = vpack.c.b16 %v456, %v456
    %vm473 = vcmask 257024
    %474 = vst.msk [vmem:[%s3] sm:$0xf] %vm473, %v457
    %475 = vst.msk [vmem:[%s3 + $0x4] sm:$0xf] %vm473, %v458
    %476 = vst.msk [vmem:[%s3 + $0x8] sm:$0xf] %vm473, %v459
    %477 = vst.msk [vmem:[%s3 + $0xc] sm:$0xf] %vm473, %v460
    %478 = vst.msk [vmem:[%s3 + $0x10] sm:$0xf] %vm473, %v461
    %479 = vst.msk [vmem:[%s3 + $0x14] sm:$0xf] %vm473, %v462
    %480 = vst.msk [vmem:[%s3 + $0x18] sm:$0xf] %vm473, %v463
    %481 = vst.msk [vmem:[%s3 + $0x1c] sm:$0xf] %vm473, %v464
  $region21: #{set_target.23} parent=0 // pred_fallthru
    _
  // Predicated region
  $region22: #{set_target.23} parent=0 // pred_check
    _
  $region23: #{set_target.23} parent=0 // pred_check_branch
    %483 = sbr.rel (0) target = $region25
  $region24: #{set_target.23} parent=0 // pred_region
    _
  $region25: #{set_target.23} parent=0 // pred_fallthru
    _
  // Predicated region
  $region26: #{set_target.23} parent=0 // pred_check
    _
  $region27: #{set_target.23} parent=0 // pred_check_branch
    %485 = sbr.rel (0) target = $region29
  $region28: #{set_target.23} parent=0 // pred_region
    _
  $region29: #{set_target.23} parent=0 // pred_fallthru
    _

// kernel: set_target.24
$region0: #{set_target.24}
  #allocation0 [shape = 'u32[]', space=smem, size = 0x4, offset = 0x4, fixed_abs, tag = 'smem constant byte address 0x4 - core index']
  #allocation1 [shape = 'u32[144,128]{1,0:T(1,128)}', space=vmem, size = 0x12000, scoped, tag = 'internal scratch']
  %s0 = inlined_call_operand.vmem [shape: bf16[1,64,32], index: 0, kind: input, shape index: {}]
  %s1 = inlined_call_operand.vmem [shape: bf16[1,64,32], index: 1, kind: output, shape index: {}]
  %s2 = sld [smem:[#allocation0]]
  $region14: #{set_target.24} parent=0
    _
  %s4 = ssub.s32 1, %s2
  %s5 = scalar_select 0, %s4, %s2
  // Predicated region
  $region2: #{set_target.24} parent=0 // pred_check
    _
  $region3: #{set_target.24} parent=0 // pred_check_branch
    %7 = sbr.rel (0) target = $region5
  $region4: #{set_target.24} parent=0 // pred_region
    _
  $region5: #{set_target.24} parent=0 // pred_fallthru
    _
  %v8 = vld [vmem:[%s0] sm:$0xf]
  %v9 = vld [vmem:[%s0 + $0x4] sm:$0xf]
  %v10 = vld [vmem:[%s0 + $0x8] sm:$0xf]
  %v11 = vld [vmem:[%s0 + $0xc] sm:$0xf]
  %v12 = vld [vmem:[%s0 + $0x10] sm:$0xf]
  %v13 = vld [vmem:[%s0 + $0x14] sm:$0xf]
  %v14 = vld [vmem:[%s0 + $0x18] sm:$0xf]
  %v15 = vld [vmem:[%s0 + $0x1c] sm:$0xf]
  %v16 = vunpack.c.l.bf16 %v8
  %v17 = vunpack.c.l.bf16 %v9
  %v18 = vunpack.c.l.bf16 %v10
  %v19 = vunpack.c.l.bf16 %v11
  %v20 = vunpack.c.l.bf16 %v12
  %v21 = vunpack.c.l.bf16 %v13
  %v22 = vunpack.c.l.bf16 %v14
  %v23 = vunpack.c.l.bf16 %v15
  %vm24 = vcmask 261120
  %v25 = vsel %vm24, %v16, 0.0
  %v26 = vsel %vm24, %v17, 0.0
  %v27 = vadd.f32 %v25, %v26
  %v28 = vsel %vm24, %v18, 0.0
  %v29 = vadd.f32 %v27, %v28
  %v30 = vsel %vm24, %v19, 0.0
  %v31 = vadd.f32 %v29, %v30
  %v32 = vsel %vm24, %v20, 0.0
  %v33 = vadd.f32 %v31, %v32
  %v34 = vsel %vm24, %v21, 0.0
  %v35 = vadd.f32 %v33, %v34
  %v36 = vsel %vm24, %v22, 0.0
  %v37 = vadd.f32 %v35, %v36
  %v38 = vsel %vm24, %v23, 0.0
  %v39 = vadd.f32 %v37, %v38
  %v40 = vrot.slane %v39, 4
  %v41 = vadd.f32 %v39, %v40
  %v42 = vrot.slane %v41, 2
  %v43 = vadd.f32 %v41, %v42
  %v44 = vrot.slane %v43, 1
  %v45 = vadd.f32 %v43, %v44
  %v46 = vmul.f32 %v16, %v16
  %v47 = vmul.f32 %v17, %v17
  %v48 = vmul.f32 %v18, %v18
  %v49 = vmul.f32 %v19, %v19
  %v50 = vmul.f32 %v20, %v20
  %v51 = vmul.f32 %v21, %v21
  %v52 = vmul.f32 %v22, %v22
  %v53 = vmul.f32 %v23, %v23
  %v54 = vsel %vm24, %v46, 0.0
  %v55 = vsel %vm24, %v47, 0.0
  %v56 = vadd.f32 %v54, %v55
  %v57 = vsel %vm24, %v48, 0.0
  %v58 = vadd.f32 %v56, %v57
  %v59 = vsel %vm24, %v49, 0.0
  %v60 = vadd.f32 %v58, %v59
  %v61 = vsel %vm24, %v50, 0.0
  %v62 = vadd.f32 %v60, %v61
  %v63 = vsel %vm24, %v51, 0.0
  %v64 = vadd.f32 %v62, %v63
  %v65 = vsel %vm24, %v52, 0.0
  %v66 = vadd.f32 %v64, %v65
  %v67 = vsel %vm24, %v53, 0.0
  %v68 = vadd.f32 %v66, %v67
  %v69 = vrot.slane %v68, 4
  %v70 = vadd.f32 %v68, %v69
  %v71 = vrot.slane %v70, 2
  %v72 = vadd.f32 %v70, %v71
  %v73 = vrot.slane %v72, 1
  %v74 = vadd.f32 %v72, %v73
  %v75 = vmul.f32 %v45, 0.015625
  %v76 = vmul.f32 %v74, 0.015625
  %v77 = vmul.f32 %v75, %v75
  %v78 = vsub.f32 %v76, %v77
  %v79 = vsub.f32 %v16, %v75
  %v80 = vsub.f32 %v17, %v75
  %v81 = vsub.f32 %v18, %v75
  %v82 = vsub.f32 %v19, %v75
  %v83 = vsub.f32 %v20, %v75
  %v84 = vsub.f32 %v21, %v75
  %v85 = vsub.f32 %v22, %v75
  %v86 = vsub.f32 %v23, %v75
  %v87 = vadd.f32 %v78, 1e-05
  %v88 = vrsqrt.pop %v87
  %v89 = vmul.f32 %v79, %v88
  %v90 = vmul.f32 %v80, %v88
  %v91 = vmul.f32 %v81, %v88
  %v92 = vmul.f32 %v82, %v88
  %v93 = vmul.f32 %v83, %v88
  %v94 = vmul.f32 %v84, %v88
  %v95 = vmul.f32 %v85, %v88
  %v96 = vmul.f32 %v86, %v88
  %v97 = vmax.f32 %v89, 0.0
  %v98 = vmax.f32 %v90, 0.0
  %v99 = vmax.f32 %v91, 0.0
  %v100 = vmax.f32 %v92, 0.0
  %v101 = vmax.f32 %v93, 0.0
  %v102 = vmax.f32 %v94, 0.0
  %v103 = vmax.f32 %v95, 0.0
  %v104 = vmax.f32 %v96, 0.0
  %v105 = vpack.c.bf16 %v98, %v97
  %v106 = vpack.c.bf16 %v100, %v99
  %v107 = vpack.c.bf16 %v102, %v101
  %v108 = vpack.c.bf16 %v104, %v103
  %v113 = vunpack.c.l.b16 %v105
  %v114 = vunpack.c.h.b16 %v105
  %v115 = vunpack.c.l.b16 %v106
  %v116 = vunpack.c.h.b16 %v106
  %v117 = vunpack.c.l.b16 %v107
  %v118 = vunpack.c.h.b16 %v107
  %v119 = vunpack.c.l.b16 %v108
  %v120 = vunpack.c.h.b16 %v108
  %v121 = vpack.c.b16 %v113, %v113
  %v122 = vpack.c.b16 %v114, %v114
  %v123 = vpack.c.b16 %v115, %v115
  %v124 = vpack.c.b16 %v116, %v116
  %v125 = vpack.c.b16 %v117, %v117
  %v126 = vpack.c.b16 %v118, %v118
  %v127 = vpack.c.b16 %v119, %v119
  %v128 = vpack.c.b16 %v120, %v120
  %vm137 = vcmask 257024
  %138 = vst.msk [vmem:[%s1] sm:$0xf] %vm137, %v121
  %139 = vst.msk [vmem:[%s1 + $0x4] sm:$0xf] %vm137, %v122
  %140 = vst.msk [vmem:[%s1 + $0x8] sm:$0xf] %vm137, %v123
  %141 = vst.msk [vmem:[%s1 + $0xc] sm:$0xf] %vm137, %v124
  %142 = vst.msk [vmem:[%s1 + $0x10] sm:$0xf] %vm137, %v125
  %143 = vst.msk [vmem:[%s1 + $0x14] sm:$0xf] %vm137, %v126
  %144 = vst.msk [vmem:[%s1 + $0x18] sm:$0xf] %vm137, %v127
  %145 = vst.msk [vmem:[%s1 + $0x1c] sm:$0xf] %vm137, %v128
  // Predicated region
  $region6: #{set_target.24} parent=0 // pred_check
    _
  $region7: #{set_target.24} parent=0 // pred_check_branch
    %147 = sbr.rel (0) target = $region9
  $region8: #{set_target.24} parent=0 // pred_region
    _
  $region9: #{set_target.24} parent=0 // pred_fallthru
    _
  // Predicated region
  $region10: #{set_target.24} parent=0 // pred_check
    _
  $region11: #{set_target.24} parent=0 // pred_check_branch
    %149 = sbr.rel (0) target = $region13
  $region12: #{set_target.24} parent=0 // pred_region
    _
  $region13: #{set_target.24} parent=0 // pred_fallthru
    _

// kernel: set_target.19
$region0: #{set_target.19}
  #allocation0 [shape = 'u32[]', space=smem, size = 0x4, offset = 0x4, fixed_abs, tag = 'smem constant byte address 0x4 - core index']
  #allocation1 [shape = 'u32[144,128]{1,0:T(1,128)}', space=vmem, size = 0x12000, scoped, tag = 'internal scratch']
  #allocation2 [shape = 'f32[64,128]{1,0:T(8,128)}', space=vmem, size = 0x8000, scoped, tag = 'scratch operand']
  %s0 = inlined_call_operand.vmem [shape: bf16[1,64,64], index: 0, kind: input, shape index: {}]
  %s1 = inlined_call_operand.vmem [shape: bf16[1,64,128], index: 1, kind: input, shape index: {}]
  %s2 = inlined_call_operand.vmem [shape: f32[1,128], index: 2, kind: input, shape index: {}]
  %s3 = inlined_call_operand.vmem [shape: bf16[1,64,128], index: 3, kind: output, shape index: {}]
  %s4 = sld [smem:[#allocation0]]
  $region30: #{set_target.19} parent=0
    _
  %s6 = ssub.s32 1, %s4
  %s7 = scalar_select 0, %s6, %s4
  // Predicated region
  $region2: #{set_target.19} parent=0 // pred_check
    _
  $region3: #{set_target.19} parent=0 // pred_check_branch
    %9 = sbr.rel (0) target = $region5
  $region4: #{set_target.19} parent=0 // pred_region
    _
  $region5: #{set_target.19} parent=0 // pred_fallthru
    _
  // Predicated region
  $region6: #{set_target.19} parent=0 // pred_check
    _
  $region7: #{set_target.19} parent=0 // pred_check_branch
    %11 = sbr.rel (0) target = $region9
  $region8: #{set_target.19} parent=0 // pred_region
    _
  $region9: #{set_target.19} parent=0 // pred_fallthru
    _
  // Predicated region
  $region10: #{set_target.19} parent=0 // pred_check
    _
  $region11: #{set_target.19} parent=0 // pred_check_branch
    %13 = sbr.rel (0) target = $region13
  $region12: #{set_target.19} parent=0 // pred_region
    _
  $region13: #{set_target.19} parent=0 // pred_fallthru
    _
  %p15 = scmp.eq.s32.totalorder 0, 0
  // Predicated region
  $region14: #{set_target.19} parent=0 // pred_check
    %p16 = pneg %p15
  $region15: #{set_target.19} parent=0 // pred_check_branch
    %18 = sbr.rel (%p16) target = $region17
  $region16: #{set_target.19} parent=0 // pred_region
    %19 = vst [vmem:[#allocation2] sm:$0xff] 0.0
    %20 = vst [vmem:[#allocation2 + $0x8] sm:$0xff] 0.0
    %21 = vst [vmem:[#allocation2 + $0x10] sm:$0xff] 0.0
    %22 = vst [vmem:[#allocation2 + $0x18] sm:$0xff] 0.0
    %23 = vst [vmem:[#allocation2 + $0x20] sm:$0xff] 0.0
    %24 = vst [vmem:[#allocation2 + $0x28] sm:$0xff] 0.0
    %25 = vst [vmem:[#allocation2 + $0x30] sm:$0xff] 0.0
    %26 = vst [vmem:[#allocation2 + $0x38] sm:$0xff] 0.0
  $region17: #{set_target.19} parent=0 // pred_fallthru
    _
  %v27 = vld [vmem:[#allocation2] sm:$0xff]
  %v28 = vld [vmem:[#allocation2 + $0x8] sm:$0xff]
  %v29 = vld [vmem:[#allocation2 + $0x10] sm:$0xff]
  %v30 = vld [vmem:[#allocation2 + $0x18] sm:$0xff]
  %v31 = vld [vmem:[#allocation2 + $0x20] sm:$0xff]
  %v32 = vld [vmem:[#allocation2 + $0x28] sm:$0xff]
  %v33 = vld [vmem:[#allocation2 + $0x30] sm:$0xff]
  %v34 = vld [vmem:[#allocation2 + $0x38] sm:$0xff]
  %v35 = vld [vmem:[%s0] sm:$0xf]
  %v36 = vld [vmem:[%s0 + $0x4] sm:$0xf]
  %v37 = vld [vmem:[%s0 + $0x8] sm:$0xf]
  %v38 = vld [vmem:[%s0 + $0xc] sm:$0xf]
  %v39 = vld [vmem:[%s0 + $0x10] sm:$0xf]
  %v40 = vld [vmem:[%s0 + $0x14] sm:$0xf]
  %v41 = vld [vmem:[%s0 + $0x18] sm:$0xf]
  %v42 = vld [vmem:[%s0 + $0x1c] sm:$0xf]
  %v43 = vld [vmem:[%s1] sm:$0xf]
  %v44 = vld [vmem:[%s1 + $0x4] sm:$0xf]
  %v45 = vld [vmem:[%s1 + $0x8] sm:$0xf]
  %v46 = vld [vmem:[%s1 + $0xc] sm:$0xf]
  %v47 = vld [vmem:[%s1 + $0x10] sm:$0xf]
  %v48 = vld [vmem:[%s1 + $0x14] sm:$0xf]
  %v49 = vld [vmem:[%s1 + $0x18] sm:$0xf]
  %v50 = vld [vmem:[%s1 + $0x1c] sm:$0xf]
  %v59 = vunpack.c.l.b16 %v35
  %v60 = vunpack.c.l.b16 %v36
  %v61 = vunpack.c.l.b16 %v37
  %v62 = vunpack.c.l.b16 %v38
  %v63 = vunpack.c.l.b16 %v39
  %v64 = vunpack.c.l.b16 %v40
  %v65 = vunpack.c.l.b16 %v41
  %v66 = vunpack.c.l.b16 %v42
  %v67 = vpack.c.b16 %v60, %v59
  %v68 = vpack.c.b16 %v62, %v61
  %v69 = vpack.c.b16 %v64, %v63
  %v70 = vpack.c.b16 %v66, %v65
  %v79 = vunpack.c.l.b16 %v43
  %v80 = vunpack.c.l.b16 %v44
  %v81 = vunpack.c.l.b16 %v45
  %v82 = vunpack.c.l.b16 %v46
  %v83 = vunpack.c.l.b16 %v47
  %v84 = vunpack.c.l.b16 %v48
  %v85 = vunpack.c.l.b16 %v49
  %v86 = vunpack.c.l.b16 %v50
  %v87 = vpack.c.b16 %v80, %v79
  %v88 = vpack.c.b16 %v82, %v81
  %v89 = vpack.c.b16 %v84, %v83
  %v90 = vpack.c.b16 %v86, %v85
  %vm95 = vcmask 523264
  %v97 = vsel %vm95, %v67, 0
  %v100 = vsel %vm95, %v68, 0
  %v103 = vsel %vm95, %v69, 0
  %v106 = vsel %vm95, %v70, 0
  %108 = vmatprep.subr.bf16.mxu0 0
  %109 = vmatpush1.bf16.msra.mxu0 0
  %110 = vmatprep.subr.bf16.mxu0 0
  %111 = vmatpush1.bf16.msra.mxu0 0
  %112 = vmatprep.subr.bf16.mxu0 0
  %113 = vmatpush1.bf16.msra.mxu0 0
  %114 = vmatprep.subr.bf16.mxu0 0
  %115 = vmatpush1.bf16.msra.mxu0 0
  %116 = vmatprep.subr.bf16.mxu0 0
  %117 = vmatpush1.bf16.msra.mxu0 %v90
  %118 = vmatprep.subr.bf16.mxu0 0
  %119 = vmatpush1.bf16.msra.mxu0 %v89
  %120 = vmatprep.subr.bf16.mxu0 0
  %121 = vmatpush1.bf16.msra.mxu0 %v88
  %122 = vmatprep.subr.bf16.mxu0 0
  %123 = vmatpush1.bf16.msra.mxu0 %v87
  %124 = vmatprep.subr.bf16.mxu0 0
  %125 = vmatpush2.bf16.msra.mxu0 0
  %126 = vmatprep.subr.bf16.mxu0 0
  %127 = vmatpush2.bf16.msra.mxu0 0
  %128 = vmatprep.subr.bf16.mxu0 0
  %129 = vmatpush2.bf16.msra.mxu0 0
  %130 = vmatprep.subr.bf16.mxu0 0
  %131 = vmatpush2.bf16.msra.mxu0 0
  %132 = vmatprep.subr.bf16.mxu0 0
  %133 = vmatpush2.bf16.msra.mxu0 0
  %134 = vmatprep.subr.bf16.mxu0 0
  %135 = vmatpush2.bf16.msra.mxu0 0
  %136 = vmatprep.subr.bf16.mxu0 0
  %137 = vmatpush2.bf16.msra.mxu0 0
  %138 = vmatprep.subr.bf16.mxu0 0
  %139 = vmatpush2.bf16.msra.mxu0 0
  %140 = vmatprep.mubr.bf16.mxu0 0
  %141 = vmatmul.mubr.bf16.gmra.mxu0 %v97
  %v142 = vpop.f32.mrf.mxu0
  %v143 = vadd.f32 0.0, %v142
  %v144 = vpop.f32.mrf.mxu0
  %v145 = vpop.f32.mrf.mxu0
  %v146 = vadd.f32 0.0, %v145
  %v147 = vpop.f32.mrf.mxu0
  %148 = vmatprep.mubr.bf16.mxu0 0
  %149 = vmatmul.mubr.bf16.gmra.mxu0 %v100
  %v150 = vpop.f32.mrf.mxu0
  %v151 = vadd.f32 0.0, %v150
  %v152 = vpop.f32.mrf.mxu0
  %v153 = vpop.f32.mrf.mxu0
  %v154 = vadd.f32 0.0, %v153
  %v155 = vpop.f32.mrf.mxu0
  %156 = vmatprep.mubr.bf16.mxu0 0
  %157 = vmatmul.mubr.bf16.gmra.mxu0 %v103
  %v158 = vpop.f32.mrf.mxu0
  %v159 = vadd.f32 0.0, %v158
  %v160 = vpop.f32.mrf.mxu0
  %v161 = vpop.f32.mrf.mxu0
  %v162 = vadd.f32 0.0, %v161
  %v163 = vpop.f32.mrf.mxu0
  %164 = vmatprep.mubr.bf16.mxu0 0
  %165 = vmatmul.mubr.bf16.gmra.mxu0 %v106
  %v166 = vpop.f32.mrf.mxu0
  %v167 = vadd.f32 0.0, %v166
  %v168 = vpop.f32.mrf.mxu0
  %v169 = vpop.f32.mrf.mxu0
  %v170 = vadd.f32 0.0, %v169
  %v171 = vpop.f32.mrf.mxu0
  %172 = vdwg.mxu0
  %v173 = vadd.f32 %v27, %v143
  %v174 = vadd.f32 %v28, %v146
  %v175 = vadd.f32 %v29, %v151
  %v176 = vadd.f32 %v30, %v154
  %v177 = vadd.f32 %v31, %v159
  %v178 = vadd.f32 %v32, %v162
  %v179 = vadd.f32 %v33, %v167
  %v180 = vadd.f32 %v34, %v170
  %181 = vst [vmem:[#allocation2] sm:$0xff] %v173
  %182 = vst [vmem:[#allocation2 + $0x8] sm:$0xff] %v174
  %183 = vst [vmem:[#allocation2 + $0x10] sm:$0xff] %v175
  %184 = vst [vmem:[#allocation2 + $0x18] sm:$0xff] %v176
  %185 = vst [vmem:[#allocation2 + $0x20] sm:$0xff] %v177
  %186 = vst [vmem:[#allocation2 + $0x28] sm:$0xff] %v178
  %187 = vst [vmem:[#allocation2 + $0x30] sm:$0xff] %v179
  %188 = vst [vmem:[#allocation2 + $0x38] sm:$0xff] %v180
  // Predicated region
  $region18: #{set_target.19} parent=0 // pred_check
    %p189 = pneg %p15
  $region19: #{set_target.19} parent=0 // pred_check_branch
    %191 = sbr.rel (%p189) target = $region21
  $region20: #{set_target.19} parent=0 // pred_region
    %v192 = vld [vmem:[#allocation2] sm:$0xff]
    %v193 = vld [vmem:[#allocation2 + $0x8] sm:$0xff]
    %v194 = vld [vmem:[#allocation2 + $0x10] sm:$0xff]
    %v195 = vld [vmem:[#allocation2 + $0x18] sm:$0xff]
    %v196 = vld [vmem:[#allocation2 + $0x20] sm:$0xff]
    %v197 = vld [vmem:[#allocation2 + $0x28] sm:$0xff]
    %v198 = vld [vmem:[#allocation2 + $0x30] sm:$0xff]
    %v199 = vld [vmem:[#allocation2 + $0x38] sm:$0xff]
    %v200 = vld [vmem:[%s2] sm:$0x1]
    %v202 = vlaneseq
    %v203 = vshrl.u32 %v202, 7
    %v204 = vsub.s32 0, %v203
    %v205 = vrot.slane %v200, %v204
    %v207 = vadd.f32 %v192, %v205
    %v208 = vadd.f32 %v193, %v205
    %v209 = vadd.f32 %v194, %v205
    %v210 = vadd.f32 %v195, %v205
    %v211 = vadd.f32 %v196, %v205
    %v212 = vadd.f32 %v197, %v205
    %v213 = vadd.f32 %v198, %v205
    %v214 = vadd.f32 %v199, %v205
    %v215 = vpack.c.bf16 %v208, %v207
    %v216 = vpack.c.bf16 %v210, %v209
    %v217 = vpack.c.bf16 %v212, %v211
    %v218 = vpack.c.bf16 %v214, %v213
    %v223 = vunpack.c.l.b16 %v215
    %v224 = vunpack.c.h.b16 %v215
    %v225 = vunpack.c.l.b16 %v216
    %v226 = vunpack.c.h.b16 %v216
    %v227 = vunpack.c.l.b16 %v217
    %v228 = vunpack.c.h.b16 %v217
    %v229 = vunpack.c.l.b16 %v218
    %v230 = vunpack.c.h.b16 %v218
    %v231 = vpack.c.b16 %v223, %v223
    %v232 = vpack.c.b16 %v224, %v224
    %v233 = vpack.c.b16 %v225, %v225
    %v234 = vpack.c.b16 %v226, %v226
    %v235 = vpack.c.b16 %v227, %v227
    %v236 = vpack.c.b16 %v228, %v228
    %v237 = vpack.c.b16 %v229, %v229
    %v238 = vpack.c.b16 %v230, %v230
    %247 = vst [vmem:[%s3] sm:$0xf] %v231
    %248 = vst [vmem:[%s3 + $0x4] sm:$0xf] %v232
    %249 = vst [vmem:[%s3 + $0x8] sm:$0xf] %v233
    %250 = vst [vmem:[%s3 + $0xc] sm:$0xf] %v234
    %251 = vst [vmem:[%s3 + $0x10] sm:$0xf] %v235
    %252 = vst [vmem:[%s3 + $0x14] sm:$0xf] %v236
    %253 = vst [vmem:[%s3 + $0x18] sm:$0xf] %v237
    %254 = vst [vmem:[%s3 + $0x1c] sm:$0xf] %v238
  $region21: #{set_target.19} parent=0 // pred_fallthru
    _
  // Predicated region
  $region22: #{set_target.19} parent=0 // pred_check
    _
  $region23: #{set_target.19} parent=0 // pred_check_branch
    %256 = sbr.rel (0) target = $region25
  $region24: #{set_target.19} parent=0 // pred_region
    _
  $region25: #{set_target.19} parent=0 // pred_fallthru
    _
  // Predicated region
  $region26: #{set_target.19} parent=0 // pred_check
    _
  $region27: #{set_target.19} parent=0 // pred_check_branch
    %258 = sbr.rel (0) target = $region29
  $region28: #{set_target.19} parent=0 // pred_region
    _
  $region29: #{set_target.19} parent=0 // pred_fallthru
    _

// kernel: set_target.27
$region0: #{set_target.27}
  #allocation0 [shape = 'u32[]', space=smem, size = 0x4, offset = 0x4, fixed_abs, tag = 'smem constant byte address 0x4 - core index']
  #allocation1 [shape = 'u32[144,128]{1,0:T(1,128)}', space=vmem, size = 0x12000, scoped, tag = 'internal scratch']
  %s0 = inlined_call_operand.vmem [shape: bf16[1,64,128], index: 0, kind: input, shape index: {}]
  %s1 = inlined_call_operand.vmem [shape: bf16[1,64,128], index: 1, kind: output, shape index: {}]
  %s2 = sld [smem:[#allocation0]]
  $region14: #{set_target.27} parent=0
    _
  %s4 = ssub.s32 1, %s2
  %s5 = scalar_select 0, %s4, %s2
  // Predicated region
  $region2: #{set_target.27} parent=0 // pred_check
    _
  $region3: #{set_target.27} parent=0 // pred_check_branch
    %7 = sbr.rel (0) target = $region5
  $region4: #{set_target.27} parent=0 // pred_region
    _
  $region5: #{set_target.27} parent=0 // pred_fallthru
    _
  %v8 = vld [vmem:[%s0] sm:$0xf]
  %v9 = vld [vmem:[%s0 + $0x4] sm:$0xf]
  %v10 = vld [vmem:[%s0 + $0x8] sm:$0xf]
  %v11 = vld [vmem:[%s0 + $0xc] sm:$0xf]
  %v12 = vld [vmem:[%s0 + $0x10] sm:$0xf]
  %v13 = vld [vmem:[%s0 + $0x14] sm:$0xf]
  %v14 = vld [vmem:[%s0 + $0x18] sm:$0xf]
  %v15 = vld [vmem:[%s0 + $0x1c] sm:$0xf]
  %v16 = vunpack.c.l.bf16 %v8
  %v17 = vunpack.c.l.bf16 %v9
  %v18 = vunpack.c.l.bf16 %v10
  %v19 = vunpack.c.l.bf16 %v11
  %v20 = vunpack.c.l.bf16 %v12
  %v21 = vunpack.c.l.bf16 %v13
  %v22 = vunpack.c.l.bf16 %v14
  %v23 = vunpack.c.l.bf16 %v15
  %v24 = vadd.f32 %v16, %v17
  %v25 = vadd.f32 %v24, %v18
  %v26 = vadd.f32 %v25, %v19
  %v27 = vadd.f32 %v26, %v20
  %v28 = vadd.f32 %v27, %v21
  %v29 = vadd.f32 %v28, %v22
  %v30 = vadd.f32 %v29, %v23
  %v31 = vrot.slane %v30, 4
  %v32 = vadd.f32 %v30, %v31
  %v33 = vrot.slane %v32, 2
  %v34 = vadd.f32 %v32, %v33
  %v35 = vrot.slane %v34, 1
  %v36 = vadd.f32 %v34, %v35
  %v37 = vmul.f32 %v16, %v16
  %v38 = vmul.f32 %v17, %v17
  %v39 = vmul.f32 %v18, %v18
  %v40 = vmul.f32 %v19, %v19
  %v41 = vmul.f32 %v20, %v20
  %v42 = vmul.f32 %v21, %v21
  %v43 = vmul.f32 %v22, %v22
  %v44 = vmul.f32 %v23, %v23
  %v45 = vadd.f32 %v37, %v38
  %v46 = vadd.f32 %v45, %v39
  %v47 = vadd.f32 %v46, %v40
  %v48 = vadd.f32 %v47, %v41
  %v49 = vadd.f32 %v48, %v42
  %v50 = vadd.f32 %v49, %v43
  %v51 = vadd.f32 %v50, %v44
  %v52 = vrot.slane %v51, 4
  %v53 = vadd.f32 %v51, %v52
  %v54 = vrot.slane %v53, 2
  %v55 = vadd.f32 %v53, %v54
  %v56 = vrot.slane %v55, 1
  %v57 = vadd.f32 %v55, %v56
  %v58 = vmul.f32 %v36, 0.015625
  %v59 = vmul.f32 %v57, 0.015625
  %v60 = vmul.f32 %v58, %v58
  %v61 = vsub.f32 %v59, %v60
  %v62 = vsub.f32 %v16, %v58
  %v63 = vsub.f32 %v17, %v58
  %v64 = vsub.f32 %v18, %v58
  %v65 = vsub.f32 %v19, %v58
  %v66 = vsub.f32 %v20, %v58
  %v67 = vsub.f32 %v21, %v58
  %v68 = vsub.f32 %v22, %v58
  %v69 = vsub.f32 %v23, %v58
  %v70 = vadd.f32 %v61, 1e-05
  %v71 = vrsqrt.pop %v70
  %v72 = vmul.f32 %v62, %v71
  %v73 = vmul.f32 %v63, %v71
  %v74 = vmul.f32 %v64, %v71
  %v75 = vmul.f32 %v65, %v71
  %v76 = vmul.f32 %v66, %v71
  %v77 = vmul.f32 %v67, %v71
  %v78 = vmul.f32 %v68, %v71
  %v79 = vmul.f32 %v69, %v71
  %v80 = vmax.f32 %v72, 0.0
  %v81 = vmax.f32 %v73, 0.0
  %v82 = vmax.f32 %v74, 0.0
  %v83 = vmax.f32 %v75, 0.0
  %v84 = vmax.f32 %v76, 0.0
  %v85 = vmax.f32 %v77, 0.0
  %v86 = vmax.f32 %v78, 0.0
  %v87 = vmax.f32 %v79, 0.0
  %v88 = vpack.c.bf16 %v81, %v80
  %v89 = vpack.c.bf16 %v83, %v82
  %v90 = vpack.c.bf16 %v85, %v84
  %v91 = vpack.c.bf16 %v87, %v86
  %v96 = vunpack.c.l.b16 %v88
  %v97 = vunpack.c.h.b16 %v88
  %v98 = vunpack.c.l.b16 %v89
  %v99 = vunpack.c.h.b16 %v89
  %v100 = vunpack.c.l.b16 %v90
  %v101 = vunpack.c.h.b16 %v90
  %v102 = vunpack.c.l.b16 %v91
  %v103 = vunpack.c.h.b16 %v91
  %v104 = vpack.c.b16 %v96, %v96
  %v105 = vpack.c.b16 %v97, %v97
  %v106 = vpack.c.b16 %v98, %v98
  %v107 = vpack.c.b16 %v99, %v99
  %v108 = vpack.c.b16 %v100, %v100
  %v109 = vpack.c.b16 %v101, %v101
  %v110 = vpack.c.b16 %v102, %v102
  %v111 = vpack.c.b16 %v103, %v103
  %120 = vst [vmem:[%s1] sm:$0xf] %v104
  %121 = vst [vmem:[%s1 + $0x4] sm:$0xf] %v105
  %122 = vst [vmem:[%s1 + $0x8] sm:$0xf] %v106
  %123 = vst [vmem:[%s1 + $0xc] sm:$0xf] %v107
  %124 = vst [vmem:[%s1 + $0x10] sm:$0xf] %v108
  %125 = vst [vmem:[%s1 + $0x14] sm:$0xf] %v109
  %126 = vst [vmem:[%s1 + $0x18] sm:$0xf] %v110
  %127 = vst [vmem:[%s1 + $0x1c] sm:$0xf] %v111
  // Predicated region
  $region6: #{set_target.27} parent=0 // pred_check
    _
  $region7: #{set_target.27} parent=0 // pred_check_branch
    %129 = sbr.rel (0) target = $region9
  $region8: #{set_target.27} parent=0 // pred_region
    _
  $region9: #{set_target.27} parent=0 // pred_fallthru
    _
  // Predicated region
  $region10: #{set_target.27} parent=0 // pred_check
    _
  $region11: #{set_target.27} parent=0 // pred_check_branch
    %131 = sbr.rel (0) target = $region13
  $region12: #{set_target.27} parent=0 // pred_region
    _
  $region13: #{set_target.27} parent=0 // pred_fallthru
    _

// kernel: set_target.25
$region0: #{set_target.25}
  #allocation0 [shape = 'u32[]', space=smem, size = 0x4, offset = 0x4, fixed_abs, tag = 'smem constant byte address 0x4 - core index']
  #allocation1 [shape = 'u32[144,128]{1,0:T(1,128)}', space=vmem, size = 0x12000, scoped, tag = 'internal scratch']
  #allocation2 [shape = 'f32[64,128]{1,0:T(8,128)}', space=vmem, size = 0x8000, scoped, tag = 'scratch operand']
  %s0 = inlined_call_operand.vmem [shape: bf16[1,64,32], index: 0, kind: input, shape index: {}]
  %s1 = inlined_call_operand.vmem [shape: bf16[1,32,128], index: 1, kind: input, shape index: {}]
  %s2 = inlined_call_operand.vmem [shape: f32[1,128], index: 2, kind: input, shape index: {}]
  %s3 = inlined_call_operand.vmem [shape: bf16[1,64,128], index: 3, kind: input, shape index: {}]
  %s4 = inlined_call_operand.vmem [shape: bf16[1,64,128], index: 4, kind: output, shape index: {}]
  %s5 = sld [smem:[#allocation0]]
  $region34: #{set_target.25} parent=0
    _
  %s7 = ssub.s32 1, %s5
  %s8 = scalar_select 0, %s7, %s5
  // Predicated region
  $region2: #{set_target.25} parent=0 // pred_check
    _
  $region3: #{set_target.25} parent=0 // pred_check_branch
    %10 = sbr.rel (0) target = $region5
  $region4: #{set_target.25} parent=0 // pred_region
    _
  $region5: #{set_target.25} parent=0 // pred_fallthru
    _
  // Predicated region
  $region6: #{set_target.25} parent=0 // pred_check
    _
  $region7: #{set_target.25} parent=0 // pred_check_branch
    %12 = sbr.rel (0) target = $region9
  $region8: #{set_target.25} parent=0 // pred_region
    _
  $region9: #{set_target.25} parent=0 // pred_fallthru
    _
  // Predicated region
  $region10: #{set_target.25} parent=0 // pred_check
    _
  $region11: #{set_target.25} parent=0 // pred_check_branch
    %14 = sbr.rel (0) target = $region13
  $region12: #{set_target.25} parent=0 // pred_region
    _
  $region13: #{set_target.25} parent=0 // pred_fallthru
    _
  // Predicated region
  $region14: #{set_target.25} parent=0 // pred_check
    _
  $region15: #{set_target.25} parent=0 // pred_check_branch
    %16 = sbr.rel (0) target = $region17
  $region16: #{set_target.25} parent=0 // pred_region
    _
  $region17: #{set_target.25} parent=0 // pred_fallthru
    _
  %p18 = scmp.eq.s32.totalorder 0, 0
  // Predicated region
  $region18: #{set_target.25} parent=0 // pred_check
    %p19 = pneg %p18
  $region19: #{set_target.25} parent=0 // pred_check_branch
    %21 = sbr.rel (%p19) target = $region21
  $region20: #{set_target.25} parent=0 // pred_region
    %22 = vst [vmem:[#allocation2] sm:$0xff] 0.0
    %23 = vst [vmem:[#allocation2 + $0x8] sm:$0xff] 0.0
    %24 = vst [vmem:[#allocation2 + $0x10] sm:$0xff] 0.0
    %25 = vst [vmem:[#allocation2 + $0x18] sm:$0xff] 0.0
    %26 = vst [vmem:[#allocation2 + $0x20] sm:$0xff] 0.0
    %27 = vst [vmem:[#allocation2 + $0x28] sm:$0xff] 0.0
    %28 = vst [vmem:[#allocation2 + $0x30] sm:$0xff] 0.0
    %29 = vst [vmem:[#allocation2 + $0x38] sm:$0xff] 0.0
  $region21: #{set_target.25} parent=0 // pred_fallthru
    _
  %v30 = vld [vmem:[#allocation2] sm:$0xff]
  %v31 = vld [vmem:[#allocation2 + $0x8] sm:$0xff]
  %v32 = vld [vmem:[#allocation2 + $0x10] sm:$0xff]
  %v33 = vld [vmem:[#allocation2 + $0x18] sm:$0xff]
  %v34 = vld [vmem:[#allocation2 + $0x20] sm:$0xff]
  %v35 = vld [vmem:[#allocation2 + $0x28] sm:$0xff]
  %v36 = vld [vmem:[#allocation2 + $0x30] sm:$0xff]
  %v37 = vld [vmem:[#allocation2 + $0x38] sm:$0xff]
  %v38 = vld [vmem:[%s0] sm:$0xf]
  %v39 = vld [vmem:[%s0 + $0x4] sm:$0xf]
  %v40 = vld [vmem:[%s0 + $0x8] sm:$0xf]
  %v41 = vld [vmem:[%s0 + $0xc] sm:$0xf]
  %v42 = vld [vmem:[%s0 + $0x10] sm:$0xf]
  %v43 = vld [vmem:[%s0 + $0x14] sm:$0xf]
  %v44 = vld [vmem:[%s0 + $0x18] sm:$0xf]
  %v45 = vld [vmem:[%s0 + $0x1c] sm:$0xf]
  %v46 = vld [vmem:[%s1] sm:$0xf]
  %v47 = vld [vmem:[%s1 + $0x4] sm:$0xf]
  %v48 = vld [vmem:[%s1 + $0x8] sm:$0xf]
  %v49 = vld [vmem:[%s1 + $0xc] sm:$0xf]
  %v58 = vunpack.c.l.b16 %v38
  %v59 = vunpack.c.l.b16 %v39
  %v60 = vunpack.c.l.b16 %v40
  %v61 = vunpack.c.l.b16 %v41
  %v62 = vunpack.c.l.b16 %v42
  %v63 = vunpack.c.l.b16 %v43
  %v64 = vunpack.c.l.b16 %v44
  %v65 = vunpack.c.l.b16 %v45
  %v66 = vpack.c.b16 %v59, %v58
  %v67 = vpack.c.b16 %v61, %v60
  %v68 = vpack.c.b16 %v63, %v62
  %v69 = vpack.c.b16 %v65, %v64
  %v74 = vunpack.c.l.b16 %v46
  %v75 = vunpack.c.l.b16 %v47
  %v76 = vunpack.c.l.b16 %v48
  %v77 = vunpack.c.l.b16 %v49
  %v78 = vpack.c.b16 %v75, %v74
  %v79 = vpack.c.b16 %v77, %v76
  %vm82 = vcmask 261120
  %v84 = vsel %vm82, %v66, 0
  %v87 = vsel %vm82, %v67, 0
  %v90 = vsel %vm82, %v68, 0
  %v93 = vsel %vm82, %v69, 0
  %95 = vmatprep.subr.bf16.mxu0 0
  %96 = vmatpush1.bf16.msra.mxu0 0
  %97 = vmatprep.subr.bf16.mxu0 0
  %98 = vmatpush1.bf16.msra.mxu0 0
  %99 = vmatprep.subr.bf16.mxu0 0
  %100 = vmatpush1.bf16.msra.mxu0 0
  %101 = vmatprep.subr.bf16.mxu0 0
  %102 = vmatpush1.bf16.msra.mxu0 0
  %103 = vmatprep.subr.bf16.mxu0 0
  %104 = vmatpush1.bf16.msra.mxu0 0
  %105 = vmatprep.subr.bf16.mxu0 0
  %106 = vmatpush1.bf16.msra.mxu0 0
  %107 = vmatprep.subr.bf16.mxu0 0
  %108 = vmatpush1.bf16.msra.mxu0 %v79
  %109 = vmatprep.subr.bf16.mxu0 0
  %110 = vmatpush1.bf16.msra.mxu0 %v78
  %111 = vmatprep.subr.bf16.mxu0 0
  %112 = vmatpush2.bf16.msra.mxu0 0
  %113 = vmatprep.subr.bf16.mxu0 0
  %114 = vmatpush2.bf16.msra.mxu0 0
  %115 = vmatprep.subr.bf16.mxu0 0
  %116 = vmatpush2.bf16.msra.mxu0 0
  %117 = vmatprep.subr.bf16.mxu0 0
  %118 = vmatpush2.bf16.msra.mxu0 0
  %119 = vmatprep.subr.bf16.mxu0 0
  %120 = vmatpush2.bf16.msra.mxu0 0
  %121 = vmatprep.subr.bf16.mxu0 0
  %122 = vmatpush2.bf16.msra.mxu0 0
  %123 = vmatprep.subr.bf16.mxu0 0
  %124 = vmatpush2.bf16.msra.mxu0 0
  %125 = vmatprep.subr.bf16.mxu0 0
  %126 = vmatpush2.bf16.msra.mxu0 0
  %127 = vmatprep.mubr.bf16.mxu0 0
  %128 = vmatmul.mubr.bf16.gmra.mxu0 %v84
  %v129 = vpop.f32.mrf.mxu0
  %v130 = vadd.f32 0.0, %v129
  %v131 = vpop.f32.mrf.mxu0
  %v132 = vpop.f32.mrf.mxu0
  %v133 = vadd.f32 0.0, %v132
  %v134 = vpop.f32.mrf.mxu0
  %135 = vmatprep.mubr.bf16.mxu0 0
  %136 = vmatmul.mubr.bf16.gmra.mxu0 %v87
  %v137 = vpop.f32.mrf.mxu0
  %v138 = vadd.f32 0.0, %v137
  %v139 = vpop.f32.mrf.mxu0
  %v140 = vpop.f32.mrf.mxu0
  %v141 = vadd.f32 0.0, %v140
  %v142 = vpop.f32.mrf.mxu0
  %143 = vmatprep.mubr.bf16.mxu0 0
  %144 = vmatmul.mubr.bf16.gmra.mxu0 %v90
  %v145 = vpop.f32.mrf.mxu0
  %v146 = vadd.f32 0.0, %v145
  %v147 = vpop.f32.mrf.mxu0
  %v148 = vpop.f32.mrf.mxu0
  %v149 = vadd.f32 0.0, %v148
  %v150 = vpop.f32.mrf.mxu0
  %151 = vmatprep.mubr.bf16.mxu0 0
  %152 = vmatmul.mubr.bf16.gmra.mxu0 %v93
  %v153 = vpop.f32.mrf.mxu0
  %v154 = vadd.f32 0.0, %v153
  %v155 = vpop.f32.mrf.mxu0
  %v156 = vpop.f32.mrf.mxu0
  %v157 = vadd.f32 0.0, %v156
  %v158 = vpop.f32.mrf.mxu0
  %159 = vdwg.mxu0
  %v160 = vadd.f32 %v30, %v130
  %v161 = vadd.f32 %v31, %v133
  %v162 = vadd.f32 %v32, %v138
  %v163 = vadd.f32 %v33, %v141
  %v164 = vadd.f32 %v34, %v146
  %v165 = vadd.f32 %v35, %v149
  %v166 = vadd.f32 %v36, %v154
  %v167 = vadd.f32 %v37, %v157
  %168 = vst [vmem:[#allocation2] sm:$0xff] %v160
  %169 = vst [vmem:[#allocation2 + $0x8] sm:$0xff] %v161
  %170 = vst [vmem:[#allocation2 + $0x10] sm:$0xff] %v162
  %171 = vst [vmem:[#allocation2 + $0x18] sm:$0xff] %v163
  %172 = vst [vmem:[#allocation2 + $0x20] sm:$0xff] %v164
  %173 = vst [vmem:[#allocation2 + $0x28] sm:$0xff] %v165
  %174 = vst [vmem:[#allocation2 + $0x30] sm:$0xff] %v166
  %175 = vst [vmem:[#allocation2 + $0x38] sm:$0xff] %v167
  // Predicated region
  $region22: #{set_target.25} parent=0 // pred_check
    %p176 = pneg %p18
  $region23: #{set_target.25} parent=0 // pred_check_branch
    %178 = sbr.rel (%p176) target = $region25
  $region24: #{set_target.25} parent=0 // pred_region
    %v179 = vld [vmem:[#allocation2] sm:$0xff]
    %v180 = vld [vmem:[#allocation2 + $0x8] sm:$0xff]
    %v181 = vld [vmem:[#allocation2 + $0x10] sm:$0xff]
    %v182 = vld [vmem:[#allocation2 + $0x18] sm:$0xff]
    %v183 = vld [vmem:[#allocation2 + $0x20] sm:$0xff]
    %v184 = vld [vmem:[#allocation2 + $0x28] sm:$0xff]
    %v185 = vld [vmem:[#allocation2 + $0x30] sm:$0xff]
    %v186 = vld [vmem:[#allocation2 + $0x38] sm:$0xff]
    %v187 = vld [vmem:[%s2] sm:$0x1]
    %v189 = vlaneseq
    %v190 = vshrl.u32 %v189, 7
    %v191 = vsub.s32 0, %v190
    %v192 = vrot.slane %v187, %v191
    %v194 = vadd.f32 %v179, %v192
    %v195 = vadd.f32 %v180, %v192
    %v196 = vadd.f32 %v181, %v192
    %v197 = vadd.f32 %v182, %v192
    %v198 = vadd.f32 %v183, %v192
    %v199 = vadd.f32 %v184, %v192
    %v200 = vadd.f32 %v185, %v192
    %v201 = vadd.f32 %v186, %v192
    %v202 = vld [vmem:[%s3] sm:$0xf]
    %v203 = vld [vmem:[%s3 + $0x4] sm:$0xf]
    %v204 = vld [vmem:[%s3 + $0x8] sm:$0xf]
    %v205 = vld [vmem:[%s3 + $0xc] sm:$0xf]
    %v206 = vld [vmem:[%s3 + $0x10] sm:$0xf]
    %v207 = vld [vmem:[%s3 + $0x14] sm:$0xf]
    %v208 = vld [vmem:[%s3 + $0x18] sm:$0xf]
    %v209 = vld [vmem:[%s3 + $0x1c] sm:$0xf]
    %v210 = vunpack.c.l.bf16 %v202
    %v211 = vunpack.c.l.bf16 %v203
    %v212 = vunpack.c.l.bf16 %v204
    %v213 = vunpack.c.l.bf16 %v205
    %v214 = vunpack.c.l.bf16 %v206
    %v215 = vunpack.c.l.bf16 %v207
    %v216 = vunpack.c.l.bf16 %v208
    %v217 = vunpack.c.l.bf16 %v209
    %v218 = vadd.f32 %v194, %v210
    %v219 = vadd.f32 %v195, %v211
    %v220 = vadd.f32 %v196, %v212
    %v221 = vadd.f32 %v197, %v213
    %v222 = vadd.f32 %v198, %v214
    %v223 = vadd.f32 %v199, %v215
    %v224 = vadd.f32 %v200, %v216
    %v225 = vadd.f32 %v201, %v217
    %v226 = vpack.c.bf16 %v219, %v218
    %v227 = vpack.c.bf16 %v221, %v220
    %v228 = vpack.c.bf16 %v223, %v222
    %v229 = vpack.c.bf16 %v225, %v224
    %v234 = vunpack.c.l.b16 %v226
    %v235 = vunpack.c.h.b16 %v226
    %v236 = vunpack.c.l.b16 %v227
    %v237 = vunpack.c.h.b16 %v227
    %v238 = vunpack.c.l.b16 %v228
    %v239 = vunpack.c.h.b16 %v228
    %v240 = vunpack.c.l.b16 %v229
    %v241 = vunpack.c.h.b16 %v229
    %v242 = vpack.c.b16 %v234, %v234
    %v243 = vpack.c.b16 %v235, %v235
    %v244 = vpack.c.b16 %v236, %v236
    %v245 = vpack.c.b16 %v237, %v237
    %v246 = vpack.c.b16 %v238, %v238
    %v247 = vpack.c.b16 %v239, %v239
    %v248 = vpack.c.b16 %v240, %v240
    %v249 = vpack.c.b16 %v241, %v241
    %258 = vst [vmem:[%s4] sm:$0xf] %v242
    %259 = vst [vmem:[%s4 + $0x4] sm:$0xf] %v243
    %260 = vst [vmem:[%s4 + $0x8] sm:$0xf] %v244
    %261 = vst [vmem:[%s4 + $0xc] sm:$0xf] %v245
    %262 = vst [vmem:[%s4 + $0x10] sm:$0xf] %v246
    %263 = vst [vmem:[%s4 + $0x14] sm:$0xf] %v247
    %264 = vst [vmem:[%s4 + $0x18] sm:$0xf] %v248
    %265 = vst [vmem:[%s4 + $0x1c] sm:$0xf] %v249
  $region25: #{set_target.25} parent=0 // pred_fallthru
    _
  // Predicated region
  $region26: #{set_target.25} parent=0 // pred_check
    _
  $region27: #{set_target.25} parent=0 // pred_check_branch
    %267 = sbr.rel (0) target = $region29
  $region28: #{set_target.25} parent=0 // pred_region
    _
  $region29: #{set_target.25} parent=0 // pred_fallthru
    _
  // Predicated region
  $region30: #{set_target.25} parent=0 // pred_check
    _
  $region31: #{set_target.25} parent=0 // pred_check_branch
    %269 = sbr.rel (0) target = $region33
  $region32: #{set_target.25} parent=0 // pred_region
    _
  $region33: #{set_target.25} parent=0 // pred_fallthru
    _

// kernel: set_target.29
$region0: #{set_target.29}
  #allocation0 [shape = 'u32[]', space=smem, size = 0x4, offset = 0x4, fixed_abs, tag = 'smem constant byte address 0x4 - core index']
  #allocation1 [shape = 'u32[144,128]{1,0:T(1,128)}', space=vmem, size = 0x12000, scoped, tag = 'internal scratch']
  %s0 = inlined_call_operand.vmem [shape: bf16[1,64,16], index: 0, kind: input, shape index: {}]
  %s1 = inlined_call_operand.vmem [shape: bf16[1,64,16], index: 1, kind: output, shape index: {}]
  %s2 = sld [smem:[#allocation0]]
  $region14: #{set_target.29} parent=0
    _
  %s4 = ssub.s32 1, %s2
  %s5 = scalar_select 0, %s4, %s2
  // Predicated region
  $region2: #{set_target.29} parent=0 // pred_check
    _
  $region3: #{set_target.29} parent=0 // pred_check_branch
    %7 = sbr.rel (0) target = $region5
  $region4: #{set_target.29} parent=0 // pred_region
    _
  $region5: #{set_target.29} parent=0 // pred_fallthru
    _
  %v8 = vld [vmem:[%s0] sm:$0xf]
  %v9 = vld [vmem:[%s0 + $0x4] sm:$0xf]
  %v10 = vld [vmem:[%s0 + $0x8] sm:$0xf]
  %v11 = vld [vmem:[%s0 + $0xc] sm:$0xf]
  %v12 = vld [vmem:[%s0 + $0x10] sm:$0xf]
  %v13 = vld [vmem:[%s0 + $0x14] sm:$0xf]
  %v14 = vld [vmem:[%s0 + $0x18] sm:$0xf]
  %v15 = vld [vmem:[%s0 + $0x1c] sm:$0xf]
  %v16 = vunpack.c.l.bf16 %v8
  %v17 = vunpack.c.l.bf16 %v9
  %v18 = vunpack.c.l.bf16 %v10
  %v19 = vunpack.c.l.bf16 %v11
  %v20 = vunpack.c.l.bf16 %v12
  %v21 = vunpack.c.l.bf16 %v13
  %v22 = vunpack.c.l.bf16 %v14
  %v23 = vunpack.c.l.bf16 %v15
  %vm24 = vcmask 130048
  %v25 = vsel %vm24, %v16, 0.0
  %v26 = vsel %vm24, %v17, 0.0
  %v27 = vadd.f32 %v25, %v26
  %v28 = vsel %vm24, %v18, 0.0
  %v29 = vadd.f32 %v27, %v28
  %v30 = vsel %vm24, %v19, 0.0
  %v31 = vadd.f32 %v29, %v30
  %v32 = vsel %vm24, %v20, 0.0
  %v33 = vadd.f32 %v31, %v32
  %v34 = vsel %vm24, %v21, 0.0
  %v35 = vadd.f32 %v33, %v34
  %v36 = vsel %vm24, %v22, 0.0
  %v37 = vadd.f32 %v35, %v36
  %v38 = vsel %vm24, %v23, 0.0
  %v39 = vadd.f32 %v37, %v38
  %v40 = vrot.slane %v39, 4
  %v41 = vadd.f32 %v39, %v40
  %v42 = vrot.slane %v41, 2
  %v43 = vadd.f32 %v41, %v42
  %v44 = vrot.slane %v43, 1
  %v45 = vadd.f32 %v43, %v44
  %v46 = vmul.f32 %v16, %v16
  %v47 = vmul.f32 %v17, %v17
  %v48 = vmul.f32 %v18, %v18
  %v49 = vmul.f32 %v19, %v19
  %v50 = vmul.f32 %v20, %v20
  %v51 = vmul.f32 %v21, %v21
  %v52 = vmul.f32 %v22, %v22
  %v53 = vmul.f32 %v23, %v23
  %v54 = vsel %vm24, %v46, 0.0
  %v55 = vsel %vm24, %v47, 0.0
  %v56 = vadd.f32 %v54, %v55
  %v57 = vsel %vm24, %v48, 0.0
  %v58 = vadd.f32 %v56, %v57
  %v59 = vsel %vm24, %v49, 0.0
  %v60 = vadd.f32 %v58, %v59
  %v61 = vsel %vm24, %v50, 0.0
  %v62 = vadd.f32 %v60, %v61
  %v63 = vsel %vm24, %v51, 0.0
  %v64 = vadd.f32 %v62, %v63
  %v65 = vsel %vm24, %v52, 0.0
  %v66 = vadd.f32 %v64, %v65
  %v67 = vsel %vm24, %v53, 0.0
  %v68 = vadd.f32 %v66, %v67
  %v69 = vrot.slane %v68, 4
  %v70 = vadd.f32 %v68, %v69
  %v71 = vrot.slane %v70, 2
  %v72 = vadd.f32 %v70, %v71
  %v73 = vrot.slane %v72, 1
  %v74 = vadd.f32 %v72, %v73
  %v75 = vmul.f32 %v45, 0.015625
  %v76 = vmul.f32 %v74, 0.015625
  %v77 = vmul.f32 %v75, %v75
  %v78 = vsub.f32 %v76, %v77
  %v79 = vsub.f32 %v16, %v75
  %v80 = vsub.f32 %v17, %v75
  %v81 = vsub.f32 %v18, %v75
  %v82 = vsub.f32 %v19, %v75
  %v83 = vsub.f32 %v20, %v75
  %v84 = vsub.f32 %v21, %v75
  %v85 = vsub.f32 %v22, %v75
  %v86 = vsub.f32 %v23, %v75
  %v87 = vadd.f32 %v78, 1e-05
  %v88 = vrsqrt.pop %v87
  %v89 = vmul.f32 %v79, %v88
  %v90 = vmul.f32 %v80, %v88
  %v91 = vmul.f32 %v81, %v88
  %v92 = vmul.f32 %v82, %v88
  %v93 = vmul.f32 %v83, %v88
  %v94 = vmul.f32 %v84, %v88
  %v95 = vmul.f32 %v85, %v88
  %v96 = vmul.f32 %v86, %v88
  %v97 = vmax.f32 %v89, 0.0
  %v98 = vmax.f32 %v90, 0.0
  %v99 = vmax.f32 %v91, 0.0
  %v100 = vmax.f32 %v92, 0.0
  %v101 = vmax.f32 %v93, 0.0
  %v102 = vmax.f32 %v94, 0.0
  %v103 = vmax.f32 %v95, 0.0
  %v104 = vmax.f32 %v96, 0.0
  %v105 = vpack.c.bf16 %v98, %v97
  %v106 = vpack.c.bf16 %v100, %v99
  %v107 = vpack.c.bf16 %v102, %v101
  %v108 = vpack.c.bf16 %v104, %v103
  %v113 = vunpack.c.l.b16 %v105
  %v114 = vunpack.c.h.b16 %v105
  %v115 = vunpack.c.l.b16 %v106
  %v116 = vunpack.c.h.b16 %v106
  %v117 = vunpack.c.l.b16 %v107
  %v118 = vunpack.c.h.b16 %v107
  %v119 = vunpack.c.l.b16 %v108
  %v120 = vunpack.c.h.b16 %v108
  %v121 = vpack.c.b16 %v113, %v113
  %v122 = vpack.c.b16 %v114, %v114
  %v123 = vpack.c.b16 %v115, %v115
  %v124 = vpack.c.b16 %v116, %v116
  %v125 = vpack.c.b16 %v117, %v117
  %v126 = vpack.c.b16 %v118, %v118
  %v127 = vpack.c.b16 %v119, %v119
  %v128 = vpack.c.b16 %v120, %v120
  %vm137 = vcmask 125952
  %138 = vst.msk [vmem:[%s1] sm:$0xf] %vm137, %v121
  %139 = vst.msk [vmem:[%s1 + $0x4] sm:$0xf] %vm137, %v122
  %140 = vst.msk [vmem:[%s1 + $0x8] sm:$0xf] %vm137, %v123
  %141 = vst.msk [vmem:[%s1 + $0xc] sm:$0xf] %vm137, %v124
  %142 = vst.msk [vmem:[%s1 + $0x10] sm:$0xf] %vm137, %v125
  %143 = vst.msk [vmem:[%s1 + $0x14] sm:$0xf] %vm137, %v126
  %144 = vst.msk [vmem:[%s1 + $0x18] sm:$0xf] %vm137, %v127
  %145 = vst.msk [vmem:[%s1 + $0x1c] sm:$0xf] %vm137, %v128
  // Predicated region
  $region6: #{set_target.29} parent=0 // pred_check
    _
  $region7: #{set_target.29} parent=0 // pred_check_branch
    %147 = sbr.rel (0) target = $region9
  $region8: #{set_target.29} parent=0 // pred_region
    _
  $region9: #{set_target.29} parent=0 // pred_fallthru
    _
  // Predicated region
  $region10: #{set_target.29} parent=0 // pred_check
    _
  $region11: #{set_target.29} parent=0 // pred_check_branch
    %149 = sbr.rel (0) target = $region13
  $region12: #{set_target.29} parent=0 // pred_region
    _
  $region13: #{set_target.29} parent=0 // pred_fallthru
    _

// kernel: set_target.28
$region0: #{set_target.28}
  #allocation0 [shape = 'u32[]', space=smem, size = 0x4, offset = 0x4, fixed_abs, tag = 'smem constant byte address 0x4 - core index']
  #allocation1 [shape = 'u32[144,128]{1,0:T(1,128)}', space=vmem, size = 0x12000, scoped, tag = 'internal scratch']
  #allocation2 [shape = 'f32[64,16]{1,0:T(8,128)}', space=vmem, size = 0x8000, scoped, tag = 'scratch operand']
  %s0 = inlined_call_operand.vmem [shape: bf16[1,64,128], index: 0, kind: input, shape index: {}]
  %s1 = inlined_call_operand.vmem [shape: bf16[1,128,16], index: 1, kind: input, shape index: {}]
  %s2 = inlined_call_operand.vmem [shape: f32[1,16], index: 2, kind: input, shape index: {}]
  %s3 = inlined_call_operand.vmem [shape: bf16[1,64,16], index: 3, kind: output, shape index: {}]
  %s4 = sld [smem:[#allocation0]]
  $region30: #{set_target.28} parent=0
    _
  %s6 = ssub.s32 1, %s4
  %s7 = scalar_select 0, %s6, %s4
  // Predicated region
  $region2: #{set_target.28} parent=0 // pred_check
    _
  $region3: #{set_target.28} parent=0 // pred_check_branch
    %9 = sbr.rel (0) target = $region5
  $region4: #{set_target.28} parent=0 // pred_region
    _
  $region5: #{set_target.28} parent=0 // pred_fallthru
    _
  // Predicated region
  $region6: #{set_target.28} parent=0 // pred_check
    _
  $region7: #{set_target.28} parent=0 // pred_check_branch
    %11 = sbr.rel (0) target = $region9
  $region8: #{set_target.28} parent=0 // pred_region
    _
  $region9: #{set_target.28} parent=0 // pred_fallthru
    _
  // Predicated region
  $region10: #{set_target.28} parent=0 // pred_check
    _
  $region11: #{set_target.28} parent=0 // pred_check_branch
    %13 = sbr.rel (0) target = $region13
  $region12: #{set_target.28} parent=0 // pred_region
    _
  $region13: #{set_target.28} parent=0 // pred_fallthru
    _
  %p15 = scmp.eq.s32.totalorder 0, 0
  // Predicated region
  $region14: #{set_target.28} parent=0 // pred_check
    %p16 = pneg %p15
  $region15: #{set_target.28} parent=0 // pred_check_branch
    %18 = sbr.rel (%p16) target = $region17
  $region16: #{set_target.28} parent=0 // pred_region
    %vm19 = vcmask 130048
    %20 = vst.msk [vmem:[#allocation2] sm:$0xff] %vm19, 0.0
    %21 = vst.msk [vmem:[#allocation2 + $0x8] sm:$0xff] %vm19, 0.0
    %22 = vst.msk [vmem:[#allocation2 + $0x10] sm:$0xff] %vm19, 0.0
    %23 = vst.msk [vmem:[#allocation2 + $0x18] sm:$0xff] %vm19, 0.0
    %24 = vst.msk [vmem:[#allocation2 + $0x20] sm:$0xff] %vm19, 0.0
    %25 = vst.msk [vmem:[#allocation2 + $0x28] sm:$0xff] %vm19, 0.0
    %26 = vst.msk [vmem:[#allocation2 + $0x30] sm:$0xff] %vm19, 0.0
    %27 = vst.msk [vmem:[#allocation2 + $0x38] sm:$0xff] %vm19, 0.0
  $region17: #{set_target.28} parent=0 // pred_fallthru
    _
  %v28 = vld [vmem:[#allocation2] sm:$0xff]
  %v29 = vld [vmem:[#allocation2 + $0x8] sm:$0xff]
  %v30 = vld [vmem:[#allocation2 + $0x10] sm:$0xff]
  %v31 = vld [vmem:[#allocation2 + $0x18] sm:$0xff]
  %v32 = vld [vmem:[#allocation2 + $0x20] sm:$0xff]
  %v33 = vld [vmem:[#allocation2 + $0x28] sm:$0xff]
  %v34 = vld [vmem:[#allocation2 + $0x30] sm:$0xff]
  %v35 = vld [vmem:[#allocation2 + $0x38] sm:$0xff]
  %v36 = vld [vmem:[%s0] sm:$0xf]
  %v37 = vld [vmem:[%s0 + $0x4] sm:$0xf]
  %v38 = vld [vmem:[%s0 + $0x8] sm:$0xf]
  %v39 = vld [vmem:[%s0 + $0xc] sm:$0xf]
  %v40 = vld [vmem:[%s0 + $0x10] sm:$0xf]
  %v41 = vld [vmem:[%s0 + $0x14] sm:$0xf]
  %v42 = vld [vmem:[%s0 + $0x18] sm:$0xf]
  %v43 = vld [vmem:[%s0 + $0x1c] sm:$0xf]
  %v44 = vld [vmem:[%s1] sm:$0xf]
  %v45 = vld [vmem:[%s1 + $0x4] sm:$0xf]
  %v46 = vld [vmem:[%s1 + $0x8] sm:$0xf]
  %v47 = vld [vmem:[%s1 + $0xc] sm:$0xf]
  %v48 = vld [vmem:[%s1 + $0x10] sm:$0xf]
  %v49 = vld [vmem:[%s1 + $0x14] sm:$0xf]
  %v50 = vld [vmem:[%s1 + $0x18] sm:$0xf]
  %v51 = vld [vmem:[%s1 + $0x1c] sm:$0xf]
  %v52 = vld [vmem:[%s1 + $0x20] sm:$0xf]
  %v53 = vld [vmem:[%s1 + $0x24] sm:$0xf]
  %v54 = vld [vmem:[%s1 + $0x28] sm:$0xf]
  %v55 = vld [vmem:[%s1 + $0x2c] sm:$0xf]
  %v56 = vld [vmem:[%s1 + $0x30] sm:$0xf]
  %v57 = vld [vmem:[%s1 + $0x34] sm:$0xf]
  %v58 = vld [vmem:[%s1 + $0x38] sm:$0xf]
  %v59 = vld [vmem:[%s1 + $0x3c] sm:$0xf]
  %v68 = vunpack.c.l.b16 %v36
  %v69 = vunpack.c.l.b16 %v37
  %v70 = vunpack.c.l.b16 %v38
  %v71 = vunpack.c.l.b16 %v39
  %v72 = vunpack.c.l.b16 %v40
  %v73 = vunpack.c.l.b16 %v41
  %v74 = vunpack.c.l.b16 %v42
  %v75 = vunpack.c.l.b16 %v43
  %v76 = vpack.c.b16 %v69, %v68
  %v77 = vpack.c.b16 %v71, %v70
  %v78 = vpack.c.b16 %v73, %v72
  %v79 = vpack.c.b16 %v75, %v74
  %v100 = vunpack.c.l.b16 %v44
  %v101 = vunpack.c.l.b16 %v45
  %v102 = vunpack.c.l.b16 %v46
  %v103 = vunpack.c.l.b16 %v47
  %v104 = vunpack.c.l.b16 %v48
  %v105 = vunpack.c.l.b16 %v49
  %v106 = vunpack.c.l.b16 %v50
  %v107 = vunpack.c.l.b16 %v51
  %v108 = vunpack.c.l.b16 %v52
  %v109 = vunpack.c.l.b16 %v53
  %v110 = vunpack.c.l.b16 %v54
  %v111 = vunpack.c.l.b16 %v55
  %v112 = vunpack.c.l.b16 %v56
  %v113 = vunpack.c.l.b16 %v57
  %v114 = vunpack.c.l.b16 %v58
  %v115 = vunpack.c.l.b16 %v59
  %v116 = vpack.c.b16 %v101, %v100
  %v117 = vpack.c.b16 %v103, %v102
  %v118 = vpack.c.b16 %v105, %v104
  %v119 = vpack.c.b16 %v107, %v106
  %v120 = vpack.c.b16 %v109, %v108
  %v121 = vpack.c.b16 %v111, %v110
  %v122 = vpack.c.b16 %v113, %v112
  %v123 = vpack.c.b16 %v115, %v114
  %132 = vmatprep.subr.bf16.mxu0 0
  %133 = vmatpush1.bf16.msra.mxu0 %v123
  %134 = vmatprep.subr.bf16.mxu0 0
  %135 = vmatpush1.bf16.msra.mxu0 %v122
  %136 = vmatprep.subr.bf16.mxu0 0
  %137 = vmatpush1.bf16.msra.mxu0 %v121
  %138 = vmatprep.subr.bf16.mxu0 0
  %139 = vmatpush1.bf16.msra.mxu0 %v120
  %140 = vmatprep.subr.bf16.mxu0 0
  %141 = vmatpush1.bf16.msra.mxu0 %v119
  %142 = vmatprep.subr.bf16.mxu0 0
  %143 = vmatpush1.bf16.msra.mxu0 %v118
  %144 = vmatprep.subr.bf16.mxu0 0
  %145 = vmatpush1.bf16.msra.mxu0 %v117
  %146 = vmatprep.subr.bf16.mxu0 0
  %147 = vmatpush1.bf16.msra.mxu0 %v116
  %148 = vmatprep.subr.bf16.mxu0 0
  %149 = vmatpush2.bf16.msra.mxu0 0
  %150 = vmatprep.subr.bf16.mxu0 0
  %151 = vmatpush2.bf16.msra.mxu0 0
  %152 = vmatprep.subr.bf16.mxu0 0
  %153 = vmatpush2.bf16.msra.mxu0 0
  %154 = vmatprep.subr.bf16.mxu0 0
  %155 = vmatpush2.bf16.msra.mxu0 0
  %156 = vmatprep.subr.bf16.mxu0 0
  %157 = vmatpush2.bf16.msra.mxu0 0
  %158 = vmatprep.subr.bf16.mxu0 0
  %159 = vmatpush2.bf16.msra.mxu0 0
  %160 = vmatprep.subr.bf16.mxu0 0
  %161 = vmatpush2.bf16.msra.mxu0 0
  %162 = vmatprep.subr.bf16.mxu0 0
  %163 = vmatpush2.bf16.msra.mxu0 0
  %164 = vmatprep.mubr.bf16.mxu0 0
  %165 = vmatmul.mubr.bf16.gmra.mxu0 %v76
  %v166 = vpop.f32.mrf.mxu0
  %v167 = vadd.f32 0.0, %v166
  %v168 = vpop.f32.mrf.mxu0
  %v169 = vpop.f32.mrf.mxu0
  %v170 = vadd.f32 0.0, %v169
  %v171 = vpop.f32.mrf.mxu0
  %172 = vmatprep.mubr.bf16.mxu0 0
  %173 = vmatmul.mubr.bf16.gmra.mxu0 %v77
  %v174 = vpop.f32.mrf.mxu0
  %v175 = vadd.f32 0.0, %v174
  %v176 = vpop.f32.mrf.mxu0
  %v177 = vpop.f32.mrf.mxu0
  %v178 = vadd.f32 0.0, %v177
  %v179 = vpop.f32.mrf.mxu0
  %180 = vmatprep.mubr.bf16.mxu0 0
  %181 = vmatmul.mubr.bf16.gmra.mxu0 %v78
  %v182 = vpop.f32.mrf.mxu0
  %v183 = vadd.f32 0.0, %v182
  %v184 = vpop.f32.mrf.mxu0
  %v185 = vpop.f32.mrf.mxu0
  %v186 = vadd.f32 0.0, %v185
  %v187 = vpop.f32.mrf.mxu0
  %188 = vmatprep.mubr.bf16.mxu0 0
  %189 = vmatmul.mubr.bf16.gmra.mxu0 %v79
  %v190 = vpop.f32.mrf.mxu0
  %v191 = vadd.f32 0.0, %v190
  %v192 = vpop.f32.mrf.mxu0
  %v193 = vpop.f32.mrf.mxu0
  %v194 = vadd.f32 0.0, %v193
  %v195 = vpop.f32.mrf.mxu0
  %196 = vdwg.mxu0
  %v197 = vadd.f32 %v28, %v167
  %v198 = vadd.f32 %v29, %v170
  %v199 = vadd.f32 %v30, %v175
  %v200 = vadd.f32 %v31, %v178
  %v201 = vadd.f32 %v32, %v183
  %v202 = vadd.f32 %v33, %v186
  %v203 = vadd.f32 %v34, %v191
  %v204 = vadd.f32 %v35, %v194
  %vm205 = vcmask 130048
  %206 = vst.msk [vmem:[#allocation2] sm:$0xff] %vm205, %v197
  %207 = vst.msk [vmem:[#allocation2 + $0x8] sm:$0xff] %vm205, %v198
  %208 = vst.msk [vmem:[#allocation2 + $0x10] sm:$0xff] %vm205, %v199
  %209 = vst.msk [vmem:[#allocation2 + $0x18] sm:$0xff] %vm205, %v200
  %210 = vst.msk [vmem:[#allocation2 + $0x20] sm:$0xff] %vm205, %v201
  %211 = vst.msk [vmem:[#allocation2 + $0x28] sm:$0xff] %vm205, %v202
  %212 = vst.msk [vmem:[#allocation2 + $0x30] sm:$0xff] %vm205, %v203
  %213 = vst.msk [vmem:[#allocation2 + $0x38] sm:$0xff] %vm205, %v204
  // Predicated region
  $region18: #{set_target.28} parent=0 // pred_check
    %p214 = pneg %p15
  $region19: #{set_target.28} parent=0 // pred_check_branch
    %216 = sbr.rel (%p214) target = $region21
  $region20: #{set_target.28} parent=0 // pred_region
    %v217 = vld [vmem:[#allocation2] sm:$0xff]
    %v218 = vld [vmem:[#allocation2 + $0x8] sm:$0xff]
    %v219 = vld [vmem:[#allocation2 + $0x10] sm:$0xff]
    %v220 = vld [vmem:[#allocation2 + $0x18] sm:$0xff]
    %v221 = vld [vmem:[#allocation2 + $0x20] sm:$0xff]
    %v222 = vld [vmem:[#allocation2 + $0x28] sm:$0xff]
    %v223 = vld [vmem:[#allocation2 + $0x30] sm:$0xff]
    %v224 = vld [vmem:[#allocation2 + $0x38] sm:$0xff]
    %v225 = vld [vmem:[%s2] sm:$0x1]
    %v227 = vlaneseq
    %v228 = vshrl.u32 %v227, 7
    %v229 = vsub.s32 0, %v228
    %v230 = vrot.slane %v225, %v229
    %v232 = vadd.f32 %v217, %v230
    %v233 = vadd.f32 %v218, %v230
    %v234 = vadd.f32 %v219, %v230
    %v235 = vadd.f32 %v220, %v230
    %v236 = vadd.f32 %v221, %v230
    %v237 = vadd.f32 %v222, %v230
    %v238 = vadd.f32 %v223, %v230
    %v239 = vadd.f32 %v224, %v230
    %v240 = vpack.c.bf16 %v233, %v232
    %v241 = vpack.c.bf16 %v235, %v234
    %v242 = vpack.c.bf16 %v237, %v236
    %v243 = vpack.c.bf16 %v239, %v238
    %v248 = vunpack.c.l.b16 %v240
    %v249 = vunpack.c.h.b16 %v240
    %v250 = vunpack.c.l.b16 %v241
    %v251 = vunpack.c.h.b16 %v241
    %v252 = vunpack.c.l.b16 %v242
    %v253 = vunpack.c.h.b16 %v242
    %v254 = vunpack.c.l.b16 %v243
    %v255 = vunpack.c.h.b16 %v243
    %v256 = vpack.c.b16 %v248, %v248
    %v257 = vpack.c.b16 %v249, %v249
    %v258 = vpack.c.b16 %v250, %v250
    %v259 = vpack.c.b16 %v251, %v251
    %v260 = vpack.c.b16 %v252, %v252
    %v261 = vpack.c.b16 %v253, %v253
    %v262 = vpack.c.b16 %v254, %v254
    %v263 = vpack.c.b16 %v255, %v255
    %vm272 = vcmask 125952
    %273 = vst.msk [vmem:[%s3] sm:$0xf] %vm272, %v256
    %274 = vst.msk [vmem:[%s3 + $0x4] sm:$0xf] %vm272, %v257
    %275 = vst.msk [vmem:[%s3 + $0x8] sm:$0xf] %vm272, %v258
    %276 = vst.msk [vmem:[%s3 + $0xc] sm:$0xf] %vm272, %v259
    %277 = vst.msk [vmem:[%s3 + $0x10] sm:$0xf] %vm272, %v260
    %278 = vst.msk [vmem:[%s3 + $0x14] sm:$0xf] %vm272, %v261
    %279 = vst.msk [vmem:[%s3 + $0x18] sm:$0xf] %vm272, %v262
    %280 = vst.msk [vmem:[%s3 + $0x1c] sm:$0xf] %vm272, %v263
  $region21: #{set_target.28} parent=0 // pred_fallthru
    _
  // Predicated region
  $region22: #{set_target.28} parent=0 // pred_check
    _
  $region23: #{set_target.28} parent=0 // pred_check_branch
    %282 = sbr.rel (0) target = $region25
  $region24: #{set_target.28} parent=0 // pred_region
    _
  $region25: #{set_target.28} parent=0 // pred_fallthru
    _
  // Predicated region
  $region26: #{set_target.28} parent=0 // pred_check
    _
  $region27: #{set_target.28} parent=0 // pred_check_branch
    %284 = sbr.rel (0) target = $region29
  $region28: #{set_target.28} parent=0 // pred_region
    _
  $region29: #{set_target.28} parent=0 // pred_fallthru
    _

// kernel: set_target.31
$region0: #{set_target.31}
  #allocation0 [shape = 'u32[]', space=smem, size = 0x4, offset = 0x4, fixed_abs, tag = 'smem constant byte address 0x4 - core index']
  #allocation1 [shape = 'u32[144,128]{1,0:T(1,128)}', space=vmem, size = 0x12000, scoped, tag = 'internal scratch']
  %s0 = inlined_call_operand.vmem [shape: bf16[1,16,16], index: 0, kind: input, shape index: {}]
  %s1 = inlined_call_operand.vmem [shape: bf16[1,16,16], index: 1, kind: output, shape index: {}]
  %s2 = sld [smem:[#allocation0]]
  $region14: #{set_target.31} parent=0
    _
  %s4 = ssub.s32 1, %s2
  %s5 = scalar_select 0, %s4, %s2
  // Predicated region
  $region2: #{set_target.31} parent=0 // pred_check
    _
  $region3: #{set_target.31} parent=0 // pred_check_branch
    %7 = sbr.rel (0) target = $region5
  $region4: #{set_target.31} parent=0 // pred_region
    _
  $region5: #{set_target.31} parent=0 // pred_fallthru
    _
  %v8 = vld [vmem:[%s0] sm:$0xf]
  %v9 = vld [vmem:[%s0 + $0x4] sm:$0xf]
  %v10 = vunpack.c.l.bf16 %v8
  %v11 = vunpack.c.l.bf16 %v9
  %vm12 = vcmask 130048
  %v13 = vsel %vm12, %v10, 0.0
  %v14 = vsel %vm12, %v11, 0.0
  %v15 = vadd.f32 %v13, %v14
  %v16 = vrot.slane %v15, 4
  %v17 = vadd.f32 %v15, %v16
  %v18 = vrot.slane %v17, 2
  %v19 = vadd.f32 %v17, %v18
  %v20 = vrot.slane %v19, 1
  %v21 = vadd.f32 %v19, %v20
  %v22 = vmul.f32 %v10, %v10
  %v23 = vmul.f32 %v11, %v11
  %v24 = vsel %vm12, %v22, 0.0
  %v25 = vsel %vm12, %v23, 0.0
  %v26 = vadd.f32 %v24, %v25
  %v27 = vrot.slane %v26, 4
  %v28 = vadd.f32 %v26, %v27
  %v29 = vrot.slane %v28, 2
  %v30 = vadd.f32 %v28, %v29
  %v31 = vrot.slane %v30, 1
  %v32 = vadd.f32 %v30, %v31
  %v33 = vmul.f32 %v21, 0.0625
  %v34 = vmul.f32 %v32, 0.0625
  %v35 = vmul.f32 %v33, %v33
  %v36 = vsub.f32 %v34, %v35
  %v37 = vsub.f32 %v10, %v33
  %v38 = vsub.f32 %v11, %v33
  %v39 = vadd.f32 %v36, 1e-05
  %v40 = vrsqrt.pop %v39
  %v41 = vmul.f32 %v37, %v40
  %v42 = vmul.f32 %v38, %v40
  %v43 = vmax.f32 %v41, 0.0
  %v44 = vmax.f32 %v42, 0.0
  %v45 = vpack.c.bf16 %v44, %v43
  %v47 = vunpack.c.l.b16 %v45
  %v48 = vunpack.c.h.b16 %v45
  %v49 = vpack.c.b16 %v47, %v47
  %v50 = vpack.c.b16 %v48, %v48
  %vm53 = vcmask 125952
  %54 = vst.msk [vmem:[%s1] sm:$0xf] %vm53, %v49
  %55 = vst.msk [vmem:[%s1 + $0x4] sm:$0xf] %vm53, %v50
  // Predicated region
  $region6: #{set_target.31} parent=0 // pred_check
    _
  $region7: #{set_target.31} parent=0 // pred_check_branch
    %57 = sbr.rel (0) target = $region9
  $region8: #{set_target.31} parent=0 // pred_region
    _
  $region9: #{set_target.31} parent=0 // pred_fallthru
    _
  // Predicated region
  $region10: #{set_target.31} parent=0 // pred_check
    _
  $region11: #{set_target.31} parent=0 // pred_check_branch
    %59 = sbr.rel (0) target = $region13
  $region12: #{set_target.31} parent=0 // pred_region
    _
  $region13: #{set_target.31} parent=0 // pred_fallthru
    _

// kernel: set_target.30
$region0: #{set_target.30}
  #allocation0 [shape = 'u32[]', space=smem, size = 0x4, offset = 0x4, fixed_abs, tag = 'smem constant byte address 0x4 - core index']
  #allocation1 [shape = 'u32[144,128]{1,0:T(1,128)}', space=vmem, size = 0x12000, scoped, tag = 'internal scratch']
  #allocation2 [shape = 'f32[16,16]{1,0:T(8,128)}', space=vmem, size = 0x2000, scoped, tag = 'scratch operand']
  %s0 = inlined_call_operand.vmem [shape: bf16[1,16,144], index: 0, kind: input, shape index: {}]
  %s1 = inlined_call_operand.vmem [shape: bf16[1,144,16], index: 1, kind: input, shape index: {}]
  %s2 = inlined_call_operand.vmem [shape: f32[1,16], index: 2, kind: input, shape index: {}]
  %s3 = inlined_call_operand.vmem [shape: bf16[1,16,16], index: 3, kind: output, shape index: {}]
  %s4 = sld [smem:[#allocation0]]
  $region30: #{set_target.30} parent=0
    _
  %s6 = ssub.s32 1, %s4
  %s7 = scalar_select 0, %s6, %s4
  // Predicated region
  $region2: #{set_target.30} parent=0 // pred_check
    _
  $region3: #{set_target.30} parent=0 // pred_check_branch
    %9 = sbr.rel (0) target = $region5
  $region4: #{set_target.30} parent=0 // pred_region
    _
  $region5: #{set_target.30} parent=0 // pred_fallthru
    _
  // Predicated region
  $region6: #{set_target.30} parent=0 // pred_check
    _
  $region7: #{set_target.30} parent=0 // pred_check_branch
    %11 = sbr.rel (0) target = $region9
  $region8: #{set_target.30} parent=0 // pred_region
    _
  $region9: #{set_target.30} parent=0 // pred_fallthru
    _
  // Predicated region
  $region10: #{set_target.30} parent=0 // pred_check
    _
  $region11: #{set_target.30} parent=0 // pred_check_branch
    %13 = sbr.rel (0) target = $region13
  $region12: #{set_target.30} parent=0 // pred_region
    _
  $region13: #{set_target.30} parent=0 // pred_fallthru
    _
  %p15 = scmp.eq.s32.totalorder 0, 0
  // Predicated region
  $region14: #{set_target.30} parent=0 // pred_check
    %p16 = pneg %p15
  $region15: #{set_target.30} parent=0 // pred_check_branch
    %18 = sbr.rel (%p16) target = $region17
  $region16: #{set_target.30} parent=0 // pred_region
    %vm19 = vcmask 130048
    %20 = vst.msk [vmem:[#allocation2] sm:$0xff] %vm19, 0.0
    %21 = vst.msk [vmem:[#allocation2 + $0x8] sm:$0xff] %vm19, 0.0
  $region17: #{set_target.30} parent=0 // pred_fallthru
    _
  %v22 = vld [vmem:[#allocation2] sm:$0xff]
  %v23 = vld [vmem:[#allocation2 + $0x8] sm:$0xff]
  %v24 = vld [vmem:[%s0] sm:$0xff]
  %v25 = vld [vmem:[%s0 + $0x8] sm:$0xff]
  %v26 = vld [vmem:[%s1] sm:$0xf]
  %v27 = vld [vmem:[%s1 + $0x4] sm:$0xf]
  %v28 = vld [vmem:[%s1 + $0x8] sm:$0xf]
  %v29 = vld [vmem:[%s1 + $0xc] sm:$0xf]
  %v30 = vld [vmem:[%s1 + $0x10] sm:$0xf]
  %v31 = vld [vmem:[%s1 + $0x14] sm:$0xf]
  %v32 = vld [vmem:[%s1 + $0x18] sm:$0xf]
  %v33 = vld [vmem:[%s1 + $0x1c] sm:$0xf]
  %v34 = vld [vmem:[%s1 + $0x20] sm:$0xf]
  %v35 = vld [vmem:[%s1 + $0x24] sm:$0xf]
  %v36 = vld [vmem:[%s1 + $0x28] sm:$0xf]
  %v37 = vld [vmem:[%s1 + $0x2c] sm:$0xf]
  %v38 = vld [vmem:[%s1 + $0x30] sm:$0xf]
  %v39 = vld [vmem:[%s1 + $0x34] sm:$0xf]
  %v40 = vld [vmem:[%s1 + $0x38] sm:$0xf]
  %v41 = vld [vmem:[%s1 + $0x3c] sm:$0xf]
  %v42 = vld [vmem:[%s1 + $0x40] sm:$0xf]
  %v43 = vld [vmem:[%s1 + $0x44] sm:$0xf]
  %v46 = vunpack.c.l.b16 %v24
  %v47 = vunpack.c.h.b16 %v24
  %v48 = vunpack.c.l.b16 %v25
  %v49 = vunpack.c.h.b16 %v25
  %v50 = vpack.c.b16 %v48, %v46
  %v51 = vpack.c.b16 %v49, %v47
  %v71 = vunpack.c.l.b16 %v26
  %v72 = vunpack.c.l.b16 %v27
  %v73 = vunpack.c.l.b16 %v28
  %v74 = vunpack.c.l.b16 %v29
  %v75 = vunpack.c.l.b16 %v30
  %v76 = vunpack.c.l.b16 %v31
  %v77 = vunpack.c.l.b16 %v32
  %v78 = vunpack.c.l.b16 %v33
  %v79 = vunpack.c.l.b16 %v34
  %v80 = vunpack.c.l.b16 %v35
  %v81 = vunpack.c.l.b16 %v36
  %v82 = vunpack.c.l.b16 %v37
  %v83 = vunpack.c.l.b16 %v38
  %v84 = vunpack.c.l.b16 %v39
  %v85 = vunpack.c.l.b16 %v40
  %v86 = vunpack.c.l.b16 %v41
  %v87 = vunpack.c.l.b16 %v42
  %v88 = vunpack.c.l.b16 %v43
  %v89 = vpack.c.b16 %v72, %v71
  %v90 = vpack.c.b16 %v74, %v73
  %v91 = vpack.c.b16 %v76, %v75
  %v92 = vpack.c.b16 %v78, %v77
  %v93 = vpack.c.b16 %v80, %v79
  %v94 = vpack.c.b16 %v82, %v81
  %v95 = vpack.c.b16 %v84, %v83
  %v96 = vpack.c.b16 %v86, %v85
  %v97 = vpack.c.b16 %v88, %v87
  %vm107 = vcmask 130048
  %v109 = vsel %vm107, %v51, 0
  %111 = vmatprep.subr.bf16.mxu0 0
  %112 = vmatpush1.bf16.msra.mxu0 %v96
  %113 = vmatprep.subr.bf16.mxu0 0
  %114 = vmatpush1.bf16.msra.mxu0 %v95
  %115 = vmatprep.subr.bf16.mxu0 0
  %116 = vmatpush1.bf16.msra.mxu0 %v94
  %117 = vmatprep.subr.bf16.mxu0 0
  %118 = vmatpush1.bf16.msra.mxu0 %v93
  %119 = vmatprep.subr.bf16.mxu0 0
  %120 = vmatpush1.bf16.msra.mxu0 %v92
  %121 = vmatprep.subr.bf16.mxu0 0
  %122 = vmatpush1.bf16.msra.mxu0 %v91
  %123 = vmatprep.subr.bf16.mxu0 0
  %124 = vmatpush1.bf16.msra.mxu0 %v90
  %125 = vmatprep.subr.bf16.mxu0 0
  %126 = vmatpush1.bf16.msra.mxu0 %v89
  %127 = vmatprep.subr.bf16.mxu0 0
  %128 = vmatpush2.bf16.msra.mxu0 0
  %129 = vmatprep.subr.bf16.mxu0 0
  %130 = vmatpush2.bf16.msra.mxu0 0
  %131 = vmatprep.subr.bf16.mxu0 0
  %132 = vmatpush2.bf16.msra.mxu0 0
  %133 = vmatprep.subr.bf16.mxu0 0
  %134 = vmatpush2.bf16.msra.mxu0 0
  %135 = vmatprep.subr.bf16.mxu0 0
  %136 = vmatpush2.bf16.msra.mxu0 0
  %137 = vmatprep.subr.bf16.mxu0 0
  %138 = vmatpush2.bf16.msra.mxu0 0
  %139 = vmatprep.subr.bf16.mxu0 0
  %140 = vmatpush2.bf16.msra.mxu0 0
  %141 = vmatprep.subr.bf16.mxu0 0
  %142 = vmatpush2.bf16.msra.mxu0 %v97
  %143 = vmatprep.mubr.bf16.mxu0 %v109
  %144 = vmatmul.mubr.bf16.gmra.mxu0 %v50
  %v145 = vpop.f32.mrf.mxu0
  %v146 = vadd.f32 0.0, %v145
  %v147 = vpop.f32.mrf.mxu0
  %v148 = vpop.f32.mrf.mxu0
  %v149 = vadd.f32 0.0, %v148
  %v150 = vpop.f32.mrf.mxu0
  %151 = vdwg.mxu0
  %v152 = vadd.f32 %v22, %v146
  %v153 = vadd.f32 %v23, %v149
  %154 = vst.msk [vmem:[#allocation2] sm:$0xff] %vm107, %v152
  %155 = vst.msk [vmem:[#allocation2 + $0x8] sm:$0xff] %vm107, %v153
  // Predicated region
  $region18: #{set_target.30} parent=0 // pred_check
    %p156 = pneg %p15
  $region19: #{set_target.30} parent=0 // pred_check_branch
    %158 = sbr.rel (%p156) target = $region21
  $region20: #{set_target.30} parent=0 // pred_region
    %v159 = vld [vmem:[#allocation2] sm:$0xff]
    %v160 = vld [vmem:[#allocation2 + $0x8] sm:$0xff]
    %v161 = vld [vmem:[%s2] sm:$0x1]
    %v163 = vlaneseq
    %v164 = vshrl.u32 %v163, 7
    %v165 = vsub.s32 0, %v164
    %v166 = vrot.slane %v161, %v165
    %v168 = vadd.f32 %v159, %v166
    %v169 = vadd.f32 %v160, %v166
    %v170 = vpack.c.bf16 %v169, %v168
    %v172 = vunpack.c.l.b16 %v170
    %v173 = vunpack.c.h.b16 %v170
    %v174 = vpack.c.b16 %v172, %v172
    %v175 = vpack.c.b16 %v173, %v173
    %vm178 = vcmask 125952
    %179 = vst.msk [vmem:[%s3] sm:$0xf] %vm178, %v174
    %180 = vst.msk [vmem:[%s3 + $0x4] sm:$0xf] %vm178, %v175
  $region21: #{set_target.30} parent=0 // pred_fallthru
    _
  // Predicated region
  $region22: #{set_target.30} parent=0 // pred_check
    _
  $region23: #{set_target.30} parent=0 // pred_check_branch
    %182 = sbr.rel (0) target = $region25
  $region24: #{set_target.30} parent=0 // pred_region
    _
  $region25: #{set_target.30} parent=0 // pred_fallthru
    _
  // Predicated region
  $region26: #{set_target.30} parent=0 // pred_check
    _
  $region27: #{set_target.30} parent=0 // pred_check_branch
    %184 = sbr.rel (0) target = $region29
  $region28: #{set_target.30} parent=0 // pred_region
    _
  $region29: #{set_target.30} parent=0 // pred_fallthru
    _

// kernel: set_target.32
$region0: #{set_target.32}
  #allocation0 [shape = 'u32[]', space=smem, size = 0x4, offset = 0x4, fixed_abs, tag = 'smem constant byte address 0x4 - core index']
  #allocation1 [shape = 'u32[144,128]{1,0:T(1,128)}', space=vmem, size = 0x12000, scoped, tag = 'internal scratch']
  #allocation2 [shape = 'f32[16,64]{1,0:T(8,128)}', space=vmem, size = 0x2000, scoped, tag = 'scratch operand']
  %s0 = inlined_call_operand.vmem [shape: bf16[1,16,16], index: 0, kind: input, shape index: {}]
  %s1 = inlined_call_operand.vmem [shape: bf16[1,16,64], index: 1, kind: input, shape index: {}]
  %s2 = inlined_call_operand.vmem [shape: f32[1,64], index: 2, kind: input, shape index: {}]
  %s3 = inlined_call_operand.vmem [shape: bf16[1,16,64], index: 3, kind: input, shape index: {}]
  %s4 = inlined_call_operand.vmem [shape: bf16[1,16,64], index: 4, kind: output, shape index: {}]
  %s5 = sld [smem:[#allocation0]]
  $region34: #{set_target.32} parent=0
    _
  %s7 = ssub.s32 1, %s5
  %s8 = scalar_select 0, %s7, %s5
  // Predicated region
  $region2: #{set_target.32} parent=0 // pred_check
    _
  $region3: #{set_target.32} parent=0 // pred_check_branch
    %10 = sbr.rel (0) target = $region5
  $region4: #{set_target.32} parent=0 // pred_region
    _
  $region5: #{set_target.32} parent=0 // pred_fallthru
    _
  // Predicated region
  $region6: #{set_target.32} parent=0 // pred_check
    _
  $region7: #{set_target.32} parent=0 // pred_check_branch
    %12 = sbr.rel (0) target = $region9
  $region8: #{set_target.32} parent=0 // pred_region
    _
  $region9: #{set_target.32} parent=0 // pred_fallthru
    _
  // Predicated region
  $region10: #{set_target.32} parent=0 // pred_check
    _
  $region11: #{set_target.32} parent=0 // pred_check_branch
    %14 = sbr.rel (0) target = $region13
  $region12: #{set_target.32} parent=0 // pred_region
    _
  $region13: #{set_target.32} parent=0 // pred_fallthru
    _
  // Predicated region
  $region14: #{set_target.32} parent=0 // pred_check
    _
  $region15: #{set_target.32} parent=0 // pred_check_branch
    %16 = sbr.rel (0) target = $region17
  $region16: #{set_target.32} parent=0 // pred_region
    _
  $region17: #{set_target.32} parent=0 // pred_fallthru
    _
  %p18 = scmp.eq.s32.totalorder 0, 0
  // Predicated region
  $region18: #{set_target.32} parent=0 // pred_check
    %p19 = pneg %p18
  $region19: #{set_target.32} parent=0 // pred_check_branch
    %21 = sbr.rel (%p19) target = $region21
  $region20: #{set_target.32} parent=0 // pred_region
    %vm22 = vcmask 523264
    %23 = vst.msk [vmem:[#allocation2] sm:$0xff] %vm22, 0.0
    %24 = vst.msk [vmem:[#allocation2 + $0x8] sm:$0xff] %vm22, 0.0
  $region21: #{set_target.32} parent=0 // pred_fallthru
    _
  %v25 = vld [vmem:[#allocation2] sm:$0xff]
  %v26 = vld [vmem:[#allocation2 + $0x8] sm:$0xff]
  %v27 = vld [vmem:[%s0] sm:$0xf]
  %v28 = vld [vmem:[%s0 + $0x4] sm:$0xf]
  %v29 = vld [vmem:[%s1] sm:$0xf]
  %v30 = vld [vmem:[%s1 + $0x4] sm:$0xf]
  %v33 = vunpack.c.l.b16 %v27
  %v34 = vunpack.c.l.b16 %v28
  %v35 = vpack.c.b16 %v34, %v33
  %v38 = vunpack.c.l.b16 %v29
  %v39 = vunpack.c.l.b16 %v30
  %v40 = vpack.c.b16 %v39, %v38
  %vm42 = vcmask 130048
  %v44 = vsel %vm42, %v35, 0
  %46 = vmatprep.subr.bf16.mxu0 0
  %47 = vmatpush1.bf16.msra.mxu0 0
  %48 = vmatprep.subr.bf16.mxu0 0
  %49 = vmatpush1.bf16.msra.mxu0 0
  %50 = vmatprep.subr.bf16.mxu0 0
  %51 = vmatpush1.bf16.msra.mxu0 0
  %52 = vmatprep.subr.bf16.mxu0 0
  %53 = vmatpush1.bf16.msra.mxu0 0
  %54 = vmatprep.subr.bf16.mxu0 0
  %55 = vmatpush1.bf16.msra.mxu0 0
  %56 = vmatprep.subr.bf16.mxu0 0
  %57 = vmatpush1.bf16.msra.mxu0 0
  %58 = vmatprep.subr.bf16.mxu0 0
  %59 = vmatpush1.bf16.msra.mxu0 0
  %60 = vmatprep.subr.bf16.mxu0 0
  %61 = vmatpush1.bf16.msra.mxu0 %v40
  %62 = vmatprep.subr.bf16.mxu0 0
  %63 = vmatpush2.bf16.msra.mxu0 0
  %64 = vmatprep.subr.bf16.mxu0 0
  %65 = vmatpush2.bf16.msra.mxu0 0
  %66 = vmatprep.subr.bf16.mxu0 0
  %67 = vmatpush2.bf16.msra.mxu0 0
  %68 = vmatprep.subr.bf16.mxu0 0
  %69 = vmatpush2.bf16.msra.mxu0 0
  %70 = vmatprep.subr.bf16.mxu0 0
  %71 = vmatpush2.bf16.msra.mxu0 0
  %72 = vmatprep.subr.bf16.mxu0 0
  %73 = vmatpush2.bf16.msra.mxu0 0
  %74 = vmatprep.subr.bf16.mxu0 0
  %75 = vmatpush2.bf16.msra.mxu0 0
  %76 = vmatprep.subr.bf16.mxu0 0
  %77 = vmatpush2.bf16.msra.mxu0 0
  %78 = vmatprep.mubr.bf16.mxu0 0
  %79 = vmatmul.mubr.bf16.gmra.mxu0 %v44
  %v80 = vpop.f32.mrf.mxu0
  %v81 = vadd.f32 0.0, %v80
  %v82 = vpop.f32.mrf.mxu0
  %v83 = vpop.f32.mrf.mxu0
  %v84 = vadd.f32 0.0, %v83
  %v85 = vpop.f32.mrf.mxu0
  %86 = vdwg.mxu0
  %v87 = vadd.f32 %v25, %v81
  %v88 = vadd.f32 %v26, %v84
  %vm89 = vcmask 523264
  %90 = vst.msk [vmem:[#allocation2] sm:$0xff] %vm89, %v87
  %91 = vst.msk [vmem:[#allocation2 + $0x8] sm:$0xff] %vm89, %v88
  // Predicated region
  $region22: #{set_target.32} parent=0 // pred_check
    %p92 = pneg %p18
  $region23: #{set_target.32} parent=0 // pred_check_branch
    %94 = sbr.rel (%p92) target = $region25
  $region24: #{set_target.32} parent=0 // pred_region
    %v95 = vld [vmem:[#allocation2] sm:$0xff]
    %v96 = vld [vmem:[#allocation2 + $0x8] sm:$0xff]
    %v97 = vld [vmem:[%s2] sm:$0x1]
    %v99 = vlaneseq
    %v100 = vshrl.u32 %v99, 7
    %v101 = vsub.s32 0, %v100
    %v102 = vrot.slane %v97, %v101
    %v104 = vadd.f32 %v95, %v102
    %v105 = vadd.f32 %v96, %v102
    %v106 = vld [vmem:[%s3] sm:$0xf]
    %v107 = vld [vmem:[%s3 + $0x4] sm:$0xf]
    %v108 = vunpack.c.l.bf16 %v106
    %v109 = vunpack.c.l.bf16 %v107
    %v110 = vadd.f32 %v104, %v108
    %v111 = vadd.f32 %v105, %v109
    %v112 = vpack.c.bf16 %v111, %v110
    %v114 = vunpack.c.l.b16 %v112
    %v115 = vunpack.c.h.b16 %v112
    %v116 = vpack.c.b16 %v114, %v114
    %v117 = vpack.c.b16 %v115, %v115
    %vm120 = vcmask 519168
    %121 = vst.msk [vmem:[%s4] sm:$0xf] %vm120, %v116
    %122 = vst.msk [vmem:[%s4 + $0x4] sm:$0xf] %vm120, %v117
  $region25: #{set_target.32} parent=0 // pred_fallthru
    _
  // Predicated region
  $region26: #{set_target.32} parent=0 // pred_check
    _
  $region27: #{set_target.32} parent=0 // pred_check_branch
    %124 = sbr.rel (0) target = $region29
  $region28: #{set_target.32} parent=0 // pred_region
    _
  $region29: #{set_target.32} parent=0 // pred_fallthru
    _
  // Predicated region
  $region30: #{set_target.32} parent=0 // pred_check
    _
  $region31: #{set_target.32} parent=0 // pred_check_branch
    %126 = sbr.rel (0) target = $region33
  $region32: #{set_target.32} parent=0 // pred_region
    _
  $region33: #{set_target.32} parent=0 // pred_fallthru
    _

// kernel: set_target.26
$region0: #{set_target.26}
  #allocation0 [shape = 'u32[]', space=smem, size = 0x4, offset = 0x4, fixed_abs, tag = 'smem constant byte address 0x4 - core index']
  #allocation1 [shape = 'u32[144,128]{1,0:T(1,128)}', space=vmem, size = 0x12000, scoped, tag = 'internal scratch']
  #allocation2 [shape = 'f32[16,64]{1,0:T(8,128)}', space=vmem, size = 0x2000, scoped, tag = 'scratch operand']
  %s0 = inlined_call_operand.vmem [shape: bf16[1,16,128], index: 0, kind: input, shape index: {}]
  %s1 = inlined_call_operand.vmem [shape: bf16[1,128,64], index: 1, kind: input, shape index: {}]
  %s2 = inlined_call_operand.vmem [shape: f32[1,64], index: 2, kind: input, shape index: {}]
  %s3 = inlined_call_operand.vmem [shape: bf16[1,16,64], index: 3, kind: output, shape index: {}]
  %s4 = sld [smem:[#allocation0]]
  $region30: #{set_target.26} parent=0
    _
  %s6 = ssub.s32 1, %s4
  %s7 = scalar_select 0, %s6, %s4
  // Predicated region
  $region2: #{set_target.26} parent=0 // pred_check
    _
  $region3: #{set_target.26} parent=0 // pred_check_branch
    %9 = sbr.rel (0) target = $region5
  $region4: #{set_target.26} parent=0 // pred_region
    _
  $region5: #{set_target.26} parent=0 // pred_fallthru
    _
  // Predicated region
  $region6: #{set_target.26} parent=0 // pred_check
    _
  $region7: #{set_target.26} parent=0 // pred_check_branch
    %11 = sbr.rel (0) target = $region9
  $region8: #{set_target.26} parent=0 // pred_region
    _
  $region9: #{set_target.26} parent=0 // pred_fallthru
    _
  // Predicated region
  $region10: #{set_target.26} parent=0 // pred_check
    _
  $region11: #{set_target.26} parent=0 // pred_check_branch
    %13 = sbr.rel (0) target = $region13
  $region12: #{set_target.26} parent=0 // pred_region
    _
  $region13: #{set_target.26} parent=0 // pred_fallthru
    _
  %p15 = scmp.eq.s32.totalorder 0, 0
  // Predicated region
  $region14: #{set_target.26} parent=0 // pred_check
    %p16 = pneg %p15
  $region15: #{set_target.26} parent=0 // pred_check_branch
    %18 = sbr.rel (%p16) target = $region17
  $region16: #{set_target.26} parent=0 // pred_region
    %vm19 = vcmask 523264
    %20 = vst.msk [vmem:[#allocation2] sm:$0xff] %vm19, 0.0
    %21 = vst.msk [vmem:[#allocation2 + $0x8] sm:$0xff] %vm19, 0.0
  $region17: #{set_target.26} parent=0 // pred_fallthru
    _
  %v22 = vld [vmem:[#allocation2] sm:$0xff]
  %v23 = vld [vmem:[#allocation2 + $0x8] sm:$0xff]
  %v24 = vld [vmem:[%s0] sm:$0xf]
  %v25 = vld [vmem:[%s0 + $0x4] sm:$0xf]
  %v26 = vld [vmem:[%s1] sm:$0xf]
  %v27 = vld [vmem:[%s1 + $0x4] sm:$0xf]
  %v28 = vld [vmem:[%s1 + $0x8] sm:$0xf]
  %v29 = vld [vmem:[%s1 + $0xc] sm:$0xf]
  %v30 = vld [vmem:[%s1 + $0x10] sm:$0xf]
  %v31 = vld [vmem:[%s1 + $0x14] sm:$0xf]
  %v32 = vld [vmem:[%s1 + $0x18] sm:$0xf]
  %v33 = vld [vmem:[%s1 + $0x1c] sm:$0xf]
  %v34 = vld [vmem:[%s1 + $0x20] sm:$0xf]
  %v35 = vld [vmem:[%s1 + $0x24] sm:$0xf]
  %v36 = vld [vmem:[%s1 + $0x28] sm:$0xf]
  %v37 = vld [vmem:[%s1 + $0x2c] sm:$0xf]
  %v38 = vld [vmem:[%s1 + $0x30] sm:$0xf]
  %v39 = vld [vmem:[%s1 + $0x34] sm:$0xf]
  %v40 = vld [vmem:[%s1 + $0x38] sm:$0xf]
  %v41 = vld [vmem:[%s1 + $0x3c] sm:$0xf]
  %v44 = vunpack.c.l.b16 %v24
  %v45 = vunpack.c.l.b16 %v25
  %v46 = vpack.c.b16 %v45, %v44
  %v64 = vunpack.c.l.b16 %v26
  %v65 = vunpack.c.l.b16 %v27
  %v66 = vunpack.c.l.b16 %v28
  %v67 = vunpack.c.l.b16 %v29
  %v68 = vunpack.c.l.b16 %v30
  %v69 = vunpack.c.l.b16 %v31
  %v70 = vunpack.c.l.b16 %v32
  %v71 = vunpack.c.l.b16 %v33
  %v72 = vunpack.c.l.b16 %v34
  %v73 = vunpack.c.l.b16 %v35
  %v74 = vunpack.c.l.b16 %v36
  %v75 = vunpack.c.l.b16 %v37
  %v76 = vunpack.c.l.b16 %v38
  %v77 = vunpack.c.l.b16 %v39
  %v78 = vunpack.c.l.b16 %v40
  %v79 = vunpack.c.l.b16 %v41
  %v80 = vpack.c.b16 %v65, %v64
  %v81 = vpack.c.b16 %v67, %v66
  %v82 = vpack.c.b16 %v69, %v68
  %v83 = vpack.c.b16 %v71, %v70
  %v84 = vpack.c.b16 %v73, %v72
  %v85 = vpack.c.b16 %v75, %v74
  %v86 = vpack.c.b16 %v77, %v76
  %v87 = vpack.c.b16 %v79, %v78
  %96 = vmatprep.subr.bf16.mxu0 0
  %97 = vmatpush1.bf16.msra.mxu0 %v87
  %98 = vmatprep.subr.bf16.mxu0 0
  %99 = vmatpush1.bf16.msra.mxu0 %v86
  %100 = vmatprep.subr.bf16.mxu0 0
  %101 = vmatpush1.bf16.msra.mxu0 %v85
  %102 = vmatprep.subr.bf16.mxu0 0
  %103 = vmatpush1.bf16.msra.mxu0 %v84
  %104 = vmatprep.subr.bf16.mxu0 0
  %105 = vmatpush1.bf16.msra.mxu0 %v83
  %106 = vmatprep.subr.bf16.mxu0 0
  %107 = vmatpush1.bf16.msra.mxu0 %v82
  %108 = vmatprep.subr.bf16.mxu0 0
  %109 = vmatpush1.bf16.msra.mxu0 %v81
  %110 = vmatprep.subr.bf16.mxu0 0
  %111 = vmatpush1.bf16.msra.mxu0 %v80
  %112 = vmatprep.subr.bf16.mxu0 0
  %113 = vmatpush2.bf16.msra.mxu0 0
  %114 = vmatprep.subr.bf16.mxu0 0
  %115 = vmatpush2.bf16.msra.mxu0 0
  %116 = vmatprep.subr.bf16.mxu0 0
  %117 = vmatpush2.bf16.msra.mxu0 0
  %118 = vmatprep.subr.bf16.mxu0 0
  %119 = vmatpush2.bf16.msra.mxu0 0
  %120 = vmatprep.subr.bf16.mxu0 0
  %121 = vmatpush2.bf16.msra.mxu0 0
  %122 = vmatprep.subr.bf16.mxu0 0
  %123 = vmatpush2.bf16.msra.mxu0 0
  %124 = vmatprep.subr.bf16.mxu0 0
  %125 = vmatpush2.bf16.msra.mxu0 0
  %126 = vmatprep.subr.bf16.mxu0 0
  %127 = vmatpush2.bf16.msra.mxu0 0
  %128 = vmatprep.mubr.bf16.mxu0 0
  %129 = vmatmul.mubr.bf16.gmra.mxu0 %v46
  %v130 = vpop.f32.mrf.mxu0
  %v131 = vadd.f32 0.0, %v130
  %v132 = vpop.f32.mrf.mxu0
  %v133 = vpop.f32.mrf.mxu0
  %v134 = vadd.f32 0.0, %v133
  %v135 = vpop.f32.mrf.mxu0
  %136 = vdwg.mxu0
  %v137 = vadd.f32 %v22, %v131
  %v138 = vadd.f32 %v23, %v134
  %vm139 = vcmask 523264
  %140 = vst.msk [vmem:[#allocation2] sm:$0xff] %vm139, %v137
  %141 = vst.msk [vmem:[#allocation2 + $0x8] sm:$0xff] %vm139, %v138
  // Predicated region
  $region18: #{set_target.26} parent=0 // pred_check
    %p142 = pneg %p15
  $region19: #{set_target.26} parent=0 // pred_check_branch
    %144 = sbr.rel (%p142) target = $region21
  $region20: #{set_target.26} parent=0 // pred_region
    %v145 = vld [vmem:[#allocation2] sm:$0xff]
    %v146 = vld [vmem:[#allocation2 + $0x8] sm:$0xff]
    %v147 = vld [vmem:[%s2] sm:$0x1]
    %v149 = vlaneseq
    %v150 = vshrl.u32 %v149, 7
    %v151 = vsub.s32 0, %v150
    %v152 = vrot.slane %v147, %v151
    %v154 = vadd.f32 %v145, %v152
    %v155 = vadd.f32 %v146, %v152
    %v156 = vpack.c.bf16 %v155, %v154
    %v158 = vunpack.c.l.b16 %v156
    %v159 = vunpack.c.h.b16 %v156
    %v160 = vpack.c.b16 %v158, %v158
    %v161 = vpack.c.b16 %v159, %v159
    %vm164 = vcmask 519168
    %165 = vst.msk [vmem:[%s3] sm:$0xf] %vm164, %v160
    %166 = vst.msk [vmem:[%s3 + $0x4] sm:$0xf] %vm164, %v161
  $region21: #{set_target.26} parent=0 // pred_fallthru
    _
  // Predicated region
  $region22: #{set_target.26} parent=0 // pred_check
    _
  $region23: #{set_target.26} parent=0 // pred_check_branch
    %168 = sbr.rel (0) target = $region25
  $region24: #{set_target.26} parent=0 // pred_region
    _
  $region25: #{set_target.26} parent=0 // pred_fallthru
    _
  // Predicated region
  $region26: #{set_target.26} parent=0 // pred_check
    _
  $region27: #{set_target.26} parent=0 // pred_check_branch
    %170 = sbr.rel (0) target = $region29
  $region28: #{set_target.26} parent=0 // pred_region
    _
  $region29: #{set_target.26} parent=0 // pred_fallthru
    _

// kernel: set_target.33
$region0: #{set_target.33}
  #allocation0 [shape = 'u32[]', space=smem, size = 0x4, offset = 0x4, fixed_abs, tag = 'smem constant byte address 0x4 - core index']
  #allocation1 [shape = 'u32[144,128]{1,0:T(1,128)}', space=vmem, size = 0x12000, scoped, tag = 'internal scratch']
  #allocation2 [shape = 'f32[64,64]{1,0:T(8,128)}', space=vmem, size = 0x8000, scoped, tag = 'scratch operand']
  %s0 = inlined_call_operand.vmem [shape: bf16[1,64,16], index: 0, kind: input, shape index: {}]
  %s1 = inlined_call_operand.vmem [shape: bf16[1,16,64], index: 1, kind: input, shape index: {}]
  %s2 = inlined_call_operand.vmem [shape: f32[1,64], index: 2, kind: input, shape index: {}]
  %s3 = inlined_call_operand.vmem [shape: f32[1,64,64], index: 3, kind: output, shape index: {}]
  %s4 = sld [smem:[#allocation0]]
  $region30: #{set_target.33} parent=0
    _
  %s6 = ssub.s32 1, %s4
  %s7 = scalar_select 0, %s6, %s4
  // Predicated region
  $region2: #{set_target.33} parent=0 // pred_check
    _
  $region3: #{set_target.33} parent=0 // pred_check_branch
    %9 = sbr.rel (0) target = $region5
  $region4: #{set_target.33} parent=0 // pred_region
    _
  $region5: #{set_target.33} parent=0 // pred_fallthru
    _
  // Predicated region
  $region6: #{set_target.33} parent=0 // pred_check
    _
  $region7: #{set_target.33} parent=0 // pred_check_branch
    %11 = sbr.rel (0) target = $region9
  $region8: #{set_target.33} parent=0 // pred_region
    _
  $region9: #{set_target.33} parent=0 // pred_fallthru
    _
  // Predicated region
  $region10: #{set_target.33} parent=0 // pred_check
    _
  $region11: #{set_target.33} parent=0 // pred_check_branch
    %13 = sbr.rel (0) target = $region13
  $region12: #{set_target.33} parent=0 // pred_region
    _
  $region13: #{set_target.33} parent=0 // pred_fallthru
    _
  %p15 = scmp.eq.s32.totalorder 0, 0
  // Predicated region
  $region14: #{set_target.33} parent=0 // pred_check
    %p16 = pneg %p15
  $region15: #{set_target.33} parent=0 // pred_check_branch
    %18 = sbr.rel (%p16) target = $region17
  $region16: #{set_target.33} parent=0 // pred_region
    %vm19 = vcmask 523264
    %20 = vst.msk [vmem:[#allocation2] sm:$0xff] %vm19, 0.0
    %21 = vst.msk [vmem:[#allocation2 + $0x8] sm:$0xff] %vm19, 0.0
    %22 = vst.msk [vmem:[#allocation2 + $0x10] sm:$0xff] %vm19, 0.0
    %23 = vst.msk [vmem:[#allocation2 + $0x18] sm:$0xff] %vm19, 0.0
    %24 = vst.msk [vmem:[#allocation2 + $0x20] sm:$0xff] %vm19, 0.0
    %25 = vst.msk [vmem:[#allocation2 + $0x28] sm:$0xff] %vm19, 0.0
    %26 = vst.msk [vmem:[#allocation2 + $0x30] sm:$0xff] %vm19, 0.0
    %27 = vst.msk [vmem:[#allocation2 + $0x38] sm:$0xff] %vm19, 0.0
  $region17: #{set_target.33} parent=0 // pred_fallthru
    _
  %v28 = vld [vmem:[#allocation2] sm:$0xff]
  %v29 = vld [vmem:[#allocation2 + $0x8] sm:$0xff]
  %v30 = vld [vmem:[#allocation2 + $0x10] sm:$0xff]
  %v31 = vld [vmem:[#allocation2 + $0x18] sm:$0xff]
  %v32 = vld [vmem:[#allocation2 + $0x20] sm:$0xff]
  %v33 = vld [vmem:[#allocation2 + $0x28] sm:$0xff]
  %v34 = vld [vmem:[#allocation2 + $0x30] sm:$0xff]
  %v35 = vld [vmem:[#allocation2 + $0x38] sm:$0xff]
  %v36 = vld [vmem:[%s0] sm:$0xf]
  %v37 = vld [vmem:[%s0 + $0x4] sm:$0xf]
  %v38 = vld [vmem:[%s0 + $0x8] sm:$0xf]
  %v39 = vld [vmem:[%s0 + $0xc] sm:$0xf]
  %v40 = vld [vmem:[%s0 + $0x10] sm:$0xf]
  %v41 = vld [vmem:[%s0 + $0x14] sm:$0xf]
  %v42 = vld [vmem:[%s0 + $0x18] sm:$0xf]
  %v43 = vld [vmem:[%s0 + $0x1c] sm:$0xf]
  %v44 = vld [vmem:[%s1] sm:$0xf]
  %v45 = vld [vmem:[%s1 + $0x4] sm:$0xf]
  %v54 = vunpack.c.l.b16 %v36
  %v55 = vunpack.c.l.b16 %v37
  %v56 = vunpack.c.l.b16 %v38
  %v57 = vunpack.c.l.b16 %v39
  %v58 = vunpack.c.l.b16 %v40
  %v59 = vunpack.c.l.b16 %v41
  %v60 = vunpack.c.l.b16 %v42
  %v61 = vunpack.c.l.b16 %v43
  %v62 = vpack.c.b16 %v55, %v54
  %v63 = vpack.c.b16 %v57, %v56
  %v64 = vpack.c.b16 %v59, %v58
  %v65 = vpack.c.b16 %v61, %v60
  %v68 = vunpack.c.l.b16 %v44
  %v69 = vunpack.c.l.b16 %v45
  %v70 = vpack.c.b16 %v69, %v68
  %vm72 = vcmask 130048
  %v74 = vsel %vm72, %v62, 0
  %v77 = vsel %vm72, %v63, 0
  %v80 = vsel %vm72, %v64, 0
  %v83 = vsel %vm72, %v65, 0
  %85 = vmatprep.subr.bf16.mxu0 0
  %86 = vmatpush1.bf16.msra.mxu0 0
  %87 = vmatprep.subr.bf16.mxu0 0
  %88 = vmatpush1.bf16.msra.mxu0 0
  %89 = vmatprep.subr.bf16.mxu0 0
  %90 = vmatpush1.bf16.msra.mxu0 0
  %91 = vmatprep.subr.bf16.mxu0 0
  %92 = vmatpush1.bf16.msra.mxu0 0
  %93 = vmatprep.subr.bf16.mxu0 0
  %94 = vmatpush1.bf16.msra.mxu0 0
  %95 = vmatprep.subr.bf16.mxu0 0
  %96 = vmatpush1.bf16.msra.mxu0 0
  %97 = vmatprep.subr.bf16.mxu0 0
  %98 = vmatpush1.bf16.msra.mxu0 0
  %99 = vmatprep.subr.bf16.mxu0 0
  %100 = vmatpush1.bf16.msra.mxu0 %v70
  %101 = vmatprep.subr.bf16.mxu0 0
  %102 = vmatpush2.bf16.msra.mxu0 0
  %103 = vmatprep.subr.bf16.mxu0 0
  %104 = vmatpush2.bf16.msra.mxu0 0
  %105 = vmatprep.subr.bf16.mxu0 0
  %106 = vmatpush2.bf16.msra.mxu0 0
  %107 = vmatprep.subr.bf16.mxu0 0
  %108 = vmatpush2.bf16.msra.mxu0 0
  %109 = vmatprep.subr.bf16.mxu0 0
  %110 = vmatpush2.bf16.msra.mxu0 0
  %111 = vmatprep.subr.bf16.mxu0 0
  %112 = vmatpush2.bf16.msra.mxu0 0
  %113 = vmatprep.subr.bf16.mxu0 0
  %114 = vmatpush2.bf16.msra.mxu0 0
  %115 = vmatprep.subr.bf16.mxu0 0
  %116 = vmatpush2.bf16.msra.mxu0 0
  %117 = vmatprep.mubr.bf16.mxu0 0
  %118 = vmatmul.mubr.bf16.gmra.mxu0 %v74
  %v119 = vpop.f32.mrf.mxu0
  %v120 = vadd.f32 0.0, %v119
  %v121 = vpop.f32.mrf.mxu0
  %v122 = vpop.f32.mrf.mxu0
  %v123 = vadd.f32 0.0, %v122
  %v124 = vpop.f32.mrf.mxu0
  %125 = vmatprep.mubr.bf16.mxu0 0
  %126 = vmatmul.mubr.bf16.gmra.mxu0 %v77
  %v127 = vpop.f32.mrf.mxu0
  %v128 = vadd.f32 0.0, %v127
  %v129 = vpop.f32.mrf.mxu0
  %v130 = vpop.f32.mrf.mxu0
  %v131 = vadd.f32 0.0, %v130
  %v132 = vpop.f32.mrf.mxu0
  %133 = vmatprep.mubr.bf16.mxu0 0
  %134 = vmatmul.mubr.bf16.gmra.mxu0 %v80
  %v135 = vpop.f32.mrf.mxu0
  %v136 = vadd.f32 0.0, %v135
  %v137 = vpop.f32.mrf.mxu0
  %v138 = vpop.f32.mrf.mxu0
  %v139 = vadd.f32 0.0, %v138
  %v140 = vpop.f32.mrf.mxu0
  %141 = vmatprep.mubr.bf16.mxu0 0
  %142 = vmatmul.mubr.bf16.gmra.mxu0 %v83
  %v143 = vpop.f32.mrf.mxu0
  %v144 = vadd.f32 0.0, %v143
  %v145 = vpop.f32.mrf.mxu0
  %v146 = vpop.f32.mrf.mxu0
  %v147 = vadd.f32 0.0, %v146
  %v148 = vpop.f32.mrf.mxu0
  %149 = vdwg.mxu0
  %v150 = vadd.f32 %v28, %v120
  %v151 = vadd.f32 %v29, %v123
  %v152 = vadd.f32 %v30, %v128
  %v153 = vadd.f32 %v31, %v131
  %v154 = vadd.f32 %v32, %v136
  %v155 = vadd.f32 %v33, %v139
  %v156 = vadd.f32 %v34, %v144
  %v157 = vadd.f32 %v35, %v147
  %vm158 = vcmask 523264
  %159 = vst.msk [vmem:[#allocation2] sm:$0xff] %vm158, %v150
  %160 = vst.msk [vmem:[#allocation2 + $0x8] sm:$0xff] %vm158, %v151
  %161 = vst.msk [vmem:[#allocation2 + $0x10] sm:$0xff] %vm158, %v152
  %162 = vst.msk [vmem:[#allocation2 + $0x18] sm:$0xff] %vm158, %v153
  %163 = vst.msk [vmem:[#allocation2 + $0x20] sm:$0xff] %vm158, %v154
  %164 = vst.msk [vmem:[#allocation2 + $0x28] sm:$0xff] %vm158, %v155
  %165 = vst.msk [vmem:[#allocation2 + $0x30] sm:$0xff] %vm158, %v156
  %166 = vst.msk [vmem:[#allocation2 + $0x38] sm:$0xff] %vm158, %v157
  // Predicated region
  $region18: #{set_target.33} parent=0 // pred_check
    %p167 = pneg %p15
  $region19: #{set_target.33} parent=0 // pred_check_branch
    %169 = sbr.rel (%p167) target = $region21
  $region20: #{set_target.33} parent=0 // pred_region
    %v170 = vld [vmem:[#allocation2] sm:$0xff]
    %v171 = vld [vmem:[#allocation2 + $0x8] sm:$0xff]
    %v172 = vld [vmem:[#allocation2 + $0x10] sm:$0xff]
    %v173 = vld [vmem:[#allocation2 + $0x18] sm:$0xff]
    %v174 = vld [vmem:[#allocation2 + $0x20] sm:$0xff]
    %v175 = vld [vmem:[#allocation2 + $0x28] sm:$0xff]
    %v176 = vld [vmem:[#allocation2 + $0x30] sm:$0xff]
    %v177 = vld [vmem:[#allocation2 + $0x38] sm:$0xff]
    %v178 = vld [vmem:[%s2] sm:$0x1]
    %v180 = vlaneseq
    %v181 = vshrl.u32 %v180, 7
    %v182 = vsub.s32 0, %v181
    %v183 = vrot.slane %v178, %v182
    %v185 = vadd.f32 %v170, %v183
    %v186 = vadd.f32 %v171, %v183
    %v187 = vadd.f32 %v172, %v183
    %v188 = vadd.f32 %v173, %v183
    %v189 = vadd.f32 %v174, %v183
    %v190 = vadd.f32 %v175, %v183
    %v191 = vadd.f32 %v176, %v183
    %v192 = vadd.f32 %v177, %v183
    %193 = vst.msk [vmem:[%s3] sm:$0xff] %vm158, %v185
    %194 = vst.msk [vmem:[%s3 + $0x8] sm:$0xff] %vm158, %v186
    %195 = vst.msk [vmem:[%s3 + $0x10] sm:$0xff] %vm158, %v187
    %196 = vst.msk [vmem:[%s3 + $0x18] sm:$0xff] %vm158, %v188
    %197 = vst.msk [vmem:[%s3 + $0x20] sm:$0xff] %vm158, %v189
    %198 = vst.msk [vmem:[%s3 + $0x28] sm:$0xff] %vm158, %v190
    %199 = vst.msk [vmem:[%s3 + $0x30] sm:$0xff] %vm158, %v191
    %200 = vst.msk [vmem:[%s3 + $0x38] sm:$0xff] %vm158, %v192
  $region21: #{set_target.33} parent=0 // pred_fallthru
    _
  // Predicated region
  $region22: #{set_target.33} parent=0 // pred_check
    _
  $region23: #{set_target.33} parent=0 // pred_check_branch
    %202 = sbr.rel (0) target = $region25
  $region24: #{set_target.33} parent=0 // pred_region
    _
  $region25: #{set_target.33} parent=0 // pred_fallthru
    _
  // Predicated region
  $region26: #{set_target.33} parent=0 // pred_check
    _
  $region27: #{set_target.33} parent=0 // pred_check_branch
    %204 = sbr.rel (0) target = $region29
  $region28: #{set_target.33} parent=0 // pred_region
    _
  $region29: #{set_target.33} parent=0 // pred_fallthru
    _

</llo_original>
